<compile_context>
chip_gen: v7x
topology: tpu7x:2x2x1
jax: 0.10.0
libtpu: 0.0.40
codegen_flags: <defaults>
</compile_context>

<pallas_src>
import jax
import jax.numpy as jnp
import numpy as np
from jax.experimental import pallas as pl
from jax.experimental.pallas import tpu as pltpu

EPS = 1e-5  # PyTorch InstanceNorm2d default (affine=False, biased variance)


# ---------------- kernel-side helpers (traced inside the Pallas body) --------

def _conv3x3_reflect(x, w_ref, H, W):
    """3x3 'same' conv with ReflectionPad2d(1), as 9 MXU matmuls.

    x: (H, W, C) compute dtype; w_ref: (3, 3, Cin, Cout) VMEM ref.
    Returns (H, W, Cout) float32. No bias (cancelled by InstanceNorm).
    Assumes H >= 2 and W >= 2 (required by ReflectionPad2d(1) anyway).
    """
    # Reflection-pad rows along the leading (non-tiled) dim: address math only.
    rows = jnp.concatenate([x[1:2], x, x[H - 2:H - 1]], axis=0)        # (H+2, W, C)
    # The three dx-shifted column views, built once and reused for every dy.
    # Only dx=0 and dx=2 need a sublane relayout; dx=1 is `rows` itself.
    cols = (
        jnp.concatenate([rows[:, 1:2], rows[:, :W - 1]], axis=1),      # dx = 0
        rows,                                                          # dx = 1
        jnp.concatenate([rows[:, 1:], rows[:, W - 2:W - 1]], axis=1),  # dx = 2
    )
    acc = None
    for dy in range(3):
        for dx in range(3):
            tap = jax.lax.dot_general(
                cols[dx][dy:dy + H],          # leading-dim slice: free
                w_ref[dy, dx],                # (Cin, Cout)
                dimension_numbers=(((2,), (0,)), ((), ())),
                preferred_element_type=jnp.float32)
            acc = tap if acc is None else acc + tap
    return acc                                                         # (H, W, Cout) f32


def _instance_norm(y, H, W):
    """affine=False InstanceNorm2d over the spatial dims, single-pass stats."""
    inv_hw = 1.0 / (H * W)
    s = jnp.sum(y, axis=(0, 1), keepdims=True)
    ss = jnp.sum(y * y, axis=(0, 1), keepdims=True)
    mean = s * inv_hw
    var = jnp.maximum(ss * inv_hw - mean * mean, 0.0)
    return (y - mean) * jax.lax.rsqrt(var + EPS)


# ---------------- Pallas kernel: one image (one batch element) per grid step -

def residual_block_kernel(x_ref, w1_ref, w2_ref, o_ref):
    _, H, W, C = x_ref.shape
    x = x_ref[0]                                       # (H, W, C) compute dtype

    # conv1 -> instance-norm -> relu   (reflection pad done inside)
    y = _conv3x3_reflect(x, w1_ref, H, W)              # f32
    y = jnp.maximum(_instance_norm(y, H, W), 0.0)

    # conv2 -> instance-norm           (reflection pad done inside)
    z = _conv3x3_reflect(y.astype(x.dtype), w2_ref, H, W)
    z = _instance_norm(z, H, W)

    # residual add
    o_ref[0] = (x.astype(jnp.float32) + z).astype(o_ref.dtype)


# ---------------- wrappers ----------------------------------------------------

def residual_block_nhwc(x, w1, w2, b1=None, b2=None):
    """x: (N, H, W, C) channels-last activations.
    w1, w2: PyTorch-layout Conv2d weights (Cout, Cin, 3, 3) with Cin == Cout == C.
    b1, b2 accepted for API parity but unused: a per-channel conv bias is
    exactly cancelled by the affine=False InstanceNorm that follows it.
    """
    del b1, b2
    N, H, W, C = x.shape
    cdtype = x.dtype
    w1k = jnp.transpose(w1, (2, 3, 1, 0)).astype(cdtype)   # (3, 3, Cin, Cout)
    w2k = jnp.transpose(w2, (2, 3, 1, 0)).astype(cdtype)

    itemsize = jnp.dtype(cdtype).itemsize
    blk = H * W * C * itemsize                       # one image block
    wbytes = 2 * 9 * C * C * itemsize                # both weight tensors
    # double-buffered in/out blocks + (double-buffered) weights + headroom for
    # the ~handful of live f32 intermediates the kernel creates per image
    vmem_est = 4 * blk + 2 * wbytes + 12 * H * W * C * 4
    vmem_limit = int(min(max(vmem_est, 32 * 1024 * 1024), 56 * 1024 * 1024))

    cost = pl.CostEstimate(
        flops=2 * 2 * 9 * H * W * C * C * N,         # two 3x3 convs per image
        transcendentals=0,
        bytes_accessed=2 * N * blk + wbytes,
    )

    return pl.pallas_call(
        residual_block_kernel,
        out_shape=jax.ShapeDtypeStruct((N, H, W, C), x.dtype),
        grid_spec=pltpu.PrefetchScalarGridSpec(
            num_scalar_prefetch=0,
            grid=(N,),
            in_specs=[
                pl.BlockSpec((1, H, W, C), lambda n: (n, 0, 0, 0)),
                pl.BlockSpec((3, 3, C, C), lambda n: (0, 0, 0, 0)),
                pl.BlockSpec((3, 3, C, C), lambda n: (0, 0, 0, 0)),
            ],
            out_specs=pl.BlockSpec((1, H, W, C), lambda n: (n, 0, 0, 0)),
        ),
        compiler_params=pltpu.CompilerParams(
            dimension_semantics=("parallel",),
            vmem_limit_bytes=vmem_limit),
        cost_estimate=cost,
    )(x, w1k, w2k)


def residual_block_nchw(x_nchw, w1, b1, w2, b2):
    """PyTorch-layout convenience wrapper (N, C, H, W). Prefer the NHWC entry
    point: these two transposes round-trip the activation through HBM."""
    x = jnp.transpose(x_nchw, (0, 2, 3, 1))
    out = residual_block_nhwc(x, w1, w2, b1, b2)
    return jnp.transpose(out, (0, 3, 1, 2))


# ---------------- pure-JAX reference (with biases, to prove cancellation) ----

def reference_nhwc(x, w1, b1, w2, b2):
    def conv_norm(t, w, b, relu):
        tp = jnp.pad(t, ((0, 0), (1, 1), (1, 1), (0, 0)), mode="reflect")
        wk = jnp.transpose(w, (2, 3, 1, 0))                  # HWIO
        y = jax.lax.conv_general_dilated(
            tp, wk, window_strides=(1, 1), padding="VALID",
            dimension_numbers=("NHWC", "HWIO", "NHWC")) + b.reshape(1, 1, 1, -1)
        mean = y.mean(axis=(1, 2), keepdims=True)
        var = ((y - mean) ** 2).mean(axis=(1, 2), keepdims=True)
        y = (y - mean) / jnp.sqrt(var + EPS)
        return jnp.maximum(y, 0.0) if relu else y

    y = conv_norm(x, w1, b1, True)
    z = conv_norm(y, w2, b2, False)
    return x + z


if __name__ == "__main__":
    # Channel count matches the Generator's residual stage (in_features = 256),
    # with a small spatial extent and batch to keep the test light.
    N, H, W, C = 2, 16, 16, 256
    key = jax.random.PRNGKey(0)
    kx, kw1, kb1, kw2, kb2 = jax.random.split(key, 5)

    x = jax.random.normal(kx, (N, H, W, C), dtype=jnp.float32)
    fan_in = C * 3 * 3
    w1 = jax.random.normal(kw1, (C, C, 3, 3), dtype=jnp.float32) / np.sqrt(fan_in)
    b1 = jax.random.normal(kb1, (C,), dtype=jnp.float32) * 0.1
    w2 = jax.random.normal(kw2, (C, C, 3, 3), dtype=jnp.float32) / np.sqrt(fan_in)
    b2 = jax.random.normal(kb2, (C,), dtype=jnp.float32) * 0.1

    out = jax.block_until_ready(residual_block_nhwc(x, w1, w2, b1, b2))

    ref = jax.block_until_ready(reference_nhwc(x, w1, b1, w2, b2))
    np.testing.assert_allclose(np.asarray(out), np.asarray(ref),
                               rtol=2e-4, atol=2e-4)
    print("KERNEL_OK")
</pallas_src>

<mosaic_0001>
module attributes {stable_mosaic.version = 11 : i64} {
  func.func @residual_block_kernel(%arg0: i32, %arg1: memref<1x16x16x256xf32, #tpu.memory_space<vmem>>, %arg2: memref<3x3x256x256xf32, #tpu.memory_space<vmem>>, %arg3: memref<3x3x256x256xf32, #tpu.memory_space<vmem>>, %arg4: memref<1x16x16x256xf32, #tpu.memory_space<vmem>>) attributes {dimension_semantics = [#tpu.dimension_semantics<parallel>], iteration_bounds = array<i64: 2>, scalar_prefetch = 0 : i64, scratch_operands = 0 : i64, tpu.core_type = #tpu.core_type<tc>, window_params = [{transform_indices = @transform_0, window_bounds = array<i64: 1, 16, 16, 256>}, {pipeline_mode = #tpu.pipeline_mode<synchronous>, transform_indices = @transform_1, window_bounds = array<i64: 3, 3, 256, 256>}, {pipeline_mode = #tpu.pipeline_mode<synchronous>, transform_indices = @transform_2, window_bounds = array<i64: 3, 3, 256, 256>}, {transform_indices = @transform_3, window_bounds = array<i64: 1, 16, 16, 256>}]} {
    %c0 = arith.constant 0 : index
    %c0_0 = arith.constant 0 : index
    %c0_1 = arith.constant 0 : index
    %c0_2 = arith.constant 0 : index
    %0 = vector.load %arg1[%c0, %c0_0, %c0_1, %c0_2] : memref<1x16x16x256xf32, #tpu.memory_space<vmem>>, vector<1x16x16x256xf32>
    %1 = vector.shape_cast %0 : vector<1x16x16x256xf32> to vector<16x16x256xf32>
    %2 = vector.extract_strided_slice %1 {offsets = [1, 0, 0], sizes = [1, 16, 256], strides = [1, 1, 1]} : vector<16x16x256xf32> to vector<1x16x256xf32>
    %3 = vector.extract_strided_slice %1 {offsets = [14, 0, 0], sizes = [1, 16, 256], strides = [1, 1, 1]} : vector<16x16x256xf32> to vector<1x16x256xf32>
    %4 = tpu.concatenate %2, %1, %3 in 0 : vector<1x16x256xf32>, vector<16x16x256xf32>, vector<1x16x256xf32> -> vector<18x16x256xf32>
    %5 = vector.extract_strided_slice %4 {offsets = [0, 1, 0], sizes = [18, 1, 256], strides = [1, 1, 1]} : vector<18x16x256xf32> to vector<18x1x256xf32>
    %6 = vector.extract_strided_slice %4 {offsets = [0, 0, 0], sizes = [18, 15, 256], strides = [1, 1, 1]} : vector<18x16x256xf32> to vector<18x15x256xf32>
    %7 = tpu.concatenate %5, %6 in 1 : vector<18x1x256xf32>, vector<18x15x256xf32> -> vector<18x16x256xf32>
    %8 = vector.extract_strided_slice %4 {offsets = [0, 1, 0], sizes = [18, 15, 256], strides = [1, 1, 1]} : vector<18x16x256xf32> to vector<18x15x256xf32>
    %9 = vector.extract_strided_slice %4 {offsets = [0, 14, 0], sizes = [18, 1, 256], strides = [1, 1, 1]} : vector<18x16x256xf32> to vector<18x1x256xf32>
    %10 = tpu.concatenate %8, %9 in 1 : vector<18x15x256xf32>, vector<18x1x256xf32> -> vector<18x16x256xf32>
    %11 = vector.extract_strided_slice %7 {offsets = [0, 0, 0], sizes = [16, 16, 256], strides = [1, 1, 1]} : vector<18x16x256xf32> to vector<16x16x256xf32>
    %c0_3 = arith.constant 0 : index
    %c0_4 = arith.constant 0 : index
    %c0_5 = arith.constant 0 : index
    %c0_6 = arith.constant 0 : index
    %12 = vector.load %arg2[%c0_3, %c0_4, %c0_5, %c0_6] : memref<3x3x256x256xf32, #tpu.memory_space<vmem>>, vector<1x1x256x256xf32>
    %13 = vector.shape_cast %12 : vector<1x1x256x256xf32> to vector<256x256xf32>
    %cst = arith.constant dense<0.000000e+00> : vector<16x16x256xf32>
    %14 = tpu.matmul %11, %13, %cst {dimension_numbers = #tpu.dot_dimension_numbers<[2], [0], [0, 1], [1], [0, 0, 0, 1, 1, 1], [], []>} : vector<16x16x256xf32>, vector<256x256xf32>, vector<16x16x256xf32> -> vector<16x16x256xf32>
    %15 = vector.extract_strided_slice %4 {offsets = [0, 0, 0], sizes = [16, 16, 256], strides = [1, 1, 1]} : vector<18x16x256xf32> to vector<16x16x256xf32>
    %c0_7 = arith.constant 0 : index
    %c1 = arith.constant 1 : index
    %c0_8 = arith.constant 0 : index
    %c0_9 = arith.constant 0 : index
    %16 = vector.load %arg2[%c0_7, %c1, %c0_8, %c0_9] : memref<3x3x256x256xf32, #tpu.memory_space<vmem>>, vector<1x1x256x256xf32>
    %17 = vector.shape_cast %16 : vector<1x1x256x256xf32> to vector<256x256xf32>
    %cst_10 = arith.constant dense<0.000000e+00> : vector<16x16x256xf32>
    %18 = tpu.matmul %15, %17, %cst_10 {dimension_numbers = #tpu.dot_dimension_numbers<[2], [0], [0, 1], [1], [0, 0, 0, 1, 1, 1], [], []>} : vector<16x16x256xf32>, vector<256x256xf32>, vector<16x16x256xf32> -> vector<16x16x256xf32>
    %19 = arith.addf %14, %18 : vector<16x16x256xf32>
    %20 = vector.extract_strided_slice %10 {offsets = [0, 0, 0], sizes = [16, 16, 256], strides = [1, 1, 1]} : vector<18x16x256xf32> to vector<16x16x256xf32>
    %c0_11 = arith.constant 0 : index
    %c2 = arith.constant 2 : index
    %c0_12 = arith.constant 0 : index
    %c0_13 = arith.constant 0 : index
    %21 = vector.load %arg2[%c0_11, %c2, %c0_12, %c0_13] : memref<3x3x256x256xf32, #tpu.memory_space<vmem>>, vector<1x1x256x256xf32>
    %22 = vector.shape_cast %21 : vector<1x1x256x256xf32> to vector<256x256xf32>
    %cst_14 = arith.constant dense<0.000000e+00> : vector<16x16x256xf32>
    %23 = tpu.matmul %20, %22, %cst_14 {dimension_numbers = #tpu.dot_dimension_numbers<[2], [0], [0, 1], [1], [0, 0, 0, 1, 1, 1], [], []>} : vector<16x16x256xf32>, vector<256x256xf32>, vector<16x16x256xf32> -> vector<16x16x256xf32>
    %24 = arith.addf %19, %23 : vector<16x16x256xf32>
    %25 = vector.extract_strided_slice %7 {offsets = [1, 0, 0], sizes = [16, 16, 256], strides = [1, 1, 1]} : vector<18x16x256xf32> to vector<16x16x256xf32>
    %c1_15 = arith.constant 1 : index
    %c0_16 = arith.constant 0 : index
    %c0_17 = arith.constant 0 : index
    %c0_18 = arith.constant 0 : index
    %26 = vector.load %arg2[%c1_15, %c0_16, %c0_17, %c0_18] : memref<3x3x256x256xf32, #tpu.memory_space<vmem>>, vector<1x1x256x256xf32>
    %27 = vector.shape_cast %26 : vector<1x1x256x256xf32> to vector<256x256xf32>
    %cst_19 = arith.constant dense<0.000000e+00> : vector<16x16x256xf32>
    %28 = tpu.matmul %25, %27, %cst_19 {dimension_numbers = #tpu.dot_dimension_numbers<[2], [0], [0, 1], [1], [0, 0, 0, 1, 1, 1], [], []>} : vector<16x16x256xf32>, vector<256x256xf32>, vector<16x16x256xf32> -> vector<16x16x256xf32>
    %29 = arith.addf %24, %28 : vector<16x16x256xf32>
    %30 = vector.extract_strided_slice %4 {offsets = [1, 0, 0], sizes = [16, 16, 256], strides = [1, 1, 1]} : vector<18x16x256xf32> to vector<16x16x256xf32>
    %c1_20 = arith.constant 1 : index
    %c1_21 = arith.constant 1 : index
    %c0_22 = arith.constant 0 : index
    %c0_23 = arith.constant 0 : index
    %31 = vector.load %arg2[%c1_20, %c1_21, %c0_22, %c0_23] : memref<3x3x256x256xf32, #tpu.memory_space<vmem>>, vector<1x1x256x256xf32>
    %32 = vector.shape_cast %31 : vector<1x1x256x256xf32> to vector<256x256xf32>
    %cst_24 = arith.constant dense<0.000000e+00> : vector<16x16x256xf32>
    %33 = tpu.matmul %30, %32, %cst_24 {dimension_numbers = #tpu.dot_dimension_numbers<[2], [0], [0, 1], [1], [0, 0, 0, 1, 1, 1], [], []>} : vector<16x16x256xf32>, vector<256x256xf32>, vector<16x16x256xf32> -> vector<16x16x256xf32>
    %34 = arith.addf %29, %33 : vector<16x16x256xf32>
    %35 = vector.extract_strided_slice %10 {offsets = [1, 0, 0], sizes = [16, 16, 256], strides = [1, 1, 1]} : vector<18x16x256xf32> to vector<16x16x256xf32>
    %c1_25 = arith.constant 1 : index
    %c2_26 = arith.constant 2 : index
    %c0_27 = arith.constant 0 : index
    %c0_28 = arith.constant 0 : index
    %36 = vector.load %arg2[%c1_25, %c2_26, %c0_27, %c0_28] : memref<3x3x256x256xf32, #tpu.memory_space<vmem>>, vector<1x1x256x256xf32>
    %37 = vector.shape_cast %36 : vector<1x1x256x256xf32> to vector<256x256xf32>
    %cst_29 = arith.constant dense<0.000000e+00> : vector<16x16x256xf32>
    %38 = tpu.matmul %35, %37, %cst_29 {dimension_numbers = #tpu.dot_dimension_numbers<[2], [0], [0, 1], [1], [0, 0, 0, 1, 1, 1], [], []>} : vector<16x16x256xf32>, vector<256x256xf32>, vector<16x16x256xf32> -> vector<16x16x256xf32>
    %39 = arith.addf %34, %38 : vector<16x16x256xf32>
    %40 = vector.extract_strided_slice %7 {offsets = [2, 0, 0], sizes = [16, 16, 256], strides = [1, 1, 1]} : vector<18x16x256xf32> to vector<16x16x256xf32>
    %c2_30 = arith.constant 2 : index
    %c0_31 = arith.constant 0 : index
    %c0_32 = arith.constant 0 : index
    %c0_33 = arith.constant 0 : index
    %41 = vector.load %arg2[%c2_30, %c0_31, %c0_32, %c0_33] : memref<3x3x256x256xf32, #tpu.memory_space<vmem>>, vector<1x1x256x256xf32>
    %42 = vector.shape_cast %41 : vector<1x1x256x256xf32> to vector<256x256xf32>
    %cst_34 = arith.constant dense<0.000000e+00> : vector<16x16x256xf32>
    %43 = tpu.matmul %40, %42, %cst_34 {dimension_numbers = #tpu.dot_dimension_numbers<[2], [0], [0, 1], [1], [0, 0, 0, 1, 1, 1], [], []>} : vector<16x16x256xf32>, vector<256x256xf32>, vector<16x16x256xf32> -> vector<16x16x256xf32>
    %44 = arith.addf %39, %43 : vector<16x16x256xf32>
    %45 = vector.extract_strided_slice %4 {offsets = [2, 0, 0], sizes = [16, 16, 256], strides = [1, 1, 1]} : vector<18x16x256xf32> to vector<16x16x256xf32>
    %c2_35 = arith.constant 2 : index
    %c1_36 = arith.constant 1 : index
    %c0_37 = arith.constant 0 : index
    %c0_38 = arith.constant 0 : index
    %46 = vector.load %arg2[%c2_35, %c1_36, %c0_37, %c0_38] : memref<3x3x256x256xf32, #tpu.memory_space<vmem>>, vector<1x1x256x256xf32>
    %47 = vector.shape_cast %46 : vector<1x1x256x256xf32> to vector<256x256xf32>
    %cst_39 = arith.constant dense<0.000000e+00> : vector<16x16x256xf32>
    %48 = tpu.matmul %45, %47, %cst_39 {dimension_numbers = #tpu.dot_dimension_numbers<[2], [0], [0, 1], [1], [0, 0, 0, 1, 1, 1], [], []>} : vector<16x16x256xf32>, vector<256x256xf32>, vector<16x16x256xf32> -> vector<16x16x256xf32>
    %49 = arith.addf %44, %48 : vector<16x16x256xf32>
    %50 = vector.extract_strided_slice %10 {offsets = [2, 0, 0], sizes = [16, 16, 256], strides = [1, 1, 1]} : vector<18x16x256xf32> to vector<16x16x256xf32>
    %c2_40 = arith.constant 2 : index
    %c2_41 = arith.constant 2 : index
    %c0_42 = arith.constant 0 : index
    %c0_43 = arith.constant 0 : index
    %51 = vector.load %arg2[%c2_40, %c2_41, %c0_42, %c0_43] : memref<3x3x256x256xf32, #tpu.memory_space<vmem>>, vector<1x1x256x256xf32>
    %52 = vector.shape_cast %51 : vector<1x1x256x256xf32> to vector<256x256xf32>
    %cst_44 = arith.constant dense<0.000000e+00> : vector<16x16x256xf32>
    %53 = tpu.matmul %50, %52, %cst_44 {dimension_numbers = #tpu.dot_dimension_numbers<[2], [0], [0, 1], [1], [0, 0, 0, 1, 1, 1], [], []>} : vector<16x16x256xf32>, vector<256x256xf32>, vector<16x16x256xf32> -> vector<16x16x256xf32>
    %54 = arith.addf %49, %53 : vector<16x16x256xf32>
    %cst_45 = arith.constant dense<0.000000e+00> : vector<256xf32>
    %55 = vector.multi_reduction <add>, %54, %cst_45 [0, 1] : vector<16x16x256xf32> to vector<256xf32>
    %56 = vector.shape_cast %55 : vector<256xf32> to vector<1x1x256xf32>
    %57 = arith.mulf %54, %54 : vector<16x16x256xf32>
    %cst_46 = arith.constant dense<0.000000e+00> : vector<256xf32>
    %58 = vector.multi_reduction <add>, %57, %cst_46 [0, 1] : vector<16x16x256xf32> to vector<256xf32>
    %59 = vector.shape_cast %58 : vector<256xf32> to vector<1x1x256xf32>
    %cst_47 = arith.constant 3.906250e-03 : f32
    %60 = vector.broadcast %cst_47 : f32 to vector<1x1x256xf32>
    %61 = arith.mulf %56, %60 : vector<1x1x256xf32>
    %cst_48 = arith.constant 3.906250e-03 : f32
    %62 = vector.broadcast %cst_48 : f32 to vector<1x1x256xf32>
    %63 = arith.mulf %59, %62 : vector<1x1x256xf32>
    %64 = arith.mulf %61, %61 : vector<1x1x256xf32>
    %65 = arith.subf %63, %64 : vector<1x1x256xf32>
    %cst_49 = arith.constant 0.000000e+00 : f32
    %66 = vector.broadcast %cst_49 : f32 to vector<1x1x256xf32>
    %67 = arith.maximumf %65, %66 : vector<1x1x256xf32>
    %68 = vector.broadcast %61 : vector<1x1x256xf32> to vector<16x16x256xf32>
    %69 = arith.subf %54, %68 : vector<16x16x256xf32>
    %cst_50 = arith.constant 9.99999974E-6 : f32
    %70 = vector.broadcast %cst_50 : f32 to vector<1x1x256xf32>
    %71 = arith.addf %67, %70 : vector<1x1x256xf32>
    %72 = math.rsqrt %71 : vector<1x1x256xf32>
    %73 = vector.broadcast %72 : vector<1x1x256xf32> to vector<16x16x256xf32>
    %74 = arith.mulf %69, %73 : vector<16x16x256xf32>
    %cst_51 = arith.constant 0.000000e+00 : f32
    %75 = vector.broadcast %cst_51 : f32 to vector<16x16x256xf32>
    %76 = arith.maximumf %74, %75 : vector<16x16x256xf32>
    %77 = vector.extract_strided_slice %76 {offsets = [1, 0, 0], sizes = [1, 16, 256], strides = [1, 1, 1]} : vector<16x16x256xf32> to vector<1x16x256xf32>
    %78 = vector.extract_strided_slice %76 {offsets = [14, 0, 0], sizes = [1, 16, 256], strides = [1, 1, 1]} : vector<16x16x256xf32> to vector<1x16x256xf32>
    %79 = tpu.concatenate %77, %76, %78 in 0 : vector<1x16x256xf32>, vector<16x16x256xf32>, vector<1x16x256xf32> -> vector<18x16x256xf32>
    %80 = vector.extract_strided_slice %79 {offsets = [0, 1, 0], sizes = [18, 1, 256], strides = [1, 1, 1]} : vector<18x16x256xf32> to vector<18x1x256xf32>
    %81 = vector.extract_strided_slice %79 {offsets = [0, 0, 0], sizes = [18, 15, 256], strides = [1, 1, 1]} : vector<18x16x256xf32> to vector<18x15x256xf32>
    %82 = tpu.concatenate %80, %81 in 1 : vector<18x1x256xf32>, vector<18x15x256xf32> -> vector<18x16x256xf32>
    %83 = vector.extract_strided_slice %79 {offsets = [0, 1, 0], sizes = [18, 15, 256], strides = [1, 1, 1]} : vector<18x16x256xf32> to vector<18x15x256xf32>
    %84 = vector.extract_strided_slice %79 {offsets = [0, 14, 0], sizes = [18, 1, 256], strides = [1, 1, 1]} : vector<18x16x256xf32> to vector<18x1x256xf32>
    %85 = tpu.concatenate %83, %84 in 1 : vector<18x15x256xf32>, vector<18x1x256xf32> -> vector<18x16x256xf32>
    %86 = vector.extract_strided_slice %82 {offsets = [0, 0, 0], sizes = [16, 16, 256], strides = [1, 1, 1]} : vector<18x16x256xf32> to vector<16x16x256xf32>
    %c0_52 = arith.constant 0 : index
    %c0_53 = arith.constant 0 : index
    %c0_54 = arith.constant 0 : index
    %c0_55 = arith.constant 0 : index
    %87 = vector.load %arg3[%c0_52, %c0_53, %c0_54, %c0_55] : memref<3x3x256x256xf32, #tpu.memory_space<vmem>>, vector<1x1x256x256xf32>
    %88 = vector.shape_cast %87 : vector<1x1x256x256xf32> to vector<256x256xf32>
    %cst_56 = arith.constant dense<0.000000e+00> : vector<16x16x256xf32>
    %89 = tpu.matmul %86, %88, %cst_56 {dimension_numbers = #tpu.dot_dimension_numbers<[2], [0], [0, 1], [1], [0, 0, 0, 1, 1, 1], [], []>} : vector<16x16x256xf32>, vector<256x256xf32>, vector<16x16x256xf32> -> vector<16x16x256xf32>
    %90 = vector.extract_strided_slice %79 {offsets = [0, 0, 0], sizes = [16, 16, 256], strides = [1, 1, 1]} : vector<18x16x256xf32> to vector<16x16x256xf32>
    %c0_57 = arith.constant 0 : index
    %c1_58 = arith.constant 1 : index
    %c0_59 = arith.constant 0 : index
    %c0_60 = arith.constant 0 : index
    %91 = vector.load %arg3[%c0_57, %c1_58, %c0_59, %c0_60] : memref<3x3x256x256xf32, #tpu.memory_space<vmem>>, vector<1x1x256x256xf32>
    %92 = vector.shape_cast %91 : vector<1x1x256x256xf32> to vector<256x256xf32>
    %cst_61 = arith.constant dense<0.000000e+00> : vector<16x16x256xf32>
    %93 = tpu.matmul %90, %92, %cst_61 {dimension_numbers = #tpu.dot_dimension_numbers<[2], [0], [0, 1], [1], [0, 0, 0, 1, 1, 1], [], []>} : vector<16x16x256xf32>, vector<256x256xf32>, vector<16x16x256xf32> -> vector<16x16x256xf32>
    %94 = arith.addf %89, %93 : vector<16x16x256xf32>
    %95 = vector.extract_strided_slice %85 {offsets = [0, 0, 0], sizes = [16, 16, 256], strides = [1, 1, 1]} : vector<18x16x256xf32> to vector<16x16x256xf32>
    %c0_62 = arith.constant 0 : index
    %c2_63 = arith.constant 2 : index
    %c0_64 = arith.constant 0 : index
    %c0_65 = arith.constant 0 : index
    %96 = vector.load %arg3[%c0_62, %c2_63, %c0_64, %c0_65] : memref<3x3x256x256xf32, #tpu.memory_space<vmem>>, vector<1x1x256x256xf32>
    %97 = vector.shape_cast %96 : vector<1x1x256x256xf32> to vector<256x256xf32>
    %cst_66 = arith.constant dense<0.000000e+00> : vector<16x16x256xf32>
    %98 = tpu.matmul %95, %97, %cst_66 {dimension_numbers = #tpu.dot_dimension_numbers<[2], [0], [0, 1], [1], [0, 0, 0, 1, 1, 1], [], []>} : vector<16x16x256xf32>, vector<256x256xf32>, vector<16x16x256xf32> -> vector<16x16x256xf32>
    %99 = arith.addf %94, %98 : vector<16x16x256xf32>
    %100 = vector.extract_strided_slice %82 {offsets = [1, 0, 0], sizes = [16, 16, 256], strides = [1, 1, 1]} : vector<18x16x256xf32> to vector<16x16x256xf32>
    %c1_67 = arith.constant 1 : index
    %c0_68 = arith.constant 0 : index
    %c0_69 = arith.constant 0 : index
    %c0_70 = arith.constant 0 : index
    %101 = vector.load %arg3[%c1_67, %c0_68, %c0_69, %c0_70] : memref<3x3x256x256xf32, #tpu.memory_space<vmem>>, vector<1x1x256x256xf32>
    %102 = vector.shape_cast %101 : vector<1x1x256x256xf32> to vector<256x256xf32>
    %cst_71 = arith.constant dense<0.000000e+00> : vector<16x16x256xf32>
    %103 = tpu.matmul %100, %102, %cst_71 {dimension_numbers = #tpu.dot_dimension_numbers<[2], [0], [0, 1], [1], [0, 0, 0, 1, 1, 1], [], []>} : vector<16x16x256xf32>, vector<256x256xf32>, vector<16x16x256xf32> -> vector<16x16x256xf32>
    %104 = arith.addf %99, %103 : vector<16x16x256xf32>
    %105 = vector.extract_strided_slice %79 {offsets = [1, 0, 0], sizes = [16, 16, 256], strides = [1, 1, 1]} : vector<18x16x256xf32> to vector<16x16x256xf32>
    %c1_72 = arith.constant 1 : index
    %c1_73 = arith.constant 1 : index
    %c0_74 = arith.constant 0 : index
    %c0_75 = arith.constant 0 : index
    %106 = vector.load %arg3[%c1_72, %c1_73, %c0_74, %c0_75] : memref<3x3x256x256xf32, #tpu.memory_space<vmem>>, vector<1x1x256x256xf32>
    %107 = vector.shape_cast %106 : vector<1x1x256x256xf32> to vector<256x256xf32>
    %cst_76 = arith.constant dense<0.000000e+00> : vector<16x16x256xf32>
    %108 = tpu.matmul %105, %107, %cst_76 {dimension_numbers = #tpu.dot_dimension_numbers<[2], [0], [0, 1], [1], [0, 0, 0, 1, 1, 1], [], []>} : vector<16x16x256xf32>, vector<256x256xf32>, vector<16x16x256xf32> -> vector<16x16x256xf32>
    %109 = arith.addf %104, %108 : vector<16x16x256xf32>
    %110 = vector.extract_strided_slice %85 {offsets = [1, 0, 0], sizes = [16, 16, 256], strides = [1, 1, 1]} : vector<18x16x256xf32> to vector<16x16x256xf32>
    %c1_77 = arith.constant 1 : index
    %c2_78 = arith.constant 2 : index
    %c0_79 = arith.constant 0 : index
    %c0_80 = arith.constant 0 : index
    %111 = vector.load %arg3[%c1_77, %c2_78, %c0_79, %c0_80] : memref<3x3x256x256xf32, #tpu.memory_space<vmem>>, vector<1x1x256x256xf32>
    %112 = vector.shape_cast %111 : vector<1x1x256x256xf32> to vector<256x256xf32>
    %cst_81 = arith.constant dense<0.000000e+00> : vector<16x16x256xf32>
    %113 = tpu.matmul %110, %112, %cst_81 {dimension_numbers = #tpu.dot_dimension_numbers<[2], [0], [0, 1], [1], [0, 0, 0, 1, 1, 1], [], []>} : vector<16x16x256xf32>, vector<256x256xf32>, vector<16x16x256xf32> -> vector<16x16x256xf32>
    %114 = arith.addf %109, %113 : vector<16x16x256xf32>
    %115 = vector.extract_strided_slice %82 {offsets = [2, 0, 0], sizes = [16, 16, 256], strides = [1, 1, 1]} : vector<18x16x256xf32> to vector<16x16x256xf32>
    %c2_82 = arith.constant 2 : index
    %c0_83 = arith.constant 0 : index
    %c0_84 = arith.constant 0 : index
    %c0_85 = arith.constant 0 : index
    %116 = vector.load %arg3[%c2_82, %c0_83, %c0_84, %c0_85] : memref<3x3x256x256xf32, #tpu.memory_space<vmem>>, vector<1x1x256x256xf32>
    %117 = vector.shape_cast %116 : vector<1x1x256x256xf32> to vector<256x256xf32>
    %cst_86 = arith.constant dense<0.000000e+00> : vector<16x16x256xf32>
    %118 = tpu.matmul %115, %117, %cst_86 {dimension_numbers = #tpu.dot_dimension_numbers<[2], [0], [0, 1], [1], [0, 0, 0, 1, 1, 1], [], []>} : vector<16x16x256xf32>, vector<256x256xf32>, vector<16x16x256xf32> -> vector<16x16x256xf32>
    %119 = arith.addf %114, %118 : vector<16x16x256xf32>
    %120 = vector.extract_strided_slice %79 {offsets = [2, 0, 0], sizes = [16, 16, 256], strides = [1, 1, 1]} : vector<18x16x256xf32> to vector<16x16x256xf32>
    %c2_87 = arith.constant 2 : index
    %c1_88 = arith.constant 1 : index
    %c0_89 = arith.constant 0 : index
    %c0_90 = arith.constant 0 : index
    %121 = vector.load %arg3[%c2_87, %c1_88, %c0_89, %c0_90] : memref<3x3x256x256xf32, #tpu.memory_space<vmem>>, vector<1x1x256x256xf32>
    %122 = vector.shape_cast %121 : vector<1x1x256x256xf32> to vector<256x256xf32>
    %cst_91 = arith.constant dense<0.000000e+00> : vector<16x16x256xf32>
    %123 = tpu.matmul %120, %122, %cst_91 {dimension_numbers = #tpu.dot_dimension_numbers<[2], [0], [0, 1], [1], [0, 0, 0, 1, 1, 1], [], []>} : vector<16x16x256xf32>, vector<256x256xf32>, vector<16x16x256xf32> -> vector<16x16x256xf32>
    %124 = arith.addf %119, %123 : vector<16x16x256xf32>
    %125 = vector.extract_strided_slice %85 {offsets = [2, 0, 0], sizes = [16, 16, 256], strides = [1, 1, 1]} : vector<18x16x256xf32> to vector<16x16x256xf32>
    %c2_92 = arith.constant 2 : index
    %c2_93 = arith.constant 2 : index
    %c0_94 = arith.constant 0 : index
    %c0_95 = arith.constant 0 : index
    %126 = vector.load %arg3[%c2_92, %c2_93, %c0_94, %c0_95] : memref<3x3x256x256xf32, #tpu.memory_space<vmem>>, vector<1x1x256x256xf32>
    %127 = vector.shape_cast %126 : vector<1x1x256x256xf32> to vector<256x256xf32>
    %cst_96 = arith.constant dense<0.000000e+00> : vector<16x16x256xf32>
    %128 = tpu.matmul %125, %127, %cst_96 {dimension_numbers = #tpu.dot_dimension_numbers<[2], [0], [0, 1], [1], [0, 0, 0, 1, 1, 1], [], []>} : vector<16x16x256xf32>, vector<256x256xf32>, vector<16x16x256xf32> -> vector<16x16x256xf32>
    %129 = arith.addf %124, %128 : vector<16x16x256xf32>
    %cst_97 = arith.constant dense<0.000000e+00> : vector<256xf32>
    %130 = vector.multi_reduction <add>, %129, %cst_97 [0, 1] : vector<16x16x256xf32> to vector<256xf32>
    %131 = vector.shape_cast %130 : vector<256xf32> to vector<1x1x256xf32>
    %132 = arith.mulf %129, %129 : vector<16x16x256xf32>
    %cst_98 = arith.constant dense<0.000000e+00> : vector<256xf32>
    %133 = vector.multi_reduction <add>, %132, %cst_98 [0, 1] : vector<16x16x256xf32> to vector<256xf32>
    %134 = vector.shape_cast %133 : vector<256xf32> to vector<1x1x256xf32>
    %cst_99 = arith.constant 3.906250e-03 : f32
    %135 = vector.broadcast %cst_99 : f32 to vector<1x1x256xf32>
    %136 = arith.mulf %131, %135 : vector<1x1x256xf32>
    %cst_100 = arith.constant 3.906250e-03 : f32
    %137 = vector.broadcast %cst_100 : f32 to vector<1x1x256xf32>
    %138 = arith.mulf %134, %137 : vector<1x1x256xf32>
    %139 = arith.mulf %136, %136 : vector<1x1x256xf32>
    %140 = arith.subf %138, %139 : vector<1x1x256xf32>
    %cst_101 = arith.constant 0.000000e+00 : f32
    %141 = vector.broadcast %cst_101 : f32 to vector<1x1x256xf32>
    %142 = arith.maximumf %140, %141 : vector<1x1x256xf32>
    %143 = vector.broadcast %136 : vector<1x1x256xf32> to vector<16x16x256xf32>
    %144 = arith.subf %129, %143 : vector<16x16x256xf32>
    %cst_102 = arith.constant 9.99999974E-6 : f32
    %145 = vector.broadcast %cst_102 : f32 to vector<1x1x256xf32>
    %146 = arith.addf %142, %145 : vector<1x1x256xf32>
    %147 = math.rsqrt %146 : vector<1x1x256xf32>
    %148 = vector.broadcast %147 : vector<1x1x256xf32> to vector<16x16x256xf32>
    %149 = arith.mulf %144, %148 : vector<16x16x256xf32>
    %150 = arith.addf %1, %149 : vector<16x16x256xf32>
    %c0_103 = arith.constant 0 : index
    %c0_104 = arith.constant 0 : index
    %c0_105 = arith.constant 0 : index
    %c0_106 = arith.constant 0 : index
    %151 = vector.load %arg4[%c0_103, %c0_104, %c0_105, %c0_106] : memref<1x16x16x256xf32, #tpu.memory_space<vmem>>, vector<1x16x16x256xf32>
    %152 = vector.shape_cast %151 : vector<1x16x16x256xf32> to vector<16x16x256xf32>
    %153 = vector.shape_cast %150 : vector<16x16x256xf32> to vector<1x16x16x256xf32>
    tpu.vector_store %arg4[%c0_103, %c0_104, %c0_105, %c0_106], %153 {strides = array<i32>} : memref<1x16x16x256xf32, #tpu.memory_space<vmem>>, vector<1x16x16x256xf32>,
    return
  }
  func.func @transform_0(%arg0: i32) -> (i32, i32, i32, i32) {
    %c0_i32 = arith.constant 0 : i32
    %c0_i32_0 = arith.constant 0 : i32
    %c0_i32_1 = arith.constant 0 : i32
    %c0_i32_2 = arith.constant 0 : i32
    return %arg0, %c0_i32, %c0_i32_0, %c0_i32_1 : i32, i32, i32, i32
  }
  func.func @transform_1(%arg0: i32) -> (i32, i32, i32, i32) {
    %c0_i32 = arith.constant 0 : i32
    %c0_i32_0 = arith.constant 0 : i32
    %c0_i32_1 = arith.constant 0 : i32
    %c0_i32_2 = arith.constant 0 : i32
    %c0_i32_3 = arith.constant 0 : i32
    return %c0_i32, %c0_i32_0, %c0_i32_1, %c0_i32_2 : i32, i32, i32, i32
  }
  func.func @transform_2(%arg0: i32) -> (i32, i32, i32, i32) {
    %c0_i32 = arith.constant 0 : i32
    %c0_i32_0 = arith.constant 0 : i32
    %c0_i32_1 = arith.constant 0 : i32
    %c0_i32_2 = arith.constant 0 : i32
    %c0_i32_3 = arith.constant 0 : i32
    return %c0_i32, %c0_i32_0, %c0_i32_1, %c0_i32_2 : i32, i32, i32, i32
  }
  func.func @transform_3(%arg0: i32) -> (i32, i32, i32, i32) {
    %c0_i32 = arith.constant 0 : i32
    %c0_i32_0 = arith.constant 0 : i32
    %c0_i32_1 = arith.constant 0 : i32
    %c0_i32_2 = arith.constant 0 : i32
    return %arg0, %c0_i32, %c0_i32_0, %c0_i32_1 : i32, i32, i32, i32
  }
}

</mosaic_0001>

<llo_original>
// kernel: tpu_custom_call.1
$region0: #{tpu_custom_call.1}
  #allocation0 [shape = 'u32[]', space=smem, size = 0x4, offset = 0x4, fixed_abs, tag = 'smem constant byte address 0x4 - core index']
  #allocation1 [shape = 'u32[144,128]{1,0:T(1,128)}', space=vmem, size = 0x12000, scoped, tag = 'internal scratch']
  %s0 = inlined_call_operand.hbm [shape: f32[2,16,16,256], index: 0, kind: input, shape index: {}]
  %s1 = inlined_call_operand.hbm [shape: f32[3,3,256,256], index: 1, kind: input, shape index: {}]
  %s2 = inlined_call_operand.hbm [shape: f32[3,3,256,256], index: 2, kind: input, shape index: {}]
  %s3 = inlined_call_operand.hbm [shape: f32[2,16,16,256], index: 3, kind: output, shape index: {}]
  %s4 = sld [smem:[#allocation0]]
  $region57: #{tpu_custom_call.1} parent=0
    _
  %s6 = ssub.s32 1, %s4
  %s7 = scalar_select 0, %s6, %s4
  $region1: #{tpu_custom_call.1} parent=0
    #allocation2 [shape = 'u8[524288]{0}', space=vmem, size = 0x80000, scoped, tag = 'input window, operand 0']
    #allocation3 [shape = 's32[2]{0}', space=sflag, size = 0x8, scoped, tag = 'scoped memory for tpu_custom_call.1']
    #allocation4 [shape = 's32[2]{0}', space=sflag, size = 0x8, scoped, tag = 'scoped memory for tpu_custom_call.1']
    #allocation5 [shape = 'u8[2359296]{0}', space=vmem, size = 0x240000, scoped, tag = 'input window, operand 1, single buffered']
    #allocation6 [shape = 's32[1]{0}', space=sflag, size = 0x4, scoped, tag = 'scoped memory for tpu_custom_call.1']
    #allocation7 [shape = 'u8[2359296]{0}', space=vmem, size = 0x240000, scoped, tag = 'input window, operand 2, single buffered']
    #allocation8 [shape = 'u8[524288]{0}', space=vmem, size = 0x80000, scoped, tag = 'output window, operand 0']
    %8 = vsyncpa [#allocation3], 0
    %s9 = scalar_lea.sflag [#allocation3], 1
    %10 = vsyncpa %s9, 0
    %11 = vsyncpa [#allocation6], 0
    %12 = vsyncpa [#allocation4], 0
    %s13 = scalar_lea.sflag [#allocation4], 1
    %14 = vsyncpa %s13, 0
    loop: start=0, step=1, limit=4
    $region2: #{tpu_custom_call.1} parent=1 // loop_pre_header
      _
    $region3: #{tpu_custom_call.1} parent=1 // loop_header
      %s16 = sphi 0, %s20
      %p17 = scmp.ge.s32.totalorder %s16, 4
      %s26 = sphi 0, %s28
      %s29 = sphi 0, %s26
      %s30 = sphi 0, %s29
      %s46 = sphi 0, %s30
      %s50 = sphi 0, %s50
      %s52 = sphi 0, %s50
      %s53 = sphi 0, %s52
      %s67 = sphi 0, %s53
      %s71 = sphi 0, %s71
      %s73 = sphi 0, %s71
      %s74 = sphi 0, %s73
      %s88 = sphi 0, %s74
      %s94 = sphi 0, %s96
      %s97 = sphi 0, %s94
      %s98 = sphi 0, %s97
      %s114 = sphi 0, %s98
    $region4: #{tpu_custom_call.1} parent=1 // loop_header_branch
      %19 = sbr.rel (%p17) target = $region8
    $region5: #{tpu_custom_call.1} parent=1 // loop_body
      %s21 = ssub.s32 %s16, 1
      %s22 = ssub.s32 %s16, 2
      %s23 = sadd.s32 %s16, 1
      %s24 = ssub.s32 %s16, %s23
      %p25 = scmp.eq.s32.totalorder %s24, 0
      %s27 = sadd.s32 %s26, 1
      %s28 = scalar_select %p25, %s26, %s27
      %p31 = pneg %p25
      %p32 = scmp.eq.s32.totalorder %s16, 1
      %p33 = por %p31, %p32
      %p34 = scmp.ne.s32.totalorder %s26, %s29
      %p35 = scmp.eq.s32.totalorder %s16, 0
      %p36 = por %p34, %p35
      %p37 = scmp.ne.s32.totalorder %s26, %s29
      %p38 = scmp.eq.s32.totalorder %s21, 1
      %p39 = por %p37, %p38
      %p40 = scmp.ne.s32.totalorder %s29, %s30
      %p41 = scmp.eq.s32.totalorder %s21, 0
      %p42 = por %p40, %p41
      %p43 = scmp.ne.s32.totalorder %s29, %s30
      %p44 = scmp.eq.s32.totalorder %s22, 1
      %p45 = por %p43, %p44
      %p47 = scmp.ne.s32.totalorder %s30, %s46
      %p48 = scmp.eq.s32.totalorder %s22, 0
      %p49 = por %p47, %p48
      %s51 = sadd.s32 %s50, 1
      %p54 = scmp.eq.s32.totalorder %s16, 1
      %p55 = scmp.ne.s32.totalorder %s50, %s52
      %p56 = scmp.eq.s32.totalorder %s16, 0
      %p57 = por %p55, %p56
      %p58 = scmp.ne.s32.totalorder %s50, %s52
      %p59 = scmp.eq.s32.totalorder %s21, 1
      %p60 = por %p58, %p59
      %p61 = scmp.ne.s32.totalorder %s52, %s53
      %p62 = scmp.eq.s32.totalorder %s21, 0
      %p63 = por %p61, %p62
      %p64 = scmp.ne.s32.totalorder %s52, %s53
      %p65 = scmp.eq.s32.totalorder %s22, 1
      %p66 = por %p64, %p65
      %p68 = scmp.ne.s32.totalorder %s53, %s67
      %p69 = scmp.eq.s32.totalorder %s22, 0
      %p70 = por %p68, %p69
      %s72 = sadd.s32 %s71, 1
      %p75 = scmp.eq.s32.totalorder %s16, 1
      %p76 = scmp.ne.s32.totalorder %s71, %s73
      %p77 = scmp.eq.s32.totalorder %s16, 0
      %p78 = por %p76, %p77
      %p79 = scmp.ne.s32.totalorder %s71, %s73
      %p80 = scmp.eq.s32.totalorder %s21, 1
      %p81 = por %p79, %p80
      %p82 = scmp.ne.s32.totalorder %s73, %s74
      %p83 = scmp.eq.s32.totalorder %s21, 0
      %p84 = por %p82, %p83
      %p85 = scmp.ne.s32.totalorder %s73, %s74
      %p86 = scmp.eq.s32.totalorder %s22, 1
      %p87 = por %p85, %p86
      %p89 = scmp.ne.s32.totalorder %s74, %s88
      %p90 = scmp.eq.s32.totalorder %s22, 0
      %p91 = por %p89, %p90
      %s92 = ssub.s32 %s16, %s23
      %p93 = scmp.eq.s32.totalorder %s92, 0
      %s95 = sadd.s32 %s94, 1
      %s96 = scalar_select %p93, %s94, %s95
      %p99 = pneg %p93
      %p100 = scmp.eq.s32.totalorder %s16, 1
      %p101 = por %p99, %p100
      %p102 = scmp.ne.s32.totalorder %s94, %s97
      %p103 = scmp.eq.s32.totalorder %s16, 0
      %p104 = por %p102, %p103
      %p105 = scmp.ne.s32.totalorder %s94, %s97
      %p106 = scmp.eq.s32.totalorder %s21, 1
      %p107 = por %p105, %p106
      %p108 = scmp.ne.s32.totalorder %s97, %s98
      %p109 = scmp.eq.s32.totalorder %s21, 0
      %p110 = por %p108, %p109
      %p111 = scmp.ne.s32.totalorder %s97, %s98
      %p112 = scmp.eq.s32.totalorder %s22, 1
      %p113 = por %p111, %p112
      %p115 = scmp.ne.s32.totalorder %s98, %s114
      %p116 = scmp.eq.s32.totalorder %s22, 0
      %p117 = por %p115, %p116
      %p118 = scmp.le.s32.totalorder 1, %s16
      %p119 = scmp.lt.s32.totalorder %s16, 3
      %p120 = pnand %p118, %p119
      %p121 = pneg %p120
      // Predicated region
      $region9: #{tpu_custom_call.1} parent=5 // pred_check
        _
      $region10: #{tpu_custom_call.1} parent=5 // pred_check_branch
        %123 = sbr.rel (%p120) target = $region12
      $region11: #{tpu_custom_call.1} parent=5 // pred_region
        %s124 = ssub.s32 %s16, 1
        // Predicated region
        $region13: #{tpu_custom_call.1} parent=11 // pred_check
          %p125 = pneg %p63
        $region14: #{tpu_custom_call.1} parent=11 // pred_check_branch
          %127 = sbr.rel (%p125) target = $region16
        $region15: #{tpu_custom_call.1} parent=11 // pred_region
          %s129 = ssub.s32 73728, 73728
          %130 = vsyncadd [#allocation6], %s129
          %s131 = sshll.u32 [#allocation5], 4
          %s132 = int_to_ptr.vmem [resolvable:$true] %s131
          %137 = dma.hbm_to_vmem [thread:$0]  %s1, 73728, %s132, [#allocation6], 256, 256, 16
        $region16: #{tpu_custom_call.1} parent=11 // pred_fallthru
          _
        // Predicated region
        $region17: #{tpu_custom_call.1} parent=11 // pred_check
          %p138 = pneg %p84
        $region18: #{tpu_custom_call.1} parent=11 // pred_check_branch
          %140 = sbr.rel (%p138) target = $region20
        $region19: #{tpu_custom_call.1} parent=11 // pred_region
          %s142 = ssub.s32 73728, 73728
          %143 = vsyncadd [#allocation6], %s142
          %s144 = sshll.u32 [#allocation7], 4
          %s145 = int_to_ptr.vmem [resolvable:$true] %s144
          %150 = dma.hbm_to_vmem [thread:$0]  %s2, 73728, %s145, [#allocation6], 256, 256, 16
        $region20: #{tpu_custom_call.1} parent=11 // pred_fallthru
          _
      $region12: #{tpu_custom_call.1} parent=5 // pred_fallthru
        _
      %p151 = scmp.lt.s32.totalorder %s16, 2
      // Predicated region
      $region21: #{tpu_custom_call.1} parent=5 // pred_check
        %p152 = pneg %p151
      $region22: #{tpu_custom_call.1} parent=5 // pred_check_branch
        %154 = sbr.rel (%p152) target = $region24
      $region23: #{tpu_custom_call.1} parent=5 // pred_region
        // Predicated region
        $region25: #{tpu_custom_call.1} parent=23 // pred_check
          %p155 = pneg %p36
        $region26: #{tpu_custom_call.1} parent=23 // pred_check_branch
          %157 = sbr.rel (%p155) target = $region28
        $region27: #{tpu_custom_call.1} parent=23 // pred_region
          %s158 = sand.u32 %s26, 1
          %s159 = scalar_lea.sflag [#allocation3], %s158
          %s160 = sand.u32 %s26, 1
          %s161 = smul.addr %s160, 512
          %s162 = scalar_lea.vmem [#allocation2], %s161
          %s164 = ssub.s32 8192, 8192
          %165 = vsyncadd %s159, %s164
          %s166 = smul.addr %s16, 64
          %s167 = smul.addr %s166, 128
          %s168 = scalar_lea.hbm %s0, %s167
          %s169 = sshll.u32 %s162, 4
          %s170 = int_to_ptr.vmem [resolvable:$true] %s169
          %175 = dma.hbm_to_vmem [thread:$0]  %s168, 8192, %s170, %s159, 256, 256, 16
        $region28: #{tpu_custom_call.1} parent=23 // pred_fallthru
          _
      $region24: #{tpu_custom_call.1} parent=5 // pred_fallthru
        _
      %p176 = scmp.le.s32.totalorder 1, %s16
      %p177 = scmp.lt.s32.totalorder %s16, 3
      %p178 = pnand %p176, %p177
      %p179 = pneg %p178
      // Predicated region
      $region29: #{tpu_custom_call.1} parent=5 // pred_check
        _
      $region30: #{tpu_custom_call.1} parent=5 // pred_check_branch
        %181 = sbr.rel (%p178) target = $region32
      $region31: #{tpu_custom_call.1} parent=5 // pred_region
        %s182 = ssub.s32 %s16, 1
        %s183 = sand.u32 %s29, 1
        %s184 = scalar_lea.sflag [#allocation3], %s183
        %s185 = sand.u32 %s29, 1
        %s186 = smul.addr %s185, 512
        %s187 = scalar_lea.vmem [#allocation2], %s186
        // Predicated region
        $region33: #{tpu_custom_call.1} parent=31 // pred_check
          %p188 = pneg %p42
        $region34: #{tpu_custom_call.1} parent=31 // pred_check_branch
          %190 = sbr.rel (%p188) target = $region36
        $region35: #{tpu_custom_call.1} parent=31 // pred_region
          %191 = dma.done %s184, 8192
        $region36: #{tpu_custom_call.1} parent=31 // pred_fallthru
          _
        // Predicated region
        $region37: #{tpu_custom_call.1} parent=31 // pred_check
          %p192 = pneg %p63
        $region38: #{tpu_custom_call.1} parent=31 // pred_check_branch
          %194 = sbr.rel (%p192) target = $region40
        $region39: #{tpu_custom_call.1} parent=31 // pred_region
          %195 = dma.done [#allocation6], 73728
        $region40: #{tpu_custom_call.1} parent=31 // pred_fallthru
          _
        // Predicated region
        $region41: #{tpu_custom_call.1} parent=31 // pred_check
          %p196 = pneg %p84
        $region42: #{tpu_custom_call.1} parent=31 // pred_check_branch
          %198 = sbr.rel (%p196) target = $region44
        $region43: #{tpu_custom_call.1} parent=31 // pred_region
          %199 = dma.done [#allocation6], 73728
        $region44: #{tpu_custom_call.1} parent=31 // pred_fallthru
          _
        %s200 = sand.u32 %s29, 1
        %s201 = scalar_lea.sflag [#allocation3], %s200
        %s202 = sand.u32 %s29, 1
        %s203 = smul.addr %s202, 512
        %s204 = scalar_lea.vmem [#allocation2], %s203
        %p205 = pneg %p42
        %p206 = pneg %p39
        %p207 = pneg %p63
        %p208 = pneg %p60
        %p209 = pneg %p84
        %p210 = pneg %p81
        %p211 = pneg %p110
        %p212 = pneg %p107
        %s213 = sand.u32 %s97, 1
        %s214 = scalar_lea.sflag [#allocation4], %s213
        %s215 = sand.u32 %s97, 1
        %s216 = smul.addr %s215, 512
        %s217 = scalar_lea.vmem [#allocation8], %s216
        %v218 = vld [vmem:[%s187] sm:$0xff]
        %v219 = vld [vmem:[%s187 + $0x8] sm:$0xff]
        %v220 = vld [vmem:[%s187 + $0x10] sm:$0xff]
        %v221 = vld [vmem:[%s187 + $0x18] sm:$0xff]
        %v222 = vld [vmem:[%s187 + $0x20] sm:$0xff]
        %v223 = vld [vmem:[%s187 + $0x28] sm:$0xff]
        %v224 = vld [vmem:[%s187 + $0x30] sm:$0xff]
        %v225 = vld [vmem:[%s187 + $0x38] sm:$0xff]
        %v226 = vld [vmem:[%s187 + $0x40] sm:$0xff]
        %v227 = vld [vmem:[%s187 + $0x48] sm:$0xff]
        %v228 = vld [vmem:[%s187 + $0x50] sm:$0xff]
        %v229 = vld [vmem:[%s187 + $0x58] sm:$0xff]
        %v230 = vld [vmem:[%s187 + $0x60] sm:$0xff]
        %v231 = vld [vmem:[%s187 + $0x68] sm:$0xff]
        %v232 = vld [vmem:[%s187 + $0x70] sm:$0xff]
        %v233 = vld [vmem:[%s187 + $0x78] sm:$0xff]
        %v234 = vld [vmem:[%s187 + $0x80] sm:$0xff]
        %v235 = vld [vmem:[%s187 + $0x88] sm:$0xff]
        %v236 = vld [vmem:[%s187 + $0x90] sm:$0xff]
        %v237 = vld [vmem:[%s187 + $0x98] sm:$0xff]
        %v238 = vld [vmem:[%s187 + $0xa0] sm:$0xff]
        %v239 = vld [vmem:[%s187 + $0xa8] sm:$0xff]
        %v240 = vld [vmem:[%s187 + $0xb0] sm:$0xff]
        %v241 = vld [vmem:[%s187 + $0xb8] sm:$0xff]
        %v242 = vld [vmem:[%s187 + $0xc0] sm:$0xff]
        %v243 = vld [vmem:[%s187 + $0xc8] sm:$0xff]
        %v244 = vld [vmem:[%s187 + $0xd0] sm:$0xff]
        %v245 = vld [vmem:[%s187 + $0xd8] sm:$0xff]
        %v246 = vld [vmem:[%s187 + $0xe0] sm:$0xff]
        %v247 = vld [vmem:[%s187 + $0xe8] sm:$0xff]
        %v248 = vld [vmem:[%s187 + $0xf0] sm:$0xff]
        %v249 = vld [vmem:[%s187 + $0xf8] sm:$0xff]
        %v250 = vld [vmem:[%s187 + $0x100] sm:$0xff]
        %v251 = vld [vmem:[%s187 + $0x108] sm:$0xff]
        %v252 = vld [vmem:[%s187 + $0x110] sm:$0xff]
        %v253 = vld [vmem:[%s187 + $0x118] sm:$0xff]
        %v254 = vld [vmem:[%s187 + $0x120] sm:$0xff]
        %v255 = vld [vmem:[%s187 + $0x128] sm:$0xff]
        %v256 = vld [vmem:[%s187 + $0x130] sm:$0xff]
        %v257 = vld [vmem:[%s187 + $0x138] sm:$0xff]
        %v258 = vld [vmem:[%s187 + $0x140] sm:$0xff]
        %v259 = vld [vmem:[%s187 + $0x148] sm:$0xff]
        %v260 = vld [vmem:[%s187 + $0x150] sm:$0xff]
        %v261 = vld [vmem:[%s187 + $0x158] sm:$0xff]
        %v262 = vld [vmem:[%s187 + $0x160] sm:$0xff]
        %v263 = vld [vmem:[%s187 + $0x168] sm:$0xff]
        %v264 = vld [vmem:[%s187 + $0x170] sm:$0xff]
        %v265 = vld [vmem:[%s187 + $0x178] sm:$0xff]
        %v266 = vld [vmem:[%s187 + $0x180] sm:$0xff]
        %v267 = vld [vmem:[%s187 + $0x188] sm:$0xff]
        %v268 = vld [vmem:[%s187 + $0x190] sm:$0xff]
        %v269 = vld [vmem:[%s187 + $0x198] sm:$0xff]
        %v270 = vld [vmem:[%s187 + $0x1a0] sm:$0xff]
        %v271 = vld [vmem:[%s187 + $0x1a8] sm:$0xff]
        %v272 = vld [vmem:[%s187 + $0x1b0] sm:$0xff]
        %v273 = vld [vmem:[%s187 + $0x1b8] sm:$0xff]
        %v274 = vld [vmem:[%s187 + $0x1c0] sm:$0xff]
        %v275 = vld [vmem:[%s187 + $0x1c8] sm:$0xff]
        %v276 = vld [vmem:[%s187 + $0x1d0] sm:$0xff]
        %v277 = vld [vmem:[%s187 + $0x1d8] sm:$0xff]
        %v278 = vld [vmem:[%s187 + $0x1e0] sm:$0xff]
        %v279 = vld [vmem:[%s187 + $0x1e8] sm:$0xff]
        %v280 = vld [vmem:[%s187 + $0x1f0] sm:$0xff]
        %v281 = vld [vmem:[%s187 + $0x1f8] sm:$0xff]
        %v314 = vrot.slane %v222, 1
        %v315 = vrot.slane %v223, 1
        %v316 = vrot.slane %v218, 1
        %v317 = vrot.slane %v219, 1
        %v318 = vrot.slane %v226, 1
        %v319 = vrot.slane %v227, 1
        %v320 = vrot.slane %v230, 1
        %v321 = vrot.slane %v231, 1
        %v322 = vrot.slane %v234, 1
        %v323 = vrot.slane %v235, 1
        %v324 = vrot.slane %v238, 1
        %v325 = vrot.slane %v239, 1
        %v326 = vrot.slane %v242, 1
        %v327 = vrot.slane %v243, 1
        %v328 = vrot.slane %v246, 1
        %v329 = vrot.slane %v247, 1
        %v330 = vrot.slane %v250, 1
        %v331 = vrot.slane %v251, 1
        %v332 = vrot.slane %v254, 1
        %v333 = vrot.slane %v255, 1
        %v334 = vrot.slane %v258, 1
        %v335 = vrot.slane %v259, 1
        %v336 = vrot.slane %v262, 1
        %v337 = vrot.slane %v263, 1
        %v338 = vrot.slane %v266, 1
        %v339 = vrot.slane %v267, 1
        %v340 = vrot.slane %v270, 1
        %v341 = vrot.slane %v271, 1
        %v342 = vrot.slane %v274, 1
        %v343 = vrot.slane %v275, 1
        %v344 = vrot.slane %v278, 1
        %v345 = vrot.slane %v279, 1
        %vm410 = vcmask 1040384
        %v411 = vrot.slane %v222, 7
        %v412 = vrot.slane %v223, 7
        %v413 = vrot.slane %v224, 7
        %v414 = vsel %vm410, %v411, %v413
        %v415 = vrot.slane %v225, 7
        %v416 = vsel %vm410, %v412, %v415
        %v417 = vrot.slane %v218, 7
        %v418 = vrot.slane %v219, 7
        %v419 = vrot.slane %v220, 7
        %v420 = vsel %vm410, %v417, %v419
        %v421 = vrot.slane %v221, 7
        %v422 = vsel %vm410, %v418, %v421
        %v423 = vrot.slane %v226, 7
        %v424 = vrot.slane %v227, 7
        %v425 = vrot.slane %v228, 7
        %v426 = vsel %vm410, %v423, %v425
        %v427 = vrot.slane %v229, 7
        %v428 = vsel %vm410, %v424, %v427
        %v429 = vrot.slane %v230, 7
        %v430 = vrot.slane %v231, 7
        %v431 = vrot.slane %v232, 7
        %v432 = vsel %vm410, %v429, %v431
        %v433 = vrot.slane %v233, 7
        %v434 = vsel %vm410, %v430, %v433
        %v435 = vrot.slane %v234, 7
        %v436 = vrot.slane %v235, 7
        %v437 = vrot.slane %v236, 7
        %v438 = vsel %vm410, %v435, %v437
        %v439 = vrot.slane %v237, 7
        %v440 = vsel %vm410, %v436, %v439
        %v441 = vrot.slane %v238, 7
        %v442 = vrot.slane %v239, 7
        %v443 = vrot.slane %v240, 7
        %v444 = vsel %vm410, %v441, %v443
        %v445 = vrot.slane %v241, 7
        %v446 = vsel %vm410, %v442, %v445
        %v447 = vrot.slane %v242, 7
        %v448 = vrot.slane %v243, 7
        %v449 = vrot.slane %v244, 7
        %v450 = vsel %vm410, %v447, %v449
        %v451 = vrot.slane %v245, 7
        %v452 = vsel %vm410, %v448, %v451
        %v453 = vrot.slane %v246, 7
        %v454 = vrot.slane %v247, 7
        %v455 = vrot.slane %v248, 7
        %v456 = vsel %vm410, %v453, %v455
        %v457 = vrot.slane %v249, 7
        %v458 = vsel %vm410, %v454, %v457
        %v459 = vrot.slane %v250, 7
        %v460 = vrot.slane %v251, 7
        %v461 = vrot.slane %v252, 7
        %v462 = vsel %vm410, %v459, %v461
        %v463 = vrot.slane %v253, 7
        %v464 = vsel %vm410, %v460, %v463
        %v465 = vrot.slane %v254, 7
        %v466 = vrot.slane %v255, 7
        %v467 = vrot.slane %v256, 7
        %v468 = vsel %vm410, %v465, %v467
        %v469 = vrot.slane %v257, 7
        %v470 = vsel %vm410, %v466, %v469
        %v471 = vrot.slane %v258, 7
        %v472 = vrot.slane %v259, 7
        %v473 = vrot.slane %v260, 7
        %v474 = vsel %vm410, %v471, %v473
        %v475 = vrot.slane %v261, 7
        %v476 = vsel %vm410, %v472, %v475
        %v477 = vrot.slane %v262, 7
        %v478 = vrot.slane %v263, 7
        %v479 = vrot.slane %v264, 7
        %v480 = vsel %vm410, %v477, %v479
        %v481 = vrot.slane %v265, 7
        %v482 = vsel %vm410, %v478, %v481
        %v483 = vrot.slane %v266, 7
        %v484 = vrot.slane %v267, 7
        %v485 = vrot.slane %v268, 7
        %v486 = vsel %vm410, %v483, %v485
        %v487 = vrot.slane %v269, 7
        %v488 = vsel %vm410, %v484, %v487
        %v489 = vrot.slane %v270, 7
        %v490 = vrot.slane %v271, 7
        %v491 = vrot.slane %v272, 7
        %v492 = vsel %vm410, %v489, %v491
        %v493 = vrot.slane %v273, 7
        %v494 = vsel %vm410, %v490, %v493
        %v495 = vrot.slane %v274, 7
        %v496 = vrot.slane %v275, 7
        %v497 = vrot.slane %v276, 7
        %v498 = vsel %vm410, %v495, %v497
        %v499 = vrot.slane %v277, 7
        %v500 = vsel %vm410, %v496, %v499
        %v501 = vrot.slane %v278, 7
        %v502 = vrot.slane %v279, 7
        %v503 = vrot.slane %v280, 7
        %v504 = vsel %vm410, %v501, %v503
        %v505 = vrot.slane %v281, 7
        %v506 = vsel %vm410, %v502, %v505
        %v571 = vsel %vm410, %v314, %v411
        %v572 = vsel %vm410, %v315, %v412
        %v573 = vsel %vm410, %v316, %v417
        %v574 = vsel %vm410, %v317, %v418
        %v575 = vsel %vm410, %v318, %v423
        %v576 = vsel %vm410, %v319, %v424
        %v577 = vsel %vm410, %v320, %v429
        %v578 = vsel %vm410, %v321, %v430
        %v579 = vsel %vm410, %v322, %v435
        %v580 = vsel %vm410, %v323, %v436
        %v581 = vsel %vm410, %v324, %v441
        %v582 = vsel %vm410, %v325, %v442
        %v583 = vsel %vm410, %v326, %v447
        %v584 = vsel %vm410, %v327, %v448
        %v585 = vsel %vm410, %v328, %v453
        %v586 = vsel %vm410, %v329, %v454
        %v587 = vsel %vm410, %v330, %v459
        %v588 = vsel %vm410, %v331, %v460
        %v589 = vsel %vm410, %v332, %v465
        %v590 = vsel %vm410, %v333, %v466
        %v591 = vsel %vm410, %v334, %v471
        %v592 = vsel %vm410, %v335, %v472
        %v593 = vsel %vm410, %v336, %v477
        %v594 = vsel %vm410, %v337, %v478
        %v595 = vsel %vm410, %v338, %v483
        %v596 = vsel %vm410, %v339, %v484
        %v597 = vsel %vm410, %v340, %v489
        %v598 = vsel %vm410, %v341, %v490
        %v599 = vsel %vm410, %v342, %v495
        %v600 = vsel %vm410, %v343, %v496
        %v601 = vsel %vm410, %v344, %v501
        %v602 = vsel %vm410, %v345, %v502
        %vm603 = vcmask 1046528
        %v604 = vrot.slane %v224, 1
        %v605 = vsel %vm603, %v314, %v604
        %v606 = vrot.slane %v225, 1
        %v607 = vsel %vm603, %v315, %v606
        %v608 = vrot.slane %v220, 1
        %v609 = vsel %vm603, %v316, %v608
        %v610 = vrot.slane %v221, 1
        %v611 = vsel %vm603, %v317, %v610
        %v612 = vrot.slane %v228, 1
        %v613 = vsel %vm603, %v318, %v612
        %v614 = vrot.slane %v229, 1
        %v615 = vsel %vm603, %v319, %v614
        %v616 = vrot.slane %v232, 1
        %v617 = vsel %vm603, %v320, %v616
        %v618 = vrot.slane %v233, 1
        %v619 = vsel %vm603, %v321, %v618
        %v620 = vrot.slane %v236, 1
        %v621 = vsel %vm603, %v322, %v620
        %v622 = vrot.slane %v237, 1
        %v623 = vsel %vm603, %v323, %v622
        %v624 = vrot.slane %v240, 1
        %v625 = vsel %vm603, %v324, %v624
        %v626 = vrot.slane %v241, 1
        %v627 = vsel %vm603, %v325, %v626
        %v628 = vrot.slane %v244, 1
        %v629 = vsel %vm603, %v326, %v628
        %v630 = vrot.slane %v245, 1
        %v631 = vsel %vm603, %v327, %v630
        %v632 = vrot.slane %v248, 1
        %v633 = vsel %vm603, %v328, %v632
        %v634 = vrot.slane %v249, 1
        %v635 = vsel %vm603, %v329, %v634
        %v636 = vrot.slane %v252, 1
        %v637 = vsel %vm603, %v330, %v636
        %v638 = vrot.slane %v253, 1
        %v639 = vsel %vm603, %v331, %v638
        %v640 = vrot.slane %v256, 1
        %v641 = vsel %vm603, %v332, %v640
        %v642 = vrot.slane %v257, 1
        %v643 = vsel %vm603, %v333, %v642
        %v644 = vrot.slane %v260, 1
        %v645 = vsel %vm603, %v334, %v644
        %v646 = vrot.slane %v261, 1
        %v647 = vsel %vm603, %v335, %v646
        %v648 = vrot.slane %v264, 1
        %v649 = vsel %vm603, %v336, %v648
        %v650 = vrot.slane %v265, 1
        %v651 = vsel %vm603, %v337, %v650
        %v652 = vrot.slane %v268, 1
        %v653 = vsel %vm603, %v338, %v652
        %v654 = vrot.slane %v269, 1
        %v655 = vsel %vm603, %v339, %v654
        %v656 = vrot.slane %v272, 1
        %v657 = vsel %vm603, %v340, %v656
        %v658 = vrot.slane %v273, 1
        %v659 = vsel %vm603, %v341, %v658
        %v660 = vrot.slane %v276, 1
        %v661 = vsel %vm603, %v342, %v660
        %v662 = vrot.slane %v277, 1
        %v663 = vsel %vm603, %v343, %v662
        %v664 = vrot.slane %v280, 1
        %v665 = vsel %vm603, %v344, %v664
        %v666 = vrot.slane %v281, 1
        %v667 = vsel %vm603, %v345, %v666
        %v764 = vsel %vm603, %v604, %v413
        %v765 = vsel %vm603, %v606, %v415
        %v766 = vsel %vm603, %v608, %v419
        %v767 = vsel %vm603, %v610, %v421
        %v768 = vsel %vm603, %v612, %v425
        %v769 = vsel %vm603, %v614, %v427
        %v770 = vsel %vm603, %v616, %v431
        %v771 = vsel %vm603, %v618, %v433
        %v772 = vsel %vm603, %v620, %v437
        %v773 = vsel %vm603, %v622, %v439
        %v774 = vsel %vm603, %v624, %v443
        %v775 = vsel %vm603, %v626, %v445
        %v776 = vsel %vm603, %v628, %v449
        %v777 = vsel %vm603, %v630, %v451
        %v778 = vsel %vm603, %v632, %v455
        %v779 = vsel %vm603, %v634, %v457
        %v780 = vsel %vm603, %v636, %v461
        %v781 = vsel %vm603, %v638, %v463
        %v782 = vsel %vm603, %v640, %v467
        %v783 = vsel %vm603, %v642, %v469
        %v784 = vsel %vm603, %v644, %v473
        %v785 = vsel %vm603, %v646, %v475
        %v786 = vsel %vm603, %v648, %v479
        %v787 = vsel %vm603, %v650, %v481
        %v788 = vsel %vm603, %v652, %v485
        %v789 = vsel %vm603, %v654, %v487
        %v790 = vsel %vm603, %v656, %v491
        %v791 = vsel %vm603, %v658, %v493
        %v792 = vsel %vm603, %v660, %v497
        %v793 = vsel %vm603, %v662, %v499
        %v794 = vsel %vm603, %v664, %v503
        %v795 = vsel %vm603, %v666, %v505
        %v796 = vld [vmem:[#allocation5] sm:$0xff]
        %v797 = vld [vmem:[#allocation5 + $0x8] sm:$0xff]
        %v798 = vld [vmem:[#allocation5 + $0x10] sm:$0xff]
        %v799 = vld [vmem:[#allocation5 + $0x18] sm:$0xff]
        %v800 = vld [vmem:[#allocation5 + $0x20] sm:$0xff]
        %v801 = vld [vmem:[#allocation5 + $0x28] sm:$0xff]
        %v802 = vld [vmem:[#allocation5 + $0x30] sm:$0xff]
        %v803 = vld [vmem:[#allocation5 + $0x38] sm:$0xff]
        %v804 = vld [vmem:[#allocation5 + $0x40] sm:$0xff]
        %v805 = vld [vmem:[#allocation5 + $0x48] sm:$0xff]
        %v806 = vld [vmem:[#allocation5 + $0x50] sm:$0xff]
        %v807 = vld [vmem:[#allocation5 + $0x58] sm:$0xff]
        %v808 = vld [vmem:[#allocation5 + $0x60] sm:$0xff]
        %v809 = vld [vmem:[#allocation5 + $0x68] sm:$0xff]
        %v810 = vld [vmem:[#allocation5 + $0x70] sm:$0xff]
        %v811 = vld [vmem:[#allocation5 + $0x78] sm:$0xff]
        %v812 = vld [vmem:[#allocation5 + $0x80] sm:$0xff]
        %v813 = vld [vmem:[#allocation5 + $0x88] sm:$0xff]
        %v814 = vld [vmem:[#allocation5 + $0x90] sm:$0xff]
        %v815 = vld [vmem:[#allocation5 + $0x98] sm:$0xff]
        %v816 = vld [vmem:[#allocation5 + $0xa0] sm:$0xff]
        %v817 = vld [vmem:[#allocation5 + $0xa8] sm:$0xff]
        %v818 = vld [vmem:[#allocation5 + $0xb0] sm:$0xff]
        %v819 = vld [vmem:[#allocation5 + $0xb8] sm:$0xff]
        %v820 = vld [vmem:[#allocation5 + $0xc0] sm:$0xff]
        %v821 = vld [vmem:[#allocation5 + $0xc8] sm:$0xff]
        %v822 = vld [vmem:[#allocation5 + $0xd0] sm:$0xff]
        %v823 = vld [vmem:[#allocation5 + $0xd8] sm:$0xff]
        %v824 = vld [vmem:[#allocation5 + $0xe0] sm:$0xff]
        %v825 = vld [vmem:[#allocation5 + $0xe8] sm:$0xff]
        %v826 = vld [vmem:[#allocation5 + $0xf0] sm:$0xff]
        %v827 = vld [vmem:[#allocation5 + $0xf8] sm:$0xff]
        %v828 = vld [vmem:[#allocation5 + $0x100] sm:$0xff]
        %v829 = vld [vmem:[#allocation5 + $0x108] sm:$0xff]
        %v830 = vld [vmem:[#allocation5 + $0x110] sm:$0xff]
        %v831 = vld [vmem:[#allocation5 + $0x118] sm:$0xff]
        %v832 = vld [vmem:[#allocation5 + $0x120] sm:$0xff]
        %v833 = vld [vmem:[#allocation5 + $0x128] sm:$0xff]
        %v834 = vld [vmem:[#allocation5 + $0x130] sm:$0xff]
        %v835 = vld [vmem:[#allocation5 + $0x138] sm:$0xff]
        %v836 = vld [vmem:[#allocation5 + $0x140] sm:$0xff]
        %v837 = vld [vmem:[#allocation5 + $0x148] sm:$0xff]
        %v838 = vld [vmem:[#allocation5 + $0x150] sm:$0xff]
        %v839 = vld [vmem:[#allocation5 + $0x158] sm:$0xff]
        %v840 = vld [vmem:[#allocation5 + $0x160] sm:$0xff]
        %v841 = vld [vmem:[#allocation5 + $0x168] sm:$0xff]
        %v842 = vld [vmem:[#allocation5 + $0x170] sm:$0xff]
        %v843 = vld [vmem:[#allocation5 + $0x178] sm:$0xff]
        %v844 = vld [vmem:[#allocation5 + $0x180] sm:$0xff]
        %v845 = vld [vmem:[#allocation5 + $0x188] sm:$0xff]
        %v846 = vld [vmem:[#allocation5 + $0x190] sm:$0xff]
        %v847 = vld [vmem:[#allocation5 + $0x198] sm:$0xff]
        %v848 = vld [vmem:[#allocation5 + $0x1a0] sm:$0xff]
        %v849 = vld [vmem:[#allocation5 + $0x1a8] sm:$0xff]
        %v850 = vld [vmem:[#allocation5 + $0x1b0] sm:$0xff]
        %v851 = vld [vmem:[#allocation5 + $0x1b8] sm:$0xff]
        %v852 = vld [vmem:[#allocation5 + $0x1c0] sm:$0xff]
        %v853 = vld [vmem:[#allocation5 + $0x1c8] sm:$0xff]
        %v854 = vld [vmem:[#allocation5 + $0x1d0] sm:$0xff]
        %v855 = vld [vmem:[#allocation5 + $0x1d8] sm:$0xff]
        %v856 = vld [vmem:[#allocation5 + $0x1e0] sm:$0xff]
        %v857 = vld [vmem:[#allocation5 + $0x1e8] sm:$0xff]
        %v858 = vld [vmem:[#allocation5 + $0x1f0] sm:$0xff]
        %v859 = vld [vmem:[#allocation5 + $0x1f8] sm:$0xff]
        %s860 = scalar_lea.vmem [#allocation5], 512
        %v861 = vld [vmem:[%s860] sm:$0xff]
        %v862 = vld [vmem:[%s860 + $0x8] sm:$0xff]
        %v863 = vld [vmem:[%s860 + $0x10] sm:$0xff]
        %v864 = vld [vmem:[%s860 + $0x18] sm:$0xff]
        %v865 = vld [vmem:[%s860 + $0x20] sm:$0xff]
        %v866 = vld [vmem:[%s860 + $0x28] sm:$0xff]
        %v867 = vld [vmem:[%s860 + $0x30] sm:$0xff]
        %v868 = vld [vmem:[%s860 + $0x38] sm:$0xff]
        %v869 = vld [vmem:[%s860 + $0x40] sm:$0xff]
        %v870 = vld [vmem:[%s860 + $0x48] sm:$0xff]
        %v871 = vld [vmem:[%s860 + $0x50] sm:$0xff]
        %v872 = vld [vmem:[%s860 + $0x58] sm:$0xff]
        %v873 = vld [vmem:[%s860 + $0x60] sm:$0xff]
        %v874 = vld [vmem:[%s860 + $0x68] sm:$0xff]
        %v875 = vld [vmem:[%s860 + $0x70] sm:$0xff]
        %v876 = vld [vmem:[%s860 + $0x78] sm:$0xff]
        %v877 = vld [vmem:[%s860 + $0x80] sm:$0xff]
        %v878 = vld [vmem:[%s860 + $0x88] sm:$0xff]
        %v879 = vld [vmem:[%s860 + $0x90] sm:$0xff]
        %v880 = vld [vmem:[%s860 + $0x98] sm:$0xff]
        %v881 = vld [vmem:[%s860 + $0xa0] sm:$0xff]
        %v882 = vld [vmem:[%s860 + $0xa8] sm:$0xff]
        %v883 = vld [vmem:[%s860 + $0xb0] sm:$0xff]
        %v884 = vld [vmem:[%s860 + $0xb8] sm:$0xff]
        %v885 = vld [vmem:[%s860 + $0xc0] sm:$0xff]
        %v886 = vld [vmem:[%s860 + $0xc8] sm:$0xff]
        %v887 = vld [vmem:[%s860 + $0xd0] sm:$0xff]
        %v888 = vld [vmem:[%s860 + $0xd8] sm:$0xff]
        %v889 = vld [vmem:[%s860 + $0xe0] sm:$0xff]
        %v890 = vld [vmem:[%s860 + $0xe8] sm:$0xff]
        %v891 = vld [vmem:[%s860 + $0xf0] sm:$0xff]
        %v892 = vld [vmem:[%s860 + $0xf8] sm:$0xff]
        %v893 = vld [vmem:[%s860 + $0x100] sm:$0xff]
        %v894 = vld [vmem:[%s860 + $0x108] sm:$0xff]
        %v895 = vld [vmem:[%s860 + $0x110] sm:$0xff]
        %v896 = vld [vmem:[%s860 + $0x118] sm:$0xff]
        %v897 = vld [vmem:[%s860 + $0x120] sm:$0xff]
        %v898 = vld [vmem:[%s860 + $0x128] sm:$0xff]
        %v899 = vld [vmem:[%s860 + $0x130] sm:$0xff]
        %v900 = vld [vmem:[%s860 + $0x138] sm:$0xff]
        %v901 = vld [vmem:[%s860 + $0x140] sm:$0xff]
        %v902 = vld [vmem:[%s860 + $0x148] sm:$0xff]
        %v903 = vld [vmem:[%s860 + $0x150] sm:$0xff]
        %v904 = vld [vmem:[%s860 + $0x158] sm:$0xff]
        %v905 = vld [vmem:[%s860 + $0x160] sm:$0xff]
        %v906 = vld [vmem:[%s860 + $0x168] sm:$0xff]
        %v907 = vld [vmem:[%s860 + $0x170] sm:$0xff]
        %v908 = vld [vmem:[%s860 + $0x178] sm:$0xff]
        %v909 = vld [vmem:[%s860 + $0x180] sm:$0xff]
        %v910 = vld [vmem:[%s860 + $0x188] sm:$0xff]
        %v911 = vld [vmem:[%s860 + $0x190] sm:$0xff]
        %v912 = vld [vmem:[%s860 + $0x198] sm:$0xff]
        %v913 = vld [vmem:[%s860 + $0x1a0] sm:$0xff]
        %v914 = vld [vmem:[%s860 + $0x1a8] sm:$0xff]
        %v915 = vld [vmem:[%s860 + $0x1b0] sm:$0xff]
        %v916 = vld [vmem:[%s860 + $0x1b8] sm:$0xff]
        %v917 = vld [vmem:[%s860 + $0x1c0] sm:$0xff]
        %v918 = vld [vmem:[%s860 + $0x1c8] sm:$0xff]
        %v919 = vld [vmem:[%s860 + $0x1d0] sm:$0xff]
        %v920 = vld [vmem:[%s860 + $0x1d8] sm:$0xff]
        %v921 = vld [vmem:[%s860 + $0x1e0] sm:$0xff]
        %v922 = vld [vmem:[%s860 + $0x1e8] sm:$0xff]
        %v923 = vld [vmem:[%s860 + $0x1f0] sm:$0xff]
        %v924 = vld [vmem:[%s860 + $0x1f8] sm:$0xff]
        %925 = vmatprep.subr.mxu0 %v862
        %926 = vmatpush1.msra.mxu0 %v861
        %927 = vmatprep.subr.mxu0 %v864
        %928 = vmatpush1.msra.mxu0 %v863
        %929 = vmatprep.subr.mxu0 %v866
        %930 = vmatpush1.msra.mxu0 %v865
        %931 = vmatprep.subr.mxu0 %v868
        %932 = vmatpush1.msra.mxu0 %v867
        %933 = vmatprep.subr.mxu0 %v870
        %934 = vmatpush1.msra.mxu0 %v869
        %935 = vmatprep.subr.mxu0 %v872
        %936 = vmatpush1.msra.mxu0 %v871
        %937 = vmatprep.subr.mxu0 %v874
        %938 = vmatpush1.msra.mxu0 %v873
        %939 = vmatprep.subr.mxu0 %v876
        %940 = vmatpush1.msra.mxu0 %v875
        %941 = vmatprep.subr.mxu0 %v878
        %942 = vmatpush1.msra.mxu0 %v877
        %943 = vmatprep.subr.mxu0 %v880
        %944 = vmatpush1.msra.mxu0 %v879
        %945 = vmatprep.subr.mxu0 %v882
        %946 = vmatpush1.msra.mxu0 %v881
        %947 = vmatprep.subr.mxu0 %v884
        %948 = vmatpush1.msra.mxu0 %v883
        %949 = vmatprep.subr.mxu0 %v886
        %950 = vmatpush1.msra.mxu0 %v885
        %951 = vmatprep.subr.mxu0 %v888
        %952 = vmatpush1.msra.mxu0 %v887
        %953 = vmatprep.subr.mxu0 %v890
        %954 = vmatpush1.msra.mxu0 %v889
        %955 = vmatprep.subr.mxu0 %v892
        %956 = vmatpush1.msra.mxu0 %v891
        %957 = vmatprep.subr.mxu0 %v894
        %958 = vmatpush1.msra.mxu0 %v893
        %959 = vmatprep.subr.mxu0 %v896
        %960 = vmatpush1.msra.mxu0 %v895
        %961 = vmatprep.subr.mxu0 %v898
        %962 = vmatpush1.msra.mxu0 %v897
        %963 = vmatprep.subr.mxu0 %v900
        %964 = vmatpush1.msra.mxu0 %v899
        %965 = vmatprep.subr.mxu0 %v902
        %966 = vmatpush1.msra.mxu0 %v901
        %967 = vmatprep.subr.mxu0 %v904
        %968 = vmatpush1.msra.mxu0 %v903
        %969 = vmatprep.subr.mxu0 %v906
        %970 = vmatpush1.msra.mxu0 %v905
        %971 = vmatprep.subr.mxu0 %v908
        %972 = vmatpush1.msra.mxu0 %v907
        %973 = vmatprep.subr.mxu0 %v910
        %974 = vmatpush1.msra.mxu0 %v909
        %975 = vmatprep.subr.mxu0 %v912
        %976 = vmatpush1.msra.mxu0 %v911
        %977 = vmatprep.subr.mxu0 %v914
        %978 = vmatpush1.msra.mxu0 %v913
        %979 = vmatprep.subr.mxu0 %v916
        %980 = vmatpush1.msra.mxu0 %v915
        %981 = vmatprep.subr.mxu0 %v918
        %982 = vmatpush1.msra.mxu0 %v917
        %983 = vmatprep.subr.mxu0 %v920
        %984 = vmatpush1.msra.mxu0 %v919
        %985 = vmatprep.subr.mxu0 %v922
        %986 = vmatpush1.msra.mxu0 %v921
        %987 = vmatprep.subr.mxu0 %v924
        %988 = vmatpush1.msra.mxu0 %v923
        %989 = vmatprep.mubr.f32.mxu0 %v223
        %990 = vmatmul.mubr.f32.gmra.mrb[0].mxu0 %v222
        %v991 = vpop.f32.mrb[0].mxu0
        %v992 = vadd.f32 0.0, %v991
        %v993 = vpop.f32.mrb[0].mxu0
        %v994 = vadd.f32 0.0, %v993
        %995 = vmatprep.mubr.f32.mxu0 %v225
        %996 = vmatmul.mubr.f32.gmra.mrb[0].mxu0 %v224
        %v997 = vpop.f32.mrb[0].mxu0
        %v998 = vadd.f32 0.0, %v997
        %v999 = vpop.f32.mrb[0].mxu0
        %v1000 = vadd.f32 0.0, %v999
        %1001 = vmatprep.mubr.f32.mxu0 %v219
        %1002 = vmatmul.mubr.f32.gmra.mrb[0].mxu0 %v218
        %v1003 = vpop.f32.mrb[0].mxu0
        %v1004 = vadd.f32 0.0, %v1003
        %v1005 = vpop.f32.mrb[0].mxu0
        %v1006 = vadd.f32 0.0, %v1005
        %1007 = vmatprep.mubr.f32.mxu0 %v221
        %1008 = vmatmul.mubr.f32.gmra.mrb[0].mxu0 %v220
        %v1009 = vpop.f32.mrb[0].mxu0
        %v1010 = vadd.f32 0.0, %v1009
        %v1011 = vpop.f32.mrb[0].mxu0
        %v1012 = vadd.f32 0.0, %v1011
        %1013 = vmatprep.mubr.f32.mxu0 %v223
        %1014 = vmatmul.mubr.f32.gmra.mrb[0].mxu0 %v222
        %v1015 = vpop.f32.mrb[0].mxu0
        %v1016 = vadd.f32 0.0, %v1015
        %v1017 = vpop.f32.mrb[0].mxu0
        %v1018 = vadd.f32 0.0, %v1017
        %1019 = vmatprep.mubr.f32.mxu0 %v225
        %1020 = vmatmul.mubr.f32.gmra.mrb[0].mxu0 %v224
        %v1021 = vpop.f32.mrb[0].mxu0
        %v1022 = vadd.f32 0.0, %v1021
        %v1023 = vpop.f32.mrb[0].mxu0
        %v1024 = vadd.f32 0.0, %v1023
        %1025 = vmatprep.mubr.f32.mxu0 %v227
        %1026 = vmatmul.mubr.f32.gmra.mrb[0].mxu0 %v226
        %v1027 = vpop.f32.mrb[0].mxu0
        %v1028 = vadd.f32 0.0, %v1027
        %v1029 = vpop.f32.mrb[0].mxu0
        %v1030 = vadd.f32 0.0, %v1029
        %1031 = vmatprep.mubr.f32.mxu0 %v229
        %1032 = vmatmul.mubr.f32.gmra.mrb[0].mxu0 %v228
        %v1033 = vpop.f32.mrb[0].mxu0
        %v1034 = vadd.f32 0.0, %v1033
        %v1035 = vpop.f32.mrb[0].mxu0
        %v1036 = vadd.f32 0.0, %v1035
        %1037 = vmatprep.mubr.f32.mxu0 %v231
        %1038 = vmatmul.mubr.f32.gmra.mrb[0].mxu0 %v230
        %v1039 = vpop.f32.mrb[0].mxu0
        %v1040 = vadd.f32 0.0, %v1039
        %v1041 = vpop.f32.mrb[0].mxu0
        %v1042 = vadd.f32 0.0, %v1041
        %1043 = vmatprep.mubr.f32.mxu0 %v233
        %1044 = vmatmul.mubr.f32.gmra.mrb[0].mxu0 %v232
        %v1045 = vpop.f32.mrb[0].mxu0
        %v1046 = vadd.f32 0.0, %v1045
        %v1047 = vpop.f32.mrb[0].mxu0
        %v1048 = vadd.f32 0.0, %v1047
        %1049 = vmatprep.mubr.f32.mxu0 %v235
        %1050 = vmatmul.mubr.f32.gmra.mrb[0].mxu0 %v234
        %v1051 = vpop.f32.mrb[0].mxu0
        %v1052 = vadd.f32 0.0, %v1051
        %v1053 = vpop.f32.mrb[0].mxu0
        %v1054 = vadd.f32 0.0, %v1053
        %1055 = vmatprep.mubr.f32.mxu0 %v237
        %1056 = vmatmul.mubr.f32.gmra.mrb[0].mxu0 %v236
        %v1057 = vpop.f32.mrb[0].mxu0
        %v1058 = vadd.f32 0.0, %v1057
        %v1059 = vpop.f32.mrb[0].mxu0
        %v1060 = vadd.f32 0.0, %v1059
        %1061 = vmatprep.mubr.f32.mxu0 %v239
        %1062 = vmatmul.mubr.f32.gmra.mrb[0].mxu0 %v238
        %v1063 = vpop.f32.mrb[0].mxu0
        %v1064 = vadd.f32 0.0, %v1063
        %v1065 = vpop.f32.mrb[0].mxu0
        %v1066 = vadd.f32 0.0, %v1065
        %1067 = vmatprep.mubr.f32.mxu0 %v241
        %1068 = vmatmul.mubr.f32.gmra.mrb[0].mxu0 %v240
        %v1069 = vpop.f32.mrb[0].mxu0
        %v1070 = vadd.f32 0.0, %v1069
        %v1071 = vpop.f32.mrb[0].mxu0
        %v1072 = vadd.f32 0.0, %v1071
        %1073 = vmatprep.mubr.f32.mxu0 %v243
        %1074 = vmatmul.mubr.f32.gmra.mrb[0].mxu0 %v242
        %v1075 = vpop.f32.mrb[0].mxu0
        %v1076 = vadd.f32 0.0, %v1075
        %v1077 = vpop.f32.mrb[0].mxu0
        %v1078 = vadd.f32 0.0, %v1077
        %1079 = vmatprep.mubr.f32.mxu0 %v245
        %1080 = vmatmul.mubr.f32.gmra.mrb[0].mxu0 %v244
        %v1081 = vpop.f32.mrb[0].mxu0
        %v1082 = vadd.f32 0.0, %v1081
        %v1083 = vpop.f32.mrb[0].mxu0
        %v1084 = vadd.f32 0.0, %v1083
        %1085 = vmatprep.mubr.f32.mxu0 %v247
        %1086 = vmatmul.mubr.f32.gmra.mrb[0].mxu0 %v246
        %v1087 = vpop.f32.mrb[0].mxu0
        %v1088 = vadd.f32 0.0, %v1087
        %v1089 = vpop.f32.mrb[0].mxu0
        %v1090 = vadd.f32 0.0, %v1089
        %1091 = vmatprep.mubr.f32.mxu0 %v249
        %1092 = vmatmul.mubr.f32.gmra.mrb[0].mxu0 %v248
        %v1093 = vpop.f32.mrb[0].mxu0
        %v1094 = vadd.f32 0.0, %v1093
        %v1095 = vpop.f32.mrb[0].mxu0
        %v1096 = vadd.f32 0.0, %v1095
        %1097 = vmatprep.mubr.f32.mxu0 %v251
        %1098 = vmatmul.mubr.f32.gmra.mrb[0].mxu0 %v250
        %v1099 = vpop.f32.mrb[0].mxu0
        %v1100 = vadd.f32 0.0, %v1099
        %v1101 = vpop.f32.mrb[0].mxu0
        %v1102 = vadd.f32 0.0, %v1101
        %1103 = vmatprep.mubr.f32.mxu0 %v253
        %1104 = vmatmul.mubr.f32.gmra.mrb[0].mxu0 %v252
        %v1105 = vpop.f32.mrb[0].mxu0
        %v1106 = vadd.f32 0.0, %v1105
        %v1107 = vpop.f32.mrb[0].mxu0
        %v1108 = vadd.f32 0.0, %v1107
        %1109 = vmatprep.mubr.f32.mxu0 %v255
        %1110 = vmatmul.mubr.f32.gmra.mrb[0].mxu0 %v254
        %v1111 = vpop.f32.mrb[0].mxu0
        %v1112 = vadd.f32 0.0, %v1111
        %v1113 = vpop.f32.mrb[0].mxu0
        %v1114 = vadd.f32 0.0, %v1113
        %1115 = vmatprep.mubr.f32.mxu0 %v257
        %1116 = vmatmul.mubr.f32.gmra.mrb[0].mxu0 %v256
        %v1117 = vpop.f32.mrb[0].mxu0
        %v1118 = vadd.f32 0.0, %v1117
        %v1119 = vpop.f32.mrb[0].mxu0
        %v1120 = vadd.f32 0.0, %v1119
        %1121 = vmatprep.mubr.f32.mxu0 %v259
        %1122 = vmatmul.mubr.f32.gmra.mrb[0].mxu0 %v258
        %v1123 = vpop.f32.mrb[0].mxu0
        %v1124 = vadd.f32 0.0, %v1123
        %v1125 = vpop.f32.mrb[0].mxu0
        %v1126 = vadd.f32 0.0, %v1125
        %1127 = vmatprep.mubr.f32.mxu0 %v261
        %1128 = vmatmul.mubr.f32.gmra.mrb[0].mxu0 %v260
        %v1129 = vpop.f32.mrb[0].mxu0
        %v1130 = vadd.f32 0.0, %v1129
        %v1131 = vpop.f32.mrb[0].mxu0
        %v1132 = vadd.f32 0.0, %v1131
        %1133 = vmatprep.mubr.f32.mxu0 %v263
        %1134 = vmatmul.mubr.f32.gmra.mrb[0].mxu0 %v262
        %v1135 = vpop.f32.mrb[0].mxu0
        %v1136 = vadd.f32 0.0, %v1135
        %v1137 = vpop.f32.mrb[0].mxu0
        %v1138 = vadd.f32 0.0, %v1137
        %1139 = vmatprep.mubr.f32.mxu0 %v265
        %1140 = vmatmul.mubr.f32.gmra.mrb[0].mxu0 %v264
        %v1141 = vpop.f32.mrb[0].mxu0
        %v1142 = vadd.f32 0.0, %v1141
        %v1143 = vpop.f32.mrb[0].mxu0
        %v1144 = vadd.f32 0.0, %v1143
        %1145 = vmatprep.mubr.f32.mxu0 %v267
        %1146 = vmatmul.mubr.f32.gmra.mrb[0].mxu0 %v266
        %v1147 = vpop.f32.mrb[0].mxu0
        %v1148 = vadd.f32 0.0, %v1147
        %v1149 = vpop.f32.mrb[0].mxu0
        %v1150 = vadd.f32 0.0, %v1149
        %1151 = vmatprep.mubr.f32.mxu0 %v269
        %1152 = vmatmul.mubr.f32.gmra.mrb[0].mxu0 %v268
        %v1153 = vpop.f32.mrb[0].mxu0
        %v1154 = vadd.f32 0.0, %v1153
        %v1155 = vpop.f32.mrb[0].mxu0
        %v1156 = vadd.f32 0.0, %v1155
        %1157 = vmatprep.mubr.f32.mxu0 %v271
        %1158 = vmatmul.mubr.f32.gmra.mrb[0].mxu0 %v270
        %v1159 = vpop.f32.mrb[0].mxu0
        %v1160 = vadd.f32 0.0, %v1159
        %v1161 = vpop.f32.mrb[0].mxu0
        %v1162 = vadd.f32 0.0, %v1161
        %1163 = vmatprep.mubr.f32.mxu0 %v273
        %1164 = vmatmul.mubr.f32.gmra.mrb[0].mxu0 %v272
        %v1165 = vpop.f32.mrb[0].mxu0
        %v1166 = vadd.f32 0.0, %v1165
        %v1167 = vpop.f32.mrb[0].mxu0
        %v1168 = vadd.f32 0.0, %v1167
        %1169 = vmatprep.mubr.f32.mxu0 %v275
        %1170 = vmatmul.mubr.f32.gmra.mrb[0].mxu0 %v274
        %v1171 = vpop.f32.mrb[0].mxu0
        %v1172 = vadd.f32 0.0, %v1171
        %v1173 = vpop.f32.mrb[0].mxu0
        %v1174 = vadd.f32 0.0, %v1173
        %1175 = vmatprep.mubr.f32.mxu0 %v277
        %1176 = vmatmul.mubr.f32.gmra.mrb[0].mxu0 %v276
        %v1177 = vpop.f32.mrb[0].mxu0
        %v1178 = vadd.f32 0.0, %v1177
        %v1179 = vpop.f32.mrb[0].mxu0
        %v1180 = vadd.f32 0.0, %v1179
        %1181 = vdwg.mxu0
        %1182 = vmatprep.subr.mxu0 %v797
        %1183 = vmatpush1.msra.mxu0 %v796
        %1184 = vmatprep.subr.mxu0 %v799
        %1185 = vmatpush1.msra.mxu0 %v798
        %1186 = vmatprep.subr.mxu0 %v801
        %1187 = vmatpush1.msra.mxu0 %v800
        %1188 = vmatprep.subr.mxu0 %v803
        %1189 = vmatpush1.msra.mxu0 %v802
        %1190 = vmatprep.subr.mxu0 %v805
        %1191 = vmatpush1.msra.mxu0 %v804
        %1192 = vmatprep.subr.mxu0 %v807
        %1193 = vmatpush1.msra.mxu0 %v806
        %1194 = vmatprep.subr.mxu0 %v809
        %1195 = vmatpush1.msra.mxu0 %v808
        %1196 = vmatprep.subr.mxu0 %v811
        %1197 = vmatpush1.msra.mxu0 %v810
        %1198 = vmatprep.subr.mxu0 %v813
        %1199 = vmatpush1.msra.mxu0 %v812
        %1200 = vmatprep.subr.mxu0 %v815
        %1201 = vmatpush1.msra.mxu0 %v814
        %1202 = vmatprep.subr.mxu0 %v817
        %1203 = vmatpush1.msra.mxu0 %v816
        %1204 = vmatprep.subr.mxu0 %v819
        %1205 = vmatpush1.msra.mxu0 %v818
        %1206 = vmatprep.subr.mxu0 %v821
        %1207 = vmatpush1.msra.mxu0 %v820
        %1208 = vmatprep.subr.mxu0 %v823
        %1209 = vmatpush1.msra.mxu0 %v822
        %1210 = vmatprep.subr.mxu0 %v825
        %1211 = vmatpush1.msra.mxu0 %v824
        %1212 = vmatprep.subr.mxu0 %v827
        %1213 = vmatpush1.msra.mxu0 %v826
        %1214 = vmatprep.subr.mxu0 %v829
        %1215 = vmatpush1.msra.mxu0 %v828
        %1216 = vmatprep.subr.mxu0 %v831
        %1217 = vmatpush1.msra.mxu0 %v830
        %1218 = vmatprep.subr.mxu0 %v833
        %1219 = vmatpush1.msra.mxu0 %v832
        %1220 = vmatprep.subr.mxu0 %v835
        %1221 = vmatpush1.msra.mxu0 %v834
        %1222 = vmatprep.subr.mxu0 %v837
        %1223 = vmatpush1.msra.mxu0 %v836
        %1224 = vmatprep.subr.mxu0 %v839
        %1225 = vmatpush1.msra.mxu0 %v838
        %1226 = vmatprep.subr.mxu0 %v841
        %1227 = vmatpush1.msra.mxu0 %v840
        %1228 = vmatprep.subr.mxu0 %v843
        %1229 = vmatpush1.msra.mxu0 %v842
        %1230 = vmatprep.subr.mxu0 %v845
        %1231 = vmatpush1.msra.mxu0 %v844
        %1232 = vmatprep.subr.mxu0 %v847
        %1233 = vmatpush1.msra.mxu0 %v846
        %1234 = vmatprep.subr.mxu0 %v849
        %1235 = vmatpush1.msra.mxu0 %v848
        %1236 = vmatprep.subr.mxu0 %v851
        %1237 = vmatpush1.msra.mxu0 %v850
        %1238 = vmatprep.subr.mxu0 %v853
        %1239 = vmatpush1.msra.mxu0 %v852
        %1240 = vmatprep.subr.mxu0 %v855
        %1241 = vmatpush1.msra.mxu0 %v854
        %1242 = vmatprep.subr.mxu0 %v857
        %1243 = vmatpush1.msra.mxu0 %v856
        %1244 = vmatprep.subr.mxu0 %v859
        %1245 = vmatpush1.msra.mxu0 %v858
        %1246 = vmatprep.mubr.f32.mxu0 %v572
        %1247 = vmatmul.mubr.f32.gmra.mrb[0].mxu0 %v571
        %v1248 = vpop.f32.mrb[0].mxu0
        %v1249 = vadd.f32 %v992, %v1248
        %v1250 = vpop.f32.mrb[0].mxu0
        %v1251 = vadd.f32 %v994, %v1250
        %1252 = vmatprep.mubr.f32.mxu0 %v416
        %1253 = vmatmul.mubr.f32.gmra.mrb[0].mxu0 %v414
        %v1254 = vpop.f32.mrb[0].mxu0
        %v1255 = vadd.f32 %v998, %v1254
        %v1256 = vpop.f32.mrb[0].mxu0
        %v1257 = vadd.f32 %v1000, %v1256
        %1258 = vmatprep.mubr.f32.mxu0 %v574
        %1259 = vmatmul.mubr.f32.gmra.mrb[0].mxu0 %v573
        %v1260 = vpop.f32.mrb[0].mxu0
        %v1261 = vadd.f32 %v1004, %v1260
        %v1262 = vpop.f32.mrb[0].mxu0
        %v1263 = vadd.f32 %v1006, %v1262
        %1264 = vmatprep.mubr.f32.mxu0 %v422
        %1265 = vmatmul.mubr.f32.gmra.mrb[0].mxu0 %v420
        %v1266 = vpop.f32.mrb[0].mxu0
        %v1267 = vadd.f32 %v1010, %v1266
        %v1268 = vpop.f32.mrb[0].mxu0
        %v1269 = vadd.f32 %v1012, %v1268
        %1270 = vmatprep.mubr.f32.mxu0 %v572
        %1271 = vmatmul.mubr.f32.gmra.mrb[0].mxu0 %v571
        %v1272 = vpop.f32.mrb[0].mxu0
        %v1273 = vadd.f32 %v1016, %v1272
        %v1274 = vpop.f32.mrb[0].mxu0
        %v1275 = vadd.f32 %v1018, %v1274
        %1276 = vmatprep.mubr.f32.mxu0 %v416
        %1277 = vmatmul.mubr.f32.gmra.mrb[0].mxu0 %v414
        %v1278 = vpop.f32.mrb[0].mxu0
        %v1279 = vadd.f32 %v1022, %v1278
        %v1280 = vpop.f32.mrb[0].mxu0
        %v1281 = vadd.f32 %v1024, %v1280
        %1282 = vmatprep.mubr.f32.mxu0 %v576
        %1283 = vmatmul.mubr.f32.gmra.mrb[0].mxu0 %v575
        %v1284 = vpop.f32.mrb[0].mxu0
        %v1285 = vadd.f32 %v1028, %v1284
        %v1286 = vpop.f32.mrb[0].mxu0
        %v1287 = vadd.f32 %v1030, %v1286
        %1288 = vmatprep.mubr.f32.mxu0 %v428
        %1289 = vmatmul.mubr.f32.gmra.mrb[0].mxu0 %v426
        %v1290 = vpop.f32.mrb[0].mxu0
        %v1291 = vadd.f32 %v1034, %v1290
        %v1292 = vpop.f32.mrb[0].mxu0
        %v1293 = vadd.f32 %v1036, %v1292
        %1294 = vmatprep.mubr.f32.mxu0 %v578
        %1295 = vmatmul.mubr.f32.gmra.mrb[0].mxu0 %v577
        %v1296 = vpop.f32.mrb[0].mxu0
        %v1297 = vadd.f32 %v1040, %v1296
        %v1298 = vpop.f32.mrb[0].mxu0
        %v1299 = vadd.f32 %v1042, %v1298
        %1300 = vmatprep.mubr.f32.mxu0 %v434
        %1301 = vmatmul.mubr.f32.gmra.mrb[0].mxu0 %v432
        %v1302 = vpop.f32.mrb[0].mxu0
        %v1303 = vadd.f32 %v1046, %v1302
        %v1304 = vpop.f32.mrb[0].mxu0
        %v1305 = vadd.f32 %v1048, %v1304
        %1306 = vmatprep.mubr.f32.mxu0 %v580
        %1307 = vmatmul.mubr.f32.gmra.mrb[0].mxu0 %v579
        %v1308 = vpop.f32.mrb[0].mxu0
        %v1309 = vadd.f32 %v1052, %v1308
        %v1310 = vpop.f32.mrb[0].mxu0
        %v1311 = vadd.f32 %v1054, %v1310
        %1312 = vmatprep.mubr.f32.mxu0 %v440
        %1313 = vmatmul.mubr.f32.gmra.mrb[0].mxu0 %v438
        %v1314 = vpop.f32.mrb[0].mxu0
        %v1315 = vadd.f32 %v1058, %v1314
        %v1316 = vpop.f32.mrb[0].mxu0
        %v1317 = vadd.f32 %v1060, %v1316
        %1318 = vmatprep.mubr.f32.mxu0 %v582
        %1319 = vmatmul.mubr.f32.gmra.mrb[0].mxu0 %v581
        %v1320 = vpop.f32.mrb[0].mxu0
        %v1321 = vadd.f32 %v1064, %v1320
        %v1322 = vpop.f32.mrb[0].mxu0
        %v1323 = vadd.f32 %v1066, %v1322
        %1324 = vmatprep.mubr.f32.mxu0 %v446
        %1325 = vmatmul.mubr.f32.gmra.mrb[0].mxu0 %v444
        %v1326 = vpop.f32.mrb[0].mxu0
        %v1327 = vadd.f32 %v1070, %v1326
        %v1328 = vpop.f32.mrb[0].mxu0
        %v1329 = vadd.f32 %v1072, %v1328
        %1330 = vmatprep.mubr.f32.mxu0 %v584
        %1331 = vmatmul.mubr.f32.gmra.mrb[0].mxu0 %v583
        %v1332 = vpop.f32.mrb[0].mxu0
        %v1333 = vadd.f32 %v1076, %v1332
        %v1334 = vpop.f32.mrb[0].mxu0
        %v1335 = vadd.f32 %v1078, %v1334
        %1336 = vmatprep.mubr.f32.mxu0 %v452
        %1337 = vmatmul.mubr.f32.gmra.mrb[0].mxu0 %v450
        %v1338 = vpop.f32.mrb[0].mxu0
        %v1339 = vadd.f32 %v1082, %v1338
        %v1340 = vpop.f32.mrb[0].mxu0
        %v1341 = vadd.f32 %v1084, %v1340
        %1342 = vmatprep.mubr.f32.mxu0 %v586
        %1343 = vmatmul.mubr.f32.gmra.mrb[0].mxu0 %v585
        %v1344 = vpop.f32.mrb[0].mxu0
        %v1345 = vadd.f32 %v1088, %v1344
        %v1346 = vpop.f32.mrb[0].mxu0
        %v1347 = vadd.f32 %v1090, %v1346
        %1348 = vmatprep.mubr.f32.mxu0 %v458
        %1349 = vmatmul.mubr.f32.gmra.mrb[0].mxu0 %v456
        %v1350 = vpop.f32.mrb[0].mxu0
        %v1351 = vadd.f32 %v1094, %v1350
        %v1352 = vpop.f32.mrb[0].mxu0
        %v1353 = vadd.f32 %v1096, %v1352
        %1354 = vmatprep.mubr.f32.mxu0 %v588
        %1355 = vmatmul.mubr.f32.gmra.mrb[0].mxu0 %v587
        %v1356 = vpop.f32.mrb[0].mxu0
        %v1357 = vadd.f32 %v1100, %v1356
        %v1358 = vpop.f32.mrb[0].mxu0
        %v1359 = vadd.f32 %v1102, %v1358
        %1360 = vmatprep.mubr.f32.mxu0 %v464
        %1361 = vmatmul.mubr.f32.gmra.mrb[0].mxu0 %v462
        %v1362 = vpop.f32.mrb[0].mxu0
        %v1363 = vadd.f32 %v1106, %v1362
        %v1364 = vpop.f32.mrb[0].mxu0
        %v1365 = vadd.f32 %v1108, %v1364
        %1366 = vmatprep.mubr.f32.mxu0 %v590
        %1367 = vmatmul.mubr.f32.gmra.mrb[0].mxu0 %v589
        %v1368 = vpop.f32.mrb[0].mxu0
        %v1369 = vadd.f32 %v1112, %v1368
        %v1370 = vpop.f32.mrb[0].mxu0
        %v1371 = vadd.f32 %v1114, %v1370
        %1372 = vmatprep.mubr.f32.mxu0 %v470
        %1373 = vmatmul.mubr.f32.gmra.mrb[0].mxu0 %v468
        %v1374 = vpop.f32.mrb[0].mxu0
        %v1375 = vadd.f32 %v1118, %v1374
        %v1376 = vpop.f32.mrb[0].mxu0
        %v1377 = vadd.f32 %v1120, %v1376
        %1378 = vmatprep.mubr.f32.mxu0 %v592
        %1379 = vmatmul.mubr.f32.gmra.mrb[0].mxu0 %v591
        %v1380 = vpop.f32.mrb[0].mxu0
        %v1381 = vadd.f32 %v1124, %v1380
        %v1382 = vpop.f32.mrb[0].mxu0
        %v1383 = vadd.f32 %v1126, %v1382
        %1384 = vmatprep.mubr.f32.mxu0 %v476
        %1385 = vmatmul.mubr.f32.gmra.mrb[0].mxu0 %v474
        %v1386 = vpop.f32.mrb[0].mxu0
        %v1387 = vadd.f32 %v1130, %v1386
        %v1388 = vpop.f32.mrb[0].mxu0
        %v1389 = vadd.f32 %v1132, %v1388
        %1390 = vmatprep.mubr.f32.mxu0 %v594
        %1391 = vmatmul.mubr.f32.gmra.mrb[0].mxu0 %v593
        %v1392 = vpop.f32.mrb[0].mxu0
        %v1393 = vadd.f32 %v1136, %v1392
        %v1394 = vpop.f32.mrb[0].mxu0
        %v1395 = vadd.f32 %v1138, %v1394
        %1396 = vmatprep.mubr.f32.mxu0 %v482
        %1397 = vmatmul.mubr.f32.gmra.mrb[0].mxu0 %v480
        %v1398 = vpop.f32.mrb[0].mxu0
        %v1399 = vadd.f32 %v1142, %v1398
        %v1400 = vpop.f32.mrb[0].mxu0
        %v1401 = vadd.f32 %v1144, %v1400
        %1402 = vmatprep.mubr.f32.mxu0 %v596
        %1403 = vmatmul.mubr.f32.gmra.mrb[0].mxu0 %v595
        %v1404 = vpop.f32.mrb[0].mxu0
        %v1405 = vadd.f32 %v1148, %v1404
        %v1406 = vpop.f32.mrb[0].mxu0
        %v1407 = vadd.f32 %v1150, %v1406
        %1408 = vmatprep.mubr.f32.mxu0 %v488
        %1409 = vmatmul.mubr.f32.gmra.mrb[0].mxu0 %v486
        %v1410 = vpop.f32.mrb[0].mxu0
        %v1411 = vadd.f32 %v1154, %v1410
        %v1412 = vpop.f32.mrb[0].mxu0
        %v1413 = vadd.f32 %v1156, %v1412
        %1414 = vmatprep.mubr.f32.mxu0 %v598
        %1415 = vmatmul.mubr.f32.gmra.mrb[0].mxu0 %v597
        %v1416 = vpop.f32.mrb[0].mxu0
        %v1417 = vadd.f32 %v1160, %v1416
        %v1418 = vpop.f32.mrb[0].mxu0
        %v1419 = vadd.f32 %v1162, %v1418
        %1420 = vmatprep.mubr.f32.mxu0 %v494
        %1421 = vmatmul.mubr.f32.gmra.mrb[0].mxu0 %v492
        %v1422 = vpop.f32.mrb[0].mxu0
        %v1423 = vadd.f32 %v1166, %v1422
        %v1424 = vpop.f32.mrb[0].mxu0
        %v1425 = vadd.f32 %v1168, %v1424
        %1426 = vmatprep.mubr.f32.mxu0 %v600
        %1427 = vmatmul.mubr.f32.gmra.mrb[0].mxu0 %v599
        %v1428 = vpop.f32.mrb[0].mxu0
        %v1429 = vadd.f32 %v1172, %v1428
        %v1430 = vpop.f32.mrb[0].mxu0
        %v1431 = vadd.f32 %v1174, %v1430
        %1432 = vmatprep.mubr.f32.mxu0 %v500
        %1433 = vmatmul.mubr.f32.gmra.mrb[0].mxu0 %v498
        %v1434 = vpop.f32.mrb[0].mxu0
        %v1435 = vadd.f32 %v1178, %v1434
        %v1436 = vpop.f32.mrb[0].mxu0
        %v1437 = vadd.f32 %v1180, %v1436
        %1438 = vdwg.mxu0
        %s1439 = scalar_lea.vmem [#allocation5], 1024
        %v1440 = vld [vmem:[%s1439] sm:$0xff]
        %v1441 = vld [vmem:[%s1439 + $0x8] sm:$0xff]
        %v1442 = vld [vmem:[%s1439 + $0x10] sm:$0xff]
        %v1443 = vld [vmem:[%s1439 + $0x18] sm:$0xff]
        %v1444 = vld [vmem:[%s1439 + $0x20] sm:$0xff]
        %v1445 = vld [vmem:[%s1439 + $0x28] sm:$0xff]
        %v1446 = vld [vmem:[%s1439 + $0x30] sm:$0xff]
        %v1447 = vld [vmem:[%s1439 + $0x38] sm:$0xff]
        %v1448 = vld [vmem:[%s1439 + $0x40] sm:$0xff]
        %v1449 = vld [vmem:[%s1439 + $0x48] sm:$0xff]
        %v1450 = vld [vmem:[%s1439 + $0x50] sm:$0xff]
        %v1451 = vld [vmem:[%s1439 + $0x58] sm:$0xff]
        %v1452 = vld [vmem:[%s1439 + $0x60] sm:$0xff]
        %v1453 = vld [vmem:[%s1439 + $0x68] sm:$0xff]
        %v1454 = vld [vmem:[%s1439 + $0x70] sm:$0xff]
        %v1455 = vld [vmem:[%s1439 + $0x78] sm:$0xff]
        %v1456 = vld [vmem:[%s1439 + $0x80] sm:$0xff]
        %v1457 = vld [vmem:[%s1439 + $0x88] sm:$0xff]
        %v1458 = vld [vmem:[%s1439 + $0x90] sm:$0xff]
        %v1459 = vld [vmem:[%s1439 + $0x98] sm:$0xff]
        %v1460 = vld [vmem:[%s1439 + $0xa0] sm:$0xff]
        %v1461 = vld [vmem:[%s1439 + $0xa8] sm:$0xff]
        %v1462 = vld [vmem:[%s1439 + $0xb0] sm:$0xff]
        %v1463 = vld [vmem:[%s1439 + $0xb8] sm:$0xff]
        %v1464 = vld [vmem:[%s1439 + $0xc0] sm:$0xff]
        %v1465 = vld [vmem:[%s1439 + $0xc8] sm:$0xff]
        %v1466 = vld [vmem:[%s1439 + $0xd0] sm:$0xff]
        %v1467 = vld [vmem:[%s1439 + $0xd8] sm:$0xff]
        %v1468 = vld [vmem:[%s1439 + $0xe0] sm:$0xff]
        %v1469 = vld [vmem:[%s1439 + $0xe8] sm:$0xff]
        %v1470 = vld [vmem:[%s1439 + $0xf0] sm:$0xff]
        %v1471 = vld [vmem:[%s1439 + $0xf8] sm:$0xff]
        %v1472 = vld [vmem:[%s1439 + $0x100] sm:$0xff]
        %v1473 = vld [vmem:[%s1439 + $0x108] sm:$0xff]
        %v1474 = vld [vmem:[%s1439 + $0x110] sm:$0xff]
        %v1475 = vld [vmem:[%s1439 + $0x118] sm:$0xff]
        %v1476 = vld [vmem:[%s1439 + $0x120] sm:$0xff]
        %v1477 = vld [vmem:[%s1439 + $0x128] sm:$0xff]
        %v1478 = vld [vmem:[%s1439 + $0x130] sm:$0xff]
        %v1479 = vld [vmem:[%s1439 + $0x138] sm:$0xff]
        %v1480 = vld [vmem:[%s1439 + $0x140] sm:$0xff]
        %v1481 = vld [vmem:[%s1439 + $0x148] sm:$0xff]
        %v1482 = vld [vmem:[%s1439 + $0x150] sm:$0xff]
        %v1483 = vld [vmem:[%s1439 + $0x158] sm:$0xff]
        %v1484 = vld [vmem:[%s1439 + $0x160] sm:$0xff]
        %v1485 = vld [vmem:[%s1439 + $0x168] sm:$0xff]
        %v1486 = vld [vmem:[%s1439 + $0x170] sm:$0xff]
        %v1487 = vld [vmem:[%s1439 + $0x178] sm:$0xff]
        %v1488 = vld [vmem:[%s1439 + $0x180] sm:$0xff]
        %v1489 = vld [vmem:[%s1439 + $0x188] sm:$0xff]
        %v1490 = vld [vmem:[%s1439 + $0x190] sm:$0xff]
        %v1491 = vld [vmem:[%s1439 + $0x198] sm:$0xff]
        %v1492 = vld [vmem:[%s1439 + $0x1a0] sm:$0xff]
        %v1493 = vld [vmem:[%s1439 + $0x1a8] sm:$0xff]
        %v1494 = vld [vmem:[%s1439 + $0x1b0] sm:$0xff]
        %v1495 = vld [vmem:[%s1439 + $0x1b8] sm:$0xff]
        %v1496 = vld [vmem:[%s1439 + $0x1c0] sm:$0xff]
        %v1497 = vld [vmem:[%s1439 + $0x1c8] sm:$0xff]
        %v1498 = vld [vmem:[%s1439 + $0x1d0] sm:$0xff]
        %v1499 = vld [vmem:[%s1439 + $0x1d8] sm:$0xff]
        %v1500 = vld [vmem:[%s1439 + $0x1e0] sm:$0xff]
        %v1501 = vld [vmem:[%s1439 + $0x1e8] sm:$0xff]
        %v1502 = vld [vmem:[%s1439 + $0x1f0] sm:$0xff]
        %v1503 = vld [vmem:[%s1439 + $0x1f8] sm:$0xff]
        %1504 = vmatprep.subr.mxu0 %v1441
        %1505 = vmatpush1.msra.mxu0 %v1440
        %1506 = vmatprep.subr.mxu0 %v1443
        %1507 = vmatpush1.msra.mxu0 %v1442
        %1508 = vmatprep.subr.mxu0 %v1445
        %1509 = vmatpush1.msra.mxu0 %v1444
        %1510 = vmatprep.subr.mxu0 %v1447
        %1511 = vmatpush1.msra.mxu0 %v1446
        %1512 = vmatprep.subr.mxu0 %v1449
        %1513 = vmatpush1.msra.mxu0 %v1448
        %1514 = vmatprep.subr.mxu0 %v1451
        %1515 = vmatpush1.msra.mxu0 %v1450
        %1516 = vmatprep.subr.mxu0 %v1453
        %1517 = vmatpush1.msra.mxu0 %v1452
        %1518 = vmatprep.subr.mxu0 %v1455
        %1519 = vmatpush1.msra.mxu0 %v1454
        %1520 = vmatprep.subr.mxu0 %v1457
        %1521 = vmatpush1.msra.mxu0 %v1456
        %1522 = vmatprep.subr.mxu0 %v1459
        %1523 = vmatpush1.msra.mxu0 %v1458
        %1524 = vmatprep.subr.mxu0 %v1461
        %1525 = vmatpush1.msra.mxu0 %v1460
        %1526 = vmatprep.subr.mxu0 %v1463
        %1527 = vmatpush1.msra.mxu0 %v1462
        %1528 = vmatprep.subr.mxu0 %v1465
        %1529 = vmatpush1.msra.mxu0 %v1464
        %1530 = vmatprep.subr.mxu0 %v1467
        %1531 = vmatpush1.msra.mxu0 %v1466
        %1532 = vmatprep.subr.mxu0 %v1469
        %1533 = vmatpush1.msra.mxu0 %v1468
        %1534 = vmatprep.subr.mxu0 %v1471
        %1535 = vmatpush1.msra.mxu0 %v1470
        %1536 = vmatprep.subr.mxu0 %v1473
        %1537 = vmatpush1.msra.mxu0 %v1472
        %1538 = vmatprep.subr.mxu0 %v1475
        %1539 = vmatpush1.msra.mxu0 %v1474
        %1540 = vmatprep.subr.mxu0 %v1477
        %1541 = vmatpush1.msra.mxu0 %v1476
        %1542 = vmatprep.subr.mxu0 %v1479
        %1543 = vmatpush1.msra.mxu0 %v1478
        %1544 = vmatprep.subr.mxu0 %v1481
        %1545 = vmatpush1.msra.mxu0 %v1480
        %1546 = vmatprep.subr.mxu0 %v1483
        %1547 = vmatpush1.msra.mxu0 %v1482
        %1548 = vmatprep.subr.mxu0 %v1485
        %1549 = vmatpush1.msra.mxu0 %v1484
        %1550 = vmatprep.subr.mxu0 %v1487
        %1551 = vmatpush1.msra.mxu0 %v1486
        %1552 = vmatprep.subr.mxu0 %v1489
        %1553 = vmatpush1.msra.mxu0 %v1488
        %1554 = vmatprep.subr.mxu0 %v1491
        %1555 = vmatpush1.msra.mxu0 %v1490
        %1556 = vmatprep.subr.mxu0 %v1493
        %1557 = vmatpush1.msra.mxu0 %v1492
        %1558 = vmatprep.subr.mxu0 %v1495
        %1559 = vmatpush1.msra.mxu0 %v1494
        %1560 = vmatprep.subr.mxu0 %v1497
        %1561 = vmatpush1.msra.mxu0 %v1496
        %1562 = vmatprep.subr.mxu0 %v1499
        %1563 = vmatpush1.msra.mxu0 %v1498
        %1564 = vmatprep.subr.mxu0 %v1501
        %1565 = vmatpush1.msra.mxu0 %v1500
        %1566 = vmatprep.subr.mxu0 %v1503
        %1567 = vmatpush1.msra.mxu0 %v1502
        %1568 = vmatprep.mubr.f32.mxu0 %v607
        %1569 = vmatmul.mubr.f32.gmra.mrb[0].mxu0 %v605
        %v1570 = vpop.f32.mrb[0].mxu0
        %v1571 = vadd.f32 0.0, %v1570
        %v1572 = vpop.f32.mrb[0].mxu0
        %v1573 = vadd.f32 0.0, %v1572
        %1574 = vmatprep.mubr.f32.mxu0 %v765
        %1575 = vmatmul.mubr.f32.gmra.mrb[0].mxu0 %v764
        %v1576 = vpop.f32.mrb[0].mxu0
        %v1577 = vadd.f32 0.0, %v1576
        %v1578 = vpop.f32.mrb[0].mxu0
        %v1579 = vadd.f32 0.0, %v1578
        %1580 = vmatprep.mubr.f32.mxu0 %v611
        %1581 = vmatmul.mubr.f32.gmra.mrb[0].mxu0 %v609
        %v1582 = vpop.f32.mrb[0].mxu0
        %v1583 = vadd.f32 0.0, %v1582
        %v1584 = vpop.f32.mrb[0].mxu0
        %v1585 = vadd.f32 0.0, %v1584
        %1586 = vmatprep.mubr.f32.mxu0 %v767
        %1587 = vmatmul.mubr.f32.gmra.mrb[0].mxu0 %v766
        %v1588 = vpop.f32.mrb[0].mxu0
        %v1589 = vadd.f32 0.0, %v1588
        %v1590 = vpop.f32.mrb[0].mxu0
        %v1591 = vadd.f32 0.0, %v1590
        %1592 = vmatprep.mubr.f32.mxu0 %v607
        %1593 = vmatmul.mubr.f32.gmra.mrb[0].mxu0 %v605
        %v1594 = vpop.f32.mrb[0].mxu0
        %v1595 = vadd.f32 0.0, %v1594
        %v1596 = vpop.f32.mrb[0].mxu0
        %v1597 = vadd.f32 0.0, %v1596
        %1598 = vmatprep.mubr.f32.mxu0 %v765
        %1599 = vmatmul.mubr.f32.gmra.mrb[0].mxu0 %v764
        %v1600 = vpop.f32.mrb[0].mxu0
        %v1601 = vadd.f32 0.0, %v1600
        %v1602 = vpop.f32.mrb[0].mxu0
        %v1603 = vadd.f32 0.0, %v1602
        %1604 = vmatprep.mubr.f32.mxu0 %v615
        %1605 = vmatmul.mubr.f32.gmra.mrb[0].mxu0 %v613
        %v1606 = vpop.f32.mrb[0].mxu0
        %v1607 = vadd.f32 0.0, %v1606
        %v1608 = vpop.f32.mrb[0].mxu0
        %v1609 = vadd.f32 0.0, %v1608
        %1610 = vmatprep.mubr.f32.mxu0 %v769
        %1611 = vmatmul.mubr.f32.gmra.mrb[0].mxu0 %v768
        %v1612 = vpop.f32.mrb[0].mxu0
        %v1613 = vadd.f32 0.0, %v1612
        %v1614 = vpop.f32.mrb[0].mxu0
        %v1615 = vadd.f32 0.0, %v1614
        %1616 = vmatprep.mubr.f32.mxu0 %v619
        %1617 = vmatmul.mubr.f32.gmra.mrb[0].mxu0 %v617
        %v1618 = vpop.f32.mrb[0].mxu0
        %v1619 = vadd.f32 0.0, %v1618
        %v1620 = vpop.f32.mrb[0].mxu0
        %v1621 = vadd.f32 0.0, %v1620
        %1622 = vmatprep.mubr.f32.mxu0 %v771
        %1623 = vmatmul.mubr.f32.gmra.mrb[0].mxu0 %v770
        %v1624 = vpop.f32.mrb[0].mxu0
        %v1625 = vadd.f32 0.0, %v1624
        %v1626 = vpop.f32.mrb[0].mxu0
        %v1627 = vadd.f32 0.0, %v1626
        %1628 = vmatprep.mubr.f32.mxu0 %v623
        %1629 = vmatmul.mubr.f32.gmra.mrb[0].mxu0 %v621
        %v1630 = vpop.f32.mrb[0].mxu0
        %v1631 = vadd.f32 0.0, %v1630
        %v1632 = vpop.f32.mrb[0].mxu0
        %v1633 = vadd.f32 0.0, %v1632
        %1634 = vmatprep.mubr.f32.mxu0 %v773
        %1635 = vmatmul.mubr.f32.gmra.mrb[0].mxu0 %v772
        %v1636 = vpop.f32.mrb[0].mxu0
        %v1637 = vadd.f32 0.0, %v1636
        %v1638 = vpop.f32.mrb[0].mxu0
        %v1639 = vadd.f32 0.0, %v1638
        %1640 = vmatprep.mubr.f32.mxu0 %v627
        %1641 = vmatmul.mubr.f32.gmra.mrb[0].mxu0 %v625
        %v1642 = vpop.f32.mrb[0].mxu0
        %v1643 = vadd.f32 0.0, %v1642
        %v1644 = vpop.f32.mrb[0].mxu0
        %v1645 = vadd.f32 0.0, %v1644
        %1646 = vmatprep.mubr.f32.mxu0 %v775
        %1647 = vmatmul.mubr.f32.gmra.mrb[0].mxu0 %v774
        %v1648 = vpop.f32.mrb[0].mxu0
        %v1649 = vadd.f32 0.0, %v1648
        %v1650 = vpop.f32.mrb[0].mxu0
        %v1651 = vadd.f32 0.0, %v1650
        %1652 = vmatprep.mubr.f32.mxu0 %v631
        %1653 = vmatmul.mubr.f32.gmra.mrb[0].mxu0 %v629
        %v1654 = vpop.f32.mrb[0].mxu0
        %v1655 = vadd.f32 0.0, %v1654
        %v1656 = vpop.f32.mrb[0].mxu0
        %v1657 = vadd.f32 0.0, %v1656
        %1658 = vmatprep.mubr.f32.mxu0 %v777
        %1659 = vmatmul.mubr.f32.gmra.mrb[0].mxu0 %v776
        %v1660 = vpop.f32.mrb[0].mxu0
        %v1661 = vadd.f32 0.0, %v1660
        %v1662 = vpop.f32.mrb[0].mxu0
        %v1663 = vadd.f32 0.0, %v1662
        %1664 = vmatprep.mubr.f32.mxu0 %v635
        %1665 = vmatmul.mubr.f32.gmra.mrb[0].mxu0 %v633
        %v1666 = vpop.f32.mrb[0].mxu0
        %v1667 = vadd.f32 0.0, %v1666
        %v1668 = vpop.f32.mrb[0].mxu0
        %v1669 = vadd.f32 0.0, %v1668
        %1670 = vmatprep.mubr.f32.mxu0 %v779
        %1671 = vmatmul.mubr.f32.gmra.mrb[0].mxu0 %v778
        %v1672 = vpop.f32.mrb[0].mxu0
        %v1673 = vadd.f32 0.0, %v1672
        %v1674 = vpop.f32.mrb[0].mxu0
        %v1675 = vadd.f32 0.0, %v1674
        %1676 = vmatprep.mubr.f32.mxu0 %v639
        %1677 = vmatmul.mubr.f32.gmra.mrb[0].mxu0 %v637
        %v1678 = vpop.f32.mrb[0].mxu0
        %v1679 = vadd.f32 0.0, %v1678
        %v1680 = vpop.f32.mrb[0].mxu0
        %v1681 = vadd.f32 0.0, %v1680
        %1682 = vmatprep.mubr.f32.mxu0 %v781
        %1683 = vmatmul.mubr.f32.gmra.mrb[0].mxu0 %v780
        %v1684 = vpop.f32.mrb[0].mxu0
        %v1685 = vadd.f32 0.0, %v1684
        %v1686 = vpop.f32.mrb[0].mxu0
        %v1687 = vadd.f32 0.0, %v1686
        %1688 = vmatprep.mubr.f32.mxu0 %v643
        %1689 = vmatmul.mubr.f32.gmra.mrb[0].mxu0 %v641
        %v1690 = vpop.f32.mrb[0].mxu0
        %v1691 = vadd.f32 0.0, %v1690
        %v1692 = vpop.f32.mrb[0].mxu0
        %v1693 = vadd.f32 0.0, %v1692
        %1694 = vmatprep.mubr.f32.mxu0 %v783
        %1695 = vmatmul.mubr.f32.gmra.mrb[0].mxu0 %v782
        %v1696 = vpop.f32.mrb[0].mxu0
        %v1697 = vadd.f32 0.0, %v1696
        %v1698 = vpop.f32.mrb[0].mxu0
        %v1699 = vadd.f32 0.0, %v1698
        %1700 = vmatprep.mubr.f32.mxu0 %v647
        %1701 = vmatmul.mubr.f32.gmra.mrb[0].mxu0 %v645
        %v1702 = vpop.f32.mrb[0].mxu0
        %v1703 = vadd.f32 0.0, %v1702
        %v1704 = vpop.f32.mrb[0].mxu0
        %v1705 = vadd.f32 0.0, %v1704
        %1706 = vmatprep.mubr.f32.mxu0 %v785
        %1707 = vmatmul.mubr.f32.gmra.mrb[0].mxu0 %v784
        %v1708 = vpop.f32.mrb[0].mxu0
        %v1709 = vadd.f32 0.0, %v1708
        %v1710 = vpop.f32.mrb[0].mxu0
        %v1711 = vadd.f32 0.0, %v1710
        %1712 = vmatprep.mubr.f32.mxu0 %v651
        %1713 = vmatmul.mubr.f32.gmra.mrb[0].mxu0 %v649
        %v1714 = vpop.f32.mrb[0].mxu0
        %v1715 = vadd.f32 0.0, %v1714
        %v1716 = vpop.f32.mrb[0].mxu0
        %v1717 = vadd.f32 0.0, %v1716
        %1718 = vmatprep.mubr.f32.mxu0 %v787
        %1719 = vmatmul.mubr.f32.gmra.mrb[0].mxu0 %v786
        %v1720 = vpop.f32.mrb[0].mxu0
        %v1721 = vadd.f32 0.0, %v1720
        %v1722 = vpop.f32.mrb[0].mxu0
        %v1723 = vadd.f32 0.0, %v1722
        %1724 = vmatprep.mubr.f32.mxu0 %v655
        %1725 = vmatmul.mubr.f32.gmra.mrb[0].mxu0 %v653
        %v1726 = vpop.f32.mrb[0].mxu0
        %v1727 = vadd.f32 0.0, %v1726
        %v1728 = vpop.f32.mrb[0].mxu0
        %v1729 = vadd.f32 0.0, %v1728
        %1730 = vmatprep.mubr.f32.mxu0 %v789
        %1731 = vmatmul.mubr.f32.gmra.mrb[0].mxu0 %v788
        %v1732 = vpop.f32.mrb[0].mxu0
        %v1733 = vadd.f32 0.0, %v1732
        %v1734 = vpop.f32.mrb[0].mxu0
        %v1735 = vadd.f32 0.0, %v1734
        %1736 = vmatprep.mubr.f32.mxu0 %v659
        %1737 = vmatmul.mubr.f32.gmra.mrb[0].mxu0 %v657
        %v1738 = vpop.f32.mrb[0].mxu0
        %v1739 = vadd.f32 0.0, %v1738
        %v1740 = vpop.f32.mrb[0].mxu0
        %v1741 = vadd.f32 0.0, %v1740
        %1742 = vmatprep.mubr.f32.mxu0 %v791
        %1743 = vmatmul.mubr.f32.gmra.mrb[0].mxu0 %v790
        %v1744 = vpop.f32.mrb[0].mxu0
        %v1745 = vadd.f32 0.0, %v1744
        %v1746 = vpop.f32.mrb[0].mxu0
        %v1747 = vadd.f32 0.0, %v1746
        %1748 = vmatprep.mubr.f32.mxu0 %v663
        %1749 = vmatmul.mubr.f32.gmra.mrb[0].mxu0 %v661
        %v1750 = vpop.f32.mrb[0].mxu0
        %v1751 = vadd.f32 0.0, %v1750
        %v1752 = vpop.f32.mrb[0].mxu0
        %v1753 = vadd.f32 0.0, %v1752
        %1754 = vmatprep.mubr.f32.mxu0 %v793
        %1755 = vmatmul.mubr.f32.gmra.mrb[0].mxu0 %v792
        %v1756 = vpop.f32.mrb[0].mxu0
        %v1757 = vadd.f32 0.0, %v1756
        %v1758 = vpop.f32.mrb[0].mxu0
        %v1759 = vadd.f32 0.0, %v1758
        %1760 = vdwg.mxu0
        %v1761 = vadd.f32 %v1249, %v1571
        %v1762 = vadd.f32 %v1251, %v1573
        %v1763 = vadd.f32 %v1255, %v1577
        %v1764 = vadd.f32 %v1257, %v1579
        %v1765 = vadd.f32 %v1261, %v1583
        %v1766 = vadd.f32 %v1263, %v1585
        %v1767 = vadd.f32 %v1267, %v1589
        %v1768 = vadd.f32 %v1269, %v1591
        %v1769 = vadd.f32 %v1273, %v1595
        %v1770 = vadd.f32 %v1275, %v1597
        %v1771 = vadd.f32 %v1279, %v1601
        %v1772 = vadd.f32 %v1281, %v1603
        %v1773 = vadd.f32 %v1285, %v1607
        %v1774 = vadd.f32 %v1287, %v1609
        %v1775 = vadd.f32 %v1291, %v1613
        %v1776 = vadd.f32 %v1293, %v1615
        %v1777 = vadd.f32 %v1297, %v1619
        %v1778 = vadd.f32 %v1299, %v1621
        %v1779 = vadd.f32 %v1303, %v1625
        %v1780 = vadd.f32 %v1305, %v1627
        %v1781 = vadd.f32 %v1309, %v1631
        %v1782 = vadd.f32 %v1311, %v1633
        %v1783 = vadd.f32 %v1315, %v1637
        %v1784 = vadd.f32 %v1317, %v1639
        %v1785 = vadd.f32 %v1321, %v1643
        %v1786 = vadd.f32 %v1323, %v1645
        %v1787 = vadd.f32 %v1327, %v1649
        %v1788 = vadd.f32 %v1329, %v1651
        %v1789 = vadd.f32 %v1333, %v1655
        %v1790 = vadd.f32 %v1335, %v1657
        %v1791 = vadd.f32 %v1339, %v1661
        %v1792 = vadd.f32 %v1341, %v1663
        %v1793 = vadd.f32 %v1345, %v1667
        %v1794 = vadd.f32 %v1347, %v1669
        %v1795 = vadd.f32 %v1351, %v1673
        %v1796 = vadd.f32 %v1353, %v1675
        %v1797 = vadd.f32 %v1357, %v1679
        %v1798 = vadd.f32 %v1359, %v1681
        %v1799 = vadd.f32 %v1363, %v1685
        %v1800 = vadd.f32 %v1365, %v1687
        %v1801 = vadd.f32 %v1369, %v1691
        %v1802 = vadd.f32 %v1371, %v1693
        %v1803 = vadd.f32 %v1375, %v1697
        %v1804 = vadd.f32 %v1377, %v1699
        %v1805 = vadd.f32 %v1381, %v1703
        %v1806 = vadd.f32 %v1383, %v1705
        %v1807 = vadd.f32 %v1387, %v1709
        %v1808 = vadd.f32 %v1389, %v1711
        %v1809 = vadd.f32 %v1393, %v1715
        %v1810 = vadd.f32 %v1395, %v1717
        %v1811 = vadd.f32 %v1399, %v1721
        %v1812 = vadd.f32 %v1401, %v1723
        %v1813 = vadd.f32 %v1405, %v1727
        %v1814 = vadd.f32 %v1407, %v1729
        %v1815 = vadd.f32 %v1411, %v1733
        %v1816 = vadd.f32 %v1413, %v1735
        %v1817 = vadd.f32 %v1417, %v1739
        %v1818 = vadd.f32 %v1419, %v1741
        %v1819 = vadd.f32 %v1423, %v1745
        %v1820 = vadd.f32 %v1425, %v1747
        %v1821 = vadd.f32 %v1429, %v1751
        %v1822 = vadd.f32 %v1431, %v1753
        %v1823 = vadd.f32 %v1435, %v1757
        %v1824 = vadd.f32 %v1437, %v1759
        %s1825 = scalar_lea.vmem [#allocation5], 1536
        %v1826 = vld [vmem:[%s1825] sm:$0xff]
        %v1827 = vld [vmem:[%s1825 + $0x8] sm:$0xff]
        %v1828 = vld [vmem:[%s1825 + $0x10] sm:$0xff]
        %v1829 = vld [vmem:[%s1825 + $0x18] sm:$0xff]
        %v1830 = vld [vmem:[%s1825 + $0x20] sm:$0xff]
        %v1831 = vld [vmem:[%s1825 + $0x28] sm:$0xff]
        %v1832 = vld [vmem:[%s1825 + $0x30] sm:$0xff]
        %v1833 = vld [vmem:[%s1825 + $0x38] sm:$0xff]
        %v1834 = vld [vmem:[%s1825 + $0x40] sm:$0xff]
        %v1835 = vld [vmem:[%s1825 + $0x48] sm:$0xff]
        %v1836 = vld [vmem:[%s1825 + $0x50] sm:$0xff]
        %v1837 = vld [vmem:[%s1825 + $0x58] sm:$0xff]
        %v1838 = vld [vmem:[%s1825 + $0x60] sm:$0xff]
        %v1839 = vld [vmem:[%s1825 + $0x68] sm:$0xff]
        %v1840 = vld [vmem:[%s1825 + $0x70] sm:$0xff]
        %v1841 = vld [vmem:[%s1825 + $0x78] sm:$0xff]
        %v1842 = vld [vmem:[%s1825 + $0x80] sm:$0xff]
        %v1843 = vld [vmem:[%s1825 + $0x88] sm:$0xff]
        %v1844 = vld [vmem:[%s1825 + $0x90] sm:$0xff]
        %v1845 = vld [vmem:[%s1825 + $0x98] sm:$0xff]
        %v1846 = vld [vmem:[%s1825 + $0xa0] sm:$0xff]
        %v1847 = vld [vmem:[%s1825 + $0xa8] sm:$0xff]
        %v1848 = vld [vmem:[%s1825 + $0xb0] sm:$0xff]
        %v1849 = vld [vmem:[%s1825 + $0xb8] sm:$0xff]
        %v1850 = vld [vmem:[%s1825 + $0xc0] sm:$0xff]
        %v1851 = vld [vmem:[%s1825 + $0xc8] sm:$0xff]
        %v1852 = vld [vmem:[%s1825 + $0xd0] sm:$0xff]
        %v1853 = vld [vmem:[%s1825 + $0xd8] sm:$0xff]
        %v1854 = vld [vmem:[%s1825 + $0xe0] sm:$0xff]
        %v1855 = vld [vmem:[%s1825 + $0xe8] sm:$0xff]
        %v1856 = vld [vmem:[%s1825 + $0xf0] sm:$0xff]
        %v1857 = vld [vmem:[%s1825 + $0xf8] sm:$0xff]
        %v1858 = vld [vmem:[%s1825 + $0x100] sm:$0xff]
        %v1859 = vld [vmem:[%s1825 + $0x108] sm:$0xff]
        %v1860 = vld [vmem:[%s1825 + $0x110] sm:$0xff]
        %v1861 = vld [vmem:[%s1825 + $0x118] sm:$0xff]
        %v1862 = vld [vmem:[%s1825 + $0x120] sm:$0xff]
        %v1863 = vld [vmem:[%s1825 + $0x128] sm:$0xff]
        %v1864 = vld [vmem:[%s1825 + $0x130] sm:$0xff]
        %v1865 = vld [vmem:[%s1825 + $0x138] sm:$0xff]
        %v1866 = vld [vmem:[%s1825 + $0x140] sm:$0xff]
        %v1867 = vld [vmem:[%s1825 + $0x148] sm:$0xff]
        %v1868 = vld [vmem:[%s1825 + $0x150] sm:$0xff]
        %v1869 = vld [vmem:[%s1825 + $0x158] sm:$0xff]
        %v1870 = vld [vmem:[%s1825 + $0x160] sm:$0xff]
        %v1871 = vld [vmem:[%s1825 + $0x168] sm:$0xff]
        %v1872 = vld [vmem:[%s1825 + $0x170] sm:$0xff]
        %v1873 = vld [vmem:[%s1825 + $0x178] sm:$0xff]
        %v1874 = vld [vmem:[%s1825 + $0x180] sm:$0xff]
        %v1875 = vld [vmem:[%s1825 + $0x188] sm:$0xff]
        %v1876 = vld [vmem:[%s1825 + $0x190] sm:$0xff]
        %v1877 = vld [vmem:[%s1825 + $0x198] sm:$0xff]
        %v1878 = vld [vmem:[%s1825 + $0x1a0] sm:$0xff]
        %v1879 = vld [vmem:[%s1825 + $0x1a8] sm:$0xff]
        %v1880 = vld [vmem:[%s1825 + $0x1b0] sm:$0xff]
        %v1881 = vld [vmem:[%s1825 + $0x1b8] sm:$0xff]
        %v1882 = vld [vmem:[%s1825 + $0x1c0] sm:$0xff]
        %v1883 = vld [vmem:[%s1825 + $0x1c8] sm:$0xff]
        %v1884 = vld [vmem:[%s1825 + $0x1d0] sm:$0xff]
        %v1885 = vld [vmem:[%s1825 + $0x1d8] sm:$0xff]
        %v1886 = vld [vmem:[%s1825 + $0x1e0] sm:$0xff]
        %v1887 = vld [vmem:[%s1825 + $0x1e8] sm:$0xff]
        %v1888 = vld [vmem:[%s1825 + $0x1f0] sm:$0xff]
        %v1889 = vld [vmem:[%s1825 + $0x1f8] sm:$0xff]
        %1890 = vmatprep.subr.mxu0 %v1827
        %1891 = vmatpush1.msra.mxu0 %v1826
        %1892 = vmatprep.subr.mxu0 %v1829
        %1893 = vmatpush1.msra.mxu0 %v1828
        %1894 = vmatprep.subr.mxu0 %v1831
        %1895 = vmatpush1.msra.mxu0 %v1830
        %1896 = vmatprep.subr.mxu0 %v1833
        %1897 = vmatpush1.msra.mxu0 %v1832
        %1898 = vmatprep.subr.mxu0 %v1835
        %1899 = vmatpush1.msra.mxu0 %v1834
        %1900 = vmatprep.subr.mxu0 %v1837
        %1901 = vmatpush1.msra.mxu0 %v1836
        %1902 = vmatprep.subr.mxu0 %v1839
        %1903 = vmatpush1.msra.mxu0 %v1838
        %1904 = vmatprep.subr.mxu0 %v1841
        %1905 = vmatpush1.msra.mxu0 %v1840
        %1906 = vmatprep.subr.mxu0 %v1843
        %1907 = vmatpush1.msra.mxu0 %v1842
        %1908 = vmatprep.subr.mxu0 %v1845
        %1909 = vmatpush1.msra.mxu0 %v1844
        %1910 = vmatprep.subr.mxu0 %v1847
        %1911 = vmatpush1.msra.mxu0 %v1846
        %1912 = vmatprep.subr.mxu0 %v1849
        %1913 = vmatpush1.msra.mxu0 %v1848
        %1914 = vmatprep.subr.mxu0 %v1851
        %1915 = vmatpush1.msra.mxu0 %v1850
        %1916 = vmatprep.subr.mxu0 %v1853
        %1917 = vmatpush1.msra.mxu0 %v1852
        %1918 = vmatprep.subr.mxu0 %v1855
        %1919 = vmatpush1.msra.mxu0 %v1854
        %1920 = vmatprep.subr.mxu0 %v1857
        %1921 = vmatpush1.msra.mxu0 %v1856
        %1922 = vmatprep.subr.mxu0 %v1859
        %1923 = vmatpush1.msra.mxu0 %v1858
        %1924 = vmatprep.subr.mxu0 %v1861
        %1925 = vmatpush1.msra.mxu0 %v1860
        %1926 = vmatprep.subr.mxu0 %v1863
        %1927 = vmatpush1.msra.mxu0 %v1862
        %1928 = vmatprep.subr.mxu0 %v1865
        %1929 = vmatpush1.msra.mxu0 %v1864
        %1930 = vmatprep.subr.mxu0 %v1867
        %1931 = vmatpush1.msra.mxu0 %v1866
        %1932 = vmatprep.subr.mxu0 %v1869
        %1933 = vmatpush1.msra.mxu0 %v1868
        %1934 = vmatprep.subr.mxu0 %v1871
        %1935 = vmatpush1.msra.mxu0 %v1870
        %1936 = vmatprep.subr.mxu0 %v1873
        %1937 = vmatpush1.msra.mxu0 %v1872
        %1938 = vmatprep.subr.mxu0 %v1875
        %1939 = vmatpush1.msra.mxu0 %v1874
        %1940 = vmatprep.subr.mxu0 %v1877
        %1941 = vmatpush1.msra.mxu0 %v1876
        %1942 = vmatprep.subr.mxu0 %v1879
        %1943 = vmatpush1.msra.mxu0 %v1878
        %1944 = vmatprep.subr.mxu0 %v1881
        %1945 = vmatpush1.msra.mxu0 %v1880
        %1946 = vmatprep.subr.mxu0 %v1883
        %1947 = vmatpush1.msra.mxu0 %v1882
        %1948 = vmatprep.subr.mxu0 %v1885
        %1949 = vmatpush1.msra.mxu0 %v1884
        %1950 = vmatprep.subr.mxu0 %v1887
        %1951 = vmatpush1.msra.mxu0 %v1886
        %1952 = vmatprep.subr.mxu0 %v1889
        %1953 = vmatpush1.msra.mxu0 %v1888
        %1954 = vmatprep.mubr.f32.mxu0 %v574
        %1955 = vmatmul.mubr.f32.gmra.mrb[0].mxu0 %v573
        %v1956 = vpop.f32.mrb[0].mxu0
        %v1957 = vadd.f32 0.0, %v1956
        %v1958 = vpop.f32.mrb[0].mxu0
        %v1959 = vadd.f32 0.0, %v1958
        %1960 = vmatprep.mubr.f32.mxu0 %v422
        %1961 = vmatmul.mubr.f32.gmra.mrb[0].mxu0 %v420
        %v1962 = vpop.f32.mrb[0].mxu0
        %v1963 = vadd.f32 0.0, %v1962
        %v1964 = vpop.f32.mrb[0].mxu0
        %v1965 = vadd.f32 0.0, %v1964
        %1966 = vmatprep.mubr.f32.mxu0 %v572
        %1967 = vmatmul.mubr.f32.gmra.mrb[0].mxu0 %v571
        %v1968 = vpop.f32.mrb[0].mxu0
        %v1969 = vadd.f32 0.0, %v1968
        %v1970 = vpop.f32.mrb[0].mxu0
        %v1971 = vadd.f32 0.0, %v1970
        %1972 = vmatprep.mubr.f32.mxu0 %v416
        %1973 = vmatmul.mubr.f32.gmra.mrb[0].mxu0 %v414
        %v1974 = vpop.f32.mrb[0].mxu0
        %v1975 = vadd.f32 0.0, %v1974
        %v1976 = vpop.f32.mrb[0].mxu0
        %v1977 = vadd.f32 0.0, %v1976
        %1978 = vmatprep.mubr.f32.mxu0 %v576
        %1979 = vmatmul.mubr.f32.gmra.mrb[0].mxu0 %v575
        %v1980 = vpop.f32.mrb[0].mxu0
        %v1981 = vadd.f32 0.0, %v1980
        %v1982 = vpop.f32.mrb[0].mxu0
        %v1983 = vadd.f32 0.0, %v1982
        %1984 = vmatprep.mubr.f32.mxu0 %v428
        %1985 = vmatmul.mubr.f32.gmra.mrb[0].mxu0 %v426
        %v1986 = vpop.f32.mrb[0].mxu0
        %v1987 = vadd.f32 0.0, %v1986
        %v1988 = vpop.f32.mrb[0].mxu0
        %v1989 = vadd.f32 0.0, %v1988
        %1990 = vmatprep.mubr.f32.mxu0 %v578
        %1991 = vmatmul.mubr.f32.gmra.mrb[0].mxu0 %v577
        %v1992 = vpop.f32.mrb[0].mxu0
        %v1993 = vadd.f32 0.0, %v1992
        %v1994 = vpop.f32.mrb[0].mxu0
        %v1995 = vadd.f32 0.0, %v1994
        %1996 = vmatprep.mubr.f32.mxu0 %v434
        %1997 = vmatmul.mubr.f32.gmra.mrb[0].mxu0 %v432
        %v1998 = vpop.f32.mrb[0].mxu0
        %v1999 = vadd.f32 0.0, %v1998
        %v2000 = vpop.f32.mrb[0].mxu0
        %v2001 = vadd.f32 0.0, %v2000
        %2002 = vmatprep.mubr.f32.mxu0 %v580
        %2003 = vmatmul.mubr.f32.gmra.mrb[0].mxu0 %v579
        %v2004 = vpop.f32.mrb[0].mxu0
        %v2005 = vadd.f32 0.0, %v2004
        %v2006 = vpop.f32.mrb[0].mxu0
        %v2007 = vadd.f32 0.0, %v2006
        %2008 = vmatprep.mubr.f32.mxu0 %v440
        %2009 = vmatmul.mubr.f32.gmra.mrb[0].mxu0 %v438
        %v2010 = vpop.f32.mrb[0].mxu0
        %v2011 = vadd.f32 0.0, %v2010
        %v2012 = vpop.f32.mrb[0].mxu0
        %v2013 = vadd.f32 0.0, %v2012
        %2014 = vmatprep.mubr.f32.mxu0 %v582
        %2015 = vmatmul.mubr.f32.gmra.mrb[0].mxu0 %v581
        %v2016 = vpop.f32.mrb[0].mxu0
        %v2017 = vadd.f32 0.0, %v2016
        %v2018 = vpop.f32.mrb[0].mxu0
        %v2019 = vadd.f32 0.0, %v2018
        %2020 = vmatprep.mubr.f32.mxu0 %v446
        %2021 = vmatmul.mubr.f32.gmra.mrb[0].mxu0 %v444
        %v2022 = vpop.f32.mrb[0].mxu0
        %v2023 = vadd.f32 0.0, %v2022
        %v2024 = vpop.f32.mrb[0].mxu0
        %v2025 = vadd.f32 0.0, %v2024
        %2026 = vmatprep.mubr.f32.mxu0 %v584
        %2027 = vmatmul.mubr.f32.gmra.mrb[0].mxu0 %v583
        %v2028 = vpop.f32.mrb[0].mxu0
        %v2029 = vadd.f32 0.0, %v2028
        %v2030 = vpop.f32.mrb[0].mxu0
        %v2031 = vadd.f32 0.0, %v2030
        %2032 = vmatprep.mubr.f32.mxu0 %v452
        %2033 = vmatmul.mubr.f32.gmra.mrb[0].mxu0 %v450
        %v2034 = vpop.f32.mrb[0].mxu0
        %v2035 = vadd.f32 0.0, %v2034
        %v2036 = vpop.f32.mrb[0].mxu0
        %v2037 = vadd.f32 0.0, %v2036
        %2038 = vmatprep.mubr.f32.mxu0 %v586
        %2039 = vmatmul.mubr.f32.gmra.mrb[0].mxu0 %v585
        %v2040 = vpop.f32.mrb[0].mxu0
        %v2041 = vadd.f32 0.0, %v2040
        %v2042 = vpop.f32.mrb[0].mxu0
        %v2043 = vadd.f32 0.0, %v2042
        %2044 = vmatprep.mubr.f32.mxu0 %v458
        %2045 = vmatmul.mubr.f32.gmra.mrb[0].mxu0 %v456
        %v2046 = vpop.f32.mrb[0].mxu0
        %v2047 = vadd.f32 0.0, %v2046
        %v2048 = vpop.f32.mrb[0].mxu0
        %v2049 = vadd.f32 0.0, %v2048
        %2050 = vmatprep.mubr.f32.mxu0 %v588
        %2051 = vmatmul.mubr.f32.gmra.mrb[0].mxu0 %v587
        %v2052 = vpop.f32.mrb[0].mxu0
        %v2053 = vadd.f32 0.0, %v2052
        %v2054 = vpop.f32.mrb[0].mxu0
        %v2055 = vadd.f32 0.0, %v2054
        %2056 = vmatprep.mubr.f32.mxu0 %v464
        %2057 = vmatmul.mubr.f32.gmra.mrb[0].mxu0 %v462
        %v2058 = vpop.f32.mrb[0].mxu0
        %v2059 = vadd.f32 0.0, %v2058
        %v2060 = vpop.f32.mrb[0].mxu0
        %v2061 = vadd.f32 0.0, %v2060
        %2062 = vmatprep.mubr.f32.mxu0 %v590
        %2063 = vmatmul.mubr.f32.gmra.mrb[0].mxu0 %v589
        %v2064 = vpop.f32.mrb[0].mxu0
        %v2065 = vadd.f32 0.0, %v2064
        %v2066 = vpop.f32.mrb[0].mxu0
        %v2067 = vadd.f32 0.0, %v2066
        %2068 = vmatprep.mubr.f32.mxu0 %v470
        %2069 = vmatmul.mubr.f32.gmra.mrb[0].mxu0 %v468
        %v2070 = vpop.f32.mrb[0].mxu0
        %v2071 = vadd.f32 0.0, %v2070
        %v2072 = vpop.f32.mrb[0].mxu0
        %v2073 = vadd.f32 0.0, %v2072
        %2074 = vmatprep.mubr.f32.mxu0 %v592
        %2075 = vmatmul.mubr.f32.gmra.mrb[0].mxu0 %v591
        %v2076 = vpop.f32.mrb[0].mxu0
        %v2077 = vadd.f32 0.0, %v2076
        %v2078 = vpop.f32.mrb[0].mxu0
        %v2079 = vadd.f32 0.0, %v2078
        %2080 = vmatprep.mubr.f32.mxu0 %v476
        %2081 = vmatmul.mubr.f32.gmra.mrb[0].mxu0 %v474
        %v2082 = vpop.f32.mrb[0].mxu0
        %v2083 = vadd.f32 0.0, %v2082
        %v2084 = vpop.f32.mrb[0].mxu0
        %v2085 = vadd.f32 0.0, %v2084
        %2086 = vmatprep.mubr.f32.mxu0 %v594
        %2087 = vmatmul.mubr.f32.gmra.mrb[0].mxu0 %v593
        %v2088 = vpop.f32.mrb[0].mxu0
        %v2089 = vadd.f32 0.0, %v2088
        %v2090 = vpop.f32.mrb[0].mxu0
        %v2091 = vadd.f32 0.0, %v2090
        %2092 = vmatprep.mubr.f32.mxu0 %v482
        %2093 = vmatmul.mubr.f32.gmra.mrb[0].mxu0 %v480
        %v2094 = vpop.f32.mrb[0].mxu0
        %v2095 = vadd.f32 0.0, %v2094
        %v2096 = vpop.f32.mrb[0].mxu0
        %v2097 = vadd.f32 0.0, %v2096
        %2098 = vmatprep.mubr.f32.mxu0 %v596
        %2099 = vmatmul.mubr.f32.gmra.mrb[0].mxu0 %v595
        %v2100 = vpop.f32.mrb[0].mxu0
        %v2101 = vadd.f32 0.0, %v2100
        %v2102 = vpop.f32.mrb[0].mxu0
        %v2103 = vadd.f32 0.0, %v2102
        %2104 = vmatprep.mubr.f32.mxu0 %v488
        %2105 = vmatmul.mubr.f32.gmra.mrb[0].mxu0 %v486
        %v2106 = vpop.f32.mrb[0].mxu0
        %v2107 = vadd.f32 0.0, %v2106
        %v2108 = vpop.f32.mrb[0].mxu0
        %v2109 = vadd.f32 0.0, %v2108
        %2110 = vmatprep.mubr.f32.mxu0 %v598
        %2111 = vmatmul.mubr.f32.gmra.mrb[0].mxu0 %v597
        %v2112 = vpop.f32.mrb[0].mxu0
        %v2113 = vadd.f32 0.0, %v2112
        %v2114 = vpop.f32.mrb[0].mxu0
        %v2115 = vadd.f32 0.0, %v2114
        %2116 = vmatprep.mubr.f32.mxu0 %v494
        %2117 = vmatmul.mubr.f32.gmra.mrb[0].mxu0 %v492
        %v2118 = vpop.f32.mrb[0].mxu0
        %v2119 = vadd.f32 0.0, %v2118
        %v2120 = vpop.f32.mrb[0].mxu0
        %v2121 = vadd.f32 0.0, %v2120
        %2122 = vmatprep.mubr.f32.mxu0 %v600
        %2123 = vmatmul.mubr.f32.gmra.mrb[0].mxu0 %v599
        %v2124 = vpop.f32.mrb[0].mxu0
        %v2125 = vadd.f32 0.0, %v2124
        %v2126 = vpop.f32.mrb[0].mxu0
        %v2127 = vadd.f32 0.0, %v2126
        %2128 = vmatprep.mubr.f32.mxu0 %v500
        %2129 = vmatmul.mubr.f32.gmra.mrb[0].mxu0 %v498
        %v2130 = vpop.f32.mrb[0].mxu0
        %v2131 = vadd.f32 0.0, %v2130
        %v2132 = vpop.f32.mrb[0].mxu0
        %v2133 = vadd.f32 0.0, %v2132
        %2134 = vmatprep.mubr.f32.mxu0 %v602
        %2135 = vmatmul.mubr.f32.gmra.mrb[0].mxu0 %v601
        %v2136 = vpop.f32.mrb[0].mxu0
        %v2137 = vadd.f32 0.0, %v2136
        %v2138 = vpop.f32.mrb[0].mxu0
        %v2139 = vadd.f32 0.0, %v2138
        %2140 = vmatprep.mubr.f32.mxu0 %v506
        %2141 = vmatmul.mubr.f32.gmra.mrb[0].mxu0 %v504
        %v2142 = vpop.f32.mrb[0].mxu0
        %v2143 = vadd.f32 0.0, %v2142
        %v2144 = vpop.f32.mrb[0].mxu0
        %v2145 = vadd.f32 0.0, %v2144
        %2146 = vdwg.mxu0
        %v2147 = vadd.f32 %v1761, %v1957
        %v2148 = vadd.f32 %v1762, %v1959
        %v2149 = vadd.f32 %v1763, %v1963
        %v2150 = vadd.f32 %v1764, %v1965
        %v2151 = vadd.f32 %v1765, %v1969
        %v2152 = vadd.f32 %v1766, %v1971
        %v2153 = vadd.f32 %v1767, %v1975
        %v2154 = vadd.f32 %v1768, %v1977
        %v2155 = vadd.f32 %v1769, %v1981
        %v2156 = vadd.f32 %v1770, %v1983
        %v2157 = vadd.f32 %v1771, %v1987
        %v2158 = vadd.f32 %v1772, %v1989
        %v2159 = vadd.f32 %v1773, %v1993
        %v2160 = vadd.f32 %v1774, %v1995
        %v2161 = vadd.f32 %v1775, %v1999
        %v2162 = vadd.f32 %v1776, %v2001
        %v2163 = vadd.f32 %v1777, %v2005
        %v2164 = vadd.f32 %v1778, %v2007
        %v2165 = vadd.f32 %v1779, %v2011
        %v2166 = vadd.f32 %v1780, %v2013
        %v2167 = vadd.f32 %v1781, %v2017
        %v2168 = vadd.f32 %v1782, %v2019
        %v2169 = vadd.f32 %v1783, %v2023
        %v2170 = vadd.f32 %v1784, %v2025
        %v2171 = vadd.f32 %v1785, %v2029
        %v2172 = vadd.f32 %v1786, %v2031
        %v2173 = vadd.f32 %v1787, %v2035
        %v2174 = vadd.f32 %v1788, %v2037
        %v2175 = vadd.f32 %v1789, %v2041
        %v2176 = vadd.f32 %v1790, %v2043
        %v2177 = vadd.f32 %v1791, %v2047
        %v2178 = vadd.f32 %v1792, %v2049
        %v2179 = vadd.f32 %v1793, %v2053
        %v2180 = vadd.f32 %v1794, %v2055
        %v2181 = vadd.f32 %v1795, %v2059
        %v2182 = vadd.f32 %v1796, %v2061
        %v2183 = vadd.f32 %v1797, %v2065
        %v2184 = vadd.f32 %v1798, %v2067
        %v2185 = vadd.f32 %v1799, %v2071
        %v2186 = vadd.f32 %v1800, %v2073
        %v2187 = vadd.f32 %v1801, %v2077
        %v2188 = vadd.f32 %v1802, %v2079
        %v2189 = vadd.f32 %v1803, %v2083
        %v2190 = vadd.f32 %v1804, %v2085
        %v2191 = vadd.f32 %v1805, %v2089
        %v2192 = vadd.f32 %v1806, %v2091
        %v2193 = vadd.f32 %v1807, %v2095
        %v2194 = vadd.f32 %v1808, %v2097
        %v2195 = vadd.f32 %v1809, %v2101
        %v2196 = vadd.f32 %v1810, %v2103
        %v2197 = vadd.f32 %v1811, %v2107
        %v2198 = vadd.f32 %v1812, %v2109
        %v2199 = vadd.f32 %v1813, %v2113
        %v2200 = vadd.f32 %v1814, %v2115
        %v2201 = vadd.f32 %v1815, %v2119
        %v2202 = vadd.f32 %v1816, %v2121
        %v2203 = vadd.f32 %v1817, %v2125
        %v2204 = vadd.f32 %v1818, %v2127
        %v2205 = vadd.f32 %v1819, %v2131
        %v2206 = vadd.f32 %v1820, %v2133
        %v2207 = vadd.f32 %v1821, %v2137
        %v2208 = vadd.f32 %v1822, %v2139
        %v2209 = vadd.f32 %v1823, %v2143
        %v2210 = vadd.f32 %v1824, %v2145
        %s2211 = scalar_lea.vmem [#allocation5], 2048
        %v2212 = vld [vmem:[%s2211] sm:$0xff]
        %v2213 = vld [vmem:[%s2211 + $0x8] sm:$0xff]
        %v2214 = vld [vmem:[%s2211 + $0x10] sm:$0xff]
        %v2215 = vld [vmem:[%s2211 + $0x18] sm:$0xff]
        %v2216 = vld [vmem:[%s2211 + $0x20] sm:$0xff]
        %v2217 = vld [vmem:[%s2211 + $0x28] sm:$0xff]
        %v2218 = vld [vmem:[%s2211 + $0x30] sm:$0xff]
        %v2219 = vld [vmem:[%s2211 + $0x38] sm:$0xff]
        %v2220 = vld [vmem:[%s2211 + $0x40] sm:$0xff]
        %v2221 = vld [vmem:[%s2211 + $0x48] sm:$0xff]
        %v2222 = vld [vmem:[%s2211 + $0x50] sm:$0xff]
        %v2223 = vld [vmem:[%s2211 + $0x58] sm:$0xff]
        %v2224 = vld [vmem:[%s2211 + $0x60] sm:$0xff]
        %v2225 = vld [vmem:[%s2211 + $0x68] sm:$0xff]
        %v2226 = vld [vmem:[%s2211 + $0x70] sm:$0xff]
        %v2227 = vld [vmem:[%s2211 + $0x78] sm:$0xff]
        %v2228 = vld [vmem:[%s2211 + $0x80] sm:$0xff]
        %v2229 = vld [vmem:[%s2211 + $0x88] sm:$0xff]
        %v2230 = vld [vmem:[%s2211 + $0x90] sm:$0xff]
        %v2231 = vld [vmem:[%s2211 + $0x98] sm:$0xff]
        %v2232 = vld [vmem:[%s2211 + $0xa0] sm:$0xff]
        %v2233 = vld [vmem:[%s2211 + $0xa8] sm:$0xff]
        %v2234 = vld [vmem:[%s2211 + $0xb0] sm:$0xff]
        %v2235 = vld [vmem:[%s2211 + $0xb8] sm:$0xff]
        %v2236 = vld [vmem:[%s2211 + $0xc0] sm:$0xff]
        %v2237 = vld [vmem:[%s2211 + $0xc8] sm:$0xff]
        %v2238 = vld [vmem:[%s2211 + $0xd0] sm:$0xff]
        %v2239 = vld [vmem:[%s2211 + $0xd8] sm:$0xff]
        %v2240 = vld [vmem:[%s2211 + $0xe0] sm:$0xff]
        %v2241 = vld [vmem:[%s2211 + $0xe8] sm:$0xff]
        %v2242 = vld [vmem:[%s2211 + $0xf0] sm:$0xff]
        %v2243 = vld [vmem:[%s2211 + $0xf8] sm:$0xff]
        %v2244 = vld [vmem:[%s2211 + $0x100] sm:$0xff]
        %v2245 = vld [vmem:[%s2211 + $0x108] sm:$0xff]
        %v2246 = vld [vmem:[%s2211 + $0x110] sm:$0xff]
        %v2247 = vld [vmem:[%s2211 + $0x118] sm:$0xff]
        %v2248 = vld [vmem:[%s2211 + $0x120] sm:$0xff]
        %v2249 = vld [vmem:[%s2211 + $0x128] sm:$0xff]
        %v2250 = vld [vmem:[%s2211 + $0x130] sm:$0xff]
        %v2251 = vld [vmem:[%s2211 + $0x138] sm:$0xff]
        %v2252 = vld [vmem:[%s2211 + $0x140] sm:$0xff]
        %v2253 = vld [vmem:[%s2211 + $0x148] sm:$0xff]
        %v2254 = vld [vmem:[%s2211 + $0x150] sm:$0xff]
        %v2255 = vld [vmem:[%s2211 + $0x158] sm:$0xff]
        %v2256 = vld [vmem:[%s2211 + $0x160] sm:$0xff]
        %v2257 = vld [vmem:[%s2211 + $0x168] sm:$0xff]
        %v2258 = vld [vmem:[%s2211 + $0x170] sm:$0xff]
        %v2259 = vld [vmem:[%s2211 + $0x178] sm:$0xff]
        %v2260 = vld [vmem:[%s2211 + $0x180] sm:$0xff]
        %v2261 = vld [vmem:[%s2211 + $0x188] sm:$0xff]
        %v2262 = vld [vmem:[%s2211 + $0x190] sm:$0xff]
        %v2263 = vld [vmem:[%s2211 + $0x198] sm:$0xff]
        %v2264 = vld [vmem:[%s2211 + $0x1a0] sm:$0xff]
        %v2265 = vld [vmem:[%s2211 + $0x1a8] sm:$0xff]
        %v2266 = vld [vmem:[%s2211 + $0x1b0] sm:$0xff]
        %v2267 = vld [vmem:[%s2211 + $0x1b8] sm:$0xff]
        %v2268 = vld [vmem:[%s2211 + $0x1c0] sm:$0xff]
        %v2269 = vld [vmem:[%s2211 + $0x1c8] sm:$0xff]
        %v2270 = vld [vmem:[%s2211 + $0x1d0] sm:$0xff]
        %v2271 = vld [vmem:[%s2211 + $0x1d8] sm:$0xff]
        %v2272 = vld [vmem:[%s2211 + $0x1e0] sm:$0xff]
        %v2273 = vld [vmem:[%s2211 + $0x1e8] sm:$0xff]
        %v2274 = vld [vmem:[%s2211 + $0x1f0] sm:$0xff]
        %v2275 = vld [vmem:[%s2211 + $0x1f8] sm:$0xff]
        %2276 = vmatprep.subr.mxu0 %v2213
        %2277 = vmatpush1.msra.mxu0 %v2212
        %2278 = vmatprep.subr.mxu0 %v2215
        %2279 = vmatpush1.msra.mxu0 %v2214
        %2280 = vmatprep.subr.mxu0 %v2217
        %2281 = vmatpush1.msra.mxu0 %v2216
        %2282 = vmatprep.subr.mxu0 %v2219
        %2283 = vmatpush1.msra.mxu0 %v2218
        %2284 = vmatprep.subr.mxu0 %v2221
        %2285 = vmatpush1.msra.mxu0 %v2220
        %2286 = vmatprep.subr.mxu0 %v2223
        %2287 = vmatpush1.msra.mxu0 %v2222
        %2288 = vmatprep.subr.mxu0 %v2225
        %2289 = vmatpush1.msra.mxu0 %v2224
        %2290 = vmatprep.subr.mxu0 %v2227
        %2291 = vmatpush1.msra.mxu0 %v2226
        %2292 = vmatprep.subr.mxu0 %v2229
        %2293 = vmatpush1.msra.mxu0 %v2228
        %2294 = vmatprep.subr.mxu0 %v2231
        %2295 = vmatpush1.msra.mxu0 %v2230
        %2296 = vmatprep.subr.mxu0 %v2233
        %2297 = vmatpush1.msra.mxu0 %v2232
        %2298 = vmatprep.subr.mxu0 %v2235
        %2299 = vmatpush1.msra.mxu0 %v2234
        %2300 = vmatprep.subr.mxu0 %v2237
        %2301 = vmatpush1.msra.mxu0 %v2236
        %2302 = vmatprep.subr.mxu0 %v2239
        %2303 = vmatpush1.msra.mxu0 %v2238
        %2304 = vmatprep.subr.mxu0 %v2241
        %2305 = vmatpush1.msra.mxu0 %v2240
        %2306 = vmatprep.subr.mxu0 %v2243
        %2307 = vmatpush1.msra.mxu0 %v2242
        %2308 = vmatprep.subr.mxu0 %v2245
        %2309 = vmatpush1.msra.mxu0 %v2244
        %2310 = vmatprep.subr.mxu0 %v2247
        %2311 = vmatpush1.msra.mxu0 %v2246
        %2312 = vmatprep.subr.mxu0 %v2249
        %2313 = vmatpush1.msra.mxu0 %v2248
        %2314 = vmatprep.subr.mxu0 %v2251
        %2315 = vmatpush1.msra.mxu0 %v2250
        %2316 = vmatprep.subr.mxu0 %v2253
        %2317 = vmatpush1.msra.mxu0 %v2252
        %2318 = vmatprep.subr.mxu0 %v2255
        %2319 = vmatpush1.msra.mxu0 %v2254
        %2320 = vmatprep.subr.mxu0 %v2257
        %2321 = vmatpush1.msra.mxu0 %v2256
        %2322 = vmatprep.subr.mxu0 %v2259
        %2323 = vmatpush1.msra.mxu0 %v2258
        %2324 = vmatprep.subr.mxu0 %v2261
        %2325 = vmatpush1.msra.mxu0 %v2260
        %2326 = vmatprep.subr.mxu0 %v2263
        %2327 = vmatpush1.msra.mxu0 %v2262
        %2328 = vmatprep.subr.mxu0 %v2265
        %2329 = vmatpush1.msra.mxu0 %v2264
        %2330 = vmatprep.subr.mxu0 %v2267
        %2331 = vmatpush1.msra.mxu0 %v2266
        %2332 = vmatprep.subr.mxu0 %v2269
        %2333 = vmatpush1.msra.mxu0 %v2268
        %2334 = vmatprep.subr.mxu0 %v2271
        %2335 = vmatpush1.msra.mxu0 %v2270
        %2336 = vmatprep.subr.mxu0 %v2273
        %2337 = vmatpush1.msra.mxu0 %v2272
        %2338 = vmatprep.subr.mxu0 %v2275
        %2339 = vmatpush1.msra.mxu0 %v2274
        %2340 = vmatprep.mubr.f32.mxu0 %v219
        %2341 = vmatmul.mubr.f32.gmra.mrb[0].mxu0 %v218
        %v2342 = vpop.f32.mrb[0].mxu0
        %v2343 = vadd.f32 0.0, %v2342
        %v2344 = vpop.f32.mrb[0].mxu0
        %v2345 = vadd.f32 0.0, %v2344
        %2346 = vmatprep.mubr.f32.mxu0 %v221
        %2347 = vmatmul.mubr.f32.gmra.mrb[0].mxu0 %v220
        %v2348 = vpop.f32.mrb[0].mxu0
        %v2349 = vadd.f32 0.0, %v2348
        %v2350 = vpop.f32.mrb[0].mxu0
        %v2351 = vadd.f32 0.0, %v2350
        %2352 = vmatprep.mubr.f32.mxu0 %v223
        %2353 = vmatmul.mubr.f32.gmra.mrb[0].mxu0 %v222
        %v2354 = vpop.f32.mrb[0].mxu0
        %v2355 = vadd.f32 0.0, %v2354
        %v2356 = vpop.f32.mrb[0].mxu0
        %v2357 = vadd.f32 0.0, %v2356
        %2358 = vmatprep.mubr.f32.mxu0 %v225
        %2359 = vmatmul.mubr.f32.gmra.mrb[0].mxu0 %v224
        %v2360 = vpop.f32.mrb[0].mxu0
        %v2361 = vadd.f32 0.0, %v2360
        %v2362 = vpop.f32.mrb[0].mxu0
        %v2363 = vadd.f32 0.0, %v2362
        %2364 = vmatprep.mubr.f32.mxu0 %v227
        %2365 = vmatmul.mubr.f32.gmra.mrb[0].mxu0 %v226
        %v2366 = vpop.f32.mrb[0].mxu0
        %v2367 = vadd.f32 0.0, %v2366
        %v2368 = vpop.f32.mrb[0].mxu0
        %v2369 = vadd.f32 0.0, %v2368
        %2370 = vmatprep.mubr.f32.mxu0 %v229
        %2371 = vmatmul.mubr.f32.gmra.mrb[0].mxu0 %v228
        %v2372 = vpop.f32.mrb[0].mxu0
        %v2373 = vadd.f32 0.0, %v2372
        %v2374 = vpop.f32.mrb[0].mxu0
        %v2375 = vadd.f32 0.0, %v2374
        %2376 = vmatprep.mubr.f32.mxu0 %v231
        %2377 = vmatmul.mubr.f32.gmra.mrb[0].mxu0 %v230
        %v2378 = vpop.f32.mrb[0].mxu0
        %v2379 = vadd.f32 0.0, %v2378
        %v2380 = vpop.f32.mrb[0].mxu0
        %v2381 = vadd.f32 0.0, %v2380
        %2382 = vmatprep.mubr.f32.mxu0 %v233
        %2383 = vmatmul.mubr.f32.gmra.mrb[0].mxu0 %v232
        %v2384 = vpop.f32.mrb[0].mxu0
        %v2385 = vadd.f32 0.0, %v2384
        %v2386 = vpop.f32.mrb[0].mxu0
        %v2387 = vadd.f32 0.0, %v2386
        %2388 = vmatprep.mubr.f32.mxu0 %v235
        %2389 = vmatmul.mubr.f32.gmra.mrb[0].mxu0 %v234
        %v2390 = vpop.f32.mrb[0].mxu0
        %v2391 = vadd.f32 0.0, %v2390
        %v2392 = vpop.f32.mrb[0].mxu0
        %v2393 = vadd.f32 0.0, %v2392
        %2394 = vmatprep.mubr.f32.mxu0 %v237
        %2395 = vmatmul.mubr.f32.gmra.mrb[0].mxu0 %v236
        %v2396 = vpop.f32.mrb[0].mxu0
        %v2397 = vadd.f32 0.0, %v2396
        %v2398 = vpop.f32.mrb[0].mxu0
        %v2399 = vadd.f32 0.0, %v2398
        %2400 = vmatprep.mubr.f32.mxu0 %v239
        %2401 = vmatmul.mubr.f32.gmra.mrb[0].mxu0 %v238
        %v2402 = vpop.f32.mrb[0].mxu0
        %v2403 = vadd.f32 0.0, %v2402
        %v2404 = vpop.f32.mrb[0].mxu0
        %v2405 = vadd.f32 0.0, %v2404
        %2406 = vmatprep.mubr.f32.mxu0 %v241
        %2407 = vmatmul.mubr.f32.gmra.mrb[0].mxu0 %v240
        %v2408 = vpop.f32.mrb[0].mxu0
        %v2409 = vadd.f32 0.0, %v2408
        %v2410 = vpop.f32.mrb[0].mxu0
        %v2411 = vadd.f32 0.0, %v2410
        %2412 = vmatprep.mubr.f32.mxu0 %v243
        %2413 = vmatmul.mubr.f32.gmra.mrb[0].mxu0 %v242
        %v2414 = vpop.f32.mrb[0].mxu0
        %v2415 = vadd.f32 0.0, %v2414
        %v2416 = vpop.f32.mrb[0].mxu0
        %v2417 = vadd.f32 0.0, %v2416
        %2418 = vmatprep.mubr.f32.mxu0 %v245
        %2419 = vmatmul.mubr.f32.gmra.mrb[0].mxu0 %v244
        %v2420 = vpop.f32.mrb[0].mxu0
        %v2421 = vadd.f32 0.0, %v2420
        %v2422 = vpop.f32.mrb[0].mxu0
        %v2423 = vadd.f32 0.0, %v2422
        %2424 = vmatprep.mubr.f32.mxu0 %v247
        %2425 = vmatmul.mubr.f32.gmra.mrb[0].mxu0 %v246
        %v2426 = vpop.f32.mrb[0].mxu0
        %v2427 = vadd.f32 0.0, %v2426
        %v2428 = vpop.f32.mrb[0].mxu0
        %v2429 = vadd.f32 0.0, %v2428
        %2430 = vmatprep.mubr.f32.mxu0 %v249
        %2431 = vmatmul.mubr.f32.gmra.mrb[0].mxu0 %v248
        %v2432 = vpop.f32.mrb[0].mxu0
        %v2433 = vadd.f32 0.0, %v2432
        %v2434 = vpop.f32.mrb[0].mxu0
        %v2435 = vadd.f32 0.0, %v2434
        %2436 = vmatprep.mubr.f32.mxu0 %v251
        %2437 = vmatmul.mubr.f32.gmra.mrb[0].mxu0 %v250
        %v2438 = vpop.f32.mrb[0].mxu0
        %v2439 = vadd.f32 0.0, %v2438
        %v2440 = vpop.f32.mrb[0].mxu0
        %v2441 = vadd.f32 0.0, %v2440
        %2442 = vmatprep.mubr.f32.mxu0 %v253
        %2443 = vmatmul.mubr.f32.gmra.mrb[0].mxu0 %v252
        %v2444 = vpop.f32.mrb[0].mxu0
        %v2445 = vadd.f32 0.0, %v2444
        %v2446 = vpop.f32.mrb[0].mxu0
        %v2447 = vadd.f32 0.0, %v2446
        %2448 = vmatprep.mubr.f32.mxu0 %v255
        %2449 = vmatmul.mubr.f32.gmra.mrb[0].mxu0 %v254
        %v2450 = vpop.f32.mrb[0].mxu0
        %v2451 = vadd.f32 0.0, %v2450
        %v2452 = vpop.f32.mrb[0].mxu0
        %v2453 = vadd.f32 0.0, %v2452
        %2454 = vmatprep.mubr.f32.mxu0 %v257
        %2455 = vmatmul.mubr.f32.gmra.mrb[0].mxu0 %v256
        %v2456 = vpop.f32.mrb[0].mxu0
        %v2457 = vadd.f32 0.0, %v2456
        %v2458 = vpop.f32.mrb[0].mxu0
        %v2459 = vadd.f32 0.0, %v2458
        %2460 = vmatprep.mubr.f32.mxu0 %v259
        %2461 = vmatmul.mubr.f32.gmra.mrb[0].mxu0 %v258
        %v2462 = vpop.f32.mrb[0].mxu0
        %v2463 = vadd.f32 0.0, %v2462
        %v2464 = vpop.f32.mrb[0].mxu0
        %v2465 = vadd.f32 0.0, %v2464
        %2466 = vmatprep.mubr.f32.mxu0 %v261
        %2467 = vmatmul.mubr.f32.gmra.mrb[0].mxu0 %v260
        %v2468 = vpop.f32.mrb[0].mxu0
        %v2469 = vadd.f32 0.0, %v2468
        %v2470 = vpop.f32.mrb[0].mxu0
        %v2471 = vadd.f32 0.0, %v2470
        %2472 = vmatprep.mubr.f32.mxu0 %v263
        %2473 = vmatmul.mubr.f32.gmra.mrb[0].mxu0 %v262
        %v2474 = vpop.f32.mrb[0].mxu0
        %v2475 = vadd.f32 0.0, %v2474
        %v2476 = vpop.f32.mrb[0].mxu0
        %v2477 = vadd.f32 0.0, %v2476
        %2478 = vmatprep.mubr.f32.mxu0 %v265
        %2479 = vmatmul.mubr.f32.gmra.mrb[0].mxu0 %v264
        %v2480 = vpop.f32.mrb[0].mxu0
        %v2481 = vadd.f32 0.0, %v2480
        %v2482 = vpop.f32.mrb[0].mxu0
        %v2483 = vadd.f32 0.0, %v2482
        %2484 = vmatprep.mubr.f32.mxu0 %v267
        %2485 = vmatmul.mubr.f32.gmra.mrb[0].mxu0 %v266
        %v2486 = vpop.f32.mrb[0].mxu0
        %v2487 = vadd.f32 0.0, %v2486
        %v2488 = vpop.f32.mrb[0].mxu0
        %v2489 = vadd.f32 0.0, %v2488
        %2490 = vmatprep.mubr.f32.mxu0 %v269
        %2491 = vmatmul.mubr.f32.gmra.mrb[0].mxu0 %v268
        %v2492 = vpop.f32.mrb[0].mxu0
        %v2493 = vadd.f32 0.0, %v2492
        %v2494 = vpop.f32.mrb[0].mxu0
        %v2495 = vadd.f32 0.0, %v2494
        %2496 = vmatprep.mubr.f32.mxu0 %v271
        %2497 = vmatmul.mubr.f32.gmra.mrb[0].mxu0 %v270
        %v2498 = vpop.f32.mrb[0].mxu0
        %v2499 = vadd.f32 0.0, %v2498
        %v2500 = vpop.f32.mrb[0].mxu0
        %v2501 = vadd.f32 0.0, %v2500
        %2502 = vmatprep.mubr.f32.mxu0 %v273
        %2503 = vmatmul.mubr.f32.gmra.mrb[0].mxu0 %v272
        %v2504 = vpop.f32.mrb[0].mxu0
        %v2505 = vadd.f32 0.0, %v2504
        %v2506 = vpop.f32.mrb[0].mxu0
        %v2507 = vadd.f32 0.0, %v2506
        %2508 = vmatprep.mubr.f32.mxu0 %v275
        %2509 = vmatmul.mubr.f32.gmra.mrb[0].mxu0 %v274
        %v2510 = vpop.f32.mrb[0].mxu0
        %v2511 = vadd.f32 0.0, %v2510
        %v2512 = vpop.f32.mrb[0].mxu0
        %v2513 = vadd.f32 0.0, %v2512
        %2514 = vmatprep.mubr.f32.mxu0 %v277
        %2515 = vmatmul.mubr.f32.gmra.mrb[0].mxu0 %v276
        %v2516 = vpop.f32.mrb[0].mxu0
        %v2517 = vadd.f32 0.0, %v2516
        %v2518 = vpop.f32.mrb[0].mxu0
        %v2519 = vadd.f32 0.0, %v2518
        %2520 = vmatprep.mubr.f32.mxu0 %v279
        %2521 = vmatmul.mubr.f32.gmra.mrb[0].mxu0 %v278
        %v2522 = vpop.f32.mrb[0].mxu0
        %v2523 = vadd.f32 0.0, %v2522
        %v2524 = vpop.f32.mrb[0].mxu0
        %v2525 = vadd.f32 0.0, %v2524
        %2526 = vmatprep.mubr.f32.mxu0 %v281
        %2527 = vmatmul.mubr.f32.gmra.mrb[0].mxu0 %v280
        %v2528 = vpop.f32.mrb[0].mxu0
        %v2529 = vadd.f32 0.0, %v2528
        %v2530 = vpop.f32.mrb[0].mxu0
        %v2531 = vadd.f32 0.0, %v2530
        %2532 = vdwg.mxu0
        %v2533 = vadd.f32 %v2147, %v2343
        %v2534 = vadd.f32 %v2148, %v2345
        %v2535 = vadd.f32 %v2149, %v2349
        %v2536 = vadd.f32 %v2150, %v2351
        %v2537 = vadd.f32 %v2151, %v2355
        %v2538 = vadd.f32 %v2152, %v2357
        %v2539 = vadd.f32 %v2153, %v2361
        %v2540 = vadd.f32 %v2154, %v2363
        %v2541 = vadd.f32 %v2155, %v2367
        %v2542 = vadd.f32 %v2156, %v2369
        %v2543 = vadd.f32 %v2157, %v2373
        %v2544 = vadd.f32 %v2158, %v2375
        %v2545 = vadd.f32 %v2159, %v2379
        %v2546 = vadd.f32 %v2160, %v2381
        %v2547 = vadd.f32 %v2161, %v2385
        %v2548 = vadd.f32 %v2162, %v2387
        %v2549 = vadd.f32 %v2163, %v2391
        %v2550 = vadd.f32 %v2164, %v2393
        %v2551 = vadd.f32 %v2165, %v2397
        %v2552 = vadd.f32 %v2166, %v2399
        %v2553 = vadd.f32 %v2167, %v2403
        %v2554 = vadd.f32 %v2168, %v2405
        %v2555 = vadd.f32 %v2169, %v2409
        %v2556 = vadd.f32 %v2170, %v2411
        %v2557 = vadd.f32 %v2171, %v2415
        %v2558 = vadd.f32 %v2172, %v2417
        %v2559 = vadd.f32 %v2173, %v2421
        %v2560 = vadd.f32 %v2174, %v2423
        %v2561 = vadd.f32 %v2175, %v2427
        %v2562 = vadd.f32 %v2176, %v2429
        %v2563 = vadd.f32 %v2177, %v2433
        %v2564 = vadd.f32 %v2178, %v2435
        %v2565 = vadd.f32 %v2179, %v2439
        %v2566 = vadd.f32 %v2180, %v2441
        %v2567 = vadd.f32 %v2181, %v2445
        %v2568 = vadd.f32 %v2182, %v2447
        %v2569 = vadd.f32 %v2183, %v2451
        %v2570 = vadd.f32 %v2184, %v2453
        %v2571 = vadd.f32 %v2185, %v2457
        %v2572 = vadd.f32 %v2186, %v2459
        %v2573 = vadd.f32 %v2187, %v2463
        %v2574 = vadd.f32 %v2188, %v2465
        %v2575 = vadd.f32 %v2189, %v2469
        %v2576 = vadd.f32 %v2190, %v2471
        %v2577 = vadd.f32 %v2191, %v2475
        %v2578 = vadd.f32 %v2192, %v2477
        %v2579 = vadd.f32 %v2193, %v2481
        %v2580 = vadd.f32 %v2194, %v2483
        %v2581 = vadd.f32 %v2195, %v2487
        %v2582 = vadd.f32 %v2196, %v2489
        %v2583 = vadd.f32 %v2197, %v2493
        %v2584 = vadd.f32 %v2198, %v2495
        %v2585 = vadd.f32 %v2199, %v2499
        %v2586 = vadd.f32 %v2200, %v2501
        %v2587 = vadd.f32 %v2201, %v2505
        %v2588 = vadd.f32 %v2202, %v2507
        %v2589 = vadd.f32 %v2203, %v2511
        %v2590 = vadd.f32 %v2204, %v2513
        %v2591 = vadd.f32 %v2205, %v2517
        %v2592 = vadd.f32 %v2206, %v2519
        %v2593 = vadd.f32 %v2207, %v2523
        %v2594 = vadd.f32 %v2208, %v2525
        %v2595 = vadd.f32 %v2209, %v2529
        %v2596 = vadd.f32 %v2210, %v2531
        %s2597 = scalar_lea.vmem [#allocation5], 2560
        %v2598 = vld [vmem:[%s2597] sm:$0xff]
        %v2599 = vld [vmem:[%s2597 + $0x8] sm:$0xff]
        %v2600 = vld [vmem:[%s2597 + $0x10] sm:$0xff]
        %v2601 = vld [vmem:[%s2597 + $0x18] sm:$0xff]
        %v2602 = vld [vmem:[%s2597 + $0x20] sm:$0xff]
        %v2603 = vld [vmem:[%s2597 + $0x28] sm:$0xff]
        %v2604 = vld [vmem:[%s2597 + $0x30] sm:$0xff]
        %v2605 = vld [vmem:[%s2597 + $0x38] sm:$0xff]
        %v2606 = vld [vmem:[%s2597 + $0x40] sm:$0xff]
        %v2607 = vld [vmem:[%s2597 + $0x48] sm:$0xff]
        %v2608 = vld [vmem:[%s2597 + $0x50] sm:$0xff]
        %v2609 = vld [vmem:[%s2597 + $0x58] sm:$0xff]
        %v2610 = vld [vmem:[%s2597 + $0x60] sm:$0xff]
        %v2611 = vld [vmem:[%s2597 + $0x68] sm:$0xff]
        %v2612 = vld [vmem:[%s2597 + $0x70] sm:$0xff]
        %v2613 = vld [vmem:[%s2597 + $0x78] sm:$0xff]
        %v2614 = vld [vmem:[%s2597 + $0x80] sm:$0xff]
        %v2615 = vld [vmem:[%s2597 + $0x88] sm:$0xff]
        %v2616 = vld [vmem:[%s2597 + $0x90] sm:$0xff]
        %v2617 = vld [vmem:[%s2597 + $0x98] sm:$0xff]
        %v2618 = vld [vmem:[%s2597 + $0xa0] sm:$0xff]
        %v2619 = vld [vmem:[%s2597 + $0xa8] sm:$0xff]
        %v2620 = vld [vmem:[%s2597 + $0xb0] sm:$0xff]
        %v2621 = vld [vmem:[%s2597 + $0xb8] sm:$0xff]
        %v2622 = vld [vmem:[%s2597 + $0xc0] sm:$0xff]
        %v2623 = vld [vmem:[%s2597 + $0xc8] sm:$0xff]
        %v2624 = vld [vmem:[%s2597 + $0xd0] sm:$0xff]
        %v2625 = vld [vmem:[%s2597 + $0xd8] sm:$0xff]
        %v2626 = vld [vmem:[%s2597 + $0xe0] sm:$0xff]
        %v2627 = vld [vmem:[%s2597 + $0xe8] sm:$0xff]
        %v2628 = vld [vmem:[%s2597 + $0xf0] sm:$0xff]
        %v2629 = vld [vmem:[%s2597 + $0xf8] sm:$0xff]
        %v2630 = vld [vmem:[%s2597 + $0x100] sm:$0xff]
        %v2631 = vld [vmem:[%s2597 + $0x108] sm:$0xff]
        %v2632 = vld [vmem:[%s2597 + $0x110] sm:$0xff]
        %v2633 = vld [vmem:[%s2597 + $0x118] sm:$0xff]
        %v2634 = vld [vmem:[%s2597 + $0x120] sm:$0xff]
        %v2635 = vld [vmem:[%s2597 + $0x128] sm:$0xff]
        %v2636 = vld [vmem:[%s2597 + $0x130] sm:$0xff]
        %v2637 = vld [vmem:[%s2597 + $0x138] sm:$0xff]
        %v2638 = vld [vmem:[%s2597 + $0x140] sm:$0xff]
        %v2639 = vld [vmem:[%s2597 + $0x148] sm:$0xff]
        %v2640 = vld [vmem:[%s2597 + $0x150] sm:$0xff]
        %v2641 = vld [vmem:[%s2597 + $0x158] sm:$0xff]
        %v2642 = vld [vmem:[%s2597 + $0x160] sm:$0xff]
        %v2643 = vld [vmem:[%s2597 + $0x168] sm:$0xff]
        %v2644 = vld [vmem:[%s2597 + $0x170] sm:$0xff]
        %v2645 = vld [vmem:[%s2597 + $0x178] sm:$0xff]
        %v2646 = vld [vmem:[%s2597 + $0x180] sm:$0xff]
        %v2647 = vld [vmem:[%s2597 + $0x188] sm:$0xff]
        %v2648 = vld [vmem:[%s2597 + $0x190] sm:$0xff]
        %v2649 = vld [vmem:[%s2597 + $0x198] sm:$0xff]
        %v2650 = vld [vmem:[%s2597 + $0x1a0] sm:$0xff]
        %v2651 = vld [vmem:[%s2597 + $0x1a8] sm:$0xff]
        %v2652 = vld [vmem:[%s2597 + $0x1b0] sm:$0xff]
        %v2653 = vld [vmem:[%s2597 + $0x1b8] sm:$0xff]
        %v2654 = vld [vmem:[%s2597 + $0x1c0] sm:$0xff]
        %v2655 = vld [vmem:[%s2597 + $0x1c8] sm:$0xff]
        %v2656 = vld [vmem:[%s2597 + $0x1d0] sm:$0xff]
        %v2657 = vld [vmem:[%s2597 + $0x1d8] sm:$0xff]
        %v2658 = vld [vmem:[%s2597 + $0x1e0] sm:$0xff]
        %v2659 = vld [vmem:[%s2597 + $0x1e8] sm:$0xff]
        %v2660 = vld [vmem:[%s2597 + $0x1f0] sm:$0xff]
        %v2661 = vld [vmem:[%s2597 + $0x1f8] sm:$0xff]
        %2662 = vmatprep.subr.mxu0 %v2599
        %2663 = vmatpush1.msra.mxu0 %v2598
        %2664 = vmatprep.subr.mxu0 %v2601
        %2665 = vmatpush1.msra.mxu0 %v2600
        %2666 = vmatprep.subr.mxu0 %v2603
        %2667 = vmatpush1.msra.mxu0 %v2602
        %2668 = vmatprep.subr.mxu0 %v2605
        %2669 = vmatpush1.msra.mxu0 %v2604
        %2670 = vmatprep.subr.mxu0 %v2607
        %2671 = vmatpush1.msra.mxu0 %v2606
        %2672 = vmatprep.subr.mxu0 %v2609
        %2673 = vmatpush1.msra.mxu0 %v2608
        %2674 = vmatprep.subr.mxu0 %v2611
        %2675 = vmatpush1.msra.mxu0 %v2610
        %2676 = vmatprep.subr.mxu0 %v2613
        %2677 = vmatpush1.msra.mxu0 %v2612
        %2678 = vmatprep.subr.mxu0 %v2615
        %2679 = vmatpush1.msra.mxu0 %v2614
        %2680 = vmatprep.subr.mxu0 %v2617
        %2681 = vmatpush1.msra.mxu0 %v2616
        %2682 = vmatprep.subr.mxu0 %v2619
        %2683 = vmatpush1.msra.mxu0 %v2618
        %2684 = vmatprep.subr.mxu0 %v2621
        %2685 = vmatpush1.msra.mxu0 %v2620
        %2686 = vmatprep.subr.mxu0 %v2623
        %2687 = vmatpush1.msra.mxu0 %v2622
        %2688 = vmatprep.subr.mxu0 %v2625
        %2689 = vmatpush1.msra.mxu0 %v2624
        %2690 = vmatprep.subr.mxu0 %v2627
        %2691 = vmatpush1.msra.mxu0 %v2626
        %2692 = vmatprep.subr.mxu0 %v2629
        %2693 = vmatpush1.msra.mxu0 %v2628
        %2694 = vmatprep.subr.mxu0 %v2631
        %2695 = vmatpush1.msra.mxu0 %v2630
        %2696 = vmatprep.subr.mxu0 %v2633
        %2697 = vmatpush1.msra.mxu0 %v2632
        %2698 = vmatprep.subr.mxu0 %v2635
        %2699 = vmatpush1.msra.mxu0 %v2634
        %2700 = vmatprep.subr.mxu0 %v2637
        %2701 = vmatpush1.msra.mxu0 %v2636
        %2702 = vmatprep.subr.mxu0 %v2639
        %2703 = vmatpush1.msra.mxu0 %v2638
        %2704 = vmatprep.subr.mxu0 %v2641
        %2705 = vmatpush1.msra.mxu0 %v2640
        %2706 = vmatprep.subr.mxu0 %v2643
        %2707 = vmatpush1.msra.mxu0 %v2642
        %2708 = vmatprep.subr.mxu0 %v2645
        %2709 = vmatpush1.msra.mxu0 %v2644
        %2710 = vmatprep.subr.mxu0 %v2647
        %2711 = vmatpush1.msra.mxu0 %v2646
        %2712 = vmatprep.subr.mxu0 %v2649
        %2713 = vmatpush1.msra.mxu0 %v2648
        %2714 = vmatprep.subr.mxu0 %v2651
        %2715 = vmatpush1.msra.mxu0 %v2650
        %2716 = vmatprep.subr.mxu0 %v2653
        %2717 = vmatpush1.msra.mxu0 %v2652
        %2718 = vmatprep.subr.mxu0 %v2655
        %2719 = vmatpush1.msra.mxu0 %v2654
        %2720 = vmatprep.subr.mxu0 %v2657
        %2721 = vmatpush1.msra.mxu0 %v2656
        %2722 = vmatprep.subr.mxu0 %v2659
        %2723 = vmatpush1.msra.mxu0 %v2658
        %2724 = vmatprep.subr.mxu0 %v2661
        %2725 = vmatpush1.msra.mxu0 %v2660
        %2726 = vmatprep.mubr.f32.mxu0 %v611
        %2727 = vmatmul.mubr.f32.gmra.mrb[0].mxu0 %v609
        %v2728 = vpop.f32.mrb[0].mxu0
        %v2729 = vadd.f32 0.0, %v2728
        %v2730 = vpop.f32.mrb[0].mxu0
        %v2731 = vadd.f32 0.0, %v2730
        %2732 = vmatprep.mubr.f32.mxu0 %v767
        %2733 = vmatmul.mubr.f32.gmra.mrb[0].mxu0 %v766
        %v2734 = vpop.f32.mrb[0].mxu0
        %v2735 = vadd.f32 0.0, %v2734
        %v2736 = vpop.f32.mrb[0].mxu0
        %v2737 = vadd.f32 0.0, %v2736
        %2738 = vmatprep.mubr.f32.mxu0 %v607
        %2739 = vmatmul.mubr.f32.gmra.mrb[0].mxu0 %v605
        %v2740 = vpop.f32.mrb[0].mxu0
        %v2741 = vadd.f32 0.0, %v2740
        %v2742 = vpop.f32.mrb[0].mxu0
        %v2743 = vadd.f32 0.0, %v2742
        %2744 = vmatprep.mubr.f32.mxu0 %v765
        %2745 = vmatmul.mubr.f32.gmra.mrb[0].mxu0 %v764
        %v2746 = vpop.f32.mrb[0].mxu0
        %v2747 = vadd.f32 0.0, %v2746
        %v2748 = vpop.f32.mrb[0].mxu0
        %v2749 = vadd.f32 0.0, %v2748
        %2750 = vmatprep.mubr.f32.mxu0 %v615
        %2751 = vmatmul.mubr.f32.gmra.mrb[0].mxu0 %v613
        %v2752 = vpop.f32.mrb[0].mxu0
        %v2753 = vadd.f32 0.0, %v2752
        %v2754 = vpop.f32.mrb[0].mxu0
        %v2755 = vadd.f32 0.0, %v2754
        %2756 = vmatprep.mubr.f32.mxu0 %v769
        %2757 = vmatmul.mubr.f32.gmra.mrb[0].mxu0 %v768
        %v2758 = vpop.f32.mrb[0].mxu0
        %v2759 = vadd.f32 0.0, %v2758
        %v2760 = vpop.f32.mrb[0].mxu0
        %v2761 = vadd.f32 0.0, %v2760
        %2762 = vmatprep.mubr.f32.mxu0 %v619
        %2763 = vmatmul.mubr.f32.gmra.mrb[0].mxu0 %v617
        %v2764 = vpop.f32.mrb[0].mxu0
        %v2765 = vadd.f32 0.0, %v2764
        %v2766 = vpop.f32.mrb[0].mxu0
        %v2767 = vadd.f32 0.0, %v2766
        %2768 = vmatprep.mubr.f32.mxu0 %v771
        %2769 = vmatmul.mubr.f32.gmra.mrb[0].mxu0 %v770
        %v2770 = vpop.f32.mrb[0].mxu0
        %v2771 = vadd.f32 0.0, %v2770
        %v2772 = vpop.f32.mrb[0].mxu0
        %v2773 = vadd.f32 0.0, %v2772
        %2774 = vmatprep.mubr.f32.mxu0 %v623
        %2775 = vmatmul.mubr.f32.gmra.mrb[0].mxu0 %v621
        %v2776 = vpop.f32.mrb[0].mxu0
        %v2777 = vadd.f32 0.0, %v2776
        %v2778 = vpop.f32.mrb[0].mxu0
        %v2779 = vadd.f32 0.0, %v2778
        %2780 = vmatprep.mubr.f32.mxu0 %v773
        %2781 = vmatmul.mubr.f32.gmra.mrb[0].mxu0 %v772
        %v2782 = vpop.f32.mrb[0].mxu0
        %v2783 = vadd.f32 0.0, %v2782
        %v2784 = vpop.f32.mrb[0].mxu0
        %v2785 = vadd.f32 0.0, %v2784
        %2786 = vmatprep.mubr.f32.mxu0 %v627
        %2787 = vmatmul.mubr.f32.gmra.mrb[0].mxu0 %v625
        %v2788 = vpop.f32.mrb[0].mxu0
        %v2789 = vadd.f32 0.0, %v2788
        %v2790 = vpop.f32.mrb[0].mxu0
        %v2791 = vadd.f32 0.0, %v2790
        %2792 = vmatprep.mubr.f32.mxu0 %v775
        %2793 = vmatmul.mubr.f32.gmra.mrb[0].mxu0 %v774
        %v2794 = vpop.f32.mrb[0].mxu0
        %v2795 = vadd.f32 0.0, %v2794
        %v2796 = vpop.f32.mrb[0].mxu0
        %v2797 = vadd.f32 0.0, %v2796
        %2798 = vmatprep.mubr.f32.mxu0 %v631
        %2799 = vmatmul.mubr.f32.gmra.mrb[0].mxu0 %v629
        %v2800 = vpop.f32.mrb[0].mxu0
        %v2801 = vadd.f32 0.0, %v2800
        %v2802 = vpop.f32.mrb[0].mxu0
        %v2803 = vadd.f32 0.0, %v2802
        %2804 = vmatprep.mubr.f32.mxu0 %v777
        %2805 = vmatmul.mubr.f32.gmra.mrb[0].mxu0 %v776
        %v2806 = vpop.f32.mrb[0].mxu0
        %v2807 = vadd.f32 0.0, %v2806
        %v2808 = vpop.f32.mrb[0].mxu0
        %v2809 = vadd.f32 0.0, %v2808
        %2810 = vmatprep.mubr.f32.mxu0 %v635
        %2811 = vmatmul.mubr.f32.gmra.mrb[0].mxu0 %v633
        %v2812 = vpop.f32.mrb[0].mxu0
        %v2813 = vadd.f32 0.0, %v2812
        %v2814 = vpop.f32.mrb[0].mxu0
        %v2815 = vadd.f32 0.0, %v2814
        %2816 = vmatprep.mubr.f32.mxu0 %v779
        %2817 = vmatmul.mubr.f32.gmra.mrb[0].mxu0 %v778
        %v2818 = vpop.f32.mrb[0].mxu0
        %v2819 = vadd.f32 0.0, %v2818
        %v2820 = vpop.f32.mrb[0].mxu0
        %v2821 = vadd.f32 0.0, %v2820
        %2822 = vmatprep.mubr.f32.mxu0 %v639
        %2823 = vmatmul.mubr.f32.gmra.mrb[0].mxu0 %v637
        %v2824 = vpop.f32.mrb[0].mxu0
        %v2825 = vadd.f32 0.0, %v2824
        %v2826 = vpop.f32.mrb[0].mxu0
        %v2827 = vadd.f32 0.0, %v2826
        %2828 = vmatprep.mubr.f32.mxu0 %v781
        %2829 = vmatmul.mubr.f32.gmra.mrb[0].mxu0 %v780
        %v2830 = vpop.f32.mrb[0].mxu0
        %v2831 = vadd.f32 0.0, %v2830
        %v2832 = vpop.f32.mrb[0].mxu0
        %v2833 = vadd.f32 0.0, %v2832
        %2834 = vmatprep.mubr.f32.mxu0 %v643
        %2835 = vmatmul.mubr.f32.gmra.mrb[0].mxu0 %v641
        %v2836 = vpop.f32.mrb[0].mxu0
        %v2837 = vadd.f32 0.0, %v2836
        %v2838 = vpop.f32.mrb[0].mxu0
        %v2839 = vadd.f32 0.0, %v2838
        %2840 = vmatprep.mubr.f32.mxu0 %v783
        %2841 = vmatmul.mubr.f32.gmra.mrb[0].mxu0 %v782
        %v2842 = vpop.f32.mrb[0].mxu0
        %v2843 = vadd.f32 0.0, %v2842
        %v2844 = vpop.f32.mrb[0].mxu0
        %v2845 = vadd.f32 0.0, %v2844
        %2846 = vmatprep.mubr.f32.mxu0 %v647
        %2847 = vmatmul.mubr.f32.gmra.mrb[0].mxu0 %v645
        %v2848 = vpop.f32.mrb[0].mxu0
        %v2849 = vadd.f32 0.0, %v2848
        %v2850 = vpop.f32.mrb[0].mxu0
        %v2851 = vadd.f32 0.0, %v2850
        %2852 = vmatprep.mubr.f32.mxu0 %v785
        %2853 = vmatmul.mubr.f32.gmra.mrb[0].mxu0 %v784
        %v2854 = vpop.f32.mrb[0].mxu0
        %v2855 = vadd.f32 0.0, %v2854
        %v2856 = vpop.f32.mrb[0].mxu0
        %v2857 = vadd.f32 0.0, %v2856
        %2858 = vmatprep.mubr.f32.mxu0 %v651
        %2859 = vmatmul.mubr.f32.gmra.mrb[0].mxu0 %v649
        %v2860 = vpop.f32.mrb[0].mxu0
        %v2861 = vadd.f32 0.0, %v2860
        %v2862 = vpop.f32.mrb[0].mxu0
        %v2863 = vadd.f32 0.0, %v2862
        %2864 = vmatprep.mubr.f32.mxu0 %v787
        %2865 = vmatmul.mubr.f32.gmra.mrb[0].mxu0 %v786
        %v2866 = vpop.f32.mrb[0].mxu0
        %v2867 = vadd.f32 0.0, %v2866
        %v2868 = vpop.f32.mrb[0].mxu0
        %v2869 = vadd.f32 0.0, %v2868
        %2870 = vmatprep.mubr.f32.mxu0 %v655
        %2871 = vmatmul.mubr.f32.gmra.mrb[0].mxu0 %v653
        %v2872 = vpop.f32.mrb[0].mxu0
        %v2873 = vadd.f32 0.0, %v2872
        %v2874 = vpop.f32.mrb[0].mxu0
        %v2875 = vadd.f32 0.0, %v2874
        %2876 = vmatprep.mubr.f32.mxu0 %v789
        %2877 = vmatmul.mubr.f32.gmra.mrb[0].mxu0 %v788
        %v2878 = vpop.f32.mrb[0].mxu0
        %v2879 = vadd.f32 0.0, %v2878
        %v2880 = vpop.f32.mrb[0].mxu0
        %v2881 = vadd.f32 0.0, %v2880
        %2882 = vmatprep.mubr.f32.mxu0 %v659
        %2883 = vmatmul.mubr.f32.gmra.mrb[0].mxu0 %v657
        %v2884 = vpop.f32.mrb[0].mxu0
        %v2885 = vadd.f32 0.0, %v2884
        %v2886 = vpop.f32.mrb[0].mxu0
        %v2887 = vadd.f32 0.0, %v2886
        %2888 = vmatprep.mubr.f32.mxu0 %v791
        %2889 = vmatmul.mubr.f32.gmra.mrb[0].mxu0 %v790
        %v2890 = vpop.f32.mrb[0].mxu0
        %v2891 = vadd.f32 0.0, %v2890
        %v2892 = vpop.f32.mrb[0].mxu0
        %v2893 = vadd.f32 0.0, %v2892
        %2894 = vmatprep.mubr.f32.mxu0 %v663
        %2895 = vmatmul.mubr.f32.gmra.mrb[0].mxu0 %v661
        %v2896 = vpop.f32.mrb[0].mxu0
        %v2897 = vadd.f32 0.0, %v2896
        %v2898 = vpop.f32.mrb[0].mxu0
        %v2899 = vadd.f32 0.0, %v2898
        %2900 = vmatprep.mubr.f32.mxu0 %v793
        %2901 = vmatmul.mubr.f32.gmra.mrb[0].mxu0 %v792
        %v2902 = vpop.f32.mrb[0].mxu0
        %v2903 = vadd.f32 0.0, %v2902
        %v2904 = vpop.f32.mrb[0].mxu0
        %v2905 = vadd.f32 0.0, %v2904
        %2906 = vmatprep.mubr.f32.mxu0 %v667
        %2907 = vmatmul.mubr.f32.gmra.mrb[0].mxu0 %v665
        %v2908 = vpop.f32.mrb[0].mxu0
        %v2909 = vadd.f32 0.0, %v2908
        %v2910 = vpop.f32.mrb[0].mxu0
        %v2911 = vadd.f32 0.0, %v2910
        %2912 = vmatprep.mubr.f32.mxu0 %v795
        %2913 = vmatmul.mubr.f32.gmra.mrb[0].mxu0 %v794
        %v2914 = vpop.f32.mrb[0].mxu0
        %v2915 = vadd.f32 0.0, %v2914
        %v2916 = vpop.f32.mrb[0].mxu0
        %v2917 = vadd.f32 0.0, %v2916
        %2918 = vdwg.mxu0
        %v2919 = vadd.f32 %v2533, %v2729
        %v2920 = vadd.f32 %v2534, %v2731
        %v2921 = vadd.f32 %v2535, %v2735
        %v2922 = vadd.f32 %v2536, %v2737
        %v2923 = vadd.f32 %v2537, %v2741
        %v2924 = vadd.f32 %v2538, %v2743
        %v2925 = vadd.f32 %v2539, %v2747
        %v2926 = vadd.f32 %v2540, %v2749
        %v2927 = vadd.f32 %v2541, %v2753
        %v2928 = vadd.f32 %v2542, %v2755
        %v2929 = vadd.f32 %v2543, %v2759
        %v2930 = vadd.f32 %v2544, %v2761
        %v2931 = vadd.f32 %v2545, %v2765
        %v2932 = vadd.f32 %v2546, %v2767
        %v2933 = vadd.f32 %v2547, %v2771
        %v2934 = vadd.f32 %v2548, %v2773
        %v2935 = vadd.f32 %v2549, %v2777
        %v2936 = vadd.f32 %v2550, %v2779
        %v2937 = vadd.f32 %v2551, %v2783
        %v2938 = vadd.f32 %v2552, %v2785
        %v2939 = vadd.f32 %v2553, %v2789
        %v2940 = vadd.f32 %v2554, %v2791
        %v2941 = vadd.f32 %v2555, %v2795
        %v2942 = vadd.f32 %v2556, %v2797
        %v2943 = vadd.f32 %v2557, %v2801
        %v2944 = vadd.f32 %v2558, %v2803
        %v2945 = vadd.f32 %v2559, %v2807
        %v2946 = vadd.f32 %v2560, %v2809
        %v2947 = vadd.f32 %v2561, %v2813
        %v2948 = vadd.f32 %v2562, %v2815
        %v2949 = vadd.f32 %v2563, %v2819
        %v2950 = vadd.f32 %v2564, %v2821
        %v2951 = vadd.f32 %v2565, %v2825
        %v2952 = vadd.f32 %v2566, %v2827
        %v2953 = vadd.f32 %v2567, %v2831
        %v2954 = vadd.f32 %v2568, %v2833
        %v2955 = vadd.f32 %v2569, %v2837
        %v2956 = vadd.f32 %v2570, %v2839
        %v2957 = vadd.f32 %v2571, %v2843
        %v2958 = vadd.f32 %v2572, %v2845
        %v2959 = vadd.f32 %v2573, %v2849
        %v2960 = vadd.f32 %v2574, %v2851
        %v2961 = vadd.f32 %v2575, %v2855
        %v2962 = vadd.f32 %v2576, %v2857
        %v2963 = vadd.f32 %v2577, %v2861
        %v2964 = vadd.f32 %v2578, %v2863
        %v2965 = vadd.f32 %v2579, %v2867
        %v2966 = vadd.f32 %v2580, %v2869
        %v2967 = vadd.f32 %v2581, %v2873
        %v2968 = vadd.f32 %v2582, %v2875
        %v2969 = vadd.f32 %v2583, %v2879
        %v2970 = vadd.f32 %v2584, %v2881
        %v2971 = vadd.f32 %v2585, %v2885
        %v2972 = vadd.f32 %v2586, %v2887
        %v2973 = vadd.f32 %v2587, %v2891
        %v2974 = vadd.f32 %v2588, %v2893
        %v2975 = vadd.f32 %v2589, %v2897
        %v2976 = vadd.f32 %v2590, %v2899
        %v2977 = vadd.f32 %v2591, %v2903
        %v2978 = vadd.f32 %v2592, %v2905
        %v2979 = vadd.f32 %v2593, %v2909
        %v2980 = vadd.f32 %v2594, %v2911
        %v2981 = vadd.f32 %v2595, %v2915
        %v2982 = vadd.f32 %v2596, %v2917
        %s2983 = scalar_lea.vmem [#allocation5], 3072
        %v2984 = vld [vmem:[%s2983] sm:$0xff]
        %v2985 = vld [vmem:[%s2983 + $0x8] sm:$0xff]
        %v2986 = vld [vmem:[%s2983 + $0x10] sm:$0xff]
        %v2987 = vld [vmem:[%s2983 + $0x18] sm:$0xff]
        %v2988 = vld [vmem:[%s2983 + $0x20] sm:$0xff]
        %v2989 = vld [vmem:[%s2983 + $0x28] sm:$0xff]
        %v2990 = vld [vmem:[%s2983 + $0x30] sm:$0xff]
        %v2991 = vld [vmem:[%s2983 + $0x38] sm:$0xff]
        %v2992 = vld [vmem:[%s2983 + $0x40] sm:$0xff]
        %v2993 = vld [vmem:[%s2983 + $0x48] sm:$0xff]
        %v2994 = vld [vmem:[%s2983 + $0x50] sm:$0xff]
        %v2995 = vld [vmem:[%s2983 + $0x58] sm:$0xff]
        %v2996 = vld [vmem:[%s2983 + $0x60] sm:$0xff]
        %v2997 = vld [vmem:[%s2983 + $0x68] sm:$0xff]
        %v2998 = vld [vmem:[%s2983 + $0x70] sm:$0xff]
        %v2999 = vld [vmem:[%s2983 + $0x78] sm:$0xff]
        %v3000 = vld [vmem:[%s2983 + $0x80] sm:$0xff]
        %v3001 = vld [vmem:[%s2983 + $0x88] sm:$0xff]
        %v3002 = vld [vmem:[%s2983 + $0x90] sm:$0xff]
        %v3003 = vld [vmem:[%s2983 + $0x98] sm:$0xff]
        %v3004 = vld [vmem:[%s2983 + $0xa0] sm:$0xff]
        %v3005 = vld [vmem:[%s2983 + $0xa8] sm:$0xff]
        %v3006 = vld [vmem:[%s2983 + $0xb0] sm:$0xff]
        %v3007 = vld [vmem:[%s2983 + $0xb8] sm:$0xff]
        %v3008 = vld [vmem:[%s2983 + $0xc0] sm:$0xff]
        %v3009 = vld [vmem:[%s2983 + $0xc8] sm:$0xff]
        %v3010 = vld [vmem:[%s2983 + $0xd0] sm:$0xff]
        %v3011 = vld [vmem:[%s2983 + $0xd8] sm:$0xff]
        %v3012 = vld [vmem:[%s2983 + $0xe0] sm:$0xff]
        %v3013 = vld [vmem:[%s2983 + $0xe8] sm:$0xff]
        %v3014 = vld [vmem:[%s2983 + $0xf0] sm:$0xff]
        %v3015 = vld [vmem:[%s2983 + $0xf8] sm:$0xff]
        %v3016 = vld [vmem:[%s2983 + $0x100] sm:$0xff]
        %v3017 = vld [vmem:[%s2983 + $0x108] sm:$0xff]
        %v3018 = vld [vmem:[%s2983 + $0x110] sm:$0xff]
        %v3019 = vld [vmem:[%s2983 + $0x118] sm:$0xff]
        %v3020 = vld [vmem:[%s2983 + $0x120] sm:$0xff]
        %v3021 = vld [vmem:[%s2983 + $0x128] sm:$0xff]
        %v3022 = vld [vmem:[%s2983 + $0x130] sm:$0xff]
        %v3023 = vld [vmem:[%s2983 + $0x138] sm:$0xff]
        %v3024 = vld [vmem:[%s2983 + $0x140] sm:$0xff]
        %v3025 = vld [vmem:[%s2983 + $0x148] sm:$0xff]
        %v3026 = vld [vmem:[%s2983 + $0x150] sm:$0xff]
        %v3027 = vld [vmem:[%s2983 + $0x158] sm:$0xff]
        %v3028 = vld [vmem:[%s2983 + $0x160] sm:$0xff]
        %v3029 = vld [vmem:[%s2983 + $0x168] sm:$0xff]
        %v3030 = vld [vmem:[%s2983 + $0x170] sm:$0xff]
        %v3031 = vld [vmem:[%s2983 + $0x178] sm:$0xff]
        %v3032 = vld [vmem:[%s2983 + $0x180] sm:$0xff]
        %v3033 = vld [vmem:[%s2983 + $0x188] sm:$0xff]
        %v3034 = vld [vmem:[%s2983 + $0x190] sm:$0xff]
        %v3035 = vld [vmem:[%s2983 + $0x198] sm:$0xff]
        %v3036 = vld [vmem:[%s2983 + $0x1a0] sm:$0xff]
        %v3037 = vld [vmem:[%s2983 + $0x1a8] sm:$0xff]
        %v3038 = vld [vmem:[%s2983 + $0x1b0] sm:$0xff]
        %v3039 = vld [vmem:[%s2983 + $0x1b8] sm:$0xff]
        %v3040 = vld [vmem:[%s2983 + $0x1c0] sm:$0xff]
        %v3041 = vld [vmem:[%s2983 + $0x1c8] sm:$0xff]
        %v3042 = vld [vmem:[%s2983 + $0x1d0] sm:$0xff]
        %v3043 = vld [vmem:[%s2983 + $0x1d8] sm:$0xff]
        %v3044 = vld [vmem:[%s2983 + $0x1e0] sm:$0xff]
        %v3045 = vld [vmem:[%s2983 + $0x1e8] sm:$0xff]
        %v3046 = vld [vmem:[%s2983 + $0x1f0] sm:$0xff]
        %v3047 = vld [vmem:[%s2983 + $0x1f8] sm:$0xff]
        %3048 = vmatprep.subr.mxu0 %v2985
        %3049 = vmatpush1.msra.mxu0 %v2984
        %3050 = vmatprep.subr.mxu0 %v2987
        %3051 = vmatpush1.msra.mxu0 %v2986
        %3052 = vmatprep.subr.mxu0 %v2989
        %3053 = vmatpush1.msra.mxu0 %v2988
        %3054 = vmatprep.subr.mxu0 %v2991
        %3055 = vmatpush1.msra.mxu0 %v2990
        %3056 = vmatprep.subr.mxu0 %v2993
        %3057 = vmatpush1.msra.mxu0 %v2992
        %3058 = vmatprep.subr.mxu0 %v2995
        %3059 = vmatpush1.msra.mxu0 %v2994
        %3060 = vmatprep.subr.mxu0 %v2997
        %3061 = vmatpush1.msra.mxu0 %v2996
        %3062 = vmatprep.subr.mxu0 %v2999
        %3063 = vmatpush1.msra.mxu0 %v2998
        %3064 = vmatprep.subr.mxu0 %v3001
        %3065 = vmatpush1.msra.mxu0 %v3000
        %3066 = vmatprep.subr.mxu0 %v3003
        %3067 = vmatpush1.msra.mxu0 %v3002
        %3068 = vmatprep.subr.mxu0 %v3005
        %3069 = vmatpush1.msra.mxu0 %v3004
        %3070 = vmatprep.subr.mxu0 %v3007
        %3071 = vmatpush1.msra.mxu0 %v3006
        %3072 = vmatprep.subr.mxu0 %v3009
        %3073 = vmatpush1.msra.mxu0 %v3008
        %3074 = vmatprep.subr.mxu0 %v3011
        %3075 = vmatpush1.msra.mxu0 %v3010
        %3076 = vmatprep.subr.mxu0 %v3013
        %3077 = vmatpush1.msra.mxu0 %v3012
        %3078 = vmatprep.subr.mxu0 %v3015
        %3079 = vmatpush1.msra.mxu0 %v3014
        %3080 = vmatprep.subr.mxu0 %v3017
        %3081 = vmatpush1.msra.mxu0 %v3016
        %3082 = vmatprep.subr.mxu0 %v3019
        %3083 = vmatpush1.msra.mxu0 %v3018
        %3084 = vmatprep.subr.mxu0 %v3021
        %3085 = vmatpush1.msra.mxu0 %v3020
        %3086 = vmatprep.subr.mxu0 %v3023
        %3087 = vmatpush1.msra.mxu0 %v3022
        %3088 = vmatprep.subr.mxu0 %v3025
        %3089 = vmatpush1.msra.mxu0 %v3024
        %3090 = vmatprep.subr.mxu0 %v3027
        %3091 = vmatpush1.msra.mxu0 %v3026
        %3092 = vmatprep.subr.mxu0 %v3029
        %3093 = vmatpush1.msra.mxu0 %v3028
        %3094 = vmatprep.subr.mxu0 %v3031
        %3095 = vmatpush1.msra.mxu0 %v3030
        %3096 = vmatprep.subr.mxu0 %v3033
        %3097 = vmatpush1.msra.mxu0 %v3032
        %3098 = vmatprep.subr.mxu0 %v3035
        %3099 = vmatpush1.msra.mxu0 %v3034
        %3100 = vmatprep.subr.mxu0 %v3037
        %3101 = vmatpush1.msra.mxu0 %v3036
        %3102 = vmatprep.subr.mxu0 %v3039
        %3103 = vmatpush1.msra.mxu0 %v3038
        %3104 = vmatprep.subr.mxu0 %v3041
        %3105 = vmatpush1.msra.mxu0 %v3040
        %3106 = vmatprep.subr.mxu0 %v3043
        %3107 = vmatpush1.msra.mxu0 %v3042
        %3108 = vmatprep.subr.mxu0 %v3045
        %3109 = vmatpush1.msra.mxu0 %v3044
        %3110 = vmatprep.subr.mxu0 %v3047
        %3111 = vmatpush1.msra.mxu0 %v3046
        %3112 = vmatprep.mubr.f32.mxu0 %v572
        %3113 = vmatmul.mubr.f32.gmra.mrb[0].mxu0 %v571
        %v3114 = vpop.f32.mrb[0].mxu0
        %v3115 = vadd.f32 0.0, %v3114
        %v3116 = vpop.f32.mrb[0].mxu0
        %v3117 = vadd.f32 0.0, %v3116
        %3118 = vmatprep.mubr.f32.mxu0 %v416
        %3119 = vmatmul.mubr.f32.gmra.mrb[0].mxu0 %v414
        %v3120 = vpop.f32.mrb[0].mxu0
        %v3121 = vadd.f32 0.0, %v3120
        %v3122 = vpop.f32.mrb[0].mxu0
        %v3123 = vadd.f32 0.0, %v3122
        %3124 = vmatprep.mubr.f32.mxu0 %v576
        %3125 = vmatmul.mubr.f32.gmra.mrb[0].mxu0 %v575
        %v3126 = vpop.f32.mrb[0].mxu0
        %v3127 = vadd.f32 0.0, %v3126
        %v3128 = vpop.f32.mrb[0].mxu0
        %v3129 = vadd.f32 0.0, %v3128
        %3130 = vmatprep.mubr.f32.mxu0 %v428
        %3131 = vmatmul.mubr.f32.gmra.mrb[0].mxu0 %v426
        %v3132 = vpop.f32.mrb[0].mxu0
        %v3133 = vadd.f32 0.0, %v3132
        %v3134 = vpop.f32.mrb[0].mxu0
        %v3135 = vadd.f32 0.0, %v3134
        %3136 = vmatprep.mubr.f32.mxu0 %v578
        %3137 = vmatmul.mubr.f32.gmra.mrb[0].mxu0 %v577
        %v3138 = vpop.f32.mrb[0].mxu0
        %v3139 = vadd.f32 0.0, %v3138
        %v3140 = vpop.f32.mrb[0].mxu0
        %v3141 = vadd.f32 0.0, %v3140
        %3142 = vmatprep.mubr.f32.mxu0 %v434
        %3143 = vmatmul.mubr.f32.gmra.mrb[0].mxu0 %v432
        %v3144 = vpop.f32.mrb[0].mxu0
        %v3145 = vadd.f32 0.0, %v3144
        %v3146 = vpop.f32.mrb[0].mxu0
        %v3147 = vadd.f32 0.0, %v3146
        %3148 = vmatprep.mubr.f32.mxu0 %v580
        %3149 = vmatmul.mubr.f32.gmra.mrb[0].mxu0 %v579
        %v3150 = vpop.f32.mrb[0].mxu0
        %v3151 = vadd.f32 0.0, %v3150
        %v3152 = vpop.f32.mrb[0].mxu0
        %v3153 = vadd.f32 0.0, %v3152
        %3154 = vmatprep.mubr.f32.mxu0 %v440
        %3155 = vmatmul.mubr.f32.gmra.mrb[0].mxu0 %v438
        %v3156 = vpop.f32.mrb[0].mxu0
        %v3157 = vadd.f32 0.0, %v3156
        %v3158 = vpop.f32.mrb[0].mxu0
        %v3159 = vadd.f32 0.0, %v3158
        %3160 = vmatprep.mubr.f32.mxu0 %v582
        %3161 = vmatmul.mubr.f32.gmra.mrb[0].mxu0 %v581
        %v3162 = vpop.f32.mrb[0].mxu0
        %v3163 = vadd.f32 0.0, %v3162
        %v3164 = vpop.f32.mrb[0].mxu0
        %v3165 = vadd.f32 0.0, %v3164
        %3166 = vmatprep.mubr.f32.mxu0 %v446
        %3167 = vmatmul.mubr.f32.gmra.mrb[0].mxu0 %v444
        %v3168 = vpop.f32.mrb[0].mxu0
        %v3169 = vadd.f32 0.0, %v3168
        %v3170 = vpop.f32.mrb[0].mxu0
        %v3171 = vadd.f32 0.0, %v3170
        %3172 = vmatprep.mubr.f32.mxu0 %v584
        %3173 = vmatmul.mubr.f32.gmra.mrb[0].mxu0 %v583
        %v3174 = vpop.f32.mrb[0].mxu0
        %v3175 = vadd.f32 0.0, %v3174
        %v3176 = vpop.f32.mrb[0].mxu0
        %v3177 = vadd.f32 0.0, %v3176
        %3178 = vmatprep.mubr.f32.mxu0 %v452
        %3179 = vmatmul.mubr.f32.gmra.mrb[0].mxu0 %v450
        %v3180 = vpop.f32.mrb[0].mxu0
        %v3181 = vadd.f32 0.0, %v3180
        %v3182 = vpop.f32.mrb[0].mxu0
        %v3183 = vadd.f32 0.0, %v3182
        %3184 = vmatprep.mubr.f32.mxu0 %v586
        %3185 = vmatmul.mubr.f32.gmra.mrb[0].mxu0 %v585
        %v3186 = vpop.f32.mrb[0].mxu0
        %v3187 = vadd.f32 0.0, %v3186
        %v3188 = vpop.f32.mrb[0].mxu0
        %v3189 = vadd.f32 0.0, %v3188
        %3190 = vmatprep.mubr.f32.mxu0 %v458
        %3191 = vmatmul.mubr.f32.gmra.mrb[0].mxu0 %v456
        %v3192 = vpop.f32.mrb[0].mxu0
        %v3193 = vadd.f32 0.0, %v3192
        %v3194 = vpop.f32.mrb[0].mxu0
        %v3195 = vadd.f32 0.0, %v3194
        %3196 = vmatprep.mubr.f32.mxu0 %v588
        %3197 = vmatmul.mubr.f32.gmra.mrb[0].mxu0 %v587
        %v3198 = vpop.f32.mrb[0].mxu0
        %v3199 = vadd.f32 0.0, %v3198
        %v3200 = vpop.f32.mrb[0].mxu0
        %v3201 = vadd.f32 0.0, %v3200
        %3202 = vmatprep.mubr.f32.mxu0 %v464
        %3203 = vmatmul.mubr.f32.gmra.mrb[0].mxu0 %v462
        %v3204 = vpop.f32.mrb[0].mxu0
        %v3205 = vadd.f32 0.0, %v3204
        %v3206 = vpop.f32.mrb[0].mxu0
        %v3207 = vadd.f32 0.0, %v3206
        %3208 = vmatprep.mubr.f32.mxu0 %v590
        %3209 = vmatmul.mubr.f32.gmra.mrb[0].mxu0 %v589
        %v3210 = vpop.f32.mrb[0].mxu0
        %v3211 = vadd.f32 0.0, %v3210
        %v3212 = vpop.f32.mrb[0].mxu0
        %v3213 = vadd.f32 0.0, %v3212
        %3214 = vmatprep.mubr.f32.mxu0 %v470
        %3215 = vmatmul.mubr.f32.gmra.mrb[0].mxu0 %v468
        %v3216 = vpop.f32.mrb[0].mxu0
        %v3217 = vadd.f32 0.0, %v3216
        %v3218 = vpop.f32.mrb[0].mxu0
        %v3219 = vadd.f32 0.0, %v3218
        %3220 = vmatprep.mubr.f32.mxu0 %v592
        %3221 = vmatmul.mubr.f32.gmra.mrb[0].mxu0 %v591
        %v3222 = vpop.f32.mrb[0].mxu0
        %v3223 = vadd.f32 0.0, %v3222
        %v3224 = vpop.f32.mrb[0].mxu0
        %v3225 = vadd.f32 0.0, %v3224
        %3226 = vmatprep.mubr.f32.mxu0 %v476
        %3227 = vmatmul.mubr.f32.gmra.mrb[0].mxu0 %v474
        %v3228 = vpop.f32.mrb[0].mxu0
        %v3229 = vadd.f32 0.0, %v3228
        %v3230 = vpop.f32.mrb[0].mxu0
        %v3231 = vadd.f32 0.0, %v3230
        %3232 = vmatprep.mubr.f32.mxu0 %v594
        %3233 = vmatmul.mubr.f32.gmra.mrb[0].mxu0 %v593
        %v3234 = vpop.f32.mrb[0].mxu0
        %v3235 = vadd.f32 0.0, %v3234
        %v3236 = vpop.f32.mrb[0].mxu0
        %v3237 = vadd.f32 0.0, %v3236
        %3238 = vmatprep.mubr.f32.mxu0 %v482
        %3239 = vmatmul.mubr.f32.gmra.mrb[0].mxu0 %v480
        %v3240 = vpop.f32.mrb[0].mxu0
        %v3241 = vadd.f32 0.0, %v3240
        %v3242 = vpop.f32.mrb[0].mxu0
        %v3243 = vadd.f32 0.0, %v3242
        %3244 = vmatprep.mubr.f32.mxu0 %v596
        %3245 = vmatmul.mubr.f32.gmra.mrb[0].mxu0 %v595
        %v3246 = vpop.f32.mrb[0].mxu0
        %v3247 = vadd.f32 0.0, %v3246
        %v3248 = vpop.f32.mrb[0].mxu0
        %v3249 = vadd.f32 0.0, %v3248
        %3250 = vmatprep.mubr.f32.mxu0 %v488
        %3251 = vmatmul.mubr.f32.gmra.mrb[0].mxu0 %v486
        %v3252 = vpop.f32.mrb[0].mxu0
        %v3253 = vadd.f32 0.0, %v3252
        %v3254 = vpop.f32.mrb[0].mxu0
        %v3255 = vadd.f32 0.0, %v3254
        %3256 = vmatprep.mubr.f32.mxu0 %v598
        %3257 = vmatmul.mubr.f32.gmra.mrb[0].mxu0 %v597
        %v3258 = vpop.f32.mrb[0].mxu0
        %v3259 = vadd.f32 0.0, %v3258
        %v3260 = vpop.f32.mrb[0].mxu0
        %v3261 = vadd.f32 0.0, %v3260
        %3262 = vmatprep.mubr.f32.mxu0 %v494
        %3263 = vmatmul.mubr.f32.gmra.mrb[0].mxu0 %v492
        %v3264 = vpop.f32.mrb[0].mxu0
        %v3265 = vadd.f32 0.0, %v3264
        %v3266 = vpop.f32.mrb[0].mxu0
        %v3267 = vadd.f32 0.0, %v3266
        %3268 = vmatprep.mubr.f32.mxu0 %v600
        %3269 = vmatmul.mubr.f32.gmra.mrb[0].mxu0 %v599
        %v3270 = vpop.f32.mrb[0].mxu0
        %v3271 = vadd.f32 0.0, %v3270
        %v3272 = vpop.f32.mrb[0].mxu0
        %v3273 = vadd.f32 0.0, %v3272
        %3274 = vmatprep.mubr.f32.mxu0 %v500
        %3275 = vmatmul.mubr.f32.gmra.mrb[0].mxu0 %v498
        %v3276 = vpop.f32.mrb[0].mxu0
        %v3277 = vadd.f32 0.0, %v3276
        %v3278 = vpop.f32.mrb[0].mxu0
        %v3279 = vadd.f32 0.0, %v3278
        %3280 = vmatprep.mubr.f32.mxu0 %v602
        %3281 = vmatmul.mubr.f32.gmra.mrb[0].mxu0 %v601
        %v3282 = vpop.f32.mrb[0].mxu0
        %v3283 = vadd.f32 0.0, %v3282
        %v3284 = vpop.f32.mrb[0].mxu0
        %v3285 = vadd.f32 0.0, %v3284
        %3286 = vmatprep.mubr.f32.mxu0 %v506
        %3287 = vmatmul.mubr.f32.gmra.mrb[0].mxu0 %v504
        %v3288 = vpop.f32.mrb[0].mxu0
        %v3289 = vadd.f32 0.0, %v3288
        %v3290 = vpop.f32.mrb[0].mxu0
        %v3291 = vadd.f32 0.0, %v3290
        %3292 = vmatprep.mubr.f32.mxu0 %v600
        %3293 = vmatmul.mubr.f32.gmra.mrb[0].mxu0 %v599
        %v3294 = vpop.f32.mrb[0].mxu0
        %v3295 = vadd.f32 0.0, %v3294
        %v3296 = vpop.f32.mrb[0].mxu0
        %v3297 = vadd.f32 0.0, %v3296
        %3298 = vmatprep.mubr.f32.mxu0 %v500
        %3299 = vmatmul.mubr.f32.gmra.mrb[0].mxu0 %v498
        %v3300 = vpop.f32.mrb[0].mxu0
        %v3301 = vadd.f32 0.0, %v3300
        %v3302 = vpop.f32.mrb[0].mxu0
        %v3303 = vadd.f32 0.0, %v3302
        %3304 = vdwg.mxu0
        %v3305 = vadd.f32 %v2919, %v3115
        %v3306 = vadd.f32 %v2920, %v3117
        %v3307 = vadd.f32 %v2921, %v3121
        %v3308 = vadd.f32 %v2922, %v3123
        %v3309 = vadd.f32 %v2923, %v3127
        %v3310 = vadd.f32 %v2924, %v3129
        %v3311 = vadd.f32 %v2925, %v3133
        %v3312 = vadd.f32 %v2926, %v3135
        %v3313 = vadd.f32 %v2927, %v3139
        %v3314 = vadd.f32 %v2928, %v3141
        %v3315 = vadd.f32 %v2929, %v3145
        %v3316 = vadd.f32 %v2930, %v3147
        %v3317 = vadd.f32 %v2931, %v3151
        %v3318 = vadd.f32 %v2932, %v3153
        %v3319 = vadd.f32 %v2933, %v3157
        %v3320 = vadd.f32 %v2934, %v3159
        %v3321 = vadd.f32 %v2935, %v3163
        %v3322 = vadd.f32 %v2936, %v3165
        %v3323 = vadd.f32 %v2937, %v3169
        %v3324 = vadd.f32 %v2938, %v3171
        %v3325 = vadd.f32 %v2939, %v3175
        %v3326 = vadd.f32 %v2940, %v3177
        %v3327 = vadd.f32 %v2941, %v3181
        %v3328 = vadd.f32 %v2942, %v3183
        %v3329 = vadd.f32 %v2943, %v3187
        %v3330 = vadd.f32 %v2944, %v3189
        %v3331 = vadd.f32 %v2945, %v3193
        %v3332 = vadd.f32 %v2946, %v3195
        %v3333 = vadd.f32 %v2947, %v3199
        %v3334 = vadd.f32 %v2948, %v3201
        %v3335 = vadd.f32 %v2949, %v3205
        %v3336 = vadd.f32 %v2950, %v3207
        %v3337 = vadd.f32 %v2951, %v3211
        %v3338 = vadd.f32 %v2952, %v3213
        %v3339 = vadd.f32 %v2953, %v3217
        %v3340 = vadd.f32 %v2954, %v3219
        %v3341 = vadd.f32 %v2955, %v3223
        %v3342 = vadd.f32 %v2956, %v3225
        %v3343 = vadd.f32 %v2957, %v3229
        %v3344 = vadd.f32 %v2958, %v3231
        %v3345 = vadd.f32 %v2959, %v3235
        %v3346 = vadd.f32 %v2960, %v3237
        %v3347 = vadd.f32 %v2961, %v3241
        %v3348 = vadd.f32 %v2962, %v3243
        %v3349 = vadd.f32 %v2963, %v3247
        %v3350 = vadd.f32 %v2964, %v3249
        %v3351 = vadd.f32 %v2965, %v3253
        %v3352 = vadd.f32 %v2966, %v3255
        %v3353 = vadd.f32 %v2967, %v3259
        %v3354 = vadd.f32 %v2968, %v3261
        %v3355 = vadd.f32 %v2969, %v3265
        %v3356 = vadd.f32 %v2970, %v3267
        %v3357 = vadd.f32 %v2971, %v3271
        %v3358 = vadd.f32 %v2972, %v3273
        %v3359 = vadd.f32 %v2973, %v3277
        %v3360 = vadd.f32 %v2974, %v3279
        %v3361 = vadd.f32 %v2975, %v3283
        %v3362 = vadd.f32 %v2976, %v3285
        %v3363 = vadd.f32 %v2977, %v3289
        %v3364 = vadd.f32 %v2978, %v3291
        %v3365 = vadd.f32 %v2979, %v3295
        %v3366 = vadd.f32 %v2980, %v3297
        %v3367 = vadd.f32 %v2981, %v3301
        %v3368 = vadd.f32 %v2982, %v3303
        %s3369 = scalar_lea.vmem [#allocation5], 3584
        %v3370 = vld [vmem:[%s3369] sm:$0xff]
        %v3371 = vld [vmem:[%s3369 + $0x8] sm:$0xff]
        %v3372 = vld [vmem:[%s3369 + $0x10] sm:$0xff]
        %v3373 = vld [vmem:[%s3369 + $0x18] sm:$0xff]
        %v3374 = vld [vmem:[%s3369 + $0x20] sm:$0xff]
        %v3375 = vld [vmem:[%s3369 + $0x28] sm:$0xff]
        %v3376 = vld [vmem:[%s3369 + $0x30] sm:$0xff]
        %v3377 = vld [vmem:[%s3369 + $0x38] sm:$0xff]
        %v3378 = vld [vmem:[%s3369 + $0x40] sm:$0xff]
        %v3379 = vld [vmem:[%s3369 + $0x48] sm:$0xff]
        %v3380 = vld [vmem:[%s3369 + $0x50] sm:$0xff]
        %v3381 = vld [vmem:[%s3369 + $0x58] sm:$0xff]
        %v3382 = vld [vmem:[%s3369 + $0x60] sm:$0xff]
        %v3383 = vld [vmem:[%s3369 + $0x68] sm:$0xff]
        %v3384 = vld [vmem:[%s3369 + $0x70] sm:$0xff]
        %v3385 = vld [vmem:[%s3369 + $0x78] sm:$0xff]
        %v3386 = vld [vmem:[%s3369 + $0x80] sm:$0xff]
        %v3387 = vld [vmem:[%s3369 + $0x88] sm:$0xff]
        %v3388 = vld [vmem:[%s3369 + $0x90] sm:$0xff]
        %v3389 = vld [vmem:[%s3369 + $0x98] sm:$0xff]
        %v3390 = vld [vmem:[%s3369 + $0xa0] sm:$0xff]
        %v3391 = vld [vmem:[%s3369 + $0xa8] sm:$0xff]
        %v3392 = vld [vmem:[%s3369 + $0xb0] sm:$0xff]
        %v3393 = vld [vmem:[%s3369 + $0xb8] sm:$0xff]
        %v3394 = vld [vmem:[%s3369 + $0xc0] sm:$0xff]
        %v3395 = vld [vmem:[%s3369 + $0xc8] sm:$0xff]
        %v3396 = vld [vmem:[%s3369 + $0xd0] sm:$0xff]
        %v3397 = vld [vmem:[%s3369 + $0xd8] sm:$0xff]
        %v3398 = vld [vmem:[%s3369 + $0xe0] sm:$0xff]
        %v3399 = vld [vmem:[%s3369 + $0xe8] sm:$0xff]
        %v3400 = vld [vmem:[%s3369 + $0xf0] sm:$0xff]
        %v3401 = vld [vmem:[%s3369 + $0xf8] sm:$0xff]
        %v3402 = vld [vmem:[%s3369 + $0x100] sm:$0xff]
        %v3403 = vld [vmem:[%s3369 + $0x108] sm:$0xff]
        %v3404 = vld [vmem:[%s3369 + $0x110] sm:$0xff]
        %v3405 = vld [vmem:[%s3369 + $0x118] sm:$0xff]
        %v3406 = vld [vmem:[%s3369 + $0x120] sm:$0xff]
        %v3407 = vld [vmem:[%s3369 + $0x128] sm:$0xff]
        %v3408 = vld [vmem:[%s3369 + $0x130] sm:$0xff]
        %v3409 = vld [vmem:[%s3369 + $0x138] sm:$0xff]
        %v3410 = vld [vmem:[%s3369 + $0x140] sm:$0xff]
        %v3411 = vld [vmem:[%s3369 + $0x148] sm:$0xff]
        %v3412 = vld [vmem:[%s3369 + $0x150] sm:$0xff]
        %v3413 = vld [vmem:[%s3369 + $0x158] sm:$0xff]
        %v3414 = vld [vmem:[%s3369 + $0x160] sm:$0xff]
        %v3415 = vld [vmem:[%s3369 + $0x168] sm:$0xff]
        %v3416 = vld [vmem:[%s3369 + $0x170] sm:$0xff]
        %v3417 = vld [vmem:[%s3369 + $0x178] sm:$0xff]
        %v3418 = vld [vmem:[%s3369 + $0x180] sm:$0xff]
        %v3419 = vld [vmem:[%s3369 + $0x188] sm:$0xff]
        %v3420 = vld [vmem:[%s3369 + $0x190] sm:$0xff]
        %v3421 = vld [vmem:[%s3369 + $0x198] sm:$0xff]
        %v3422 = vld [vmem:[%s3369 + $0x1a0] sm:$0xff]
        %v3423 = vld [vmem:[%s3369 + $0x1a8] sm:$0xff]
        %v3424 = vld [vmem:[%s3369 + $0x1b0] sm:$0xff]
        %v3425 = vld [vmem:[%s3369 + $0x1b8] sm:$0xff]
        %v3426 = vld [vmem:[%s3369 + $0x1c0] sm:$0xff]
        %v3427 = vld [vmem:[%s3369 + $0x1c8] sm:$0xff]
        %v3428 = vld [vmem:[%s3369 + $0x1d0] sm:$0xff]
        %v3429 = vld [vmem:[%s3369 + $0x1d8] sm:$0xff]
        %v3430 = vld [vmem:[%s3369 + $0x1e0] sm:$0xff]
        %v3431 = vld [vmem:[%s3369 + $0x1e8] sm:$0xff]
        %v3432 = vld [vmem:[%s3369 + $0x1f0] sm:$0xff]
        %v3433 = vld [vmem:[%s3369 + $0x1f8] sm:$0xff]
        %3434 = vmatprep.subr.mxu0 %v3371
        %3435 = vmatpush1.msra.mxu0 %v3370
        %3436 = vmatprep.subr.mxu0 %v3373
        %3437 = vmatpush1.msra.mxu0 %v3372
        %3438 = vmatprep.subr.mxu0 %v3375
        %3439 = vmatpush1.msra.mxu0 %v3374
        %3440 = vmatprep.subr.mxu0 %v3377
        %3441 = vmatpush1.msra.mxu0 %v3376
        %3442 = vmatprep.subr.mxu0 %v3379
        %3443 = vmatpush1.msra.mxu0 %v3378
        %3444 = vmatprep.subr.mxu0 %v3381
        %3445 = vmatpush1.msra.mxu0 %v3380
        %3446 = vmatprep.subr.mxu0 %v3383
        %3447 = vmatpush1.msra.mxu0 %v3382
        %3448 = vmatprep.subr.mxu0 %v3385
        %3449 = vmatpush1.msra.mxu0 %v3384
        %3450 = vmatprep.subr.mxu0 %v3387
        %3451 = vmatpush1.msra.mxu0 %v3386
        %3452 = vmatprep.subr.mxu0 %v3389
        %3453 = vmatpush1.msra.mxu0 %v3388
        %3454 = vmatprep.subr.mxu0 %v3391
        %3455 = vmatpush1.msra.mxu0 %v3390
        %3456 = vmatprep.subr.mxu0 %v3393
        %3457 = vmatpush1.msra.mxu0 %v3392
        %3458 = vmatprep.subr.mxu0 %v3395
        %3459 = vmatpush1.msra.mxu0 %v3394
        %3460 = vmatprep.subr.mxu0 %v3397
        %3461 = vmatpush1.msra.mxu0 %v3396
        %3462 = vmatprep.subr.mxu0 %v3399
        %3463 = vmatpush1.msra.mxu0 %v3398
        %3464 = vmatprep.subr.mxu0 %v3401
        %3465 = vmatpush1.msra.mxu0 %v3400
        %3466 = vmatprep.subr.mxu0 %v3403
        %3467 = vmatpush1.msra.mxu0 %v3402
        %3468 = vmatprep.subr.mxu0 %v3405
        %3469 = vmatpush1.msra.mxu0 %v3404
        %3470 = vmatprep.subr.mxu0 %v3407
        %3471 = vmatpush1.msra.mxu0 %v3406
        %3472 = vmatprep.subr.mxu0 %v3409
        %3473 = vmatpush1.msra.mxu0 %v3408
        %3474 = vmatprep.subr.mxu0 %v3411
        %3475 = vmatpush1.msra.mxu0 %v3410
        %3476 = vmatprep.subr.mxu0 %v3413
        %3477 = vmatpush1.msra.mxu0 %v3412
        %3478 = vmatprep.subr.mxu0 %v3415
        %3479 = vmatpush1.msra.mxu0 %v3414
        %3480 = vmatprep.subr.mxu0 %v3417
        %3481 = vmatpush1.msra.mxu0 %v3416
        %3482 = vmatprep.subr.mxu0 %v3419
        %3483 = vmatpush1.msra.mxu0 %v3418
        %3484 = vmatprep.subr.mxu0 %v3421
        %3485 = vmatpush1.msra.mxu0 %v3420
        %3486 = vmatprep.subr.mxu0 %v3423
        %3487 = vmatpush1.msra.mxu0 %v3422
        %3488 = vmatprep.subr.mxu0 %v3425
        %3489 = vmatpush1.msra.mxu0 %v3424
        %3490 = vmatprep.subr.mxu0 %v3427
        %3491 = vmatpush1.msra.mxu0 %v3426
        %3492 = vmatprep.subr.mxu0 %v3429
        %3493 = vmatpush1.msra.mxu0 %v3428
        %3494 = vmatprep.subr.mxu0 %v3431
        %3495 = vmatpush1.msra.mxu0 %v3430
        %3496 = vmatprep.subr.mxu0 %v3433
        %3497 = vmatpush1.msra.mxu0 %v3432
        %3498 = vmatprep.mubr.f32.mxu0 %v223
        %3499 = vmatmul.mubr.f32.gmra.mrb[0].mxu0 %v222
        %v3500 = vpop.f32.mrb[0].mxu0
        %v3501 = vadd.f32 0.0, %v3500
        %v3502 = vpop.f32.mrb[0].mxu0
        %v3503 = vadd.f32 0.0, %v3502
        %3504 = vmatprep.mubr.f32.mxu0 %v225
        %3505 = vmatmul.mubr.f32.gmra.mrb[0].mxu0 %v224
        %v3506 = vpop.f32.mrb[0].mxu0
        %v3507 = vadd.f32 0.0, %v3506
        %v3508 = vpop.f32.mrb[0].mxu0
        %v3509 = vadd.f32 0.0, %v3508
        %3510 = vmatprep.mubr.f32.mxu0 %v227
        %3511 = vmatmul.mubr.f32.gmra.mrb[0].mxu0 %v226
        %v3512 = vpop.f32.mrb[0].mxu0
        %v3513 = vadd.f32 0.0, %v3512
        %v3514 = vpop.f32.mrb[0].mxu0
        %v3515 = vadd.f32 0.0, %v3514
        %3516 = vmatprep.mubr.f32.mxu0 %v229
        %3517 = vmatmul.mubr.f32.gmra.mrb[0].mxu0 %v228
        %v3518 = vpop.f32.mrb[0].mxu0
        %v3519 = vadd.f32 0.0, %v3518
        %v3520 = vpop.f32.mrb[0].mxu0
        %v3521 = vadd.f32 0.0, %v3520
        %3522 = vmatprep.mubr.f32.mxu0 %v231
        %3523 = vmatmul.mubr.f32.gmra.mrb[0].mxu0 %v230
        %v3524 = vpop.f32.mrb[0].mxu0
        %v3525 = vadd.f32 0.0, %v3524
        %v3526 = vpop.f32.mrb[0].mxu0
        %v3527 = vadd.f32 0.0, %v3526
        %3528 = vmatprep.mubr.f32.mxu0 %v233
        %3529 = vmatmul.mubr.f32.gmra.mrb[0].mxu0 %v232
        %v3530 = vpop.f32.mrb[0].mxu0
        %v3531 = vadd.f32 0.0, %v3530
        %v3532 = vpop.f32.mrb[0].mxu0
        %v3533 = vadd.f32 0.0, %v3532
        %3534 = vmatprep.mubr.f32.mxu0 %v235
        %3535 = vmatmul.mubr.f32.gmra.mrb[0].mxu0 %v234
        %v3536 = vpop.f32.mrb[0].mxu0
        %v3537 = vadd.f32 0.0, %v3536
        %v3538 = vpop.f32.mrb[0].mxu0
        %v3539 = vadd.f32 0.0, %v3538
        %3540 = vmatprep.mubr.f32.mxu0 %v237
        %3541 = vmatmul.mubr.f32.gmra.mrb[0].mxu0 %v236
        %v3542 = vpop.f32.mrb[0].mxu0
        %v3543 = vadd.f32 0.0, %v3542
        %v3544 = vpop.f32.mrb[0].mxu0
        %v3545 = vadd.f32 0.0, %v3544
        %3546 = vmatprep.mubr.f32.mxu0 %v239
        %3547 = vmatmul.mubr.f32.gmra.mrb[0].mxu0 %v238
        %v3548 = vpop.f32.mrb[0].mxu0
        %v3549 = vadd.f32 0.0, %v3548
        %v3550 = vpop.f32.mrb[0].mxu0
        %v3551 = vadd.f32 0.0, %v3550
        %3552 = vmatprep.mubr.f32.mxu0 %v241
        %3553 = vmatmul.mubr.f32.gmra.mrb[0].mxu0 %v240
        %v3554 = vpop.f32.mrb[0].mxu0
        %v3555 = vadd.f32 0.0, %v3554
        %v3556 = vpop.f32.mrb[0].mxu0
        %v3557 = vadd.f32 0.0, %v3556
        %3558 = vmatprep.mubr.f32.mxu0 %v243
        %3559 = vmatmul.mubr.f32.gmra.mrb[0].mxu0 %v242
        %v3560 = vpop.f32.mrb[0].mxu0
        %v3561 = vadd.f32 0.0, %v3560
        %v3562 = vpop.f32.mrb[0].mxu0
        %v3563 = vadd.f32 0.0, %v3562
        %3564 = vmatprep.mubr.f32.mxu0 %v245
        %3565 = vmatmul.mubr.f32.gmra.mrb[0].mxu0 %v244
        %v3566 = vpop.f32.mrb[0].mxu0
        %v3567 = vadd.f32 0.0, %v3566
        %v3568 = vpop.f32.mrb[0].mxu0
        %v3569 = vadd.f32 0.0, %v3568
        %3570 = vmatprep.mubr.f32.mxu0 %v247
        %3571 = vmatmul.mubr.f32.gmra.mrb[0].mxu0 %v246
        %v3572 = vpop.f32.mrb[0].mxu0
        %v3573 = vadd.f32 0.0, %v3572
        %v3574 = vpop.f32.mrb[0].mxu0
        %v3575 = vadd.f32 0.0, %v3574
        %3576 = vmatprep.mubr.f32.mxu0 %v249
        %3577 = vmatmul.mubr.f32.gmra.mrb[0].mxu0 %v248
        %v3578 = vpop.f32.mrb[0].mxu0
        %v3579 = vadd.f32 0.0, %v3578
        %v3580 = vpop.f32.mrb[0].mxu0
        %v3581 = vadd.f32 0.0, %v3580
        %3582 = vmatprep.mubr.f32.mxu0 %v251
        %3583 = vmatmul.mubr.f32.gmra.mrb[0].mxu0 %v250
        %v3584 = vpop.f32.mrb[0].mxu0
        %v3585 = vadd.f32 0.0, %v3584
        %v3586 = vpop.f32.mrb[0].mxu0
        %v3587 = vadd.f32 0.0, %v3586
        %3588 = vmatprep.mubr.f32.mxu0 %v253
        %3589 = vmatmul.mubr.f32.gmra.mrb[0].mxu0 %v252
        %v3590 = vpop.f32.mrb[0].mxu0
        %v3591 = vadd.f32 0.0, %v3590
        %v3592 = vpop.f32.mrb[0].mxu0
        %v3593 = vadd.f32 0.0, %v3592
        %3594 = vmatprep.mubr.f32.mxu0 %v255
        %3595 = vmatmul.mubr.f32.gmra.mrb[0].mxu0 %v254
        %v3596 = vpop.f32.mrb[0].mxu0
        %v3597 = vadd.f32 0.0, %v3596
        %v3598 = vpop.f32.mrb[0].mxu0
        %v3599 = vadd.f32 0.0, %v3598
        %3600 = vmatprep.mubr.f32.mxu0 %v257
        %3601 = vmatmul.mubr.f32.gmra.mrb[0].mxu0 %v256
        %v3602 = vpop.f32.mrb[0].mxu0
        %v3603 = vadd.f32 0.0, %v3602
        %v3604 = vpop.f32.mrb[0].mxu0
        %v3605 = vadd.f32 0.0, %v3604
        %3606 = vmatprep.mubr.f32.mxu0 %v259
        %3607 = vmatmul.mubr.f32.gmra.mrb[0].mxu0 %v258
        %v3608 = vpop.f32.mrb[0].mxu0
        %v3609 = vadd.f32 0.0, %v3608
        %v3610 = vpop.f32.mrb[0].mxu0
        %v3611 = vadd.f32 0.0, %v3610
        %3612 = vmatprep.mubr.f32.mxu0 %v261
        %3613 = vmatmul.mubr.f32.gmra.mrb[0].mxu0 %v260
        %v3614 = vpop.f32.mrb[0].mxu0
        %v3615 = vadd.f32 0.0, %v3614
        %v3616 = vpop.f32.mrb[0].mxu0
        %v3617 = vadd.f32 0.0, %v3616
        %3618 = vmatprep.mubr.f32.mxu0 %v263
        %3619 = vmatmul.mubr.f32.gmra.mrb[0].mxu0 %v262
        %v3620 = vpop.f32.mrb[0].mxu0
        %v3621 = vadd.f32 0.0, %v3620
        %v3622 = vpop.f32.mrb[0].mxu0
        %v3623 = vadd.f32 0.0, %v3622
        %3624 = vmatprep.mubr.f32.mxu0 %v265
        %3625 = vmatmul.mubr.f32.gmra.mrb[0].mxu0 %v264
        %v3626 = vpop.f32.mrb[0].mxu0
        %v3627 = vadd.f32 0.0, %v3626
        %v3628 = vpop.f32.mrb[0].mxu0
        %v3629 = vadd.f32 0.0, %v3628
        %3630 = vmatprep.mubr.f32.mxu0 %v267
        %3631 = vmatmul.mubr.f32.gmra.mrb[0].mxu0 %v266
        %v3632 = vpop.f32.mrb[0].mxu0
        %v3633 = vadd.f32 0.0, %v3632
        %v3634 = vpop.f32.mrb[0].mxu0
        %v3635 = vadd.f32 0.0, %v3634
        %3636 = vmatprep.mubr.f32.mxu0 %v269
        %3637 = vmatmul.mubr.f32.gmra.mrb[0].mxu0 %v268
        %v3638 = vpop.f32.mrb[0].mxu0
        %v3639 = vadd.f32 0.0, %v3638
        %v3640 = vpop.f32.mrb[0].mxu0
        %v3641 = vadd.f32 0.0, %v3640
        %3642 = vmatprep.mubr.f32.mxu0 %v271
        %3643 = vmatmul.mubr.f32.gmra.mrb[0].mxu0 %v270
        %v3644 = vpop.f32.mrb[0].mxu0
        %v3645 = vadd.f32 0.0, %v3644
        %v3646 = vpop.f32.mrb[0].mxu0
        %v3647 = vadd.f32 0.0, %v3646
        %3648 = vmatprep.mubr.f32.mxu0 %v273
        %3649 = vmatmul.mubr.f32.gmra.mrb[0].mxu0 %v272
        %v3650 = vpop.f32.mrb[0].mxu0
        %v3651 = vadd.f32 0.0, %v3650
        %v3652 = vpop.f32.mrb[0].mxu0
        %v3653 = vadd.f32 0.0, %v3652
        %3654 = vmatprep.mubr.f32.mxu0 %v275
        %3655 = vmatmul.mubr.f32.gmra.mrb[0].mxu0 %v274
        %v3656 = vpop.f32.mrb[0].mxu0
        %v3657 = vadd.f32 0.0, %v3656
        %v3658 = vpop.f32.mrb[0].mxu0
        %v3659 = vadd.f32 0.0, %v3658
        %3660 = vmatprep.mubr.f32.mxu0 %v277
        %3661 = vmatmul.mubr.f32.gmra.mrb[0].mxu0 %v276
        %v3662 = vpop.f32.mrb[0].mxu0
        %v3663 = vadd.f32 0.0, %v3662
        %v3664 = vpop.f32.mrb[0].mxu0
        %v3665 = vadd.f32 0.0, %v3664
        %3666 = vmatprep.mubr.f32.mxu0 %v279
        %3667 = vmatmul.mubr.f32.gmra.mrb[0].mxu0 %v278
        %v3668 = vpop.f32.mrb[0].mxu0
        %v3669 = vadd.f32 0.0, %v3668
        %v3670 = vpop.f32.mrb[0].mxu0
        %v3671 = vadd.f32 0.0, %v3670
        %3672 = vmatprep.mubr.f32.mxu0 %v281
        %3673 = vmatmul.mubr.f32.gmra.mrb[0].mxu0 %v280
        %v3674 = vpop.f32.mrb[0].mxu0
        %v3675 = vadd.f32 0.0, %v3674
        %v3676 = vpop.f32.mrb[0].mxu0
        %v3677 = vadd.f32 0.0, %v3676
        %3678 = vmatprep.mubr.f32.mxu0 %v275
        %3679 = vmatmul.mubr.f32.gmra.mrb[0].mxu0 %v274
        %v3680 = vpop.f32.mrb[0].mxu0
        %v3681 = vadd.f32 0.0, %v3680
        %v3682 = vpop.f32.mrb[0].mxu0
        %v3683 = vadd.f32 0.0, %v3682
        %3684 = vmatprep.mubr.f32.mxu0 %v277
        %3685 = vmatmul.mubr.f32.gmra.mrb[0].mxu0 %v276
        %v3686 = vpop.f32.mrb[0].mxu0
        %v3687 = vadd.f32 0.0, %v3686
        %v3688 = vpop.f32.mrb[0].mxu0
        %v3689 = vadd.f32 0.0, %v3688
        %3690 = vdwg.mxu0
        %v3691 = vadd.f32 %v3305, %v3501
        %v3692 = vadd.f32 %v3306, %v3503
        %v3693 = vadd.f32 %v3307, %v3507
        %v3694 = vadd.f32 %v3308, %v3509
        %v3695 = vadd.f32 %v3309, %v3513
        %v3696 = vadd.f32 %v3310, %v3515
        %v3697 = vadd.f32 %v3311, %v3519
        %v3698 = vadd.f32 %v3312, %v3521
        %v3699 = vadd.f32 %v3313, %v3525
        %v3700 = vadd.f32 %v3314, %v3527
        %v3701 = vadd.f32 %v3315, %v3531
        %v3702 = vadd.f32 %v3316, %v3533
        %v3703 = vadd.f32 %v3317, %v3537
        %v3704 = vadd.f32 %v3318, %v3539
        %v3705 = vadd.f32 %v3319, %v3543
        %v3706 = vadd.f32 %v3320, %v3545
        %v3707 = vadd.f32 %v3321, %v3549
        %v3708 = vadd.f32 %v3322, %v3551
        %v3709 = vadd.f32 %v3323, %v3555
        %v3710 = vadd.f32 %v3324, %v3557
        %v3711 = vadd.f32 %v3325, %v3561
        %v3712 = vadd.f32 %v3326, %v3563
        %v3713 = vadd.f32 %v3327, %v3567
        %v3714 = vadd.f32 %v3328, %v3569
        %v3715 = vadd.f32 %v3329, %v3573
        %v3716 = vadd.f32 %v3330, %v3575
        %v3717 = vadd.f32 %v3331, %v3579
        %v3718 = vadd.f32 %v3332, %v3581
        %v3719 = vadd.f32 %v3333, %v3585
        %v3720 = vadd.f32 %v3334, %v3587
        %v3721 = vadd.f32 %v3335, %v3591
        %v3722 = vadd.f32 %v3336, %v3593
        %v3723 = vadd.f32 %v3337, %v3597
        %v3724 = vadd.f32 %v3338, %v3599
        %v3725 = vadd.f32 %v3339, %v3603
        %v3726 = vadd.f32 %v3340, %v3605
        %v3727 = vadd.f32 %v3341, %v3609
        %v3728 = vadd.f32 %v3342, %v3611
        %v3729 = vadd.f32 %v3343, %v3615
        %v3730 = vadd.f32 %v3344, %v3617
        %v3731 = vadd.f32 %v3345, %v3621
        %v3732 = vadd.f32 %v3346, %v3623
        %v3733 = vadd.f32 %v3347, %v3627
        %v3734 = vadd.f32 %v3348, %v3629
        %v3735 = vadd.f32 %v3349, %v3633
        %v3736 = vadd.f32 %v3350, %v3635
        %v3737 = vadd.f32 %v3351, %v3639
        %v3738 = vadd.f32 %v3352, %v3641
        %v3739 = vadd.f32 %v3353, %v3645
        %v3740 = vadd.f32 %v3354, %v3647
        %v3741 = vadd.f32 %v3355, %v3651
        %v3742 = vadd.f32 %v3356, %v3653
        %v3743 = vadd.f32 %v3357, %v3657
        %v3744 = vadd.f32 %v3358, %v3659
        %v3745 = vadd.f32 %v3359, %v3663
        %v3746 = vadd.f32 %v3360, %v3665
        %v3747 = vadd.f32 %v3361, %v3669
        %v3748 = vadd.f32 %v3362, %v3671
        %v3749 = vadd.f32 %v3363, %v3675
        %v3750 = vadd.f32 %v3364, %v3677
        %v3751 = vadd.f32 %v3365, %v3681
        %v3752 = vadd.f32 %v3366, %v3683
        %v3753 = vadd.f32 %v3367, %v3687
        %v3754 = vadd.f32 %v3368, %v3689
        %s3755 = scalar_lea.vmem [#allocation5], 4096
        %v3756 = vld [vmem:[%s3755] sm:$0xff]
        %v3757 = vld [vmem:[%s3755 + $0x8] sm:$0xff]
        %v3758 = vld [vmem:[%s3755 + $0x10] sm:$0xff]
        %v3759 = vld [vmem:[%s3755 + $0x18] sm:$0xff]
        %v3760 = vld [vmem:[%s3755 + $0x20] sm:$0xff]
        %v3761 = vld [vmem:[%s3755 + $0x28] sm:$0xff]
        %v3762 = vld [vmem:[%s3755 + $0x30] sm:$0xff]
        %v3763 = vld [vmem:[%s3755 + $0x38] sm:$0xff]
        %v3764 = vld [vmem:[%s3755 + $0x40] sm:$0xff]
        %v3765 = vld [vmem:[%s3755 + $0x48] sm:$0xff]
        %v3766 = vld [vmem:[%s3755 + $0x50] sm:$0xff]
        %v3767 = vld [vmem:[%s3755 + $0x58] sm:$0xff]
        %v3768 = vld [vmem:[%s3755 + $0x60] sm:$0xff]
        %v3769 = vld [vmem:[%s3755 + $0x68] sm:$0xff]
        %v3770 = vld [vmem:[%s3755 + $0x70] sm:$0xff]
        %v3771 = vld [vmem:[%s3755 + $0x78] sm:$0xff]
        %v3772 = vld [vmem:[%s3755 + $0x80] sm:$0xff]
        %v3773 = vld [vmem:[%s3755 + $0x88] sm:$0xff]
        %v3774 = vld [vmem:[%s3755 + $0x90] sm:$0xff]
        %v3775 = vld [vmem:[%s3755 + $0x98] sm:$0xff]
        %v3776 = vld [vmem:[%s3755 + $0xa0] sm:$0xff]
        %v3777 = vld [vmem:[%s3755 + $0xa8] sm:$0xff]
        %v3778 = vld [vmem:[%s3755 + $0xb0] sm:$0xff]
        %v3779 = vld [vmem:[%s3755 + $0xb8] sm:$0xff]
        %v3780 = vld [vmem:[%s3755 + $0xc0] sm:$0xff]
        %v3781 = vld [vmem:[%s3755 + $0xc8] sm:$0xff]
        %v3782 = vld [vmem:[%s3755 + $0xd0] sm:$0xff]
        %v3783 = vld [vmem:[%s3755 + $0xd8] sm:$0xff]
        %v3784 = vld [vmem:[%s3755 + $0xe0] sm:$0xff]
        %v3785 = vld [vmem:[%s3755 + $0xe8] sm:$0xff]
        %v3786 = vld [vmem:[%s3755 + $0xf0] sm:$0xff]
        %v3787 = vld [vmem:[%s3755 + $0xf8] sm:$0xff]
        %v3788 = vld [vmem:[%s3755 + $0x100] sm:$0xff]
        %v3789 = vld [vmem:[%s3755 + $0x108] sm:$0xff]
        %v3790 = vld [vmem:[%s3755 + $0x110] sm:$0xff]
        %v3791 = vld [vmem:[%s3755 + $0x118] sm:$0xff]
        %v3792 = vld [vmem:[%s3755 + $0x120] sm:$0xff]
        %v3793 = vld [vmem:[%s3755 + $0x128] sm:$0xff]
        %v3794 = vld [vmem:[%s3755 + $0x130] sm:$0xff]
        %v3795 = vld [vmem:[%s3755 + $0x138] sm:$0xff]
        %v3796 = vld [vmem:[%s3755 + $0x140] sm:$0xff]
        %v3797 = vld [vmem:[%s3755 + $0x148] sm:$0xff]
        %v3798 = vld [vmem:[%s3755 + $0x150] sm:$0xff]
        %v3799 = vld [vmem:[%s3755 + $0x158] sm:$0xff]
        %v3800 = vld [vmem:[%s3755 + $0x160] sm:$0xff]
        %v3801 = vld [vmem:[%s3755 + $0x168] sm:$0xff]
        %v3802 = vld [vmem:[%s3755 + $0x170] sm:$0xff]
        %v3803 = vld [vmem:[%s3755 + $0x178] sm:$0xff]
        %v3804 = vld [vmem:[%s3755 + $0x180] sm:$0xff]
        %v3805 = vld [vmem:[%s3755 + $0x188] sm:$0xff]
        %v3806 = vld [vmem:[%s3755 + $0x190] sm:$0xff]
        %v3807 = vld [vmem:[%s3755 + $0x198] sm:$0xff]
        %v3808 = vld [vmem:[%s3755 + $0x1a0] sm:$0xff]
        %v3809 = vld [vmem:[%s3755 + $0x1a8] sm:$0xff]
        %v3810 = vld [vmem:[%s3755 + $0x1b0] sm:$0xff]
        %v3811 = vld [vmem:[%s3755 + $0x1b8] sm:$0xff]
        %v3812 = vld [vmem:[%s3755 + $0x1c0] sm:$0xff]
        %v3813 = vld [vmem:[%s3755 + $0x1c8] sm:$0xff]
        %v3814 = vld [vmem:[%s3755 + $0x1d0] sm:$0xff]
        %v3815 = vld [vmem:[%s3755 + $0x1d8] sm:$0xff]
        %v3816 = vld [vmem:[%s3755 + $0x1e0] sm:$0xff]
        %v3817 = vld [vmem:[%s3755 + $0x1e8] sm:$0xff]
        %v3818 = vld [vmem:[%s3755 + $0x1f0] sm:$0xff]
        %v3819 = vld [vmem:[%s3755 + $0x1f8] sm:$0xff]
        %3820 = vmatprep.subr.mxu0 %v3757
        %3821 = vmatpush1.msra.mxu0 %v3756
        %3822 = vmatprep.subr.mxu0 %v3759
        %3823 = vmatpush1.msra.mxu0 %v3758
        %3824 = vmatprep.subr.mxu0 %v3761
        %3825 = vmatpush1.msra.mxu0 %v3760
        %3826 = vmatprep.subr.mxu0 %v3763
        %3827 = vmatpush1.msra.mxu0 %v3762
        %3828 = vmatprep.subr.mxu0 %v3765
        %3829 = vmatpush1.msra.mxu0 %v3764
        %3830 = vmatprep.subr.mxu0 %v3767
        %3831 = vmatpush1.msra.mxu0 %v3766
        %3832 = vmatprep.subr.mxu0 %v3769
        %3833 = vmatpush1.msra.mxu0 %v3768
        %3834 = vmatprep.subr.mxu0 %v3771
        %3835 = vmatpush1.msra.mxu0 %v3770
        %3836 = vmatprep.subr.mxu0 %v3773
        %3837 = vmatpush1.msra.mxu0 %v3772
        %3838 = vmatprep.subr.mxu0 %v3775
        %3839 = vmatpush1.msra.mxu0 %v3774
        %3840 = vmatprep.subr.mxu0 %v3777
        %3841 = vmatpush1.msra.mxu0 %v3776
        %3842 = vmatprep.subr.mxu0 %v3779
        %3843 = vmatpush1.msra.mxu0 %v3778
        %3844 = vmatprep.subr.mxu0 %v3781
        %3845 = vmatpush1.msra.mxu0 %v3780
        %3846 = vmatprep.subr.mxu0 %v3783
        %3847 = vmatpush1.msra.mxu0 %v3782
        %3848 = vmatprep.subr.mxu0 %v3785
        %3849 = vmatpush1.msra.mxu0 %v3784
        %3850 = vmatprep.subr.mxu0 %v3787
        %3851 = vmatpush1.msra.mxu0 %v3786
        %3852 = vmatprep.subr.mxu0 %v3789
        %3853 = vmatpush1.msra.mxu0 %v3788
        %3854 = vmatprep.subr.mxu0 %v3791
        %3855 = vmatpush1.msra.mxu0 %v3790
        %3856 = vmatprep.subr.mxu0 %v3793
        %3857 = vmatpush1.msra.mxu0 %v3792
        %3858 = vmatprep.subr.mxu0 %v3795
        %3859 = vmatpush1.msra.mxu0 %v3794
        %3860 = vmatprep.subr.mxu0 %v3797
        %3861 = vmatpush1.msra.mxu0 %v3796
        %3862 = vmatprep.subr.mxu0 %v3799
        %3863 = vmatpush1.msra.mxu0 %v3798
        %3864 = vmatprep.subr.mxu0 %v3801
        %3865 = vmatpush1.msra.mxu0 %v3800
        %3866 = vmatprep.subr.mxu0 %v3803
        %3867 = vmatpush1.msra.mxu0 %v3802
        %3868 = vmatprep.subr.mxu0 %v3805
        %3869 = vmatpush1.msra.mxu0 %v3804
        %3870 = vmatprep.subr.mxu0 %v3807
        %3871 = vmatpush1.msra.mxu0 %v3806
        %3872 = vmatprep.subr.mxu0 %v3809
        %3873 = vmatpush1.msra.mxu0 %v3808
        %3874 = vmatprep.subr.mxu0 %v3811
        %3875 = vmatpush1.msra.mxu0 %v3810
        %3876 = vmatprep.subr.mxu0 %v3813
        %3877 = vmatpush1.msra.mxu0 %v3812
        %3878 = vmatprep.subr.mxu0 %v3815
        %3879 = vmatpush1.msra.mxu0 %v3814
        %3880 = vmatprep.subr.mxu0 %v3817
        %3881 = vmatpush1.msra.mxu0 %v3816
        %3882 = vmatprep.subr.mxu0 %v3819
        %3883 = vmatpush1.msra.mxu0 %v3818
        %3884 = vmatprep.mubr.f32.mxu0 %v607
        %3885 = vmatmul.mubr.f32.gmra.mrb[0].mxu0 %v605
        %v3886 = vpop.f32.mrb[0].mxu0
        %v3887 = vadd.f32 0.0, %v3886
        %v3888 = vpop.f32.mrb[0].mxu0
        %v3889 = vadd.f32 0.0, %v3888
        %3890 = vmatprep.mubr.f32.mxu0 %v765
        %3891 = vmatmul.mubr.f32.gmra.mrb[0].mxu0 %v764
        %v3892 = vpop.f32.mrb[0].mxu0
        %v3893 = vadd.f32 0.0, %v3892
        %v3894 = vpop.f32.mrb[0].mxu0
        %v3895 = vadd.f32 0.0, %v3894
        %3896 = vmatprep.mubr.f32.mxu0 %v615
        %3897 = vmatmul.mubr.f32.gmra.mrb[0].mxu0 %v613
        %v3898 = vpop.f32.mrb[0].mxu0
        %v3899 = vadd.f32 0.0, %v3898
        %v3900 = vpop.f32.mrb[0].mxu0
        %v3901 = vadd.f32 0.0, %v3900
        %3902 = vmatprep.mubr.f32.mxu0 %v769
        %3903 = vmatmul.mubr.f32.gmra.mrb[0].mxu0 %v768
        %v3904 = vpop.f32.mrb[0].mxu0
        %v3905 = vadd.f32 0.0, %v3904
        %v3906 = vpop.f32.mrb[0].mxu0
        %v3907 = vadd.f32 0.0, %v3906
        %3908 = vmatprep.mubr.f32.mxu0 %v619
        %3909 = vmatmul.mubr.f32.gmra.mrb[0].mxu0 %v617
        %v3910 = vpop.f32.mrb[0].mxu0
        %v3911 = vadd.f32 0.0, %v3910
        %v3912 = vpop.f32.mrb[0].mxu0
        %v3913 = vadd.f32 0.0, %v3912
        %3914 = vmatprep.mubr.f32.mxu0 %v771
        %3915 = vmatmul.mubr.f32.gmra.mrb[0].mxu0 %v770
        %v3916 = vpop.f32.mrb[0].mxu0
        %v3917 = vadd.f32 0.0, %v3916
        %v3918 = vpop.f32.mrb[0].mxu0
        %v3919 = vadd.f32 0.0, %v3918
        %3920 = vmatprep.mubr.f32.mxu0 %v623
        %3921 = vmatmul.mubr.f32.gmra.mrb[0].mxu0 %v621
        %v3922 = vpop.f32.mrb[0].mxu0
        %v3923 = vadd.f32 0.0, %v3922
        %v3924 = vpop.f32.mrb[0].mxu0
        %v3925 = vadd.f32 0.0, %v3924
        %3926 = vmatprep.mubr.f32.mxu0 %v773
        %3927 = vmatmul.mubr.f32.gmra.mrb[0].mxu0 %v772
        %v3928 = vpop.f32.mrb[0].mxu0
        %v3929 = vadd.f32 0.0, %v3928
        %v3930 = vpop.f32.mrb[0].mxu0
        %v3931 = vadd.f32 0.0, %v3930
        %3932 = vmatprep.mubr.f32.mxu0 %v627
        %3933 = vmatmul.mubr.f32.gmra.mrb[0].mxu0 %v625
        %v3934 = vpop.f32.mrb[0].mxu0
        %v3935 = vadd.f32 0.0, %v3934
        %v3936 = vpop.f32.mrb[0].mxu0
        %v3937 = vadd.f32 0.0, %v3936
        %3938 = vmatprep.mubr.f32.mxu0 %v775
        %3939 = vmatmul.mubr.f32.gmra.mrb[0].mxu0 %v774
        %v3940 = vpop.f32.mrb[0].mxu0
        %v3941 = vadd.f32 0.0, %v3940
        %v3942 = vpop.f32.mrb[0].mxu0
        %v3943 = vadd.f32 0.0, %v3942
        %3944 = vmatprep.mubr.f32.mxu0 %v631
        %3945 = vmatmul.mubr.f32.gmra.mrb[0].mxu0 %v629
        %v3946 = vpop.f32.mrb[0].mxu0
        %v3947 = vadd.f32 0.0, %v3946
        %v3948 = vpop.f32.mrb[0].mxu0
        %v3949 = vadd.f32 0.0, %v3948
        %3950 = vmatprep.mubr.f32.mxu0 %v777
        %3951 = vmatmul.mubr.f32.gmra.mrb[0].mxu0 %v776
        %v3952 = vpop.f32.mrb[0].mxu0
        %v3953 = vadd.f32 0.0, %v3952
        %v3954 = vpop.f32.mrb[0].mxu0
        %v3955 = vadd.f32 0.0, %v3954
        %3956 = vmatprep.mubr.f32.mxu0 %v635
        %3957 = vmatmul.mubr.f32.gmra.mrb[0].mxu0 %v633
        %v3958 = vpop.f32.mrb[0].mxu0
        %v3959 = vadd.f32 0.0, %v3958
        %v3960 = vpop.f32.mrb[0].mxu0
        %v3961 = vadd.f32 0.0, %v3960
        %3962 = vmatprep.mubr.f32.mxu0 %v779
        %3963 = vmatmul.mubr.f32.gmra.mrb[0].mxu0 %v778
        %v3964 = vpop.f32.mrb[0].mxu0
        %v3965 = vadd.f32 0.0, %v3964
        %v3966 = vpop.f32.mrb[0].mxu0
        %v3967 = vadd.f32 0.0, %v3966
        %3968 = vmatprep.mubr.f32.mxu0 %v639
        %3969 = vmatmul.mubr.f32.gmra.mrb[0].mxu0 %v637
        %v3970 = vpop.f32.mrb[0].mxu0
        %v3971 = vadd.f32 0.0, %v3970
        %v3972 = vpop.f32.mrb[0].mxu0
        %v3973 = vadd.f32 0.0, %v3972
        %3974 = vmatprep.mubr.f32.mxu0 %v781
        %3975 = vmatmul.mubr.f32.gmra.mrb[0].mxu0 %v780
        %v3976 = vpop.f32.mrb[0].mxu0
        %v3977 = vadd.f32 0.0, %v3976
        %v3978 = vpop.f32.mrb[0].mxu0
        %v3979 = vadd.f32 0.0, %v3978
        %3980 = vmatprep.mubr.f32.mxu0 %v643
        %3981 = vmatmul.mubr.f32.gmra.mrb[0].mxu0 %v641
        %v3982 = vpop.f32.mrb[0].mxu0
        %v3983 = vadd.f32 0.0, %v3982
        %v3984 = vpop.f32.mrb[0].mxu0
        %v3985 = vadd.f32 0.0, %v3984
        %3986 = vmatprep.mubr.f32.mxu0 %v783
        %3987 = vmatmul.mubr.f32.gmra.mrb[0].mxu0 %v782
        %v3988 = vpop.f32.mrb[0].mxu0
        %v3989 = vadd.f32 0.0, %v3988
        %v3990 = vpop.f32.mrb[0].mxu0
        %v3991 = vadd.f32 0.0, %v3990
        %3992 = vmatprep.mubr.f32.mxu0 %v647
        %3993 = vmatmul.mubr.f32.gmra.mrb[0].mxu0 %v645
        %v3994 = vpop.f32.mrb[0].mxu0
        %v3995 = vadd.f32 0.0, %v3994
        %v3996 = vpop.f32.mrb[0].mxu0
        %v3997 = vadd.f32 0.0, %v3996
        %3998 = vmatprep.mubr.f32.mxu0 %v785
        %3999 = vmatmul.mubr.f32.gmra.mrb[0].mxu0 %v784
        %v4000 = vpop.f32.mrb[0].mxu0
        %v4001 = vadd.f32 0.0, %v4000
        %v4002 = vpop.f32.mrb[0].mxu0
        %v4003 = vadd.f32 0.0, %v4002
        %4004 = vmatprep.mubr.f32.mxu0 %v651
        %4005 = vmatmul.mubr.f32.gmra.mrb[0].mxu0 %v649
        %v4006 = vpop.f32.mrb[0].mxu0
        %v4007 = vadd.f32 0.0, %v4006
        %v4008 = vpop.f32.mrb[0].mxu0
        %v4009 = vadd.f32 0.0, %v4008
        %4010 = vmatprep.mubr.f32.mxu0 %v787
        %4011 = vmatmul.mubr.f32.gmra.mrb[0].mxu0 %v786
        %v4012 = vpop.f32.mrb[0].mxu0
        %v4013 = vadd.f32 0.0, %v4012
        %v4014 = vpop.f32.mrb[0].mxu0
        %v4015 = vadd.f32 0.0, %v4014
        %4016 = vmatprep.mubr.f32.mxu0 %v655
        %4017 = vmatmul.mubr.f32.gmra.mrb[0].mxu0 %v653
        %v4018 = vpop.f32.mrb[0].mxu0
        %v4019 = vadd.f32 0.0, %v4018
        %v4020 = vpop.f32.mrb[0].mxu0
        %v4021 = vadd.f32 0.0, %v4020
        %4022 = vmatprep.mubr.f32.mxu0 %v789
        %4023 = vmatmul.mubr.f32.gmra.mrb[0].mxu0 %v788
        %v4024 = vpop.f32.mrb[0].mxu0
        %v4025 = vadd.f32 0.0, %v4024
        %v4026 = vpop.f32.mrb[0].mxu0
        %v4027 = vadd.f32 0.0, %v4026
        %4028 = vmatprep.mubr.f32.mxu0 %v659
        %4029 = vmatmul.mubr.f32.gmra.mrb[0].mxu0 %v657
        %v4030 = vpop.f32.mrb[0].mxu0
        %v4031 = vadd.f32 0.0, %v4030
        %v4032 = vpop.f32.mrb[0].mxu0
        %v4033 = vadd.f32 0.0, %v4032
        %4034 = vmatprep.mubr.f32.mxu0 %v791
        %4035 = vmatmul.mubr.f32.gmra.mrb[0].mxu0 %v790
        %v4036 = vpop.f32.mrb[0].mxu0
        %v4037 = vadd.f32 0.0, %v4036
        %v4038 = vpop.f32.mrb[0].mxu0
        %v4039 = vadd.f32 0.0, %v4038
        %4040 = vmatprep.mubr.f32.mxu0 %v663
        %4041 = vmatmul.mubr.f32.gmra.mrb[0].mxu0 %v661
        %v4042 = vpop.f32.mrb[0].mxu0
        %v4043 = vadd.f32 0.0, %v4042
        %v4044 = vpop.f32.mrb[0].mxu0
        %v4045 = vadd.f32 0.0, %v4044
        %4046 = vmatprep.mubr.f32.mxu0 %v793
        %4047 = vmatmul.mubr.f32.gmra.mrb[0].mxu0 %v792
        %v4048 = vpop.f32.mrb[0].mxu0
        %v4049 = vadd.f32 0.0, %v4048
        %v4050 = vpop.f32.mrb[0].mxu0
        %v4051 = vadd.f32 0.0, %v4050
        %4052 = vmatprep.mubr.f32.mxu0 %v667
        %4053 = vmatmul.mubr.f32.gmra.mrb[0].mxu0 %v665
        %v4054 = vpop.f32.mrb[0].mxu0
        %v4055 = vadd.f32 0.0, %v4054
        %v4056 = vpop.f32.mrb[0].mxu0
        %v4057 = vadd.f32 0.0, %v4056
        %4058 = vmatprep.mubr.f32.mxu0 %v795
        %4059 = vmatmul.mubr.f32.gmra.mrb[0].mxu0 %v794
        %v4060 = vpop.f32.mrb[0].mxu0
        %v4061 = vadd.f32 0.0, %v4060
        %v4062 = vpop.f32.mrb[0].mxu0
        %v4063 = vadd.f32 0.0, %v4062
        %4064 = vmatprep.mubr.f32.mxu0 %v663
        %4065 = vmatmul.mubr.f32.gmra.mrb[0].mxu0 %v661
        %v4066 = vpop.f32.mrb[0].mxu0
        %v4067 = vadd.f32 0.0, %v4066
        %v4068 = vpop.f32.mrb[0].mxu0
        %v4069 = vadd.f32 0.0, %v4068
        %4070 = vmatprep.mubr.f32.mxu0 %v793
        %4071 = vmatmul.mubr.f32.gmra.mrb[0].mxu0 %v792
        %v4072 = vpop.f32.mrb[0].mxu0
        %v4073 = vadd.f32 0.0, %v4072
        %v4074 = vpop.f32.mrb[0].mxu0
        %v4075 = vadd.f32 0.0, %v4074
        %4076 = vdwg.mxu0
        %v4077 = vadd.f32 %v3691, %v3887
        %v4078 = vadd.f32 %v3692, %v3889
        %v4079 = vadd.f32 %v3693, %v3893
        %v4080 = vadd.f32 %v3694, %v3895
        %v4081 = vadd.f32 %v3695, %v3899
        %v4082 = vadd.f32 %v3696, %v3901
        %v4083 = vadd.f32 %v3697, %v3905
        %v4084 = vadd.f32 %v3698, %v3907
        %v4085 = vadd.f32 %v3699, %v3911
        %v4086 = vadd.f32 %v3700, %v3913
        %v4087 = vadd.f32 %v3701, %v3917
        %v4088 = vadd.f32 %v3702, %v3919
        %v4089 = vadd.f32 %v3703, %v3923
        %v4090 = vadd.f32 %v3704, %v3925
        %v4091 = vadd.f32 %v3705, %v3929
        %v4092 = vadd.f32 %v3706, %v3931
        %v4093 = vadd.f32 %v3707, %v3935
        %v4094 = vadd.f32 %v3708, %v3937
        %v4095 = vadd.f32 %v3709, %v3941
        %v4096 = vadd.f32 %v3710, %v3943
        %v4097 = vadd.f32 %v3711, %v3947
        %v4098 = vadd.f32 %v3712, %v3949
        %v4099 = vadd.f32 %v3713, %v3953
        %v4100 = vadd.f32 %v3714, %v3955
        %v4101 = vadd.f32 %v3715, %v3959
        %v4102 = vadd.f32 %v3716, %v3961
        %v4103 = vadd.f32 %v3717, %v3965
        %v4104 = vadd.f32 %v3718, %v3967
        %v4105 = vadd.f32 %v3719, %v3971
        %v4106 = vadd.f32 %v3720, %v3973
        %v4107 = vadd.f32 %v3721, %v3977
        %v4108 = vadd.f32 %v3722, %v3979
        %v4109 = vadd.f32 %v3723, %v3983
        %v4110 = vadd.f32 %v3724, %v3985
        %v4111 = vadd.f32 %v3725, %v3989
        %v4112 = vadd.f32 %v3726, %v3991
        %v4113 = vadd.f32 %v3727, %v3995
        %v4114 = vadd.f32 %v3728, %v3997
        %v4115 = vadd.f32 %v3729, %v4001
        %v4116 = vadd.f32 %v3730, %v4003
        %v4117 = vadd.f32 %v3731, %v4007
        %v4118 = vadd.f32 %v3732, %v4009
        %v4119 = vadd.f32 %v3733, %v4013
        %v4120 = vadd.f32 %v3734, %v4015
        %v4121 = vadd.f32 %v3735, %v4019
        %v4122 = vadd.f32 %v3736, %v4021
        %v4123 = vadd.f32 %v3737, %v4025
        %v4124 = vadd.f32 %v3738, %v4027
        %v4125 = vadd.f32 %v3739, %v4031
        %v4126 = vadd.f32 %v3740, %v4033
        %v4127 = vadd.f32 %v3741, %v4037
        %v4128 = vadd.f32 %v3742, %v4039
        %v4129 = vadd.f32 %v3743, %v4043
        %v4130 = vadd.f32 %v3744, %v4045
        %v4131 = vadd.f32 %v3745, %v4049
        %v4132 = vadd.f32 %v3746, %v4051
        %v4133 = vadd.f32 %v3747, %v4055
        %v4134 = vadd.f32 %v3748, %v4057
        %v4135 = vadd.f32 %v3749, %v4061
        %v4136 = vadd.f32 %v3750, %v4063
        %v4137 = vadd.f32 %v3751, %v4067
        %v4138 = vadd.f32 %v3752, %v4069
        %v4139 = vadd.f32 %v3753, %v4073
        %v4140 = vadd.f32 %v3754, %v4075
        %v4141 = vadd.f32 %v4077, %v4079
        %v4142 = vadd.f32 %v4141, %v4081
        %v4143 = vadd.f32 %v4142, %v4083
        %v4144 = vadd.f32 %v4143, %v4085
        %v4145 = vadd.f32 %v4144, %v4087
        %v4146 = vadd.f32 %v4145, %v4089
        %v4147 = vadd.f32 %v4146, %v4091
        %v4148 = vadd.f32 %v4147, %v4093
        %v4149 = vadd.f32 %v4148, %v4095
        %v4150 = vadd.f32 %v4149, %v4097
        %v4151 = vadd.f32 %v4150, %v4099
        %v4152 = vadd.f32 %v4151, %v4101
        %v4153 = vadd.f32 %v4152, %v4103
        %v4154 = vadd.f32 %v4153, %v4105
        %v4155 = vadd.f32 %v4154, %v4107
        %v4156 = vadd.f32 %v4155, %v4109
        %v4157 = vadd.f32 %v4156, %v4111
        %v4158 = vadd.f32 %v4157, %v4113
        %v4159 = vadd.f32 %v4158, %v4115
        %v4160 = vadd.f32 %v4159, %v4117
        %v4161 = vadd.f32 %v4160, %v4119
        %v4162 = vadd.f32 %v4161, %v4121
        %v4163 = vadd.f32 %v4162, %v4123
        %v4164 = vadd.f32 %v4163, %v4125
        %v4165 = vadd.f32 %v4164, %v4127
        %v4166 = vadd.f32 %v4165, %v4129
        %v4167 = vadd.f32 %v4166, %v4131
        %v4168 = vadd.f32 %v4167, %v4133
        %v4169 = vadd.f32 %v4168, %v4135
        %v4170 = vadd.f32 %v4169, %v4137
        %v4171 = vadd.f32 %v4170, %v4139
        %v4172 = vrot.slane %v4171, 4
        %v4173 = vadd.f32 %v4171, %v4172
        %v4174 = vrot.slane %v4173, 2
        %v4175 = vadd.f32 %v4173, %v4174
        %v4176 = vrot.slane %v4175, 1
        %v4177 = vadd.f32 %v4175, %v4176
        %v4178 = vadd.f32 %v4078, %v4080
        %v4179 = vadd.f32 %v4178, %v4082
        %v4180 = vadd.f32 %v4179, %v4084
        %v4181 = vadd.f32 %v4180, %v4086
        %v4182 = vadd.f32 %v4181, %v4088
        %v4183 = vadd.f32 %v4182, %v4090
        %v4184 = vadd.f32 %v4183, %v4092
        %v4185 = vadd.f32 %v4184, %v4094
        %v4186 = vadd.f32 %v4185, %v4096
        %v4187 = vadd.f32 %v4186, %v4098
        %v4188 = vadd.f32 %v4187, %v4100
        %v4189 = vadd.f32 %v4188, %v4102
        %v4190 = vadd.f32 %v4189, %v4104
        %v4191 = vadd.f32 %v4190, %v4106
        %v4192 = vadd.f32 %v4191, %v4108
        %v4193 = vadd.f32 %v4192, %v4110
        %v4194 = vadd.f32 %v4193, %v4112
        %v4195 = vadd.f32 %v4194, %v4114
        %v4196 = vadd.f32 %v4195, %v4116
        %v4197 = vadd.f32 %v4196, %v4118
        %v4198 = vadd.f32 %v4197, %v4120
        %v4199 = vadd.f32 %v4198, %v4122
        %v4200 = vadd.f32 %v4199, %v4124
        %v4201 = vadd.f32 %v4200, %v4126
        %v4202 = vadd.f32 %v4201, %v4128
        %v4203 = vadd.f32 %v4202, %v4130
        %v4204 = vadd.f32 %v4203, %v4132
        %v4205 = vadd.f32 %v4204, %v4134
        %v4206 = vadd.f32 %v4205, %v4136
        %v4207 = vadd.f32 %v4206, %v4138
        %v4208 = vadd.f32 %v4207, %v4140
        %v4209 = vrot.slane %v4208, 4
        %v4210 = vadd.f32 %v4208, %v4209
        %v4211 = vrot.slane %v4210, 2
        %v4212 = vadd.f32 %v4210, %v4211
        %v4213 = vrot.slane %v4212, 1
        %v4214 = vadd.f32 %v4212, %v4213
        %v4215 = vmul.f32 %v4077, %v4077
        %v4216 = vmul.f32 %v4078, %v4078
        %v4217 = vmul.f32 %v4079, %v4079
        %v4218 = vmul.f32 %v4080, %v4080
        %v4219 = vmul.f32 %v4081, %v4081
        %v4220 = vmul.f32 %v4082, %v4082
        %v4221 = vmul.f32 %v4083, %v4083
        %v4222 = vmul.f32 %v4084, %v4084
        %v4223 = vmul.f32 %v4085, %v4085
        %v4224 = vmul.f32 %v4086, %v4086
        %v4225 = vmul.f32 %v4087, %v4087
        %v4226 = vmul.f32 %v4088, %v4088
        %v4227 = vmul.f32 %v4089, %v4089
        %v4228 = vmul.f32 %v4090, %v4090
        %v4229 = vmul.f32 %v4091, %v4091
        %v4230 = vmul.f32 %v4092, %v4092
        %v4231 = vmul.f32 %v4093, %v4093
        %v4232 = vmul.f32 %v4094, %v4094
        %v4233 = vmul.f32 %v4095, %v4095
        %v4234 = vmul.f32 %v4096, %v4096
        %v4235 = vmul.f32 %v4097, %v4097
        %v4236 = vmul.f32 %v4098, %v4098
        %v4237 = vmul.f32 %v4099, %v4099
        %v4238 = vmul.f32 %v4100, %v4100
        %v4239 = vmul.f32 %v4101, %v4101
        %v4240 = vmul.f32 %v4102, %v4102
        %v4241 = vmul.f32 %v4103, %v4103
        %v4242 = vmul.f32 %v4104, %v4104
        %v4243 = vmul.f32 %v4105, %v4105
        %v4244 = vmul.f32 %v4106, %v4106
        %v4245 = vmul.f32 %v4107, %v4107
        %v4246 = vmul.f32 %v4108, %v4108
        %v4247 = vmul.f32 %v4109, %v4109
        %v4248 = vmul.f32 %v4110, %v4110
        %v4249 = vmul.f32 %v4111, %v4111
        %v4250 = vmul.f32 %v4112, %v4112
        %v4251 = vmul.f32 %v4113, %v4113
        %v4252 = vmul.f32 %v4114, %v4114
        %v4253 = vmul.f32 %v4115, %v4115
        %v4254 = vmul.f32 %v4116, %v4116
        %v4255 = vmul.f32 %v4117, %v4117
        %v4256 = vmul.f32 %v4118, %v4118
        %v4257 = vmul.f32 %v4119, %v4119
        %v4258 = vmul.f32 %v4120, %v4120
        %v4259 = vmul.f32 %v4121, %v4121
        %v4260 = vmul.f32 %v4122, %v4122
        %v4261 = vmul.f32 %v4123, %v4123
        %v4262 = vmul.f32 %v4124, %v4124
        %v4263 = vmul.f32 %v4125, %v4125
        %v4264 = vmul.f32 %v4126, %v4126
        %v4265 = vmul.f32 %v4127, %v4127
        %v4266 = vmul.f32 %v4128, %v4128
        %v4267 = vmul.f32 %v4129, %v4129
        %v4268 = vmul.f32 %v4130, %v4130
        %v4269 = vmul.f32 %v4131, %v4131
        %v4270 = vmul.f32 %v4132, %v4132
        %v4271 = vmul.f32 %v4133, %v4133
        %v4272 = vmul.f32 %v4134, %v4134
        %v4273 = vmul.f32 %v4135, %v4135
        %v4274 = vmul.f32 %v4136, %v4136
        %v4275 = vmul.f32 %v4137, %v4137
        %v4276 = vmul.f32 %v4138, %v4138
        %v4277 = vmul.f32 %v4139, %v4139
        %v4278 = vmul.f32 %v4140, %v4140
        %v4279 = vadd.f32 %v4215, %v4217
        %v4280 = vadd.f32 %v4279, %v4219
        %v4281 = vadd.f32 %v4280, %v4221
        %v4282 = vadd.f32 %v4281, %v4223
        %v4283 = vadd.f32 %v4282, %v4225
        %v4284 = vadd.f32 %v4283, %v4227
        %v4285 = vadd.f32 %v4284, %v4229
        %v4286 = vadd.f32 %v4285, %v4231
        %v4287 = vadd.f32 %v4286, %v4233
        %v4288 = vadd.f32 %v4287, %v4235
        %v4289 = vadd.f32 %v4288, %v4237
        %v4290 = vadd.f32 %v4289, %v4239
        %v4291 = vadd.f32 %v4290, %v4241
        %v4292 = vadd.f32 %v4291, %v4243
        %v4293 = vadd.f32 %v4292, %v4245
        %v4294 = vadd.f32 %v4293, %v4247
        %v4295 = vadd.f32 %v4294, %v4249
        %v4296 = vadd.f32 %v4295, %v4251
        %v4297 = vadd.f32 %v4296, %v4253
        %v4298 = vadd.f32 %v4297, %v4255
        %v4299 = vadd.f32 %v4298, %v4257
        %v4300 = vadd.f32 %v4299, %v4259
        %v4301 = vadd.f32 %v4300, %v4261
        %v4302 = vadd.f32 %v4301, %v4263
        %v4303 = vadd.f32 %v4302, %v4265
        %v4304 = vadd.f32 %v4303, %v4267
        %v4305 = vadd.f32 %v4304, %v4269
        %v4306 = vadd.f32 %v4305, %v4271
        %v4307 = vadd.f32 %v4306, %v4273
        %v4308 = vadd.f32 %v4307, %v4275
        %v4309 = vadd.f32 %v4308, %v4277
        %v4310 = vrot.slane %v4309, 4
        %v4311 = vadd.f32 %v4309, %v4310
        %v4312 = vrot.slane %v4311, 2
        %v4313 = vadd.f32 %v4311, %v4312
        %v4314 = vrot.slane %v4313, 1
        %v4315 = vadd.f32 %v4313, %v4314
        %v4316 = vadd.f32 %v4216, %v4218
        %v4317 = vadd.f32 %v4316, %v4220
        %v4318 = vadd.f32 %v4317, %v4222
        %v4319 = vadd.f32 %v4318, %v4224
        %v4320 = vadd.f32 %v4319, %v4226
        %v4321 = vadd.f32 %v4320, %v4228
        %v4322 = vadd.f32 %v4321, %v4230
        %v4323 = vadd.f32 %v4322, %v4232
        %v4324 = vadd.f32 %v4323, %v4234
        %v4325 = vadd.f32 %v4324, %v4236
        %v4326 = vadd.f32 %v4325, %v4238
        %v4327 = vadd.f32 %v4326, %v4240
        %v4328 = vadd.f32 %v4327, %v4242
        %v4329 = vadd.f32 %v4328, %v4244
        %v4330 = vadd.f32 %v4329, %v4246
        %v4331 = vadd.f32 %v4330, %v4248
        %v4332 = vadd.f32 %v4331, %v4250
        %v4333 = vadd.f32 %v4332, %v4252
        %v4334 = vadd.f32 %v4333, %v4254
        %v4335 = vadd.f32 %v4334, %v4256
        %v4336 = vadd.f32 %v4335, %v4258
        %v4337 = vadd.f32 %v4336, %v4260
        %v4338 = vadd.f32 %v4337, %v4262
        %v4339 = vadd.f32 %v4338, %v4264
        %v4340 = vadd.f32 %v4339, %v4266
        %v4341 = vadd.f32 %v4340, %v4268
        %v4342 = vadd.f32 %v4341, %v4270
        %v4343 = vadd.f32 %v4342, %v4272
        %v4344 = vadd.f32 %v4343, %v4274
        %v4345 = vadd.f32 %v4344, %v4276
        %v4346 = vadd.f32 %v4345, %v4278
        %v4347 = vrot.slane %v4346, 4
        %v4348 = vadd.f32 %v4346, %v4347
        %v4349 = vrot.slane %v4348, 2
        %v4350 = vadd.f32 %v4348, %v4349
        %v4351 = vrot.slane %v4350, 1
        %v4352 = vadd.f32 %v4350, %v4351
        %v4353 = vmul.f32 %v4177, 0.00390625
        %v4354 = vmul.f32 %v4214, 0.00390625
        %v4355 = vmul.f32 %v4315, 0.00390625
        %v4356 = vmul.f32 %v4352, 0.00390625
        %v4357 = vmul.f32 %v4353, %v4353
        %v4358 = vmul.f32 %v4354, %v4354
        %v4359 = vsub.f32 %v4355, %v4357
        %v4360 = vsub.f32 %v4356, %v4358
        %v4361 = vmax.f32 %v4359, 0.0
        %v4362 = vmax.f32 %v4360, 0.0
        %v4363 = vsub.f32 %v4077, %v4353
        %v4364 = vsub.f32 %v4078, %v4354
        %v4365 = vsub.f32 %v4079, %v4353
        %v4366 = vsub.f32 %v4080, %v4354
        %v4367 = vsub.f32 %v4081, %v4353
        %v4368 = vsub.f32 %v4082, %v4354
        %v4369 = vsub.f32 %v4083, %v4353
        %v4370 = vsub.f32 %v4084, %v4354
        %v4371 = vsub.f32 %v4085, %v4353
        %v4372 = vsub.f32 %v4086, %v4354
        %v4373 = vsub.f32 %v4087, %v4353
        %v4374 = vsub.f32 %v4088, %v4354
        %v4375 = vsub.f32 %v4089, %v4353
        %v4376 = vsub.f32 %v4090, %v4354
        %v4377 = vsub.f32 %v4091, %v4353
        %v4378 = vsub.f32 %v4092, %v4354
        %v4379 = vsub.f32 %v4093, %v4353
        %v4380 = vsub.f32 %v4094, %v4354
        %v4381 = vsub.f32 %v4095, %v4353
        %v4382 = vsub.f32 %v4096, %v4354
        %v4383 = vsub.f32 %v4097, %v4353
        %v4384 = vsub.f32 %v4098, %v4354
        %v4385 = vsub.f32 %v4099, %v4353
        %v4386 = vsub.f32 %v4100, %v4354
        %v4387 = vsub.f32 %v4101, %v4353
        %v4388 = vsub.f32 %v4102, %v4354
        %v4389 = vsub.f32 %v4103, %v4353
        %v4390 = vsub.f32 %v4104, %v4354
        %v4391 = vsub.f32 %v4105, %v4353
        %v4392 = vsub.f32 %v4106, %v4354
        %v4393 = vsub.f32 %v4107, %v4353
        %v4394 = vsub.f32 %v4108, %v4354
        %v4395 = vsub.f32 %v4109, %v4353
        %v4396 = vsub.f32 %v4110, %v4354
        %v4397 = vsub.f32 %v4111, %v4353
        %v4398 = vsub.f32 %v4112, %v4354
        %v4399 = vsub.f32 %v4113, %v4353
        %v4400 = vsub.f32 %v4114, %v4354
        %v4401 = vsub.f32 %v4115, %v4353
        %v4402 = vsub.f32 %v4116, %v4354
        %v4403 = vsub.f32 %v4117, %v4353
        %v4404 = vsub.f32 %v4118, %v4354
        %v4405 = vsub.f32 %v4119, %v4353
        %v4406 = vsub.f32 %v4120, %v4354
        %v4407 = vsub.f32 %v4121, %v4353
        %v4408 = vsub.f32 %v4122, %v4354
        %v4409 = vsub.f32 %v4123, %v4353
        %v4410 = vsub.f32 %v4124, %v4354
        %v4411 = vsub.f32 %v4125, %v4353
        %v4412 = vsub.f32 %v4126, %v4354
        %v4413 = vsub.f32 %v4127, %v4353
        %v4414 = vsub.f32 %v4128, %v4354
        %v4415 = vsub.f32 %v4129, %v4353
        %v4416 = vsub.f32 %v4130, %v4354
        %v4417 = vsub.f32 %v4131, %v4353
        %v4418 = vsub.f32 %v4132, %v4354
        %v4419 = vsub.f32 %v4133, %v4353
        %v4420 = vsub.f32 %v4134, %v4354
        %v4421 = vsub.f32 %v4135, %v4353
        %v4422 = vsub.f32 %v4136, %v4354
        %v4423 = vsub.f32 %v4137, %v4353
        %v4424 = vsub.f32 %v4138, %v4354
        %v4425 = vsub.f32 %v4139, %v4353
        %v4426 = vsub.f32 %v4140, %v4354
        %v4427 = vadd.f32 %v4361, 1e-05
        %v4428 = vadd.f32 %v4362, 1e-05
        %v4429 = vrsqrt.pop %v4427
        %v4430 = vrsqrt.pop %v4428
        %v4431 = vmul.f32 %v4363, %v4429
        %v4432 = vmul.f32 %v4364, %v4430
        %v4433 = vmul.f32 %v4365, %v4429
        %v4434 = vmul.f32 %v4366, %v4430
        %v4435 = vmul.f32 %v4367, %v4429
        %v4436 = vmul.f32 %v4368, %v4430
        %v4437 = vmul.f32 %v4369, %v4429
        %v4438 = vmul.f32 %v4370, %v4430
        %v4439 = vmul.f32 %v4371, %v4429
        %v4440 = vmul.f32 %v4372, %v4430
        %v4441 = vmul.f32 %v4373, %v4429
        %v4442 = vmul.f32 %v4374, %v4430
        %v4443 = vmul.f32 %v4375, %v4429
        %v4444 = vmul.f32 %v4376, %v4430
        %v4445 = vmul.f32 %v4377, %v4429
        %v4446 = vmul.f32 %v4378, %v4430
        %v4447 = vmul.f32 %v4379, %v4429
        %v4448 = vmul.f32 %v4380, %v4430
        %v4449 = vmul.f32 %v4381, %v4429
        %v4450 = vmul.f32 %v4382, %v4430
        %v4451 = vmul.f32 %v4383, %v4429
        %v4452 = vmul.f32 %v4384, %v4430
        %v4453 = vmul.f32 %v4385, %v4429
        %v4454 = vmul.f32 %v4386, %v4430
        %v4455 = vmul.f32 %v4387, %v4429
        %v4456 = vmul.f32 %v4388, %v4430
        %v4457 = vmul.f32 %v4389, %v4429
        %v4458 = vmul.f32 %v4390, %v4430
        %v4459 = vmul.f32 %v4391, %v4429
        %v4460 = vmul.f32 %v4392, %v4430
        %v4461 = vmul.f32 %v4393, %v4429
        %v4462 = vmul.f32 %v4394, %v4430
        %v4463 = vmul.f32 %v4395, %v4429
        %v4464 = vmul.f32 %v4396, %v4430
        %v4465 = vmul.f32 %v4397, %v4429
        %v4466 = vmul.f32 %v4398, %v4430
        %v4467 = vmul.f32 %v4399, %v4429
        %v4468 = vmul.f32 %v4400, %v4430
        %v4469 = vmul.f32 %v4401, %v4429
        %v4470 = vmul.f32 %v4402, %v4430
        %v4471 = vmul.f32 %v4403, %v4429
        %v4472 = vmul.f32 %v4404, %v4430
        %v4473 = vmul.f32 %v4405, %v4429
        %v4474 = vmul.f32 %v4406, %v4430
        %v4475 = vmul.f32 %v4407, %v4429
        %v4476 = vmul.f32 %v4408, %v4430
        %v4477 = vmul.f32 %v4409, %v4429
        %v4478 = vmul.f32 %v4410, %v4430
        %v4479 = vmul.f32 %v4411, %v4429
        %v4480 = vmul.f32 %v4412, %v4430
        %v4481 = vmul.f32 %v4413, %v4429
        %v4482 = vmul.f32 %v4414, %v4430
        %v4483 = vmul.f32 %v4415, %v4429
        %v4484 = vmul.f32 %v4416, %v4430
        %v4485 = vmul.f32 %v4417, %v4429
        %v4486 = vmul.f32 %v4418, %v4430
        %v4487 = vmul.f32 %v4419, %v4429
        %v4488 = vmul.f32 %v4420, %v4430
        %v4489 = vmul.f32 %v4421, %v4429
        %v4490 = vmul.f32 %v4422, %v4430
        %v4491 = vmul.f32 %v4423, %v4429
        %v4492 = vmul.f32 %v4424, %v4430
        %v4493 = vmul.f32 %v4425, %v4429
        %v4494 = vmul.f32 %v4426, %v4430
        %v4495 = vmax.f32 %v4431, 0.0
        %v4496 = vmax.f32 %v4432, 0.0
        %v4497 = vmax.f32 %v4433, 0.0
        %v4498 = vmax.f32 %v4434, 0.0
        %v4499 = vmax.f32 %v4435, 0.0
        %v4500 = vmax.f32 %v4436, 0.0
        %v4501 = vmax.f32 %v4437, 0.0
        %v4502 = vmax.f32 %v4438, 0.0
        %v4503 = vmax.f32 %v4439, 0.0
        %v4504 = vmax.f32 %v4440, 0.0
        %v4505 = vmax.f32 %v4441, 0.0
        %v4506 = vmax.f32 %v4442, 0.0
        %v4507 = vmax.f32 %v4443, 0.0
        %v4508 = vmax.f32 %v4444, 0.0
        %v4509 = vmax.f32 %v4445, 0.0
        %v4510 = vmax.f32 %v4446, 0.0
        %v4511 = vmax.f32 %v4447, 0.0
        %v4512 = vmax.f32 %v4448, 0.0
        %v4513 = vmax.f32 %v4449, 0.0
        %v4514 = vmax.f32 %v4450, 0.0
        %v4515 = vmax.f32 %v4451, 0.0
        %v4516 = vmax.f32 %v4452, 0.0
        %v4517 = vmax.f32 %v4453, 0.0
        %v4518 = vmax.f32 %v4454, 0.0
        %v4519 = vmax.f32 %v4455, 0.0
        %v4520 = vmax.f32 %v4456, 0.0
        %v4521 = vmax.f32 %v4457, 0.0
        %v4522 = vmax.f32 %v4458, 0.0
        %v4523 = vmax.f32 %v4459, 0.0
        %v4524 = vmax.f32 %v4460, 0.0
        %v4525 = vmax.f32 %v4461, 0.0
        %v4526 = vmax.f32 %v4462, 0.0
        %v4527 = vmax.f32 %v4463, 0.0
        %v4528 = vmax.f32 %v4464, 0.0
        %v4529 = vmax.f32 %v4465, 0.0
        %v4530 = vmax.f32 %v4466, 0.0
        %v4531 = vmax.f32 %v4467, 0.0
        %v4532 = vmax.f32 %v4468, 0.0
        %v4533 = vmax.f32 %v4469, 0.0
        %v4534 = vmax.f32 %v4470, 0.0
        %v4535 = vmax.f32 %v4471, 0.0
        %v4536 = vmax.f32 %v4472, 0.0
        %v4537 = vmax.f32 %v4473, 0.0
        %v4538 = vmax.f32 %v4474, 0.0
        %v4539 = vmax.f32 %v4475, 0.0
        %v4540 = vmax.f32 %v4476, 0.0
        %v4541 = vmax.f32 %v4477, 0.0
        %v4542 = vmax.f32 %v4478, 0.0
        %v4543 = vmax.f32 %v4479, 0.0
        %v4544 = vmax.f32 %v4480, 0.0
        %v4545 = vmax.f32 %v4481, 0.0
        %v4546 = vmax.f32 %v4482, 0.0
        %v4547 = vmax.f32 %v4483, 0.0
        %v4548 = vmax.f32 %v4484, 0.0
        %v4549 = vmax.f32 %v4485, 0.0
        %v4550 = vmax.f32 %v4486, 0.0
        %v4551 = vmax.f32 %v4487, 0.0
        %v4552 = vmax.f32 %v4488, 0.0
        %v4553 = vmax.f32 %v4489, 0.0
        %v4554 = vmax.f32 %v4490, 0.0
        %v4555 = vmax.f32 %v4491, 0.0
        %v4556 = vmax.f32 %v4492, 0.0
        %v4557 = vmax.f32 %v4493, 0.0
        %v4558 = vmax.f32 %v4494, 0.0
        %v4591 = vrot.slane %v4499, 1
        %v4592 = vrot.slane %v4500, 1
        %v4593 = vrot.slane %v4495, 1
        %v4594 = vrot.slane %v4496, 1
        %v4595 = vrot.slane %v4503, 1
        %v4596 = vrot.slane %v4504, 1
        %v4597 = vrot.slane %v4507, 1
        %v4598 = vrot.slane %v4508, 1
        %v4599 = vrot.slane %v4511, 1
        %v4600 = vrot.slane %v4512, 1
        %v4601 = vrot.slane %v4515, 1
        %v4602 = vrot.slane %v4516, 1
        %v4603 = vrot.slane %v4519, 1
        %v4604 = vrot.slane %v4520, 1
        %v4605 = vrot.slane %v4523, 1
        %v4606 = vrot.slane %v4524, 1
        %v4607 = vrot.slane %v4527, 1
        %v4608 = vrot.slane %v4528, 1
        %v4609 = vrot.slane %v4531, 1
        %v4610 = vrot.slane %v4532, 1
        %v4611 = vrot.slane %v4535, 1
        %v4612 = vrot.slane %v4536, 1
        %v4613 = vrot.slane %v4539, 1
        %v4614 = vrot.slane %v4540, 1
        %v4615 = vrot.slane %v4543, 1
        %v4616 = vrot.slane %v4544, 1
        %v4617 = vrot.slane %v4547, 1
        %v4618 = vrot.slane %v4548, 1
        %v4619 = vrot.slane %v4551, 1
        %v4620 = vrot.slane %v4552, 1
        %v4621 = vrot.slane %v4555, 1
        %v4622 = vrot.slane %v4556, 1
        %v4687 = vrot.slane %v4499, 7
        %v4688 = vrot.slane %v4500, 7
        %v4689 = vrot.slane %v4501, 7
        %v4690 = vsel %vm410, %v4687, %v4689
        %v4691 = vrot.slane %v4502, 7
        %v4692 = vsel %vm410, %v4688, %v4691
        %v4693 = vrot.slane %v4495, 7
        %v4694 = vrot.slane %v4496, 7
        %v4695 = vrot.slane %v4497, 7
        %v4696 = vsel %vm410, %v4693, %v4695
        %v4697 = vrot.slane %v4498, 7
        %v4698 = vsel %vm410, %v4694, %v4697
        %v4699 = vrot.slane %v4503, 7
        %v4700 = vrot.slane %v4504, 7
        %v4701 = vrot.slane %v4505, 7
        %v4702 = vsel %vm410, %v4699, %v4701
        %v4703 = vrot.slane %v4506, 7
        %v4704 = vsel %vm410, %v4700, %v4703
        %v4705 = vrot.slane %v4507, 7
        %v4706 = vrot.slane %v4508, 7
        %v4707 = vrot.slane %v4509, 7
        %v4708 = vsel %vm410, %v4705, %v4707
        %v4709 = vrot.slane %v4510, 7
        %v4710 = vsel %vm410, %v4706, %v4709
        %v4711 = vrot.slane %v4511, 7
        %v4712 = vrot.slane %v4512, 7
        %v4713 = vrot.slane %v4513, 7
        %v4714 = vsel %vm410, %v4711, %v4713
        %v4715 = vrot.slane %v4514, 7
        %v4716 = vsel %vm410, %v4712, %v4715
        %v4717 = vrot.slane %v4515, 7
        %v4718 = vrot.slane %v4516, 7
        %v4719 = vrot.slane %v4517, 7
        %v4720 = vsel %vm410, %v4717, %v4719
        %v4721 = vrot.slane %v4518, 7
        %v4722 = vsel %vm410, %v4718, %v4721
        %v4723 = vrot.slane %v4519, 7
        %v4724 = vrot.slane %v4520, 7
        %v4725 = vrot.slane %v4521, 7
        %v4726 = vsel %vm410, %v4723, %v4725
        %v4727 = vrot.slane %v4522, 7
        %v4728 = vsel %vm410, %v4724, %v4727
        %v4729 = vrot.slane %v4523, 7
        %v4730 = vrot.slane %v4524, 7
        %v4731 = vrot.slane %v4525, 7
        %v4732 = vsel %vm410, %v4729, %v4731
        %v4733 = vrot.slane %v4526, 7
        %v4734 = vsel %vm410, %v4730, %v4733
        %v4735 = vrot.slane %v4527, 7
        %v4736 = vrot.slane %v4528, 7
        %v4737 = vrot.slane %v4529, 7
        %v4738 = vsel %vm410, %v4735, %v4737
        %v4739 = vrot.slane %v4530, 7
        %v4740 = vsel %vm410, %v4736, %v4739
        %v4741 = vrot.slane %v4531, 7
        %v4742 = vrot.slane %v4532, 7
        %v4743 = vrot.slane %v4533, 7
        %v4744 = vsel %vm410, %v4741, %v4743
        %v4745 = vrot.slane %v4534, 7
        %v4746 = vsel %vm410, %v4742, %v4745
        %v4747 = vrot.slane %v4535, 7
        %v4748 = vrot.slane %v4536, 7
        %v4749 = vrot.slane %v4537, 7
        %v4750 = vsel %vm410, %v4747, %v4749
        %v4751 = vrot.slane %v4538, 7
        %v4752 = vsel %vm410, %v4748, %v4751
        %v4753 = vrot.slane %v4539, 7
        %v4754 = vrot.slane %v4540, 7
        %v4755 = vrot.slane %v4541, 7
        %v4756 = vsel %vm410, %v4753, %v4755
        %v4757 = vrot.slane %v4542, 7
        %v4758 = vsel %vm410, %v4754, %v4757
        %v4759 = vrot.slane %v4543, 7
        %v4760 = vrot.slane %v4544, 7
        %v4761 = vrot.slane %v4545, 7
        %v4762 = vsel %vm410, %v4759, %v4761
        %v4763 = vrot.slane %v4546, 7
        %v4764 = vsel %vm410, %v4760, %v4763
        %v4765 = vrot.slane %v4547, 7
        %v4766 = vrot.slane %v4548, 7
        %v4767 = vrot.slane %v4549, 7
        %v4768 = vsel %vm410, %v4765, %v4767
        %v4769 = vrot.slane %v4550, 7
        %v4770 = vsel %vm410, %v4766, %v4769
        %v4771 = vrot.slane %v4551, 7
        %v4772 = vrot.slane %v4552, 7
        %v4773 = vrot.slane %v4553, 7
        %v4774 = vsel %vm410, %v4771, %v4773
        %v4775 = vrot.slane %v4554, 7
        %v4776 = vsel %vm410, %v4772, %v4775
        %v4777 = vrot.slane %v4555, 7
        %v4778 = vrot.slane %v4556, 7
        %v4779 = vrot.slane %v4557, 7
        %v4780 = vsel %vm410, %v4777, %v4779
        %v4781 = vrot.slane %v4558, 7
        %v4782 = vsel %vm410, %v4778, %v4781
        %v4847 = vsel %vm410, %v4591, %v4687
        %v4848 = vsel %vm410, %v4592, %v4688
        %v4849 = vsel %vm410, %v4593, %v4693
        %v4850 = vsel %vm410, %v4594, %v4694
        %v4851 = vsel %vm410, %v4595, %v4699
        %v4852 = vsel %vm410, %v4596, %v4700
        %v4853 = vsel %vm410, %v4597, %v4705
        %v4854 = vsel %vm410, %v4598, %v4706
        %v4855 = vsel %vm410, %v4599, %v4711
        %v4856 = vsel %vm410, %v4600, %v4712
        %v4857 = vsel %vm410, %v4601, %v4717
        %v4858 = vsel %vm410, %v4602, %v4718
        %v4859 = vsel %vm410, %v4603, %v4723
        %v4860 = vsel %vm410, %v4604, %v4724
        %v4861 = vsel %vm410, %v4605, %v4729
        %v4862 = vsel %vm410, %v4606, %v4730
        %v4863 = vsel %vm410, %v4607, %v4735
        %v4864 = vsel %vm410, %v4608, %v4736
        %v4865 = vsel %vm410, %v4609, %v4741
        %v4866 = vsel %vm410, %v4610, %v4742
        %v4867 = vsel %vm410, %v4611, %v4747
        %v4868 = vsel %vm410, %v4612, %v4748
        %v4869 = vsel %vm410, %v4613, %v4753
        %v4870 = vsel %vm410, %v4614, %v4754
        %v4871 = vsel %vm410, %v4615, %v4759
        %v4872 = vsel %vm410, %v4616, %v4760
        %v4873 = vsel %vm410, %v4617, %v4765
        %v4874 = vsel %vm410, %v4618, %v4766
        %v4875 = vsel %vm410, %v4619, %v4771
        %v4876 = vsel %vm410, %v4620, %v4772
        %v4877 = vsel %vm410, %v4621, %v4777
        %v4878 = vsel %vm410, %v4622, %v4778
        %v4879 = vrot.slane %v4501, 1
        %v4880 = vsel %vm603, %v4591, %v4879
        %v4881 = vrot.slane %v4502, 1
        %v4882 = vsel %vm603, %v4592, %v4881
        %v4883 = vrot.slane %v4497, 1
        %v4884 = vsel %vm603, %v4593, %v4883
        %v4885 = vrot.slane %v4498, 1
        %v4886 = vsel %vm603, %v4594, %v4885
        %v4887 = vrot.slane %v4505, 1
        %v4888 = vsel %vm603, %v4595, %v4887
        %v4889 = vrot.slane %v4506, 1
        %v4890 = vsel %vm603, %v4596, %v4889
        %v4891 = vrot.slane %v4509, 1
        %v4892 = vsel %vm603, %v4597, %v4891
        %v4893 = vrot.slane %v4510, 1
        %v4894 = vsel %vm603, %v4598, %v4893
        %v4895 = vrot.slane %v4513, 1
        %v4896 = vsel %vm603, %v4599, %v4895
        %v4897 = vrot.slane %v4514, 1
        %v4898 = vsel %vm603, %v4600, %v4897
        %v4899 = vrot.slane %v4517, 1
        %v4900 = vsel %vm603, %v4601, %v4899
        %v4901 = vrot.slane %v4518, 1
        %v4902 = vsel %vm603, %v4602, %v4901
        %v4903 = vrot.slane %v4521, 1
        %v4904 = vsel %vm603, %v4603, %v4903
        %v4905 = vrot.slane %v4522, 1
        %v4906 = vsel %vm603, %v4604, %v4905
        %v4907 = vrot.slane %v4525, 1
        %v4908 = vsel %vm603, %v4605, %v4907
        %v4909 = vrot.slane %v4526, 1
        %v4910 = vsel %vm603, %v4606, %v4909
        %v4911 = vrot.slane %v4529, 1
        %v4912 = vsel %vm603, %v4607, %v4911
        %v4913 = vrot.slane %v4530, 1
        %v4914 = vsel %vm603, %v4608, %v4913
        %v4915 = vrot.slane %v4533, 1
        %v4916 = vsel %vm603, %v4609, %v4915
        %v4917 = vrot.slane %v4534, 1
        %v4918 = vsel %vm603, %v4610, %v4917
        %v4919 = vrot.slane %v4537, 1
        %v4920 = vsel %vm603, %v4611, %v4919
        %v4921 = vrot.slane %v4538, 1
        %v4922 = vsel %vm603, %v4612, %v4921
        %v4923 = vrot.slane %v4541, 1
        %v4924 = vsel %vm603, %v4613, %v4923
        %v4925 = vrot.slane %v4542, 1
        %v4926 = vsel %vm603, %v4614, %v4925
        %v4927 = vrot.slane %v4545, 1
        %v4928 = vsel %vm603, %v4615, %v4927
        %v4929 = vrot.slane %v4546, 1
        %v4930 = vsel %vm603, %v4616, %v4929
        %v4931 = vrot.slane %v4549, 1
        %v4932 = vsel %vm603, %v4617, %v4931
        %v4933 = vrot.slane %v4550, 1
        %v4934 = vsel %vm603, %v4618, %v4933
        %v4935 = vrot.slane %v4553, 1
        %v4936 = vsel %vm603, %v4619, %v4935
        %v4937 = vrot.slane %v4554, 1
        %v4938 = vsel %vm603, %v4620, %v4937
        %v4939 = vrot.slane %v4557, 1
        %v4940 = vsel %vm603, %v4621, %v4939
        %v4941 = vrot.slane %v4558, 1
        %v4942 = vsel %vm603, %v4622, %v4941
        %v5039 = vsel %vm603, %v4879, %v4689
        %v5040 = vsel %vm603, %v4881, %v4691
        %v5041 = vsel %vm603, %v4883, %v4695
        %v5042 = vsel %vm603, %v4885, %v4697
        %v5043 = vsel %vm603, %v4887, %v4701
        %v5044 = vsel %vm603, %v4889, %v4703
        %v5045 = vsel %vm603, %v4891, %v4707
        %v5046 = vsel %vm603, %v4893, %v4709
        %v5047 = vsel %vm603, %v4895, %v4713
        %v5048 = vsel %vm603, %v4897, %v4715
        %v5049 = vsel %vm603, %v4899, %v4719
        %v5050 = vsel %vm603, %v4901, %v4721
        %v5051 = vsel %vm603, %v4903, %v4725
        %v5052 = vsel %vm603, %v4905, %v4727
        %v5053 = vsel %vm603, %v4907, %v4731
        %v5054 = vsel %vm603, %v4909, %v4733
        %v5055 = vsel %vm603, %v4911, %v4737
        %v5056 = vsel %vm603, %v4913, %v4739
        %v5057 = vsel %vm603, %v4915, %v4743
        %v5058 = vsel %vm603, %v4917, %v4745
        %v5059 = vsel %vm603, %v4919, %v4749
        %v5060 = vsel %vm603, %v4921, %v4751
        %v5061 = vsel %vm603, %v4923, %v4755
        %v5062 = vsel %vm603, %v4925, %v4757
        %v5063 = vsel %vm603, %v4927, %v4761
        %v5064 = vsel %vm603, %v4929, %v4763
        %v5065 = vsel %vm603, %v4931, %v4767
        %v5066 = vsel %vm603, %v4933, %v4769
        %v5067 = vsel %vm603, %v4935, %v4773
        %v5068 = vsel %vm603, %v4937, %v4775
        %v5069 = vsel %vm603, %v4939, %v4779
        %v5070 = vsel %vm603, %v4941, %v4781
        %v5071 = vld [vmem:[#allocation7] sm:$0xff]
        %v5072 = vld [vmem:[#allocation7 + $0x8] sm:$0xff]
        %v5073 = vld [vmem:[#allocation7 + $0x10] sm:$0xff]
        %v5074 = vld [vmem:[#allocation7 + $0x18] sm:$0xff]
        %v5075 = vld [vmem:[#allocation7 + $0x20] sm:$0xff]
        %v5076 = vld [vmem:[#allocation7 + $0x28] sm:$0xff]
        %v5077 = vld [vmem:[#allocation7 + $0x30] sm:$0xff]
        %v5078 = vld [vmem:[#allocation7 + $0x38] sm:$0xff]
        %v5079 = vld [vmem:[#allocation7 + $0x40] sm:$0xff]
        %v5080 = vld [vmem:[#allocation7 + $0x48] sm:$0xff]
        %v5081 = vld [vmem:[#allocation7 + $0x50] sm:$0xff]
        %v5082 = vld [vmem:[#allocation7 + $0x58] sm:$0xff]
        %v5083 = vld [vmem:[#allocation7 + $0x60] sm:$0xff]
        %v5084 = vld [vmem:[#allocation7 + $0x68] sm:$0xff]
        %v5085 = vld [vmem:[#allocation7 + $0x70] sm:$0xff]
        %v5086 = vld [vmem:[#allocation7 + $0x78] sm:$0xff]
        %v5087 = vld [vmem:[#allocation7 + $0x80] sm:$0xff]
        %v5088 = vld [vmem:[#allocation7 + $0x88] sm:$0xff]
        %v5089 = vld [vmem:[#allocation7 + $0x90] sm:$0xff]
        %v5090 = vld [vmem:[#allocation7 + $0x98] sm:$0xff]
        %v5091 = vld [vmem:[#allocation7 + $0xa0] sm:$0xff]
        %v5092 = vld [vmem:[#allocation7 + $0xa8] sm:$0xff]
        %v5093 = vld [vmem:[#allocation7 + $0xb0] sm:$0xff]
        %v5094 = vld [vmem:[#allocation7 + $0xb8] sm:$0xff]
        %v5095 = vld [vmem:[#allocation7 + $0xc0] sm:$0xff]
        %v5096 = vld [vmem:[#allocation7 + $0xc8] sm:$0xff]
        %v5097 = vld [vmem:[#allocation7 + $0xd0] sm:$0xff]
        %v5098 = vld [vmem:[#allocation7 + $0xd8] sm:$0xff]
        %v5099 = vld [vmem:[#allocation7 + $0xe0] sm:$0xff]
        %v5100 = vld [vmem:[#allocation7 + $0xe8] sm:$0xff]
        %v5101 = vld [vmem:[#allocation7 + $0xf0] sm:$0xff]
        %v5102 = vld [vmem:[#allocation7 + $0xf8] sm:$0xff]
        %v5103 = vld [vmem:[#allocation7 + $0x100] sm:$0xff]
        %v5104 = vld [vmem:[#allocation7 + $0x108] sm:$0xff]
        %v5105 = vld [vmem:[#allocation7 + $0x110] sm:$0xff]
        %v5106 = vld [vmem:[#allocation7 + $0x118] sm:$0xff]
        %v5107 = vld [vmem:[#allocation7 + $0x120] sm:$0xff]
        %v5108 = vld [vmem:[#allocation7 + $0x128] sm:$0xff]
        %v5109 = vld [vmem:[#allocation7 + $0x130] sm:$0xff]
        %v5110 = vld [vmem:[#allocation7 + $0x138] sm:$0xff]
        %v5111 = vld [vmem:[#allocation7 + $0x140] sm:$0xff]
        %v5112 = vld [vmem:[#allocation7 + $0x148] sm:$0xff]
        %v5113 = vld [vmem:[#allocation7 + $0x150] sm:$0xff]
        %v5114 = vld [vmem:[#allocation7 + $0x158] sm:$0xff]
        %v5115 = vld [vmem:[#allocation7 + $0x160] sm:$0xff]
        %v5116 = vld [vmem:[#allocation7 + $0x168] sm:$0xff]
        %v5117 = vld [vmem:[#allocation7 + $0x170] sm:$0xff]
        %v5118 = vld [vmem:[#allocation7 + $0x178] sm:$0xff]
        %v5119 = vld [vmem:[#allocation7 + $0x180] sm:$0xff]
        %v5120 = vld [vmem:[#allocation7 + $0x188] sm:$0xff]
        %v5121 = vld [vmem:[#allocation7 + $0x190] sm:$0xff]
        %v5122 = vld [vmem:[#allocation7 + $0x198] sm:$0xff]
        %v5123 = vld [vmem:[#allocation7 + $0x1a0] sm:$0xff]
        %v5124 = vld [vmem:[#allocation7 + $0x1a8] sm:$0xff]
        %v5125 = vld [vmem:[#allocation7 + $0x1b0] sm:$0xff]
        %v5126 = vld [vmem:[#allocation7 + $0x1b8] sm:$0xff]
        %v5127 = vld [vmem:[#allocation7 + $0x1c0] sm:$0xff]
        %v5128 = vld [vmem:[#allocation7 + $0x1c8] sm:$0xff]
        %v5129 = vld [vmem:[#allocation7 + $0x1d0] sm:$0xff]
        %v5130 = vld [vmem:[#allocation7 + $0x1d8] sm:$0xff]
        %v5131 = vld [vmem:[#allocation7 + $0x1e0] sm:$0xff]
        %v5132 = vld [vmem:[#allocation7 + $0x1e8] sm:$0xff]
        %v5133 = vld [vmem:[#allocation7 + $0x1f0] sm:$0xff]
        %v5134 = vld [vmem:[#allocation7 + $0x1f8] sm:$0xff]
        %s5135 = scalar_lea.vmem [#allocation7], 512
        %v5136 = vld [vmem:[%s5135] sm:$0xff]
        %v5137 = vld [vmem:[%s5135 + $0x8] sm:$0xff]
        %v5138 = vld [vmem:[%s5135 + $0x10] sm:$0xff]
        %v5139 = vld [vmem:[%s5135 + $0x18] sm:$0xff]
        %v5140 = vld [vmem:[%s5135 + $0x20] sm:$0xff]
        %v5141 = vld [vmem:[%s5135 + $0x28] sm:$0xff]
        %v5142 = vld [vmem:[%s5135 + $0x30] sm:$0xff]
        %v5143 = vld [vmem:[%s5135 + $0x38] sm:$0xff]
        %v5144 = vld [vmem:[%s5135 + $0x40] sm:$0xff]
        %v5145 = vld [vmem:[%s5135 + $0x48] sm:$0xff]
        %v5146 = vld [vmem:[%s5135 + $0x50] sm:$0xff]
        %v5147 = vld [vmem:[%s5135 + $0x58] sm:$0xff]
        %v5148 = vld [vmem:[%s5135 + $0x60] sm:$0xff]
        %v5149 = vld [vmem:[%s5135 + $0x68] sm:$0xff]
        %v5150 = vld [vmem:[%s5135 + $0x70] sm:$0xff]
        %v5151 = vld [vmem:[%s5135 + $0x78] sm:$0xff]
        %v5152 = vld [vmem:[%s5135 + $0x80] sm:$0xff]
        %v5153 = vld [vmem:[%s5135 + $0x88] sm:$0xff]
        %v5154 = vld [vmem:[%s5135 + $0x90] sm:$0xff]
        %v5155 = vld [vmem:[%s5135 + $0x98] sm:$0xff]
        %v5156 = vld [vmem:[%s5135 + $0xa0] sm:$0xff]
        %v5157 = vld [vmem:[%s5135 + $0xa8] sm:$0xff]
        %v5158 = vld [vmem:[%s5135 + $0xb0] sm:$0xff]
        %v5159 = vld [vmem:[%s5135 + $0xb8] sm:$0xff]
        %v5160 = vld [vmem:[%s5135 + $0xc0] sm:$0xff]
        %v5161 = vld [vmem:[%s5135 + $0xc8] sm:$0xff]
        %v5162 = vld [vmem:[%s5135 + $0xd0] sm:$0xff]
        %v5163 = vld [vmem:[%s5135 + $0xd8] sm:$0xff]
        %v5164 = vld [vmem:[%s5135 + $0xe0] sm:$0xff]
        %v5165 = vld [vmem:[%s5135 + $0xe8] sm:$0xff]
        %v5166 = vld [vmem:[%s5135 + $0xf0] sm:$0xff]
        %v5167 = vld [vmem:[%s5135 + $0xf8] sm:$0xff]
        %v5168 = vld [vmem:[%s5135 + $0x100] sm:$0xff]
        %v5169 = vld [vmem:[%s5135 + $0x108] sm:$0xff]
        %v5170 = vld [vmem:[%s5135 + $0x110] sm:$0xff]
        %v5171 = vld [vmem:[%s5135 + $0x118] sm:$0xff]
        %v5172 = vld [vmem:[%s5135 + $0x120] sm:$0xff]
        %v5173 = vld [vmem:[%s5135 + $0x128] sm:$0xff]
        %v5174 = vld [vmem:[%s5135 + $0x130] sm:$0xff]
        %v5175 = vld [vmem:[%s5135 + $0x138] sm:$0xff]
        %v5176 = vld [vmem:[%s5135 + $0x140] sm:$0xff]
        %v5177 = vld [vmem:[%s5135 + $0x148] sm:$0xff]
        %v5178 = vld [vmem:[%s5135 + $0x150] sm:$0xff]
        %v5179 = vld [vmem:[%s5135 + $0x158] sm:$0xff]
        %v5180 = vld [vmem:[%s5135 + $0x160] sm:$0xff]
        %v5181 = vld [vmem:[%s5135 + $0x168] sm:$0xff]
        %v5182 = vld [vmem:[%s5135 + $0x170] sm:$0xff]
        %v5183 = vld [vmem:[%s5135 + $0x178] sm:$0xff]
        %v5184 = vld [vmem:[%s5135 + $0x180] sm:$0xff]
        %v5185 = vld [vmem:[%s5135 + $0x188] sm:$0xff]
        %v5186 = vld [vmem:[%s5135 + $0x190] sm:$0xff]
        %v5187 = vld [vmem:[%s5135 + $0x198] sm:$0xff]
        %v5188 = vld [vmem:[%s5135 + $0x1a0] sm:$0xff]
        %v5189 = vld [vmem:[%s5135 + $0x1a8] sm:$0xff]
        %v5190 = vld [vmem:[%s5135 + $0x1b0] sm:$0xff]
        %v5191 = vld [vmem:[%s5135 + $0x1b8] sm:$0xff]
        %v5192 = vld [vmem:[%s5135 + $0x1c0] sm:$0xff]
        %v5193 = vld [vmem:[%s5135 + $0x1c8] sm:$0xff]
        %v5194 = vld [vmem:[%s5135 + $0x1d0] sm:$0xff]
        %v5195 = vld [vmem:[%s5135 + $0x1d8] sm:$0xff]
        %v5196 = vld [vmem:[%s5135 + $0x1e0] sm:$0xff]
        %v5197 = vld [vmem:[%s5135 + $0x1e8] sm:$0xff]
        %v5198 = vld [vmem:[%s5135 + $0x1f0] sm:$0xff]
        %v5199 = vld [vmem:[%s5135 + $0x1f8] sm:$0xff]
        %5200 = vmatprep.subr.mxu0 %v5137
        %5201 = vmatpush1.msra.mxu0 %v5136
        %5202 = vmatprep.subr.mxu0 %v5139
        %5203 = vmatpush1.msra.mxu0 %v5138
        %5204 = vmatprep.subr.mxu0 %v5141
        %5205 = vmatpush1.msra.mxu0 %v5140
        %5206 = vmatprep.subr.mxu0 %v5143
        %5207 = vmatpush1.msra.mxu0 %v5142
        %5208 = vmatprep.subr.mxu0 %v5145
        %5209 = vmatpush1.msra.mxu0 %v5144
        %5210 = vmatprep.subr.mxu0 %v5147
        %5211 = vmatpush1.msra.mxu0 %v5146
        %5212 = vmatprep.subr.mxu0 %v5149
        %5213 = vmatpush1.msra.mxu0 %v5148
        %5214 = vmatprep.subr.mxu0 %v5151
        %5215 = vmatpush1.msra.mxu0 %v5150
        %5216 = vmatprep.subr.mxu0 %v5153
        %5217 = vmatpush1.msra.mxu0 %v5152
        %5218 = vmatprep.subr.mxu0 %v5155
        %5219 = vmatpush1.msra.mxu0 %v5154
        %5220 = vmatprep.subr.mxu0 %v5157
        %5221 = vmatpush1.msra.mxu0 %v5156
        %5222 = vmatprep.subr.mxu0 %v5159
        %5223 = vmatpush1.msra.mxu0 %v5158
        %5224 = vmatprep.subr.mxu0 %v5161
        %5225 = vmatpush1.msra.mxu0 %v5160
        %5226 = vmatprep.subr.mxu0 %v5163
        %5227 = vmatpush1.msra.mxu0 %v5162
        %5228 = vmatprep.subr.mxu0 %v5165
        %5229 = vmatpush1.msra.mxu0 %v5164
        %5230 = vmatprep.subr.mxu0 %v5167
        %5231 = vmatpush1.msra.mxu0 %v5166
        %5232 = vmatprep.subr.mxu0 %v5169
        %5233 = vmatpush1.msra.mxu0 %v5168
        %5234 = vmatprep.subr.mxu0 %v5171
        %5235 = vmatpush1.msra.mxu0 %v5170
        %5236 = vmatprep.subr.mxu0 %v5173
        %5237 = vmatpush1.msra.mxu0 %v5172
        %5238 = vmatprep.subr.mxu0 %v5175
        %5239 = vmatpush1.msra.mxu0 %v5174
        %5240 = vmatprep.subr.mxu0 %v5177
        %5241 = vmatpush1.msra.mxu0 %v5176
        %5242 = vmatprep.subr.mxu0 %v5179
        %5243 = vmatpush1.msra.mxu0 %v5178
        %5244 = vmatprep.subr.mxu0 %v5181
        %5245 = vmatpush1.msra.mxu0 %v5180
        %5246 = vmatprep.subr.mxu0 %v5183
        %5247 = vmatpush1.msra.mxu0 %v5182
        %5248 = vmatprep.subr.mxu0 %v5185
        %5249 = vmatpush1.msra.mxu0 %v5184
        %5250 = vmatprep.subr.mxu0 %v5187
        %5251 = vmatpush1.msra.mxu0 %v5186
        %5252 = vmatprep.subr.mxu0 %v5189
        %5253 = vmatpush1.msra.mxu0 %v5188
        %5254 = vmatprep.subr.mxu0 %v5191
        %5255 = vmatpush1.msra.mxu0 %v5190
        %5256 = vmatprep.subr.mxu0 %v5193
        %5257 = vmatpush1.msra.mxu0 %v5192
        %5258 = vmatprep.subr.mxu0 %v5195
        %5259 = vmatpush1.msra.mxu0 %v5194
        %5260 = vmatprep.subr.mxu0 %v5197
        %5261 = vmatpush1.msra.mxu0 %v5196
        %5262 = vmatprep.subr.mxu0 %v5199
        %5263 = vmatpush1.msra.mxu0 %v5198
        %5264 = vmatprep.mubr.f32.mxu0 %v4500
        %5265 = vmatmul.mubr.f32.gmra.mrb[0].mxu0 %v4499
        %v5266 = vpop.f32.mrb[0].mxu0
        %v5267 = vadd.f32 0.0, %v5266
        %v5268 = vpop.f32.mrb[0].mxu0
        %v5269 = vadd.f32 0.0, %v5268
        %5270 = vmatprep.mubr.f32.mxu0 %v4502
        %5271 = vmatmul.mubr.f32.gmra.mrb[0].mxu0 %v4501
        %v5272 = vpop.f32.mrb[0].mxu0
        %v5273 = vadd.f32 0.0, %v5272
        %v5274 = vpop.f32.mrb[0].mxu0
        %v5275 = vadd.f32 0.0, %v5274
        %5276 = vmatprep.mubr.f32.mxu0 %v4496
        %5277 = vmatmul.mubr.f32.gmra.mrb[0].mxu0 %v4495
        %v5278 = vpop.f32.mrb[0].mxu0
        %v5279 = vadd.f32 0.0, %v5278
        %v5280 = vpop.f32.mrb[0].mxu0
        %v5281 = vadd.f32 0.0, %v5280
        %5282 = vmatprep.mubr.f32.mxu0 %v4498
        %5283 = vmatmul.mubr.f32.gmra.mrb[0].mxu0 %v4497
        %v5284 = vpop.f32.mrb[0].mxu0
        %v5285 = vadd.f32 0.0, %v5284
        %v5286 = vpop.f32.mrb[0].mxu0
        %v5287 = vadd.f32 0.0, %v5286
        %5288 = vmatprep.mubr.f32.mxu0 %v4500
        %5289 = vmatmul.mubr.f32.gmra.mrb[0].mxu0 %v4499
        %v5290 = vpop.f32.mrb[0].mxu0
        %v5291 = vadd.f32 0.0, %v5290
        %v5292 = vpop.f32.mrb[0].mxu0
        %v5293 = vadd.f32 0.0, %v5292
        %5294 = vmatprep.mubr.f32.mxu0 %v4502
        %5295 = vmatmul.mubr.f32.gmra.mrb[0].mxu0 %v4501
        %v5296 = vpop.f32.mrb[0].mxu0
        %v5297 = vadd.f32 0.0, %v5296
        %v5298 = vpop.f32.mrb[0].mxu0
        %v5299 = vadd.f32 0.0, %v5298
        %5300 = vmatprep.mubr.f32.mxu0 %v4504
        %5301 = vmatmul.mubr.f32.gmra.mrb[0].mxu0 %v4503
        %v5302 = vpop.f32.mrb[0].mxu0
        %v5303 = vadd.f32 0.0, %v5302
        %v5304 = vpop.f32.mrb[0].mxu0
        %v5305 = vadd.f32 0.0, %v5304
        %5306 = vmatprep.mubr.f32.mxu0 %v4506
        %5307 = vmatmul.mubr.f32.gmra.mrb[0].mxu0 %v4505
        %v5308 = vpop.f32.mrb[0].mxu0
        %v5309 = vadd.f32 0.0, %v5308
        %v5310 = vpop.f32.mrb[0].mxu0
        %v5311 = vadd.f32 0.0, %v5310
        %5312 = vmatprep.mubr.f32.mxu0 %v4508
        %5313 = vmatmul.mubr.f32.gmra.mrb[0].mxu0 %v4507
        %v5314 = vpop.f32.mrb[0].mxu0
        %v5315 = vadd.f32 0.0, %v5314
        %v5316 = vpop.f32.mrb[0].mxu0
        %v5317 = vadd.f32 0.0, %v5316
        %5318 = vmatprep.mubr.f32.mxu0 %v4510
        %5319 = vmatmul.mubr.f32.gmra.mrb[0].mxu0 %v4509
        %v5320 = vpop.f32.mrb[0].mxu0
        %v5321 = vadd.f32 0.0, %v5320
        %v5322 = vpop.f32.mrb[0].mxu0
        %v5323 = vadd.f32 0.0, %v5322
        %5324 = vmatprep.mubr.f32.mxu0 %v4512
        %5325 = vmatmul.mubr.f32.gmra.mrb[0].mxu0 %v4511
        %v5326 = vpop.f32.mrb[0].mxu0
        %v5327 = vadd.f32 0.0, %v5326
        %v5328 = vpop.f32.mrb[0].mxu0
        %v5329 = vadd.f32 0.0, %v5328
        %5330 = vmatprep.mubr.f32.mxu0 %v4514
        %5331 = vmatmul.mubr.f32.gmra.mrb[0].mxu0 %v4513
        %v5332 = vpop.f32.mrb[0].mxu0
        %v5333 = vadd.f32 0.0, %v5332
        %v5334 = vpop.f32.mrb[0].mxu0
        %v5335 = vadd.f32 0.0, %v5334
        %5336 = vmatprep.mubr.f32.mxu0 %v4516
        %5337 = vmatmul.mubr.f32.gmra.mrb[0].mxu0 %v4515
        %v5338 = vpop.f32.mrb[0].mxu0
        %v5339 = vadd.f32 0.0, %v5338
        %v5340 = vpop.f32.mrb[0].mxu0
        %v5341 = vadd.f32 0.0, %v5340
        %5342 = vmatprep.mubr.f32.mxu0 %v4518
        %5343 = vmatmul.mubr.f32.gmra.mrb[0].mxu0 %v4517
        %v5344 = vpop.f32.mrb[0].mxu0
        %v5345 = vadd.f32 0.0, %v5344
        %v5346 = vpop.f32.mrb[0].mxu0
        %v5347 = vadd.f32 0.0, %v5346
        %5348 = vmatprep.mubr.f32.mxu0 %v4520
        %5349 = vmatmul.mubr.f32.gmra.mrb[0].mxu0 %v4519
        %v5350 = vpop.f32.mrb[0].mxu0
        %v5351 = vadd.f32 0.0, %v5350
        %v5352 = vpop.f32.mrb[0].mxu0
        %v5353 = vadd.f32 0.0, %v5352
        %5354 = vmatprep.mubr.f32.mxu0 %v4522
        %5355 = vmatmul.mubr.f32.gmra.mrb[0].mxu0 %v4521
        %v5356 = vpop.f32.mrb[0].mxu0
        %v5357 = vadd.f32 0.0, %v5356
        %v5358 = vpop.f32.mrb[0].mxu0
        %v5359 = vadd.f32 0.0, %v5358
        %5360 = vmatprep.mubr.f32.mxu0 %v4524
        %5361 = vmatmul.mubr.f32.gmra.mrb[0].mxu0 %v4523
        %v5362 = vpop.f32.mrb[0].mxu0
        %v5363 = vadd.f32 0.0, %v5362
        %v5364 = vpop.f32.mrb[0].mxu0
        %v5365 = vadd.f32 0.0, %v5364
        %5366 = vmatprep.mubr.f32.mxu0 %v4526
        %5367 = vmatmul.mubr.f32.gmra.mrb[0].mxu0 %v4525
        %v5368 = vpop.f32.mrb[0].mxu0
        %v5369 = vadd.f32 0.0, %v5368
        %v5370 = vpop.f32.mrb[0].mxu0
        %v5371 = vadd.f32 0.0, %v5370
        %5372 = vmatprep.mubr.f32.mxu0 %v4528
        %5373 = vmatmul.mubr.f32.gmra.mrb[0].mxu0 %v4527
        %v5374 = vpop.f32.mrb[0].mxu0
        %v5375 = vadd.f32 0.0, %v5374
        %v5376 = vpop.f32.mrb[0].mxu0
        %v5377 = vadd.f32 0.0, %v5376
        %5378 = vmatprep.mubr.f32.mxu0 %v4530
        %5379 = vmatmul.mubr.f32.gmra.mrb[0].mxu0 %v4529
        %v5380 = vpop.f32.mrb[0].mxu0
        %v5381 = vadd.f32 0.0, %v5380
        %v5382 = vpop.f32.mrb[0].mxu0
        %v5383 = vadd.f32 0.0, %v5382
        %5384 = vmatprep.mubr.f32.mxu0 %v4532
        %5385 = vmatmul.mubr.f32.gmra.mrb[0].mxu0 %v4531
        %v5386 = vpop.f32.mrb[0].mxu0
        %v5387 = vadd.f32 0.0, %v5386
        %v5388 = vpop.f32.mrb[0].mxu0
        %v5389 = vadd.f32 0.0, %v5388
        %5390 = vmatprep.mubr.f32.mxu0 %v4534
        %5391 = vmatmul.mubr.f32.gmra.mrb[0].mxu0 %v4533
        %v5392 = vpop.f32.mrb[0].mxu0
        %v5393 = vadd.f32 0.0, %v5392
        %v5394 = vpop.f32.mrb[0].mxu0
        %v5395 = vadd.f32 0.0, %v5394
        %5396 = vmatprep.mubr.f32.mxu0 %v4536
        %5397 = vmatmul.mubr.f32.gmra.mrb[0].mxu0 %v4535
        %v5398 = vpop.f32.mrb[0].mxu0
        %v5399 = vadd.f32 0.0, %v5398
        %v5400 = vpop.f32.mrb[0].mxu0
        %v5401 = vadd.f32 0.0, %v5400
        %5402 = vmatprep.mubr.f32.mxu0 %v4538
        %5403 = vmatmul.mubr.f32.gmra.mrb[0].mxu0 %v4537
        %v5404 = vpop.f32.mrb[0].mxu0
        %v5405 = vadd.f32 0.0, %v5404
        %v5406 = vpop.f32.mrb[0].mxu0
        %v5407 = vadd.f32 0.0, %v5406
        %5408 = vmatprep.mubr.f32.mxu0 %v4540
        %5409 = vmatmul.mubr.f32.gmra.mrb[0].mxu0 %v4539
        %v5410 = vpop.f32.mrb[0].mxu0
        %v5411 = vadd.f32 0.0, %v5410
        %v5412 = vpop.f32.mrb[0].mxu0
        %v5413 = vadd.f32 0.0, %v5412
        %5414 = vmatprep.mubr.f32.mxu0 %v4542
        %5415 = vmatmul.mubr.f32.gmra.mrb[0].mxu0 %v4541
        %v5416 = vpop.f32.mrb[0].mxu0
        %v5417 = vadd.f32 0.0, %v5416
        %v5418 = vpop.f32.mrb[0].mxu0
        %v5419 = vadd.f32 0.0, %v5418
        %5420 = vmatprep.mubr.f32.mxu0 %v4544
        %5421 = vmatmul.mubr.f32.gmra.mrb[0].mxu0 %v4543
        %v5422 = vpop.f32.mrb[0].mxu0
        %v5423 = vadd.f32 0.0, %v5422
        %v5424 = vpop.f32.mrb[0].mxu0
        %v5425 = vadd.f32 0.0, %v5424
        %5426 = vmatprep.mubr.f32.mxu0 %v4546
        %5427 = vmatmul.mubr.f32.gmra.mrb[0].mxu0 %v4545
        %v5428 = vpop.f32.mrb[0].mxu0
        %v5429 = vadd.f32 0.0, %v5428
        %v5430 = vpop.f32.mrb[0].mxu0
        %v5431 = vadd.f32 0.0, %v5430
        %5432 = vmatprep.mubr.f32.mxu0 %v4548
        %5433 = vmatmul.mubr.f32.gmra.mrb[0].mxu0 %v4547
        %v5434 = vpop.f32.mrb[0].mxu0
        %v5435 = vadd.f32 0.0, %v5434
        %v5436 = vpop.f32.mrb[0].mxu0
        %v5437 = vadd.f32 0.0, %v5436
        %5438 = vmatprep.mubr.f32.mxu0 %v4550
        %5439 = vmatmul.mubr.f32.gmra.mrb[0].mxu0 %v4549
        %v5440 = vpop.f32.mrb[0].mxu0
        %v5441 = vadd.f32 0.0, %v5440
        %v5442 = vpop.f32.mrb[0].mxu0
        %v5443 = vadd.f32 0.0, %v5442
        %5444 = vmatprep.mubr.f32.mxu0 %v4552
        %5445 = vmatmul.mubr.f32.gmra.mrb[0].mxu0 %v4551
        %v5446 = vpop.f32.mrb[0].mxu0
        %v5447 = vadd.f32 0.0, %v5446
        %v5448 = vpop.f32.mrb[0].mxu0
        %v5449 = vadd.f32 0.0, %v5448
        %5450 = vmatprep.mubr.f32.mxu0 %v4554
        %5451 = vmatmul.mubr.f32.gmra.mrb[0].mxu0 %v4553
        %v5452 = vpop.f32.mrb[0].mxu0
        %v5453 = vadd.f32 0.0, %v5452
        %v5454 = vpop.f32.mrb[0].mxu0
        %v5455 = vadd.f32 0.0, %v5454
        %5456 = vdwg.mxu0
        %5457 = vmatprep.subr.mxu0 %v5072
        %5458 = vmatpush1.msra.mxu0 %v5071
        %5459 = vmatprep.subr.mxu0 %v5074
        %5460 = vmatpush1.msra.mxu0 %v5073
        %5461 = vmatprep.subr.mxu0 %v5076
        %5462 = vmatpush1.msra.mxu0 %v5075
        %5463 = vmatprep.subr.mxu0 %v5078
        %5464 = vmatpush1.msra.mxu0 %v5077
        %5465 = vmatprep.subr.mxu0 %v5080
        %5466 = vmatpush1.msra.mxu0 %v5079
        %5467 = vmatprep.subr.mxu0 %v5082
        %5468 = vmatpush1.msra.mxu0 %v5081
        %5469 = vmatprep.subr.mxu0 %v5084
        %5470 = vmatpush1.msra.mxu0 %v5083
        %5471 = vmatprep.subr.mxu0 %v5086
        %5472 = vmatpush1.msra.mxu0 %v5085
        %5473 = vmatprep.subr.mxu0 %v5088
        %5474 = vmatpush1.msra.mxu0 %v5087
        %5475 = vmatprep.subr.mxu0 %v5090
        %5476 = vmatpush1.msra.mxu0 %v5089
        %5477 = vmatprep.subr.mxu0 %v5092
        %5478 = vmatpush1.msra.mxu0 %v5091
        %5479 = vmatprep.subr.mxu0 %v5094
        %5480 = vmatpush1.msra.mxu0 %v5093
        %5481 = vmatprep.subr.mxu0 %v5096
        %5482 = vmatpush1.msra.mxu0 %v5095
        %5483 = vmatprep.subr.mxu0 %v5098
        %5484 = vmatpush1.msra.mxu0 %v5097
        %5485 = vmatprep.subr.mxu0 %v5100
        %5486 = vmatpush1.msra.mxu0 %v5099
        %5487 = vmatprep.subr.mxu0 %v5102
        %5488 = vmatpush1.msra.mxu0 %v5101
        %5489 = vmatprep.subr.mxu0 %v5104
        %5490 = vmatpush1.msra.mxu0 %v5103
        %5491 = vmatprep.subr.mxu0 %v5106
        %5492 = vmatpush1.msra.mxu0 %v5105
        %5493 = vmatprep.subr.mxu0 %v5108
        %5494 = vmatpush1.msra.mxu0 %v5107
        %5495 = vmatprep.subr.mxu0 %v5110
        %5496 = vmatpush1.msra.mxu0 %v5109
        %5497 = vmatprep.subr.mxu0 %v5112
        %5498 = vmatpush1.msra.mxu0 %v5111
        %5499 = vmatprep.subr.mxu0 %v5114
        %5500 = vmatpush1.msra.mxu0 %v5113
        %5501 = vmatprep.subr.mxu0 %v5116
        %5502 = vmatpush1.msra.mxu0 %v5115
        %5503 = vmatprep.subr.mxu0 %v5118
        %5504 = vmatpush1.msra.mxu0 %v5117
        %5505 = vmatprep.subr.mxu0 %v5120
        %5506 = vmatpush1.msra.mxu0 %v5119
        %5507 = vmatprep.subr.mxu0 %v5122
        %5508 = vmatpush1.msra.mxu0 %v5121
        %5509 = vmatprep.subr.mxu0 %v5124
        %5510 = vmatpush1.msra.mxu0 %v5123
        %5511 = vmatprep.subr.mxu0 %v5126
        %5512 = vmatpush1.msra.mxu0 %v5125
        %5513 = vmatprep.subr.mxu0 %v5128
        %5514 = vmatpush1.msra.mxu0 %v5127
        %5515 = vmatprep.subr.mxu0 %v5130
        %5516 = vmatpush1.msra.mxu0 %v5129
        %5517 = vmatprep.subr.mxu0 %v5132
        %5518 = vmatpush1.msra.mxu0 %v5131
        %5519 = vmatprep.subr.mxu0 %v5134
        %5520 = vmatpush1.msra.mxu0 %v5133
        %5521 = vmatprep.mubr.f32.mxu0 %v4848
        %5522 = vmatmul.mubr.f32.gmra.mrb[0].mxu0 %v4847
        %v5523 = vpop.f32.mrb[0].mxu0
        %v5524 = vadd.f32 %v5267, %v5523
        %v5525 = vpop.f32.mrb[0].mxu0
        %v5526 = vadd.f32 %v5269, %v5525
        %5527 = vmatprep.mubr.f32.mxu0 %v4692
        %5528 = vmatmul.mubr.f32.gmra.mrb[0].mxu0 %v4690
        %v5529 = vpop.f32.mrb[0].mxu0
        %v5530 = vadd.f32 %v5273, %v5529
        %v5531 = vpop.f32.mrb[0].mxu0
        %v5532 = vadd.f32 %v5275, %v5531
        %5533 = vmatprep.mubr.f32.mxu0 %v4850
        %5534 = vmatmul.mubr.f32.gmra.mrb[0].mxu0 %v4849
        %v5535 = vpop.f32.mrb[0].mxu0
        %v5536 = vadd.f32 %v5279, %v5535
        %v5537 = vpop.f32.mrb[0].mxu0
        %v5538 = vadd.f32 %v5281, %v5537
        %5539 = vmatprep.mubr.f32.mxu0 %v4698
        %5540 = vmatmul.mubr.f32.gmra.mrb[0].mxu0 %v4696
        %v5541 = vpop.f32.mrb[0].mxu0
        %v5542 = vadd.f32 %v5285, %v5541
        %v5543 = vpop.f32.mrb[0].mxu0
        %v5544 = vadd.f32 %v5287, %v5543
        %5545 = vmatprep.mubr.f32.mxu0 %v4848
        %5546 = vmatmul.mubr.f32.gmra.mrb[0].mxu0 %v4847
        %v5547 = vpop.f32.mrb[0].mxu0
        %v5548 = vadd.f32 %v5291, %v5547
        %v5549 = vpop.f32.mrb[0].mxu0
        %v5550 = vadd.f32 %v5293, %v5549
        %5551 = vmatprep.mubr.f32.mxu0 %v4692
        %5552 = vmatmul.mubr.f32.gmra.mrb[0].mxu0 %v4690
        %v5553 = vpop.f32.mrb[0].mxu0
        %v5554 = vadd.f32 %v5297, %v5553
        %v5555 = vpop.f32.mrb[0].mxu0
        %v5556 = vadd.f32 %v5299, %v5555
        %5557 = vmatprep.mubr.f32.mxu0 %v4852
        %5558 = vmatmul.mubr.f32.gmra.mrb[0].mxu0 %v4851
        %v5559 = vpop.f32.mrb[0].mxu0
        %v5560 = vadd.f32 %v5303, %v5559
        %v5561 = vpop.f32.mrb[0].mxu0
        %v5562 = vadd.f32 %v5305, %v5561
        %5563 = vmatprep.mubr.f32.mxu0 %v4704
        %5564 = vmatmul.mubr.f32.gmra.mrb[0].mxu0 %v4702
        %v5565 = vpop.f32.mrb[0].mxu0
        %v5566 = vadd.f32 %v5309, %v5565
        %v5567 = vpop.f32.mrb[0].mxu0
        %v5568 = vadd.f32 %v5311, %v5567
        %5569 = vmatprep.mubr.f32.mxu0 %v4854
        %5570 = vmatmul.mubr.f32.gmra.mrb[0].mxu0 %v4853
        %v5571 = vpop.f32.mrb[0].mxu0
        %v5572 = vadd.f32 %v5315, %v5571
        %v5573 = vpop.f32.mrb[0].mxu0
        %v5574 = vadd.f32 %v5317, %v5573
        %5575 = vmatprep.mubr.f32.mxu0 %v4710
        %5576 = vmatmul.mubr.f32.gmra.mrb[0].mxu0 %v4708
        %v5577 = vpop.f32.mrb[0].mxu0
        %v5578 = vadd.f32 %v5321, %v5577
        %v5579 = vpop.f32.mrb[0].mxu0
        %v5580 = vadd.f32 %v5323, %v5579
        %5581 = vmatprep.mubr.f32.mxu0 %v4856
        %5582 = vmatmul.mubr.f32.gmra.mrb[0].mxu0 %v4855
        %v5583 = vpop.f32.mrb[0].mxu0
        %v5584 = vadd.f32 %v5327, %v5583
        %v5585 = vpop.f32.mrb[0].mxu0
        %v5586 = vadd.f32 %v5329, %v5585
        %5587 = vmatprep.mubr.f32.mxu0 %v4716
        %5588 = vmatmul.mubr.f32.gmra.mrb[0].mxu0 %v4714
        %v5589 = vpop.f32.mrb[0].mxu0
        %v5590 = vadd.f32 %v5333, %v5589
        %v5591 = vpop.f32.mrb[0].mxu0
        %v5592 = vadd.f32 %v5335, %v5591
        %5593 = vmatprep.mubr.f32.mxu0 %v4858
        %5594 = vmatmul.mubr.f32.gmra.mrb[0].mxu0 %v4857
        %v5595 = vpop.f32.mrb[0].mxu0
        %v5596 = vadd.f32 %v5339, %v5595
        %v5597 = vpop.f32.mrb[0].mxu0
        %v5598 = vadd.f32 %v5341, %v5597
        %5599 = vmatprep.mubr.f32.mxu0 %v4722
        %5600 = vmatmul.mubr.f32.gmra.mrb[0].mxu0 %v4720
        %v5601 = vpop.f32.mrb[0].mxu0
        %v5602 = vadd.f32 %v5345, %v5601
        %v5603 = vpop.f32.mrb[0].mxu0
        %v5604 = vadd.f32 %v5347, %v5603
        %5605 = vmatprep.mubr.f32.mxu0 %v4860
        %5606 = vmatmul.mubr.f32.gmra.mrb[0].mxu0 %v4859
        %v5607 = vpop.f32.mrb[0].mxu0
        %v5608 = vadd.f32 %v5351, %v5607
        %v5609 = vpop.f32.mrb[0].mxu0
        %v5610 = vadd.f32 %v5353, %v5609
        %5611 = vmatprep.mubr.f32.mxu0 %v4728
        %5612 = vmatmul.mubr.f32.gmra.mrb[0].mxu0 %v4726
        %v5613 = vpop.f32.mrb[0].mxu0
        %v5614 = vadd.f32 %v5357, %v5613
        %v5615 = vpop.f32.mrb[0].mxu0
        %v5616 = vadd.f32 %v5359, %v5615
        %5617 = vmatprep.mubr.f32.mxu0 %v4862
        %5618 = vmatmul.mubr.f32.gmra.mrb[0].mxu0 %v4861
        %v5619 = vpop.f32.mrb[0].mxu0
        %v5620 = vadd.f32 %v5363, %v5619
        %v5621 = vpop.f32.mrb[0].mxu0
        %v5622 = vadd.f32 %v5365, %v5621
        %5623 = vmatprep.mubr.f32.mxu0 %v4734
        %5624 = vmatmul.mubr.f32.gmra.mrb[0].mxu0 %v4732
        %v5625 = vpop.f32.mrb[0].mxu0
        %v5626 = vadd.f32 %v5369, %v5625
        %v5627 = vpop.f32.mrb[0].mxu0
        %v5628 = vadd.f32 %v5371, %v5627
        %5629 = vmatprep.mubr.f32.mxu0 %v4864
        %5630 = vmatmul.mubr.f32.gmra.mrb[0].mxu0 %v4863
        %v5631 = vpop.f32.mrb[0].mxu0
        %v5632 = vadd.f32 %v5375, %v5631
        %v5633 = vpop.f32.mrb[0].mxu0
        %v5634 = vadd.f32 %v5377, %v5633
        %5635 = vmatprep.mubr.f32.mxu0 %v4740
        %5636 = vmatmul.mubr.f32.gmra.mrb[0].mxu0 %v4738
        %v5637 = vpop.f32.mrb[0].mxu0
        %v5638 = vadd.f32 %v5381, %v5637
        %v5639 = vpop.f32.mrb[0].mxu0
        %v5640 = vadd.f32 %v5383, %v5639
        %5641 = vmatprep.mubr.f32.mxu0 %v4866
        %5642 = vmatmul.mubr.f32.gmra.mrb[0].mxu0 %v4865
        %v5643 = vpop.f32.mrb[0].mxu0
        %v5644 = vadd.f32 %v5387, %v5643
        %v5645 = vpop.f32.mrb[0].mxu0
        %v5646 = vadd.f32 %v5389, %v5645
        %5647 = vmatprep.mubr.f32.mxu0 %v4746
        %5648 = vmatmul.mubr.f32.gmra.mrb[0].mxu0 %v4744
        %v5649 = vpop.f32.mrb[0].mxu0
        %v5650 = vadd.f32 %v5393, %v5649
        %v5651 = vpop.f32.mrb[0].mxu0
        %v5652 = vadd.f32 %v5395, %v5651
        %5653 = vmatprep.mubr.f32.mxu0 %v4868
        %5654 = vmatmul.mubr.f32.gmra.mrb[0].mxu0 %v4867
        %v5655 = vpop.f32.mrb[0].mxu0
        %v5656 = vadd.f32 %v5399, %v5655
        %v5657 = vpop.f32.mrb[0].mxu0
        %v5658 = vadd.f32 %v5401, %v5657
        %5659 = vmatprep.mubr.f32.mxu0 %v4752
        %5660 = vmatmul.mubr.f32.gmra.mrb[0].mxu0 %v4750
        %v5661 = vpop.f32.mrb[0].mxu0
        %v5662 = vadd.f32 %v5405, %v5661
        %v5663 = vpop.f32.mrb[0].mxu0
        %v5664 = vadd.f32 %v5407, %v5663
        %5665 = vmatprep.mubr.f32.mxu0 %v4870
        %5666 = vmatmul.mubr.f32.gmra.mrb[0].mxu0 %v4869
        %v5667 = vpop.f32.mrb[0].mxu0
        %v5668 = vadd.f32 %v5411, %v5667
        %v5669 = vpop.f32.mrb[0].mxu0
        %v5670 = vadd.f32 %v5413, %v5669
        %5671 = vmatprep.mubr.f32.mxu0 %v4758
        %5672 = vmatmul.mubr.f32.gmra.mrb[0].mxu0 %v4756
        %v5673 = vpop.f32.mrb[0].mxu0
        %v5674 = vadd.f32 %v5417, %v5673
        %v5675 = vpop.f32.mrb[0].mxu0
        %v5676 = vadd.f32 %v5419, %v5675
        %5677 = vmatprep.mubr.f32.mxu0 %v4872
        %5678 = vmatmul.mubr.f32.gmra.mrb[0].mxu0 %v4871
        %v5679 = vpop.f32.mrb[0].mxu0
        %v5680 = vadd.f32 %v5423, %v5679
        %v5681 = vpop.f32.mrb[0].mxu0
        %v5682 = vadd.f32 %v5425, %v5681
        %5683 = vmatprep.mubr.f32.mxu0 %v4764
        %5684 = vmatmul.mubr.f32.gmra.mrb[0].mxu0 %v4762
        %v5685 = vpop.f32.mrb[0].mxu0
        %v5686 = vadd.f32 %v5429, %v5685
        %v5687 = vpop.f32.mrb[0].mxu0
        %v5688 = vadd.f32 %v5431, %v5687
        %5689 = vmatprep.mubr.f32.mxu0 %v4874
        %5690 = vmatmul.mubr.f32.gmra.mrb[0].mxu0 %v4873
        %v5691 = vpop.f32.mrb[0].mxu0
        %v5692 = vadd.f32 %v5435, %v5691
        %v5693 = vpop.f32.mrb[0].mxu0
        %v5694 = vadd.f32 %v5437, %v5693
        %5695 = vmatprep.mubr.f32.mxu0 %v4770
        %5696 = vmatmul.mubr.f32.gmra.mrb[0].mxu0 %v4768
        %v5697 = vpop.f32.mrb[0].mxu0
        %v5698 = vadd.f32 %v5441, %v5697
        %v5699 = vpop.f32.mrb[0].mxu0
        %v5700 = vadd.f32 %v5443, %v5699
        %5701 = vmatprep.mubr.f32.mxu0 %v4876
        %5702 = vmatmul.mubr.f32.gmra.mrb[0].mxu0 %v4875
        %v5703 = vpop.f32.mrb[0].mxu0
        %v5704 = vadd.f32 %v5447, %v5703
        %v5705 = vpop.f32.mrb[0].mxu0
        %v5706 = vadd.f32 %v5449, %v5705
        %5707 = vmatprep.mubr.f32.mxu0 %v4776
        %5708 = vmatmul.mubr.f32.gmra.mrb[0].mxu0 %v4774
        %v5709 = vpop.f32.mrb[0].mxu0
        %v5710 = vadd.f32 %v5453, %v5709
        %v5711 = vpop.f32.mrb[0].mxu0
        %v5712 = vadd.f32 %v5455, %v5711
        %5713 = vdwg.mxu0
        %s5714 = scalar_lea.vmem [#allocation7], 1024
        %v5715 = vld [vmem:[%s5714] sm:$0xff]
        %v5716 = vld [vmem:[%s5714 + $0x8] sm:$0xff]
        %v5717 = vld [vmem:[%s5714 + $0x10] sm:$0xff]
        %v5718 = vld [vmem:[%s5714 + $0x18] sm:$0xff]
        %v5719 = vld [vmem:[%s5714 + $0x20] sm:$0xff]
        %v5720 = vld [vmem:[%s5714 + $0x28] sm:$0xff]
        %v5721 = vld [vmem:[%s5714 + $0x30] sm:$0xff]
        %v5722 = vld [vmem:[%s5714 + $0x38] sm:$0xff]
        %v5723 = vld [vmem:[%s5714 + $0x40] sm:$0xff]
        %v5724 = vld [vmem:[%s5714 + $0x48] sm:$0xff]
        %v5725 = vld [vmem:[%s5714 + $0x50] sm:$0xff]
        %v5726 = vld [vmem:[%s5714 + $0x58] sm:$0xff]
        %v5727 = vld [vmem:[%s5714 + $0x60] sm:$0xff]
        %v5728 = vld [vmem:[%s5714 + $0x68] sm:$0xff]
        %v5729 = vld [vmem:[%s5714 + $0x70] sm:$0xff]
        %v5730 = vld [vmem:[%s5714 + $0x78] sm:$0xff]
        %v5731 = vld [vmem:[%s5714 + $0x80] sm:$0xff]
        %v5732 = vld [vmem:[%s5714 + $0x88] sm:$0xff]
        %v5733 = vld [vmem:[%s5714 + $0x90] sm:$0xff]
        %v5734 = vld [vmem:[%s5714 + $0x98] sm:$0xff]
        %v5735 = vld [vmem:[%s5714 + $0xa0] sm:$0xff]
        %v5736 = vld [vmem:[%s5714 + $0xa8] sm:$0xff]
        %v5737 = vld [vmem:[%s5714 + $0xb0] sm:$0xff]
        %v5738 = vld [vmem:[%s5714 + $0xb8] sm:$0xff]
        %v5739 = vld [vmem:[%s5714 + $0xc0] sm:$0xff]
        %v5740 = vld [vmem:[%s5714 + $0xc8] sm:$0xff]
        %v5741 = vld [vmem:[%s5714 + $0xd0] sm:$0xff]
        %v5742 = vld [vmem:[%s5714 + $0xd8] sm:$0xff]
        %v5743 = vld [vmem:[%s5714 + $0xe0] sm:$0xff]
        %v5744 = vld [vmem:[%s5714 + $0xe8] sm:$0xff]
        %v5745 = vld [vmem:[%s5714 + $0xf0] sm:$0xff]
        %v5746 = vld [vmem:[%s5714 + $0xf8] sm:$0xff]
        %v5747 = vld [vmem:[%s5714 + $0x100] sm:$0xff]
        %v5748 = vld [vmem:[%s5714 + $0x108] sm:$0xff]
        %v5749 = vld [vmem:[%s5714 + $0x110] sm:$0xff]
        %v5750 = vld [vmem:[%s5714 + $0x118] sm:$0xff]
        %v5751 = vld [vmem:[%s5714 + $0x120] sm:$0xff]
        %v5752 = vld [vmem:[%s5714 + $0x128] sm:$0xff]
        %v5753 = vld [vmem:[%s5714 + $0x130] sm:$0xff]
        %v5754 = vld [vmem:[%s5714 + $0x138] sm:$0xff]
        %v5755 = vld [vmem:[%s5714 + $0x140] sm:$0xff]
        %v5756 = vld [vmem:[%s5714 + $0x148] sm:$0xff]
        %v5757 = vld [vmem:[%s5714 + $0x150] sm:$0xff]
        %v5758 = vld [vmem:[%s5714 + $0x158] sm:$0xff]
        %v5759 = vld [vmem:[%s5714 + $0x160] sm:$0xff]
        %v5760 = vld [vmem:[%s5714 + $0x168] sm:$0xff]
        %v5761 = vld [vmem:[%s5714 + $0x170] sm:$0xff]
        %v5762 = vld [vmem:[%s5714 + $0x178] sm:$0xff]
        %v5763 = vld [vmem:[%s5714 + $0x180] sm:$0xff]
        %v5764 = vld [vmem:[%s5714 + $0x188] sm:$0xff]
        %v5765 = vld [vmem:[%s5714 + $0x190] sm:$0xff]
        %v5766 = vld [vmem:[%s5714 + $0x198] sm:$0xff]
        %v5767 = vld [vmem:[%s5714 + $0x1a0] sm:$0xff]
        %v5768 = vld [vmem:[%s5714 + $0x1a8] sm:$0xff]
        %v5769 = vld [vmem:[%s5714 + $0x1b0] sm:$0xff]
        %v5770 = vld [vmem:[%s5714 + $0x1b8] sm:$0xff]
        %v5771 = vld [vmem:[%s5714 + $0x1c0] sm:$0xff]
        %v5772 = vld [vmem:[%s5714 + $0x1c8] sm:$0xff]
        %v5773 = vld [vmem:[%s5714 + $0x1d0] sm:$0xff]
        %v5774 = vld [vmem:[%s5714 + $0x1d8] sm:$0xff]
        %v5775 = vld [vmem:[%s5714 + $0x1e0] sm:$0xff]
        %v5776 = vld [vmem:[%s5714 + $0x1e8] sm:$0xff]
        %v5777 = vld [vmem:[%s5714 + $0x1f0] sm:$0xff]
        %v5778 = vld [vmem:[%s5714 + $0x1f8] sm:$0xff]
        %5779 = vmatprep.subr.mxu0 %v5716
        %5780 = vmatpush1.msra.mxu0 %v5715
        %5781 = vmatprep.subr.mxu0 %v5718
        %5782 = vmatpush1.msra.mxu0 %v5717
        %5783 = vmatprep.subr.mxu0 %v5720
        %5784 = vmatpush1.msra.mxu0 %v5719
        %5785 = vmatprep.subr.mxu0 %v5722
        %5786 = vmatpush1.msra.mxu0 %v5721
        %5787 = vmatprep.subr.mxu0 %v5724
        %5788 = vmatpush1.msra.mxu0 %v5723
        %5789 = vmatprep.subr.mxu0 %v5726
        %5790 = vmatpush1.msra.mxu0 %v5725
        %5791 = vmatprep.subr.mxu0 %v5728
        %5792 = vmatpush1.msra.mxu0 %v5727
        %5793 = vmatprep.subr.mxu0 %v5730
        %5794 = vmatpush1.msra.mxu0 %v5729
        %5795 = vmatprep.subr.mxu0 %v5732
        %5796 = vmatpush1.msra.mxu0 %v5731
        %5797 = vmatprep.subr.mxu0 %v5734
        %5798 = vmatpush1.msra.mxu0 %v5733
        %5799 = vmatprep.subr.mxu0 %v5736
        %5800 = vmatpush1.msra.mxu0 %v5735
        %5801 = vmatprep.subr.mxu0 %v5738
        %5802 = vmatpush1.msra.mxu0 %v5737
        %5803 = vmatprep.subr.mxu0 %v5740
        %5804 = vmatpush1.msra.mxu0 %v5739
        %5805 = vmatprep.subr.mxu0 %v5742
        %5806 = vmatpush1.msra.mxu0 %v5741
        %5807 = vmatprep.subr.mxu0 %v5744
        %5808 = vmatpush1.msra.mxu0 %v5743
        %5809 = vmatprep.subr.mxu0 %v5746
        %5810 = vmatpush1.msra.mxu0 %v5745
        %5811 = vmatprep.subr.mxu0 %v5748
        %5812 = vmatpush1.msra.mxu0 %v5747
        %5813 = vmatprep.subr.mxu0 %v5750
        %5814 = vmatpush1.msra.mxu0 %v5749
        %5815 = vmatprep.subr.mxu0 %v5752
        %5816 = vmatpush1.msra.mxu0 %v5751
        %5817 = vmatprep.subr.mxu0 %v5754
        %5818 = vmatpush1.msra.mxu0 %v5753
        %5819 = vmatprep.subr.mxu0 %v5756
        %5820 = vmatpush1.msra.mxu0 %v5755
        %5821 = vmatprep.subr.mxu0 %v5758
        %5822 = vmatpush1.msra.mxu0 %v5757
        %5823 = vmatprep.subr.mxu0 %v5760
        %5824 = vmatpush1.msra.mxu0 %v5759
        %5825 = vmatprep.subr.mxu0 %v5762
        %5826 = vmatpush1.msra.mxu0 %v5761
        %5827 = vmatprep.subr.mxu0 %v5764
        %5828 = vmatpush1.msra.mxu0 %v5763
        %5829 = vmatprep.subr.mxu0 %v5766
        %5830 = vmatpush1.msra.mxu0 %v5765
        %5831 = vmatprep.subr.mxu0 %v5768
        %5832 = vmatpush1.msra.mxu0 %v5767
        %5833 = vmatprep.subr.mxu0 %v5770
        %5834 = vmatpush1.msra.mxu0 %v5769
        %5835 = vmatprep.subr.mxu0 %v5772
        %5836 = vmatpush1.msra.mxu0 %v5771
        %5837 = vmatprep.subr.mxu0 %v5774
        %5838 = vmatpush1.msra.mxu0 %v5773
        %5839 = vmatprep.subr.mxu0 %v5776
        %5840 = vmatpush1.msra.mxu0 %v5775
        %5841 = vmatprep.subr.mxu0 %v5778
        %5842 = vmatpush1.msra.mxu0 %v5777
        %5843 = vmatprep.mubr.f32.mxu0 %v4882
        %5844 = vmatmul.mubr.f32.gmra.mrb[0].mxu0 %v4880
        %v5845 = vpop.f32.mrb[0].mxu0
        %v5846 = vadd.f32 0.0, %v5845
        %v5847 = vpop.f32.mrb[0].mxu0
        %v5848 = vadd.f32 0.0, %v5847
        %5849 = vmatprep.mubr.f32.mxu0 %v5040
        %5850 = vmatmul.mubr.f32.gmra.mrb[0].mxu0 %v5039
        %v5851 = vpop.f32.mrb[0].mxu0
        %v5852 = vadd.f32 0.0, %v5851
        %v5853 = vpop.f32.mrb[0].mxu0
        %v5854 = vadd.f32 0.0, %v5853
        %5855 = vmatprep.mubr.f32.mxu0 %v4886
        %5856 = vmatmul.mubr.f32.gmra.mrb[0].mxu0 %v4884
        %v5857 = vpop.f32.mrb[0].mxu0
        %v5858 = vadd.f32 0.0, %v5857
        %v5859 = vpop.f32.mrb[0].mxu0
        %v5860 = vadd.f32 0.0, %v5859
        %5861 = vmatprep.mubr.f32.mxu0 %v5042
        %5862 = vmatmul.mubr.f32.gmra.mrb[0].mxu0 %v5041
        %v5863 = vpop.f32.mrb[0].mxu0
        %v5864 = vadd.f32 0.0, %v5863
        %v5865 = vpop.f32.mrb[0].mxu0
        %v5866 = vadd.f32 0.0, %v5865
        %5867 = vmatprep.mubr.f32.mxu0 %v4882
        %5868 = vmatmul.mubr.f32.gmra.mrb[0].mxu0 %v4880
        %v5869 = vpop.f32.mrb[0].mxu0
        %v5870 = vadd.f32 0.0, %v5869
        %v5871 = vpop.f32.mrb[0].mxu0
        %v5872 = vadd.f32 0.0, %v5871
        %5873 = vmatprep.mubr.f32.mxu0 %v5040
        %5874 = vmatmul.mubr.f32.gmra.mrb[0].mxu0 %v5039
        %v5875 = vpop.f32.mrb[0].mxu0
        %v5876 = vadd.f32 0.0, %v5875
        %v5877 = vpop.f32.mrb[0].mxu0
        %v5878 = vadd.f32 0.0, %v5877
        %5879 = vmatprep.mubr.f32.mxu0 %v4890
        %5880 = vmatmul.mubr.f32.gmra.mrb[0].mxu0 %v4888
        %v5881 = vpop.f32.mrb[0].mxu0
        %v5882 = vadd.f32 0.0, %v5881
        %v5883 = vpop.f32.mrb[0].mxu0
        %v5884 = vadd.f32 0.0, %v5883
        %5885 = vmatprep.mubr.f32.mxu0 %v5044
        %5886 = vmatmul.mubr.f32.gmra.mrb[0].mxu0 %v5043
        %v5887 = vpop.f32.mrb[0].mxu0
        %v5888 = vadd.f32 0.0, %v5887
        %v5889 = vpop.f32.mrb[0].mxu0
        %v5890 = vadd.f32 0.0, %v5889
        %5891 = vmatprep.mubr.f32.mxu0 %v4894
        %5892 = vmatmul.mubr.f32.gmra.mrb[0].mxu0 %v4892
        %v5893 = vpop.f32.mrb[0].mxu0
        %v5894 = vadd.f32 0.0, %v5893
        %v5895 = vpop.f32.mrb[0].mxu0
        %v5896 = vadd.f32 0.0, %v5895
        %5897 = vmatprep.mubr.f32.mxu0 %v5046
        %5898 = vmatmul.mubr.f32.gmra.mrb[0].mxu0 %v5045
        %v5899 = vpop.f32.mrb[0].mxu0
        %v5900 = vadd.f32 0.0, %v5899
        %v5901 = vpop.f32.mrb[0].mxu0
        %v5902 = vadd.f32 0.0, %v5901
        %5903 = vmatprep.mubr.f32.mxu0 %v4898
        %5904 = vmatmul.mubr.f32.gmra.mrb[0].mxu0 %v4896
        %v5905 = vpop.f32.mrb[0].mxu0
        %v5906 = vadd.f32 0.0, %v5905
        %v5907 = vpop.f32.mrb[0].mxu0
        %v5908 = vadd.f32 0.0, %v5907
        %5909 = vmatprep.mubr.f32.mxu0 %v5048
        %5910 = vmatmul.mubr.f32.gmra.mrb[0].mxu0 %v5047
        %v5911 = vpop.f32.mrb[0].mxu0
        %v5912 = vadd.f32 0.0, %v5911
        %v5913 = vpop.f32.mrb[0].mxu0
        %v5914 = vadd.f32 0.0, %v5913
        %5915 = vmatprep.mubr.f32.mxu0 %v4902
        %5916 = vmatmul.mubr.f32.gmra.mrb[0].mxu0 %v4900
        %v5917 = vpop.f32.mrb[0].mxu0
        %v5918 = vadd.f32 0.0, %v5917
        %v5919 = vpop.f32.mrb[0].mxu0
        %v5920 = vadd.f32 0.0, %v5919
        %5921 = vmatprep.mubr.f32.mxu0 %v5050
        %5922 = vmatmul.mubr.f32.gmra.mrb[0].mxu0 %v5049
        %v5923 = vpop.f32.mrb[0].mxu0
        %v5924 = vadd.f32 0.0, %v5923
        %v5925 = vpop.f32.mrb[0].mxu0
        %v5926 = vadd.f32 0.0, %v5925
        %5927 = vmatprep.mubr.f32.mxu0 %v4906
        %5928 = vmatmul.mubr.f32.gmra.mrb[0].mxu0 %v4904
        %v5929 = vpop.f32.mrb[0].mxu0
        %v5930 = vadd.f32 0.0, %v5929
        %v5931 = vpop.f32.mrb[0].mxu0
        %v5932 = vadd.f32 0.0, %v5931
        %5933 = vmatprep.mubr.f32.mxu0 %v5052
        %5934 = vmatmul.mubr.f32.gmra.mrb[0].mxu0 %v5051
        %v5935 = vpop.f32.mrb[0].mxu0
        %v5936 = vadd.f32 0.0, %v5935
        %v5937 = vpop.f32.mrb[0].mxu0
        %v5938 = vadd.f32 0.0, %v5937
        %5939 = vmatprep.mubr.f32.mxu0 %v4910
        %5940 = vmatmul.mubr.f32.gmra.mrb[0].mxu0 %v4908
        %v5941 = vpop.f32.mrb[0].mxu0
        %v5942 = vadd.f32 0.0, %v5941
        %v5943 = vpop.f32.mrb[0].mxu0
        %v5944 = vadd.f32 0.0, %v5943
        %5945 = vmatprep.mubr.f32.mxu0 %v5054
        %5946 = vmatmul.mubr.f32.gmra.mrb[0].mxu0 %v5053
        %v5947 = vpop.f32.mrb[0].mxu0
        %v5948 = vadd.f32 0.0, %v5947
        %v5949 = vpop.f32.mrb[0].mxu0
        %v5950 = vadd.f32 0.0, %v5949
        %5951 = vmatprep.mubr.f32.mxu0 %v4914
        %5952 = vmatmul.mubr.f32.gmra.mrb[0].mxu0 %v4912
        %v5953 = vpop.f32.mrb[0].mxu0
        %v5954 = vadd.f32 0.0, %v5953
        %v5955 = vpop.f32.mrb[0].mxu0
        %v5956 = vadd.f32 0.0, %v5955
        %5957 = vmatprep.mubr.f32.mxu0 %v5056
        %5958 = vmatmul.mubr.f32.gmra.mrb[0].mxu0 %v5055
        %v5959 = vpop.f32.mrb[0].mxu0
        %v5960 = vadd.f32 0.0, %v5959
        %v5961 = vpop.f32.mrb[0].mxu0
        %v5962 = vadd.f32 0.0, %v5961
        %5963 = vmatprep.mubr.f32.mxu0 %v4918
        %5964 = vmatmul.mubr.f32.gmra.mrb[0].mxu0 %v4916
        %v5965 = vpop.f32.mrb[0].mxu0
        %v5966 = vadd.f32 0.0, %v5965
        %v5967 = vpop.f32.mrb[0].mxu0
        %v5968 = vadd.f32 0.0, %v5967
        %5969 = vmatprep.mubr.f32.mxu0 %v5058
        %5970 = vmatmul.mubr.f32.gmra.mrb[0].mxu0 %v5057
        %v5971 = vpop.f32.mrb[0].mxu0
        %v5972 = vadd.f32 0.0, %v5971
        %v5973 = vpop.f32.mrb[0].mxu0
        %v5974 = vadd.f32 0.0, %v5973
        %5975 = vmatprep.mubr.f32.mxu0 %v4922
        %5976 = vmatmul.mubr.f32.gmra.mrb[0].mxu0 %v4920
        %v5977 = vpop.f32.mrb[0].mxu0
        %v5978 = vadd.f32 0.0, %v5977
        %v5979 = vpop.f32.mrb[0].mxu0
        %v5980 = vadd.f32 0.0, %v5979
        %5981 = vmatprep.mubr.f32.mxu0 %v5060
        %5982 = vmatmul.mubr.f32.gmra.mrb[0].mxu0 %v5059
        %v5983 = vpop.f32.mrb[0].mxu0
        %v5984 = vadd.f32 0.0, %v5983
        %v5985 = vpop.f32.mrb[0].mxu0
        %v5986 = vadd.f32 0.0, %v5985
        %5987 = vmatprep.mubr.f32.mxu0 %v4926
        %5988 = vmatmul.mubr.f32.gmra.mrb[0].mxu0 %v4924
        %v5989 = vpop.f32.mrb[0].mxu0
        %v5990 = vadd.f32 0.0, %v5989
        %v5991 = vpop.f32.mrb[0].mxu0
        %v5992 = vadd.f32 0.0, %v5991
        %5993 = vmatprep.mubr.f32.mxu0 %v5062
        %5994 = vmatmul.mubr.f32.gmra.mrb[0].mxu0 %v5061
        %v5995 = vpop.f32.mrb[0].mxu0
        %v5996 = vadd.f32 0.0, %v5995
        %v5997 = vpop.f32.mrb[0].mxu0
        %v5998 = vadd.f32 0.0, %v5997
        %5999 = vmatprep.mubr.f32.mxu0 %v4930
        %6000 = vmatmul.mubr.f32.gmra.mrb[0].mxu0 %v4928
        %v6001 = vpop.f32.mrb[0].mxu0
        %v6002 = vadd.f32 0.0, %v6001
        %v6003 = vpop.f32.mrb[0].mxu0
        %v6004 = vadd.f32 0.0, %v6003
        %6005 = vmatprep.mubr.f32.mxu0 %v5064
        %6006 = vmatmul.mubr.f32.gmra.mrb[0].mxu0 %v5063
        %v6007 = vpop.f32.mrb[0].mxu0
        %v6008 = vadd.f32 0.0, %v6007
        %v6009 = vpop.f32.mrb[0].mxu0
        %v6010 = vadd.f32 0.0, %v6009
        %6011 = vmatprep.mubr.f32.mxu0 %v4934
        %6012 = vmatmul.mubr.f32.gmra.mrb[0].mxu0 %v4932
        %v6013 = vpop.f32.mrb[0].mxu0
        %v6014 = vadd.f32 0.0, %v6013
        %v6015 = vpop.f32.mrb[0].mxu0
        %v6016 = vadd.f32 0.0, %v6015
        %6017 = vmatprep.mubr.f32.mxu0 %v5066
        %6018 = vmatmul.mubr.f32.gmra.mrb[0].mxu0 %v5065
        %v6019 = vpop.f32.mrb[0].mxu0
        %v6020 = vadd.f32 0.0, %v6019
        %v6021 = vpop.f32.mrb[0].mxu0
        %v6022 = vadd.f32 0.0, %v6021
        %6023 = vmatprep.mubr.f32.mxu0 %v4938
        %6024 = vmatmul.mubr.f32.gmra.mrb[0].mxu0 %v4936
        %v6025 = vpop.f32.mrb[0].mxu0
        %v6026 = vadd.f32 0.0, %v6025
        %v6027 = vpop.f32.mrb[0].mxu0
        %v6028 = vadd.f32 0.0, %v6027
        %6029 = vmatprep.mubr.f32.mxu0 %v5068
        %6030 = vmatmul.mubr.f32.gmra.mrb[0].mxu0 %v5067
        %v6031 = vpop.f32.mrb[0].mxu0
        %v6032 = vadd.f32 0.0, %v6031
        %v6033 = vpop.f32.mrb[0].mxu0
        %v6034 = vadd.f32 0.0, %v6033
        %6035 = vdwg.mxu0
        %v6036 = vadd.f32 %v5524, %v5846
        %v6037 = vadd.f32 %v5526, %v5848
        %v6038 = vadd.f32 %v5530, %v5852
        %v6039 = vadd.f32 %v5532, %v5854
        %v6040 = vadd.f32 %v5536, %v5858
        %v6041 = vadd.f32 %v5538, %v5860
        %v6042 = vadd.f32 %v5542, %v5864
        %v6043 = vadd.f32 %v5544, %v5866
        %v6044 = vadd.f32 %v5548, %v5870
        %v6045 = vadd.f32 %v5550, %v5872
        %v6046 = vadd.f32 %v5554, %v5876
        %v6047 = vadd.f32 %v5556, %v5878
        %v6048 = vadd.f32 %v5560, %v5882
        %v6049 = vadd.f32 %v5562, %v5884
        %v6050 = vadd.f32 %v5566, %v5888
        %v6051 = vadd.f32 %v5568, %v5890
        %v6052 = vadd.f32 %v5572, %v5894
        %v6053 = vadd.f32 %v5574, %v5896
        %v6054 = vadd.f32 %v5578, %v5900
        %v6055 = vadd.f32 %v5580, %v5902
        %v6056 = vadd.f32 %v5584, %v5906
        %v6057 = vadd.f32 %v5586, %v5908
        %v6058 = vadd.f32 %v5590, %v5912
        %v6059 = vadd.f32 %v5592, %v5914
        %v6060 = vadd.f32 %v5596, %v5918
        %v6061 = vadd.f32 %v5598, %v5920
        %v6062 = vadd.f32 %v5602, %v5924
        %v6063 = vadd.f32 %v5604, %v5926
        %v6064 = vadd.f32 %v5608, %v5930
        %v6065 = vadd.f32 %v5610, %v5932
        %v6066 = vadd.f32 %v5614, %v5936
        %v6067 = vadd.f32 %v5616, %v5938
        %v6068 = vadd.f32 %v5620, %v5942
        %v6069 = vadd.f32 %v5622, %v5944
        %v6070 = vadd.f32 %v5626, %v5948
        %v6071 = vadd.f32 %v5628, %v5950
        %v6072 = vadd.f32 %v5632, %v5954
        %v6073 = vadd.f32 %v5634, %v5956
        %v6074 = vadd.f32 %v5638, %v5960
        %v6075 = vadd.f32 %v5640, %v5962
        %v6076 = vadd.f32 %v5644, %v5966
        %v6077 = vadd.f32 %v5646, %v5968
        %v6078 = vadd.f32 %v5650, %v5972
        %v6079 = vadd.f32 %v5652, %v5974
        %v6080 = vadd.f32 %v5656, %v5978
        %v6081 = vadd.f32 %v5658, %v5980
        %v6082 = vadd.f32 %v5662, %v5984
        %v6083 = vadd.f32 %v5664, %v5986
        %v6084 = vadd.f32 %v5668, %v5990
        %v6085 = vadd.f32 %v5670, %v5992
        %v6086 = vadd.f32 %v5674, %v5996
        %v6087 = vadd.f32 %v5676, %v5998
        %v6088 = vadd.f32 %v5680, %v6002
        %v6089 = vadd.f32 %v5682, %v6004
        %v6090 = vadd.f32 %v5686, %v6008
        %v6091 = vadd.f32 %v5688, %v6010
        %v6092 = vadd.f32 %v5692, %v6014
        %v6093 = vadd.f32 %v5694, %v6016
        %v6094 = vadd.f32 %v5698, %v6020
        %v6095 = vadd.f32 %v5700, %v6022
        %v6096 = vadd.f32 %v5704, %v6026
        %v6097 = vadd.f32 %v5706, %v6028
        %v6098 = vadd.f32 %v5710, %v6032
        %v6099 = vadd.f32 %v5712, %v6034
        %s6100 = scalar_lea.vmem [#allocation7], 1536
        %v6101 = vld [vmem:[%s6100] sm:$0xff]
        %v6102 = vld [vmem:[%s6100 + $0x8] sm:$0xff]
        %v6103 = vld [vmem:[%s6100 + $0x10] sm:$0xff]
        %v6104 = vld [vmem:[%s6100 + $0x18] sm:$0xff]
        %v6105 = vld [vmem:[%s6100 + $0x20] sm:$0xff]
        %v6106 = vld [vmem:[%s6100 + $0x28] sm:$0xff]
        %v6107 = vld [vmem:[%s6100 + $0x30] sm:$0xff]
        %v6108 = vld [vmem:[%s6100 + $0x38] sm:$0xff]
        %v6109 = vld [vmem:[%s6100 + $0x40] sm:$0xff]
        %v6110 = vld [vmem:[%s6100 + $0x48] sm:$0xff]
        %v6111 = vld [vmem:[%s6100 + $0x50] sm:$0xff]
        %v6112 = vld [vmem:[%s6100 + $0x58] sm:$0xff]
        %v6113 = vld [vmem:[%s6100 + $0x60] sm:$0xff]
        %v6114 = vld [vmem:[%s6100 + $0x68] sm:$0xff]
        %v6115 = vld [vmem:[%s6100 + $0x70] sm:$0xff]
        %v6116 = vld [vmem:[%s6100 + $0x78] sm:$0xff]
        %v6117 = vld [vmem:[%s6100 + $0x80] sm:$0xff]
        %v6118 = vld [vmem:[%s6100 + $0x88] sm:$0xff]
        %v6119 = vld [vmem:[%s6100 + $0x90] sm:$0xff]
        %v6120 = vld [vmem:[%s6100 + $0x98] sm:$0xff]
        %v6121 = vld [vmem:[%s6100 + $0xa0] sm:$0xff]
        %v6122 = vld [vmem:[%s6100 + $0xa8] sm:$0xff]
        %v6123 = vld [vmem:[%s6100 + $0xb0] sm:$0xff]
        %v6124 = vld [vmem:[%s6100 + $0xb8] sm:$0xff]
        %v6125 = vld [vmem:[%s6100 + $0xc0] sm:$0xff]
        %v6126 = vld [vmem:[%s6100 + $0xc8] sm:$0xff]
        %v6127 = vld [vmem:[%s6100 + $0xd0] sm:$0xff]
        %v6128 = vld [vmem:[%s6100 + $0xd8] sm:$0xff]
        %v6129 = vld [vmem:[%s6100 + $0xe0] sm:$0xff]
        %v6130 = vld [vmem:[%s6100 + $0xe8] sm:$0xff]
        %v6131 = vld [vmem:[%s6100 + $0xf0] sm:$0xff]
        %v6132 = vld [vmem:[%s6100 + $0xf8] sm:$0xff]
        %v6133 = vld [vmem:[%s6100 + $0x100] sm:$0xff]
        %v6134 = vld [vmem:[%s6100 + $0x108] sm:$0xff]
        %v6135 = vld [vmem:[%s6100 + $0x110] sm:$0xff]
        %v6136 = vld [vmem:[%s6100 + $0x118] sm:$0xff]
        %v6137 = vld [vmem:[%s6100 + $0x120] sm:$0xff]
        %v6138 = vld [vmem:[%s6100 + $0x128] sm:$0xff]
        %v6139 = vld [vmem:[%s6100 + $0x130] sm:$0xff]
        %v6140 = vld [vmem:[%s6100 + $0x138] sm:$0xff]
        %v6141 = vld [vmem:[%s6100 + $0x140] sm:$0xff]
        %v6142 = vld [vmem:[%s6100 + $0x148] sm:$0xff]
        %v6143 = vld [vmem:[%s6100 + $0x150] sm:$0xff]
        %v6144 = vld [vmem:[%s6100 + $0x158] sm:$0xff]
        %v6145 = vld [vmem:[%s6100 + $0x160] sm:$0xff]
        %v6146 = vld [vmem:[%s6100 + $0x168] sm:$0xff]
        %v6147 = vld [vmem:[%s6100 + $0x170] sm:$0xff]
        %v6148 = vld [vmem:[%s6100 + $0x178] sm:$0xff]
        %v6149 = vld [vmem:[%s6100 + $0x180] sm:$0xff]
        %v6150 = vld [vmem:[%s6100 + $0x188] sm:$0xff]
        %v6151 = vld [vmem:[%s6100 + $0x190] sm:$0xff]
        %v6152 = vld [vmem:[%s6100 + $0x198] sm:$0xff]
        %v6153 = vld [vmem:[%s6100 + $0x1a0] sm:$0xff]
        %v6154 = vld [vmem:[%s6100 + $0x1a8] sm:$0xff]
        %v6155 = vld [vmem:[%s6100 + $0x1b0] sm:$0xff]
        %v6156 = vld [vmem:[%s6100 + $0x1b8] sm:$0xff]
        %v6157 = vld [vmem:[%s6100 + $0x1c0] sm:$0xff]
        %v6158 = vld [vmem:[%s6100 + $0x1c8] sm:$0xff]
        %v6159 = vld [vmem:[%s6100 + $0x1d0] sm:$0xff]
        %v6160 = vld [vmem:[%s6100 + $0x1d8] sm:$0xff]
        %v6161 = vld [vmem:[%s6100 + $0x1e0] sm:$0xff]
        %v6162 = vld [vmem:[%s6100 + $0x1e8] sm:$0xff]
        %v6163 = vld [vmem:[%s6100 + $0x1f0] sm:$0xff]
        %v6164 = vld [vmem:[%s6100 + $0x1f8] sm:$0xff]
        %6165 = vmatprep.subr.mxu0 %v6102
        %6166 = vmatpush1.msra.mxu0 %v6101
        %6167 = vmatprep.subr.mxu0 %v6104
        %6168 = vmatpush1.msra.mxu0 %v6103
        %6169 = vmatprep.subr.mxu0 %v6106
        %6170 = vmatpush1.msra.mxu0 %v6105
        %6171 = vmatprep.subr.mxu0 %v6108
        %6172 = vmatpush1.msra.mxu0 %v6107
        %6173 = vmatprep.subr.mxu0 %v6110
        %6174 = vmatpush1.msra.mxu0 %v6109
        %6175 = vmatprep.subr.mxu0 %v6112
        %6176 = vmatpush1.msra.mxu0 %v6111
        %6177 = vmatprep.subr.mxu0 %v6114
        %6178 = vmatpush1.msra.mxu0 %v6113
        %6179 = vmatprep.subr.mxu0 %v6116
        %6180 = vmatpush1.msra.mxu0 %v6115
        %6181 = vmatprep.subr.mxu0 %v6118
        %6182 = vmatpush1.msra.mxu0 %v6117
        %6183 = vmatprep.subr.mxu0 %v6120
        %6184 = vmatpush1.msra.mxu0 %v6119
        %6185 = vmatprep.subr.mxu0 %v6122
        %6186 = vmatpush1.msra.mxu0 %v6121
        %6187 = vmatprep.subr.mxu0 %v6124
        %6188 = vmatpush1.msra.mxu0 %v6123
        %6189 = vmatprep.subr.mxu0 %v6126
        %6190 = vmatpush1.msra.mxu0 %v6125
        %6191 = vmatprep.subr.mxu0 %v6128
        %6192 = vmatpush1.msra.mxu0 %v6127
        %6193 = vmatprep.subr.mxu0 %v6130
        %6194 = vmatpush1.msra.mxu0 %v6129
        %6195 = vmatprep.subr.mxu0 %v6132
        %6196 = vmatpush1.msra.mxu0 %v6131
        %6197 = vmatprep.subr.mxu0 %v6134
        %6198 = vmatpush1.msra.mxu0 %v6133
        %6199 = vmatprep.subr.mxu0 %v6136
        %6200 = vmatpush1.msra.mxu0 %v6135
        %6201 = vmatprep.subr.mxu0 %v6138
        %6202 = vmatpush1.msra.mxu0 %v6137
        %6203 = vmatprep.subr.mxu0 %v6140
        %6204 = vmatpush1.msra.mxu0 %v6139
        %6205 = vmatprep.subr.mxu0 %v6142
        %6206 = vmatpush1.msra.mxu0 %v6141
        %6207 = vmatprep.subr.mxu0 %v6144
        %6208 = vmatpush1.msra.mxu0 %v6143
        %6209 = vmatprep.subr.mxu0 %v6146
        %6210 = vmatpush1.msra.mxu0 %v6145
        %6211 = vmatprep.subr.mxu0 %v6148
        %6212 = vmatpush1.msra.mxu0 %v6147
        %6213 = vmatprep.subr.mxu0 %v6150
        %6214 = vmatpush1.msra.mxu0 %v6149
        %6215 = vmatprep.subr.mxu0 %v6152
        %6216 = vmatpush1.msra.mxu0 %v6151
        %6217 = vmatprep.subr.mxu0 %v6154
        %6218 = vmatpush1.msra.mxu0 %v6153
        %6219 = vmatprep.subr.mxu0 %v6156
        %6220 = vmatpush1.msra.mxu0 %v6155
        %6221 = vmatprep.subr.mxu0 %v6158
        %6222 = vmatpush1.msra.mxu0 %v6157
        %6223 = vmatprep.subr.mxu0 %v6160
        %6224 = vmatpush1.msra.mxu0 %v6159
        %6225 = vmatprep.subr.mxu0 %v6162
        %6226 = vmatpush1.msra.mxu0 %v6161
        %6227 = vmatprep.subr.mxu0 %v6164
        %6228 = vmatpush1.msra.mxu0 %v6163
        %6229 = vmatprep.mubr.f32.mxu0 %v4850
        %6230 = vmatmul.mubr.f32.gmra.mrb[0].mxu0 %v4849
        %v6231 = vpop.f32.mrb[0].mxu0
        %v6232 = vadd.f32 0.0, %v6231
        %v6233 = vpop.f32.mrb[0].mxu0
        %v6234 = vadd.f32 0.0, %v6233
        %6235 = vmatprep.mubr.f32.mxu0 %v4698
        %6236 = vmatmul.mubr.f32.gmra.mrb[0].mxu0 %v4696
        %v6237 = vpop.f32.mrb[0].mxu0
        %v6238 = vadd.f32 0.0, %v6237
        %v6239 = vpop.f32.mrb[0].mxu0
        %v6240 = vadd.f32 0.0, %v6239
        %6241 = vmatprep.mubr.f32.mxu0 %v4848
        %6242 = vmatmul.mubr.f32.gmra.mrb[0].mxu0 %v4847
        %v6243 = vpop.f32.mrb[0].mxu0
        %v6244 = vadd.f32 0.0, %v6243
        %v6245 = vpop.f32.mrb[0].mxu0
        %v6246 = vadd.f32 0.0, %v6245
        %6247 = vmatprep.mubr.f32.mxu0 %v4692
        %6248 = vmatmul.mubr.f32.gmra.mrb[0].mxu0 %v4690
        %v6249 = vpop.f32.mrb[0].mxu0
        %v6250 = vadd.f32 0.0, %v6249
        %v6251 = vpop.f32.mrb[0].mxu0
        %v6252 = vadd.f32 0.0, %v6251
        %6253 = vmatprep.mubr.f32.mxu0 %v4852
        %6254 = vmatmul.mubr.f32.gmra.mrb[0].mxu0 %v4851
        %v6255 = vpop.f32.mrb[0].mxu0
        %v6256 = vadd.f32 0.0, %v6255
        %v6257 = vpop.f32.mrb[0].mxu0
        %v6258 = vadd.f32 0.0, %v6257
        %6259 = vmatprep.mubr.f32.mxu0 %v4704
        %6260 = vmatmul.mubr.f32.gmra.mrb[0].mxu0 %v4702
        %v6261 = vpop.f32.mrb[0].mxu0
        %v6262 = vadd.f32 0.0, %v6261
        %v6263 = vpop.f32.mrb[0].mxu0
        %v6264 = vadd.f32 0.0, %v6263
        %6265 = vmatprep.mubr.f32.mxu0 %v4854
        %6266 = vmatmul.mubr.f32.gmra.mrb[0].mxu0 %v4853
        %v6267 = vpop.f32.mrb[0].mxu0
        %v6268 = vadd.f32 0.0, %v6267
        %v6269 = vpop.f32.mrb[0].mxu0
        %v6270 = vadd.f32 0.0, %v6269
        %6271 = vmatprep.mubr.f32.mxu0 %v4710
        %6272 = vmatmul.mubr.f32.gmra.mrb[0].mxu0 %v4708
        %v6273 = vpop.f32.mrb[0].mxu0
        %v6274 = vadd.f32 0.0, %v6273
        %v6275 = vpop.f32.mrb[0].mxu0
        %v6276 = vadd.f32 0.0, %v6275
        %6277 = vmatprep.mubr.f32.mxu0 %v4856
        %6278 = vmatmul.mubr.f32.gmra.mrb[0].mxu0 %v4855
        %v6279 = vpop.f32.mrb[0].mxu0
        %v6280 = vadd.f32 0.0, %v6279
        %v6281 = vpop.f32.mrb[0].mxu0
        %v6282 = vadd.f32 0.0, %v6281
        %6283 = vmatprep.mubr.f32.mxu0 %v4716
        %6284 = vmatmul.mubr.f32.gmra.mrb[0].mxu0 %v4714
        %v6285 = vpop.f32.mrb[0].mxu0
        %v6286 = vadd.f32 0.0, %v6285
        %v6287 = vpop.f32.mrb[0].mxu0
        %v6288 = vadd.f32 0.0, %v6287
        %6289 = vmatprep.mubr.f32.mxu0 %v4858
        %6290 = vmatmul.mubr.f32.gmra.mrb[0].mxu0 %v4857
        %v6291 = vpop.f32.mrb[0].mxu0
        %v6292 = vadd.f32 0.0, %v6291
        %v6293 = vpop.f32.mrb[0].mxu0
        %v6294 = vadd.f32 0.0, %v6293
        %6295 = vmatprep.mubr.f32.mxu0 %v4722
        %6296 = vmatmul.mubr.f32.gmra.mrb[0].mxu0 %v4720
        %v6297 = vpop.f32.mrb[0].mxu0
        %v6298 = vadd.f32 0.0, %v6297
        %v6299 = vpop.f32.mrb[0].mxu0
        %v6300 = vadd.f32 0.0, %v6299
        %6301 = vmatprep.mubr.f32.mxu0 %v4860
        %6302 = vmatmul.mubr.f32.gmra.mrb[0].mxu0 %v4859
        %v6303 = vpop.f32.mrb[0].mxu0
        %v6304 = vadd.f32 0.0, %v6303
        %v6305 = vpop.f32.mrb[0].mxu0
        %v6306 = vadd.f32 0.0, %v6305
        %6307 = vmatprep.mubr.f32.mxu0 %v4728
        %6308 = vmatmul.mubr.f32.gmra.mrb[0].mxu0 %v4726
        %v6309 = vpop.f32.mrb[0].mxu0
        %v6310 = vadd.f32 0.0, %v6309
        %v6311 = vpop.f32.mrb[0].mxu0
        %v6312 = vadd.f32 0.0, %v6311
        %6313 = vmatprep.mubr.f32.mxu0 %v4862
        %6314 = vmatmul.mubr.f32.gmra.mrb[0].mxu0 %v4861
        %v6315 = vpop.f32.mrb[0].mxu0
        %v6316 = vadd.f32 0.0, %v6315
        %v6317 = vpop.f32.mrb[0].mxu0
        %v6318 = vadd.f32 0.0, %v6317
        %6319 = vmatprep.mubr.f32.mxu0 %v4734
        %6320 = vmatmul.mubr.f32.gmra.mrb[0].mxu0 %v4732
        %v6321 = vpop.f32.mrb[0].mxu0
        %v6322 = vadd.f32 0.0, %v6321
        %v6323 = vpop.f32.mrb[0].mxu0
        %v6324 = vadd.f32 0.0, %v6323
        %6325 = vmatprep.mubr.f32.mxu0 %v4864
        %6326 = vmatmul.mubr.f32.gmra.mrb[0].mxu0 %v4863
        %v6327 = vpop.f32.mrb[0].mxu0
        %v6328 = vadd.f32 0.0, %v6327
        %v6329 = vpop.f32.mrb[0].mxu0
        %v6330 = vadd.f32 0.0, %v6329
        %6331 = vmatprep.mubr.f32.mxu0 %v4740
        %6332 = vmatmul.mubr.f32.gmra.mrb[0].mxu0 %v4738
        %v6333 = vpop.f32.mrb[0].mxu0
        %v6334 = vadd.f32 0.0, %v6333
        %v6335 = vpop.f32.mrb[0].mxu0
        %v6336 = vadd.f32 0.0, %v6335
        %6337 = vmatprep.mubr.f32.mxu0 %v4866
        %6338 = vmatmul.mubr.f32.gmra.mrb[0].mxu0 %v4865
        %v6339 = vpop.f32.mrb[0].mxu0
        %v6340 = vadd.f32 0.0, %v6339
        %v6341 = vpop.f32.mrb[0].mxu0
        %v6342 = vadd.f32 0.0, %v6341
        %6343 = vmatprep.mubr.f32.mxu0 %v4746
        %6344 = vmatmul.mubr.f32.gmra.mrb[0].mxu0 %v4744
        %v6345 = vpop.f32.mrb[0].mxu0
        %v6346 = vadd.f32 0.0, %v6345
        %v6347 = vpop.f32.mrb[0].mxu0
        %v6348 = vadd.f32 0.0, %v6347
        %6349 = vmatprep.mubr.f32.mxu0 %v4868
        %6350 = vmatmul.mubr.f32.gmra.mrb[0].mxu0 %v4867
        %v6351 = vpop.f32.mrb[0].mxu0
        %v6352 = vadd.f32 0.0, %v6351
        %v6353 = vpop.f32.mrb[0].mxu0
        %v6354 = vadd.f32 0.0, %v6353
        %6355 = vmatprep.mubr.f32.mxu0 %v4752
        %6356 = vmatmul.mubr.f32.gmra.mrb[0].mxu0 %v4750
        %v6357 = vpop.f32.mrb[0].mxu0
        %v6358 = vadd.f32 0.0, %v6357
        %v6359 = vpop.f32.mrb[0].mxu0
        %v6360 = vadd.f32 0.0, %v6359
        %6361 = vmatprep.mubr.f32.mxu0 %v4870
        %6362 = vmatmul.mubr.f32.gmra.mrb[0].mxu0 %v4869
        %v6363 = vpop.f32.mrb[0].mxu0
        %v6364 = vadd.f32 0.0, %v6363
        %v6365 = vpop.f32.mrb[0].mxu0
        %v6366 = vadd.f32 0.0, %v6365
        %6367 = vmatprep.mubr.f32.mxu0 %v4758
        %6368 = vmatmul.mubr.f32.gmra.mrb[0].mxu0 %v4756
        %v6369 = vpop.f32.mrb[0].mxu0
        %v6370 = vadd.f32 0.0, %v6369
        %v6371 = vpop.f32.mrb[0].mxu0
        %v6372 = vadd.f32 0.0, %v6371
        %6373 = vmatprep.mubr.f32.mxu0 %v4872
        %6374 = vmatmul.mubr.f32.gmra.mrb[0].mxu0 %v4871
        %v6375 = vpop.f32.mrb[0].mxu0
        %v6376 = vadd.f32 0.0, %v6375
        %v6377 = vpop.f32.mrb[0].mxu0
        %v6378 = vadd.f32 0.0, %v6377
        %6379 = vmatprep.mubr.f32.mxu0 %v4764
        %6380 = vmatmul.mubr.f32.gmra.mrb[0].mxu0 %v4762
        %v6381 = vpop.f32.mrb[0].mxu0
        %v6382 = vadd.f32 0.0, %v6381
        %v6383 = vpop.f32.mrb[0].mxu0
        %v6384 = vadd.f32 0.0, %v6383
        %6385 = vmatprep.mubr.f32.mxu0 %v4874
        %6386 = vmatmul.mubr.f32.gmra.mrb[0].mxu0 %v4873
        %v6387 = vpop.f32.mrb[0].mxu0
        %v6388 = vadd.f32 0.0, %v6387
        %v6389 = vpop.f32.mrb[0].mxu0
        %v6390 = vadd.f32 0.0, %v6389
        %6391 = vmatprep.mubr.f32.mxu0 %v4770
        %6392 = vmatmul.mubr.f32.gmra.mrb[0].mxu0 %v4768
        %v6393 = vpop.f32.mrb[0].mxu0
        %v6394 = vadd.f32 0.0, %v6393
        %v6395 = vpop.f32.mrb[0].mxu0
        %v6396 = vadd.f32 0.0, %v6395
        %6397 = vmatprep.mubr.f32.mxu0 %v4876
        %6398 = vmatmul.mubr.f32.gmra.mrb[0].mxu0 %v4875
        %v6399 = vpop.f32.mrb[0].mxu0
        %v6400 = vadd.f32 0.0, %v6399
        %v6401 = vpop.f32.mrb[0].mxu0
        %v6402 = vadd.f32 0.0, %v6401
        %6403 = vmatprep.mubr.f32.mxu0 %v4776
        %6404 = vmatmul.mubr.f32.gmra.mrb[0].mxu0 %v4774
        %v6405 = vpop.f32.mrb[0].mxu0
        %v6406 = vadd.f32 0.0, %v6405
        %v6407 = vpop.f32.mrb[0].mxu0
        %v6408 = vadd.f32 0.0, %v6407
        %6409 = vmatprep.mubr.f32.mxu0 %v4878
        %6410 = vmatmul.mubr.f32.gmra.mrb[0].mxu0 %v4877
        %v6411 = vpop.f32.mrb[0].mxu0
        %v6412 = vadd.f32 0.0, %v6411
        %v6413 = vpop.f32.mrb[0].mxu0
        %v6414 = vadd.f32 0.0, %v6413
        %6415 = vmatprep.mubr.f32.mxu0 %v4782
        %6416 = vmatmul.mubr.f32.gmra.mrb[0].mxu0 %v4780
        %v6417 = vpop.f32.mrb[0].mxu0
        %v6418 = vadd.f32 0.0, %v6417
        %v6419 = vpop.f32.mrb[0].mxu0
        %v6420 = vadd.f32 0.0, %v6419
        %6421 = vdwg.mxu0
        %v6422 = vadd.f32 %v6036, %v6232
        %v6423 = vadd.f32 %v6037, %v6234
        %v6424 = vadd.f32 %v6038, %v6238
        %v6425 = vadd.f32 %v6039, %v6240
        %v6426 = vadd.f32 %v6040, %v6244
        %v6427 = vadd.f32 %v6041, %v6246
        %v6428 = vadd.f32 %v6042, %v6250
        %v6429 = vadd.f32 %v6043, %v6252
        %v6430 = vadd.f32 %v6044, %v6256
        %v6431 = vadd.f32 %v6045, %v6258
        %v6432 = vadd.f32 %v6046, %v6262
        %v6433 = vadd.f32 %v6047, %v6264
        %v6434 = vadd.f32 %v6048, %v6268
        %v6435 = vadd.f32 %v6049, %v6270
        %v6436 = vadd.f32 %v6050, %v6274
        %v6437 = vadd.f32 %v6051, %v6276
        %v6438 = vadd.f32 %v6052, %v6280
        %v6439 = vadd.f32 %v6053, %v6282
        %v6440 = vadd.f32 %v6054, %v6286
        %v6441 = vadd.f32 %v6055, %v6288
        %v6442 = vadd.f32 %v6056, %v6292
        %v6443 = vadd.f32 %v6057, %v6294
        %v6444 = vadd.f32 %v6058, %v6298
        %v6445 = vadd.f32 %v6059, %v6300
        %v6446 = vadd.f32 %v6060, %v6304
        %v6447 = vadd.f32 %v6061, %v6306
        %v6448 = vadd.f32 %v6062, %v6310
        %v6449 = vadd.f32 %v6063, %v6312
        %v6450 = vadd.f32 %v6064, %v6316
        %v6451 = vadd.f32 %v6065, %v6318
        %v6452 = vadd.f32 %v6066, %v6322
        %v6453 = vadd.f32 %v6067, %v6324
        %v6454 = vadd.f32 %v6068, %v6328
        %v6455 = vadd.f32 %v6069, %v6330
        %v6456 = vadd.f32 %v6070, %v6334
        %v6457 = vadd.f32 %v6071, %v6336
        %v6458 = vadd.f32 %v6072, %v6340
        %v6459 = vadd.f32 %v6073, %v6342
        %v6460 = vadd.f32 %v6074, %v6346
        %v6461 = vadd.f32 %v6075, %v6348
        %v6462 = vadd.f32 %v6076, %v6352
        %v6463 = vadd.f32 %v6077, %v6354
        %v6464 = vadd.f32 %v6078, %v6358
        %v6465 = vadd.f32 %v6079, %v6360
        %v6466 = vadd.f32 %v6080, %v6364
        %v6467 = vadd.f32 %v6081, %v6366
        %v6468 = vadd.f32 %v6082, %v6370
        %v6469 = vadd.f32 %v6083, %v6372
        %v6470 = vadd.f32 %v6084, %v6376
        %v6471 = vadd.f32 %v6085, %v6378
        %v6472 = vadd.f32 %v6086, %v6382
        %v6473 = vadd.f32 %v6087, %v6384
        %v6474 = vadd.f32 %v6088, %v6388
        %v6475 = vadd.f32 %v6089, %v6390
        %v6476 = vadd.f32 %v6090, %v6394
        %v6477 = vadd.f32 %v6091, %v6396
        %v6478 = vadd.f32 %v6092, %v6400
        %v6479 = vadd.f32 %v6093, %v6402
        %v6480 = vadd.f32 %v6094, %v6406
        %v6481 = vadd.f32 %v6095, %v6408
        %v6482 = vadd.f32 %v6096, %v6412
        %v6483 = vadd.f32 %v6097, %v6414
        %v6484 = vadd.f32 %v6098, %v6418
        %v6485 = vadd.f32 %v6099, %v6420
        %s6486 = scalar_lea.vmem [#allocation7], 2048
        %v6487 = vld [vmem:[%s6486] sm:$0xff]
        %v6488 = vld [vmem:[%s6486 + $0x8] sm:$0xff]
        %v6489 = vld [vmem:[%s6486 + $0x10] sm:$0xff]
        %v6490 = vld [vmem:[%s6486 + $0x18] sm:$0xff]
        %v6491 = vld [vmem:[%s6486 + $0x20] sm:$0xff]
        %v6492 = vld [vmem:[%s6486 + $0x28] sm:$0xff]
        %v6493 = vld [vmem:[%s6486 + $0x30] sm:$0xff]
        %v6494 = vld [vmem:[%s6486 + $0x38] sm:$0xff]
        %v6495 = vld [vmem:[%s6486 + $0x40] sm:$0xff]
        %v6496 = vld [vmem:[%s6486 + $0x48] sm:$0xff]
        %v6497 = vld [vmem:[%s6486 + $0x50] sm:$0xff]
        %v6498 = vld [vmem:[%s6486 + $0x58] sm:$0xff]
        %v6499 = vld [vmem:[%s6486 + $0x60] sm:$0xff]
        %v6500 = vld [vmem:[%s6486 + $0x68] sm:$0xff]
        %v6501 = vld [vmem:[%s6486 + $0x70] sm:$0xff]
        %v6502 = vld [vmem:[%s6486 + $0x78] sm:$0xff]
        %v6503 = vld [vmem:[%s6486 + $0x80] sm:$0xff]
        %v6504 = vld [vmem:[%s6486 + $0x88] sm:$0xff]
        %v6505 = vld [vmem:[%s6486 + $0x90] sm:$0xff]
        %v6506 = vld [vmem:[%s6486 + $0x98] sm:$0xff]
        %v6507 = vld [vmem:[%s6486 + $0xa0] sm:$0xff]
        %v6508 = vld [vmem:[%s6486 + $0xa8] sm:$0xff]
        %v6509 = vld [vmem:[%s6486 + $0xb0] sm:$0xff]
        %v6510 = vld [vmem:[%s6486 + $0xb8] sm:$0xff]
        %v6511 = vld [vmem:[%s6486 + $0xc0] sm:$0xff]
        %v6512 = vld [vmem:[%s6486 + $0xc8] sm:$0xff]
        %v6513 = vld [vmem:[%s6486 + $0xd0] sm:$0xff]
        %v6514 = vld [vmem:[%s6486 + $0xd8] sm:$0xff]
        %v6515 = vld [vmem:[%s6486 + $0xe0] sm:$0xff]
        %v6516 = vld [vmem:[%s6486 + $0xe8] sm:$0xff]
        %v6517 = vld [vmem:[%s6486 + $0xf0] sm:$0xff]
        %v6518 = vld [vmem:[%s6486 + $0xf8] sm:$0xff]
        %v6519 = vld [vmem:[%s6486 + $0x100] sm:$0xff]
        %v6520 = vld [vmem:[%s6486 + $0x108] sm:$0xff]
        %v6521 = vld [vmem:[%s6486 + $0x110] sm:$0xff]
        %v6522 = vld [vmem:[%s6486 + $0x118] sm:$0xff]
        %v6523 = vld [vmem:[%s6486 + $0x120] sm:$0xff]
        %v6524 = vld [vmem:[%s6486 + $0x128] sm:$0xff]
        %v6525 = vld [vmem:[%s6486 + $0x130] sm:$0xff]
        %v6526 = vld [vmem:[%s6486 + $0x138] sm:$0xff]
        %v6527 = vld [vmem:[%s6486 + $0x140] sm:$0xff]
        %v6528 = vld [vmem:[%s6486 + $0x148] sm:$0xff]
        %v6529 = vld [vmem:[%s6486 + $0x150] sm:$0xff]
        %v6530 = vld [vmem:[%s6486 + $0x158] sm:$0xff]
        %v6531 = vld [vmem:[%s6486 + $0x160] sm:$0xff]
        %v6532 = vld [vmem:[%s6486 + $0x168] sm:$0xff]
        %v6533 = vld [vmem:[%s6486 + $0x170] sm:$0xff]
        %v6534 = vld [vmem:[%s6486 + $0x178] sm:$0xff]
        %v6535 = vld [vmem:[%s6486 + $0x180] sm:$0xff]
        %v6536 = vld [vmem:[%s6486 + $0x188] sm:$0xff]
        %v6537 = vld [vmem:[%s6486 + $0x190] sm:$0xff]
        %v6538 = vld [vmem:[%s6486 + $0x198] sm:$0xff]
        %v6539 = vld [vmem:[%s6486 + $0x1a0] sm:$0xff]
        %v6540 = vld [vmem:[%s6486 + $0x1a8] sm:$0xff]
        %v6541 = vld [vmem:[%s6486 + $0x1b0] sm:$0xff]
        %v6542 = vld [vmem:[%s6486 + $0x1b8] sm:$0xff]
        %v6543 = vld [vmem:[%s6486 + $0x1c0] sm:$0xff]
        %v6544 = vld [vmem:[%s6486 + $0x1c8] sm:$0xff]
        %v6545 = vld [vmem:[%s6486 + $0x1d0] sm:$0xff]
        %v6546 = vld [vmem:[%s6486 + $0x1d8] sm:$0xff]
        %v6547 = vld [vmem:[%s6486 + $0x1e0] sm:$0xff]
        %v6548 = vld [vmem:[%s6486 + $0x1e8] sm:$0xff]
        %v6549 = vld [vmem:[%s6486 + $0x1f0] sm:$0xff]
        %v6550 = vld [vmem:[%s6486 + $0x1f8] sm:$0xff]
        %6551 = vmatprep.subr.mxu0 %v6488
        %6552 = vmatpush1.msra.mxu0 %v6487
        %6553 = vmatprep.subr.mxu0 %v6490
        %6554 = vmatpush1.msra.mxu0 %v6489
        %6555 = vmatprep.subr.mxu0 %v6492
        %6556 = vmatpush1.msra.mxu0 %v6491
        %6557 = vmatprep.subr.mxu0 %v6494
        %6558 = vmatpush1.msra.mxu0 %v6493
        %6559 = vmatprep.subr.mxu0 %v6496
        %6560 = vmatpush1.msra.mxu0 %v6495
        %6561 = vmatprep.subr.mxu0 %v6498
        %6562 = vmatpush1.msra.mxu0 %v6497
        %6563 = vmatprep.subr.mxu0 %v6500
        %6564 = vmatpush1.msra.mxu0 %v6499
        %6565 = vmatprep.subr.mxu0 %v6502
        %6566 = vmatpush1.msra.mxu0 %v6501
        %6567 = vmatprep.subr.mxu0 %v6504
        %6568 = vmatpush1.msra.mxu0 %v6503
        %6569 = vmatprep.subr.mxu0 %v6506
        %6570 = vmatpush1.msra.mxu0 %v6505
        %6571 = vmatprep.subr.mxu0 %v6508
        %6572 = vmatpush1.msra.mxu0 %v6507
        %6573 = vmatprep.subr.mxu0 %v6510
        %6574 = vmatpush1.msra.mxu0 %v6509
        %6575 = vmatprep.subr.mxu0 %v6512
        %6576 = vmatpush1.msra.mxu0 %v6511
        %6577 = vmatprep.subr.mxu0 %v6514
        %6578 = vmatpush1.msra.mxu0 %v6513
        %6579 = vmatprep.subr.mxu0 %v6516
        %6580 = vmatpush1.msra.mxu0 %v6515
        %6581 = vmatprep.subr.mxu0 %v6518
        %6582 = vmatpush1.msra.mxu0 %v6517
        %6583 = vmatprep.subr.mxu0 %v6520
        %6584 = vmatpush1.msra.mxu0 %v6519
        %6585 = vmatprep.subr.mxu0 %v6522
        %6586 = vmatpush1.msra.mxu0 %v6521
        %6587 = vmatprep.subr.mxu0 %v6524
        %6588 = vmatpush1.msra.mxu0 %v6523
        %6589 = vmatprep.subr.mxu0 %v6526
        %6590 = vmatpush1.msra.mxu0 %v6525
        %6591 = vmatprep.subr.mxu0 %v6528
        %6592 = vmatpush1.msra.mxu0 %v6527
        %6593 = vmatprep.subr.mxu0 %v6530
        %6594 = vmatpush1.msra.mxu0 %v6529
        %6595 = vmatprep.subr.mxu0 %v6532
        %6596 = vmatpush1.msra.mxu0 %v6531
        %6597 = vmatprep.subr.mxu0 %v6534
        %6598 = vmatpush1.msra.mxu0 %v6533
        %6599 = vmatprep.subr.mxu0 %v6536
        %6600 = vmatpush1.msra.mxu0 %v6535
        %6601 = vmatprep.subr.mxu0 %v6538
        %6602 = vmatpush1.msra.mxu0 %v6537
        %6603 = vmatprep.subr.mxu0 %v6540
        %6604 = vmatpush1.msra.mxu0 %v6539
        %6605 = vmatprep.subr.mxu0 %v6542
        %6606 = vmatpush1.msra.mxu0 %v6541
        %6607 = vmatprep.subr.mxu0 %v6544
        %6608 = vmatpush1.msra.mxu0 %v6543
        %6609 = vmatprep.subr.mxu0 %v6546
        %6610 = vmatpush1.msra.mxu0 %v6545
        %6611 = vmatprep.subr.mxu0 %v6548
        %6612 = vmatpush1.msra.mxu0 %v6547
        %6613 = vmatprep.subr.mxu0 %v6550
        %6614 = vmatpush1.msra.mxu0 %v6549
        %6615 = vmatprep.mubr.f32.mxu0 %v4496
        %6616 = vmatmul.mubr.f32.gmra.mrb[0].mxu0 %v4495
        %v6617 = vpop.f32.mrb[0].mxu0
        %v6618 = vadd.f32 0.0, %v6617
        %v6619 = vpop.f32.mrb[0].mxu0
        %v6620 = vadd.f32 0.0, %v6619
        %6621 = vmatprep.mubr.f32.mxu0 %v4498
        %6622 = vmatmul.mubr.f32.gmra.mrb[0].mxu0 %v4497
        %v6623 = vpop.f32.mrb[0].mxu0
        %v6624 = vadd.f32 0.0, %v6623
        %v6625 = vpop.f32.mrb[0].mxu0
        %v6626 = vadd.f32 0.0, %v6625
        %6627 = vmatprep.mubr.f32.mxu0 %v4500
        %6628 = vmatmul.mubr.f32.gmra.mrb[0].mxu0 %v4499
        %v6629 = vpop.f32.mrb[0].mxu0
        %v6630 = vadd.f32 0.0, %v6629
        %v6631 = vpop.f32.mrb[0].mxu0
        %v6632 = vadd.f32 0.0, %v6631
        %6633 = vmatprep.mubr.f32.mxu0 %v4502
        %6634 = vmatmul.mubr.f32.gmra.mrb[0].mxu0 %v4501
        %v6635 = vpop.f32.mrb[0].mxu0
        %v6636 = vadd.f32 0.0, %v6635
        %v6637 = vpop.f32.mrb[0].mxu0
        %v6638 = vadd.f32 0.0, %v6637
        %6639 = vmatprep.mubr.f32.mxu0 %v4504
        %6640 = vmatmul.mubr.f32.gmra.mrb[0].mxu0 %v4503
        %v6641 = vpop.f32.mrb[0].mxu0
        %v6642 = vadd.f32 0.0, %v6641
        %v6643 = vpop.f32.mrb[0].mxu0
        %v6644 = vadd.f32 0.0, %v6643
        %6645 = vmatprep.mubr.f32.mxu0 %v4506
        %6646 = vmatmul.mubr.f32.gmra.mrb[0].mxu0 %v4505
        %v6647 = vpop.f32.mrb[0].mxu0
        %v6648 = vadd.f32 0.0, %v6647
        %v6649 = vpop.f32.mrb[0].mxu0
        %v6650 = vadd.f32 0.0, %v6649
        %6651 = vmatprep.mubr.f32.mxu0 %v4508
        %6652 = vmatmul.mubr.f32.gmra.mrb[0].mxu0 %v4507
        %v6653 = vpop.f32.mrb[0].mxu0
        %v6654 = vadd.f32 0.0, %v6653
        %v6655 = vpop.f32.mrb[0].mxu0
        %v6656 = vadd.f32 0.0, %v6655
        %6657 = vmatprep.mubr.f32.mxu0 %v4510
        %6658 = vmatmul.mubr.f32.gmra.mrb[0].mxu0 %v4509
        %v6659 = vpop.f32.mrb[0].mxu0
        %v6660 = vadd.f32 0.0, %v6659
        %v6661 = vpop.f32.mrb[0].mxu0
        %v6662 = vadd.f32 0.0, %v6661
        %6663 = vmatprep.mubr.f32.mxu0 %v4512
        %6664 = vmatmul.mubr.f32.gmra.mrb[0].mxu0 %v4511
        %v6665 = vpop.f32.mrb[0].mxu0
        %v6666 = vadd.f32 0.0, %v6665
        %v6667 = vpop.f32.mrb[0].mxu0
        %v6668 = vadd.f32 0.0, %v6667
        %6669 = vmatprep.mubr.f32.mxu0 %v4514
        %6670 = vmatmul.mubr.f32.gmra.mrb[0].mxu0 %v4513
        %v6671 = vpop.f32.mrb[0].mxu0
        %v6672 = vadd.f32 0.0, %v6671
        %v6673 = vpop.f32.mrb[0].mxu0
        %v6674 = vadd.f32 0.0, %v6673
        %6675 = vmatprep.mubr.f32.mxu0 %v4516
        %6676 = vmatmul.mubr.f32.gmra.mrb[0].mxu0 %v4515
        %v6677 = vpop.f32.mrb[0].mxu0
        %v6678 = vadd.f32 0.0, %v6677
        %v6679 = vpop.f32.mrb[0].mxu0
        %v6680 = vadd.f32 0.0, %v6679
        %6681 = vmatprep.mubr.f32.mxu0 %v4518
        %6682 = vmatmul.mubr.f32.gmra.mrb[0].mxu0 %v4517
        %v6683 = vpop.f32.mrb[0].mxu0
        %v6684 = vadd.f32 0.0, %v6683
        %v6685 = vpop.f32.mrb[0].mxu0
        %v6686 = vadd.f32 0.0, %v6685
        %6687 = vmatprep.mubr.f32.mxu0 %v4520
        %6688 = vmatmul.mubr.f32.gmra.mrb[0].mxu0 %v4519
        %v6689 = vpop.f32.mrb[0].mxu0
        %v6690 = vadd.f32 0.0, %v6689
        %v6691 = vpop.f32.mrb[0].mxu0
        %v6692 = vadd.f32 0.0, %v6691
        %6693 = vmatprep.mubr.f32.mxu0 %v4522
        %6694 = vmatmul.mubr.f32.gmra.mrb[0].mxu0 %v4521
        %v6695 = vpop.f32.mrb[0].mxu0
        %v6696 = vadd.f32 0.0, %v6695
        %v6697 = vpop.f32.mrb[0].mxu0
        %v6698 = vadd.f32 0.0, %v6697
        %6699 = vmatprep.mubr.f32.mxu0 %v4524
        %6700 = vmatmul.mubr.f32.gmra.mrb[0].mxu0 %v4523
        %v6701 = vpop.f32.mrb[0].mxu0
        %v6702 = vadd.f32 0.0, %v6701
        %v6703 = vpop.f32.mrb[0].mxu0
        %v6704 = vadd.f32 0.0, %v6703
        %6705 = vmatprep.mubr.f32.mxu0 %v4526
        %6706 = vmatmul.mubr.f32.gmra.mrb[0].mxu0 %v4525
        %v6707 = vpop.f32.mrb[0].mxu0
        %v6708 = vadd.f32 0.0, %v6707
        %v6709 = vpop.f32.mrb[0].mxu0
        %v6710 = vadd.f32 0.0, %v6709
        %6711 = vmatprep.mubr.f32.mxu0 %v4528
        %6712 = vmatmul.mubr.f32.gmra.mrb[0].mxu0 %v4527
        %v6713 = vpop.f32.mrb[0].mxu0
        %v6714 = vadd.f32 0.0, %v6713
        %v6715 = vpop.f32.mrb[0].mxu0
        %v6716 = vadd.f32 0.0, %v6715
        %6717 = vmatprep.mubr.f32.mxu0 %v4530
        %6718 = vmatmul.mubr.f32.gmra.mrb[0].mxu0 %v4529
        %v6719 = vpop.f32.mrb[0].mxu0
        %v6720 = vadd.f32 0.0, %v6719
        %v6721 = vpop.f32.mrb[0].mxu0
        %v6722 = vadd.f32 0.0, %v6721
        %6723 = vmatprep.mubr.f32.mxu0 %v4532
        %6724 = vmatmul.mubr.f32.gmra.mrb[0].mxu0 %v4531
        %v6725 = vpop.f32.mrb[0].mxu0
        %v6726 = vadd.f32 0.0, %v6725
        %v6727 = vpop.f32.mrb[0].mxu0
        %v6728 = vadd.f32 0.0, %v6727
        %6729 = vmatprep.mubr.f32.mxu0 %v4534
        %6730 = vmatmul.mubr.f32.gmra.mrb[0].mxu0 %v4533
        %v6731 = vpop.f32.mrb[0].mxu0
        %v6732 = vadd.f32 0.0, %v6731
        %v6733 = vpop.f32.mrb[0].mxu0
        %v6734 = vadd.f32 0.0, %v6733
        %6735 = vmatprep.mubr.f32.mxu0 %v4536
        %6736 = vmatmul.mubr.f32.gmra.mrb[0].mxu0 %v4535
        %v6737 = vpop.f32.mrb[0].mxu0
        %v6738 = vadd.f32 0.0, %v6737
        %v6739 = vpop.f32.mrb[0].mxu0
        %v6740 = vadd.f32 0.0, %v6739
        %6741 = vmatprep.mubr.f32.mxu0 %v4538
        %6742 = vmatmul.mubr.f32.gmra.mrb[0].mxu0 %v4537
        %v6743 = vpop.f32.mrb[0].mxu0
        %v6744 = vadd.f32 0.0, %v6743
        %v6745 = vpop.f32.mrb[0].mxu0
        %v6746 = vadd.f32 0.0, %v6745
        %6747 = vmatprep.mubr.f32.mxu0 %v4540
        %6748 = vmatmul.mubr.f32.gmra.mrb[0].mxu0 %v4539
        %v6749 = vpop.f32.mrb[0].mxu0
        %v6750 = vadd.f32 0.0, %v6749
        %v6751 = vpop.f32.mrb[0].mxu0
        %v6752 = vadd.f32 0.0, %v6751
        %6753 = vmatprep.mubr.f32.mxu0 %v4542
        %6754 = vmatmul.mubr.f32.gmra.mrb[0].mxu0 %v4541
        %v6755 = vpop.f32.mrb[0].mxu0
        %v6756 = vadd.f32 0.0, %v6755
        %v6757 = vpop.f32.mrb[0].mxu0
        %v6758 = vadd.f32 0.0, %v6757
        %6759 = vmatprep.mubr.f32.mxu0 %v4544
        %6760 = vmatmul.mubr.f32.gmra.mrb[0].mxu0 %v4543
        %v6761 = vpop.f32.mrb[0].mxu0
        %v6762 = vadd.f32 0.0, %v6761
        %v6763 = vpop.f32.mrb[0].mxu0
        %v6764 = vadd.f32 0.0, %v6763
        %6765 = vmatprep.mubr.f32.mxu0 %v4546
        %6766 = vmatmul.mubr.f32.gmra.mrb[0].mxu0 %v4545
        %v6767 = vpop.f32.mrb[0].mxu0
        %v6768 = vadd.f32 0.0, %v6767
        %v6769 = vpop.f32.mrb[0].mxu0
        %v6770 = vadd.f32 0.0, %v6769
        %6771 = vmatprep.mubr.f32.mxu0 %v4548
        %6772 = vmatmul.mubr.f32.gmra.mrb[0].mxu0 %v4547
        %v6773 = vpop.f32.mrb[0].mxu0
        %v6774 = vadd.f32 0.0, %v6773
        %v6775 = vpop.f32.mrb[0].mxu0
        %v6776 = vadd.f32 0.0, %v6775
        %6777 = vmatprep.mubr.f32.mxu0 %v4550
        %6778 = vmatmul.mubr.f32.gmra.mrb[0].mxu0 %v4549
        %v6779 = vpop.f32.mrb[0].mxu0
        %v6780 = vadd.f32 0.0, %v6779
        %v6781 = vpop.f32.mrb[0].mxu0
        %v6782 = vadd.f32 0.0, %v6781
        %6783 = vmatprep.mubr.f32.mxu0 %v4552
        %6784 = vmatmul.mubr.f32.gmra.mrb[0].mxu0 %v4551
        %v6785 = vpop.f32.mrb[0].mxu0
        %v6786 = vadd.f32 0.0, %v6785
        %v6787 = vpop.f32.mrb[0].mxu0
        %v6788 = vadd.f32 0.0, %v6787
        %6789 = vmatprep.mubr.f32.mxu0 %v4554
        %6790 = vmatmul.mubr.f32.gmra.mrb[0].mxu0 %v4553
        %v6791 = vpop.f32.mrb[0].mxu0
        %v6792 = vadd.f32 0.0, %v6791
        %v6793 = vpop.f32.mrb[0].mxu0
        %v6794 = vadd.f32 0.0, %v6793
        %6795 = vmatprep.mubr.f32.mxu0 %v4556
        %6796 = vmatmul.mubr.f32.gmra.mrb[0].mxu0 %v4555
        %v6797 = vpop.f32.mrb[0].mxu0
        %v6798 = vadd.f32 0.0, %v6797
        %v6799 = vpop.f32.mrb[0].mxu0
        %v6800 = vadd.f32 0.0, %v6799
        %6801 = vmatprep.mubr.f32.mxu0 %v4558
        %6802 = vmatmul.mubr.f32.gmra.mrb[0].mxu0 %v4557
        %v6803 = vpop.f32.mrb[0].mxu0
        %v6804 = vadd.f32 0.0, %v6803
        %v6805 = vpop.f32.mrb[0].mxu0
        %v6806 = vadd.f32 0.0, %v6805
        %6807 = vdwg.mxu0
        %v6808 = vadd.f32 %v6422, %v6618
        %v6809 = vadd.f32 %v6423, %v6620
        %v6810 = vadd.f32 %v6424, %v6624
        %v6811 = vadd.f32 %v6425, %v6626
        %v6812 = vadd.f32 %v6426, %v6630
        %v6813 = vadd.f32 %v6427, %v6632
        %v6814 = vadd.f32 %v6428, %v6636
        %v6815 = vadd.f32 %v6429, %v6638
        %v6816 = vadd.f32 %v6430, %v6642
        %v6817 = vadd.f32 %v6431, %v6644
        %v6818 = vadd.f32 %v6432, %v6648
        %v6819 = vadd.f32 %v6433, %v6650
        %v6820 = vadd.f32 %v6434, %v6654
        %v6821 = vadd.f32 %v6435, %v6656
        %v6822 = vadd.f32 %v6436, %v6660
        %v6823 = vadd.f32 %v6437, %v6662
        %v6824 = vadd.f32 %v6438, %v6666
        %v6825 = vadd.f32 %v6439, %v6668
        %v6826 = vadd.f32 %v6440, %v6672
        %v6827 = vadd.f32 %v6441, %v6674
        %v6828 = vadd.f32 %v6442, %v6678
        %v6829 = vadd.f32 %v6443, %v6680
        %v6830 = vadd.f32 %v6444, %v6684
        %v6831 = vadd.f32 %v6445, %v6686
        %v6832 = vadd.f32 %v6446, %v6690
        %v6833 = vadd.f32 %v6447, %v6692
        %v6834 = vadd.f32 %v6448, %v6696
        %v6835 = vadd.f32 %v6449, %v6698
        %v6836 = vadd.f32 %v6450, %v6702
        %v6837 = vadd.f32 %v6451, %v6704
        %v6838 = vadd.f32 %v6452, %v6708
        %v6839 = vadd.f32 %v6453, %v6710
        %v6840 = vadd.f32 %v6454, %v6714
        %v6841 = vadd.f32 %v6455, %v6716
        %v6842 = vadd.f32 %v6456, %v6720
        %v6843 = vadd.f32 %v6457, %v6722
        %v6844 = vadd.f32 %v6458, %v6726
        %v6845 = vadd.f32 %v6459, %v6728
        %v6846 = vadd.f32 %v6460, %v6732
        %v6847 = vadd.f32 %v6461, %v6734
        %v6848 = vadd.f32 %v6462, %v6738
        %v6849 = vadd.f32 %v6463, %v6740
        %v6850 = vadd.f32 %v6464, %v6744
        %v6851 = vadd.f32 %v6465, %v6746
        %v6852 = vadd.f32 %v6466, %v6750
        %v6853 = vadd.f32 %v6467, %v6752
        %v6854 = vadd.f32 %v6468, %v6756
        %v6855 = vadd.f32 %v6469, %v6758
        %v6856 = vadd.f32 %v6470, %v6762
        %v6857 = vadd.f32 %v6471, %v6764
        %v6858 = vadd.f32 %v6472, %v6768
        %v6859 = vadd.f32 %v6473, %v6770
        %v6860 = vadd.f32 %v6474, %v6774
        %v6861 = vadd.f32 %v6475, %v6776
        %v6862 = vadd.f32 %v6476, %v6780
        %v6863 = vadd.f32 %v6477, %v6782
        %v6864 = vadd.f32 %v6478, %v6786
        %v6865 = vadd.f32 %v6479, %v6788
        %v6866 = vadd.f32 %v6480, %v6792
        %v6867 = vadd.f32 %v6481, %v6794
        %v6868 = vadd.f32 %v6482, %v6798
        %v6869 = vadd.f32 %v6483, %v6800
        %v6870 = vadd.f32 %v6484, %v6804
        %v6871 = vadd.f32 %v6485, %v6806
        %s6872 = scalar_lea.vmem [#allocation7], 2560
        %v6873 = vld [vmem:[%s6872] sm:$0xff]
        %v6874 = vld [vmem:[%s6872 + $0x8] sm:$0xff]
        %v6875 = vld [vmem:[%s6872 + $0x10] sm:$0xff]
        %v6876 = vld [vmem:[%s6872 + $0x18] sm:$0xff]
        %v6877 = vld [vmem:[%s6872 + $0x20] sm:$0xff]
        %v6878 = vld [vmem:[%s6872 + $0x28] sm:$0xff]
        %v6879 = vld [vmem:[%s6872 + $0x30] sm:$0xff]
        %v6880 = vld [vmem:[%s6872 + $0x38] sm:$0xff]
        %v6881 = vld [vmem:[%s6872 + $0x40] sm:$0xff]
        %v6882 = vld [vmem:[%s6872 + $0x48] sm:$0xff]
        %v6883 = vld [vmem:[%s6872 + $0x50] sm:$0xff]
        %v6884 = vld [vmem:[%s6872 + $0x58] sm:$0xff]
        %v6885 = vld [vmem:[%s6872 + $0x60] sm:$0xff]
        %v6886 = vld [vmem:[%s6872 + $0x68] sm:$0xff]
        %v6887 = vld [vmem:[%s6872 + $0x70] sm:$0xff]
        %v6888 = vld [vmem:[%s6872 + $0x78] sm:$0xff]
        %v6889 = vld [vmem:[%s6872 + $0x80] sm:$0xff]
        %v6890 = vld [vmem:[%s6872 + $0x88] sm:$0xff]
        %v6891 = vld [vmem:[%s6872 + $0x90] sm:$0xff]
        %v6892 = vld [vmem:[%s6872 + $0x98] sm:$0xff]
        %v6893 = vld [vmem:[%s6872 + $0xa0] sm:$0xff]
        %v6894 = vld [vmem:[%s6872 + $0xa8] sm:$0xff]
        %v6895 = vld [vmem:[%s6872 + $0xb0] sm:$0xff]
        %v6896 = vld [vmem:[%s6872 + $0xb8] sm:$0xff]
        %v6897 = vld [vmem:[%s6872 + $0xc0] sm:$0xff]
        %v6898 = vld [vmem:[%s6872 + $0xc8] sm:$0xff]
        %v6899 = vld [vmem:[%s6872 + $0xd0] sm:$0xff]
        %v6900 = vld [vmem:[%s6872 + $0xd8] sm:$0xff]
        %v6901 = vld [vmem:[%s6872 + $0xe0] sm:$0xff]
        %v6902 = vld [vmem:[%s6872 + $0xe8] sm:$0xff]
        %v6903 = vld [vmem:[%s6872 + $0xf0] sm:$0xff]
        %v6904 = vld [vmem:[%s6872 + $0xf8] sm:$0xff]
        %v6905 = vld [vmem:[%s6872 + $0x100] sm:$0xff]
        %v6906 = vld [vmem:[%s6872 + $0x108] sm:$0xff]
        %v6907 = vld [vmem:[%s6872 + $0x110] sm:$0xff]
        %v6908 = vld [vmem:[%s6872 + $0x118] sm:$0xff]
        %v6909 = vld [vmem:[%s6872 + $0x120] sm:$0xff]
        %v6910 = vld [vmem:[%s6872 + $0x128] sm:$0xff]
        %v6911 = vld [vmem:[%s6872 + $0x130] sm:$0xff]
        %v6912 = vld [vmem:[%s6872 + $0x138] sm:$0xff]
        %v6913 = vld [vmem:[%s6872 + $0x140] sm:$0xff]
        %v6914 = vld [vmem:[%s6872 + $0x148] sm:$0xff]
        %v6915 = vld [vmem:[%s6872 + $0x150] sm:$0xff]
        %v6916 = vld [vmem:[%s6872 + $0x158] sm:$0xff]
        %v6917 = vld [vmem:[%s6872 + $0x160] sm:$0xff]
        %v6918 = vld [vmem:[%s6872 + $0x168] sm:$0xff]
        %v6919 = vld [vmem:[%s6872 + $0x170] sm:$0xff]
        %v6920 = vld [vmem:[%s6872 + $0x178] sm:$0xff]
        %v6921 = vld [vmem:[%s6872 + $0x180] sm:$0xff]
        %v6922 = vld [vmem:[%s6872 + $0x188] sm:$0xff]
        %v6923 = vld [vmem:[%s6872 + $0x190] sm:$0xff]
        %v6924 = vld [vmem:[%s6872 + $0x198] sm:$0xff]
        %v6925 = vld [vmem:[%s6872 + $0x1a0] sm:$0xff]
        %v6926 = vld [vmem:[%s6872 + $0x1a8] sm:$0xff]
        %v6927 = vld [vmem:[%s6872 + $0x1b0] sm:$0xff]
        %v6928 = vld [vmem:[%s6872 + $0x1b8] sm:$0xff]
        %v6929 = vld [vmem:[%s6872 + $0x1c0] sm:$0xff]
        %v6930 = vld [vmem:[%s6872 + $0x1c8] sm:$0xff]
        %v6931 = vld [vmem:[%s6872 + $0x1d0] sm:$0xff]
        %v6932 = vld [vmem:[%s6872 + $0x1d8] sm:$0xff]
        %v6933 = vld [vmem:[%s6872 + $0x1e0] sm:$0xff]
        %v6934 = vld [vmem:[%s6872 + $0x1e8] sm:$0xff]
        %v6935 = vld [vmem:[%s6872 + $0x1f0] sm:$0xff]
        %v6936 = vld [vmem:[%s6872 + $0x1f8] sm:$0xff]
        %6937 = vmatprep.subr.mxu0 %v6874
        %6938 = vmatpush1.msra.mxu0 %v6873
        %6939 = vmatprep.subr.mxu0 %v6876
        %6940 = vmatpush1.msra.mxu0 %v6875
        %6941 = vmatprep.subr.mxu0 %v6878
        %6942 = vmatpush1.msra.mxu0 %v6877
        %6943 = vmatprep.subr.mxu0 %v6880
        %6944 = vmatpush1.msra.mxu0 %v6879
        %6945 = vmatprep.subr.mxu0 %v6882
        %6946 = vmatpush1.msra.mxu0 %v6881
        %6947 = vmatprep.subr.mxu0 %v6884
        %6948 = vmatpush1.msra.mxu0 %v6883
        %6949 = vmatprep.subr.mxu0 %v6886
        %6950 = vmatpush1.msra.mxu0 %v6885
        %6951 = vmatprep.subr.mxu0 %v6888
        %6952 = vmatpush1.msra.mxu0 %v6887
        %6953 = vmatprep.subr.mxu0 %v6890
        %6954 = vmatpush1.msra.mxu0 %v6889
        %6955 = vmatprep.subr.mxu0 %v6892
        %6956 = vmatpush1.msra.mxu0 %v6891
        %6957 = vmatprep.subr.mxu0 %v6894
        %6958 = vmatpush1.msra.mxu0 %v6893
        %6959 = vmatprep.subr.mxu0 %v6896
        %6960 = vmatpush1.msra.mxu0 %v6895
        %6961 = vmatprep.subr.mxu0 %v6898
        %6962 = vmatpush1.msra.mxu0 %v6897
        %6963 = vmatprep.subr.mxu0 %v6900
        %6964 = vmatpush1.msra.mxu0 %v6899
        %6965 = vmatprep.subr.mxu0 %v6902
        %6966 = vmatpush1.msra.mxu0 %v6901
        %6967 = vmatprep.subr.mxu0 %v6904
        %6968 = vmatpush1.msra.mxu0 %v6903
        %6969 = vmatprep.subr.mxu0 %v6906
        %6970 = vmatpush1.msra.mxu0 %v6905
        %6971 = vmatprep.subr.mxu0 %v6908
        %6972 = vmatpush1.msra.mxu0 %v6907
        %6973 = vmatprep.subr.mxu0 %v6910
        %6974 = vmatpush1.msra.mxu0 %v6909
        %6975 = vmatprep.subr.mxu0 %v6912
        %6976 = vmatpush1.msra.mxu0 %v6911
        %6977 = vmatprep.subr.mxu0 %v6914
        %6978 = vmatpush1.msra.mxu0 %v6913
        %6979 = vmatprep.subr.mxu0 %v6916
        %6980 = vmatpush1.msra.mxu0 %v6915
        %6981 = vmatprep.subr.mxu0 %v6918
        %6982 = vmatpush1.msra.mxu0 %v6917
        %6983 = vmatprep.subr.mxu0 %v6920
        %6984 = vmatpush1.msra.mxu0 %v6919
        %6985 = vmatprep.subr.mxu0 %v6922
        %6986 = vmatpush1.msra.mxu0 %v6921
        %6987 = vmatprep.subr.mxu0 %v6924
        %6988 = vmatpush1.msra.mxu0 %v6923
        %6989 = vmatprep.subr.mxu0 %v6926
        %6990 = vmatpush1.msra.mxu0 %v6925
        %6991 = vmatprep.subr.mxu0 %v6928
        %6992 = vmatpush1.msra.mxu0 %v6927
        %6993 = vmatprep.subr.mxu0 %v6930
        %6994 = vmatpush1.msra.mxu0 %v6929
        %6995 = vmatprep.subr.mxu0 %v6932
        %6996 = vmatpush1.msra.mxu0 %v6931
        %6997 = vmatprep.subr.mxu0 %v6934
        %6998 = vmatpush1.msra.mxu0 %v6933
        %6999 = vmatprep.subr.mxu0 %v6936
        %7000 = vmatpush1.msra.mxu0 %v6935
        %7001 = vmatprep.mubr.f32.mxu0 %v4886
        %7002 = vmatmul.mubr.f32.gmra.mrb[0].mxu0 %v4884
        %v7003 = vpop.f32.mrb[0].mxu0
        %v7004 = vadd.f32 0.0, %v7003
        %v7005 = vpop.f32.mrb[0].mxu0
        %v7006 = vadd.f32 0.0, %v7005
        %7007 = vmatprep.mubr.f32.mxu0 %v5042
        %7008 = vmatmul.mubr.f32.gmra.mrb[0].mxu0 %v5041
        %v7009 = vpop.f32.mrb[0].mxu0
        %v7010 = vadd.f32 0.0, %v7009
        %v7011 = vpop.f32.mrb[0].mxu0
        %v7012 = vadd.f32 0.0, %v7011
        %7013 = vmatprep.mubr.f32.mxu0 %v4882
        %7014 = vmatmul.mubr.f32.gmra.mrb[0].mxu0 %v4880
        %v7015 = vpop.f32.mrb[0].mxu0
        %v7016 = vadd.f32 0.0, %v7015
        %v7017 = vpop.f32.mrb[0].mxu0
        %v7018 = vadd.f32 0.0, %v7017
        %7019 = vmatprep.mubr.f32.mxu0 %v5040
        %7020 = vmatmul.mubr.f32.gmra.mrb[0].mxu0 %v5039
        %v7021 = vpop.f32.mrb[0].mxu0
        %v7022 = vadd.f32 0.0, %v7021
        %v7023 = vpop.f32.mrb[0].mxu0
        %v7024 = vadd.f32 0.0, %v7023
        %7025 = vmatprep.mubr.f32.mxu0 %v4890
        %7026 = vmatmul.mubr.f32.gmra.mrb[0].mxu0 %v4888
        %v7027 = vpop.f32.mrb[0].mxu0
        %v7028 = vadd.f32 0.0, %v7027
        %v7029 = vpop.f32.mrb[0].mxu0
        %v7030 = vadd.f32 0.0, %v7029
        %7031 = vmatprep.mubr.f32.mxu0 %v5044
        %7032 = vmatmul.mubr.f32.gmra.mrb[0].mxu0 %v5043
        %v7033 = vpop.f32.mrb[0].mxu0
        %v7034 = vadd.f32 0.0, %v7033
        %v7035 = vpop.f32.mrb[0].mxu0
        %v7036 = vadd.f32 0.0, %v7035
        %7037 = vmatprep.mubr.f32.mxu0 %v4894
        %7038 = vmatmul.mubr.f32.gmra.mrb[0].mxu0 %v4892
        %v7039 = vpop.f32.mrb[0].mxu0
        %v7040 = vadd.f32 0.0, %v7039
        %v7041 = vpop.f32.mrb[0].mxu0
        %v7042 = vadd.f32 0.0, %v7041
        %7043 = vmatprep.mubr.f32.mxu0 %v5046
        %7044 = vmatmul.mubr.f32.gmra.mrb[0].mxu0 %v5045
        %v7045 = vpop.f32.mrb[0].mxu0
        %v7046 = vadd.f32 0.0, %v7045
        %v7047 = vpop.f32.mrb[0].mxu0
        %v7048 = vadd.f32 0.0, %v7047
        %7049 = vmatprep.mubr.f32.mxu0 %v4898
        %7050 = vmatmul.mubr.f32.gmra.mrb[0].mxu0 %v4896
        %v7051 = vpop.f32.mrb[0].mxu0
        %v7052 = vadd.f32 0.0, %v7051
        %v7053 = vpop.f32.mrb[0].mxu0
        %v7054 = vadd.f32 0.0, %v7053
        %7055 = vmatprep.mubr.f32.mxu0 %v5048
        %7056 = vmatmul.mubr.f32.gmra.mrb[0].mxu0 %v5047
        %v7057 = vpop.f32.mrb[0].mxu0
        %v7058 = vadd.f32 0.0, %v7057
        %v7059 = vpop.f32.mrb[0].mxu0
        %v7060 = vadd.f32 0.0, %v7059
        %7061 = vmatprep.mubr.f32.mxu0 %v4902
        %7062 = vmatmul.mubr.f32.gmra.mrb[0].mxu0 %v4900
        %v7063 = vpop.f32.mrb[0].mxu0
        %v7064 = vadd.f32 0.0, %v7063
        %v7065 = vpop.f32.mrb[0].mxu0
        %v7066 = vadd.f32 0.0, %v7065
        %7067 = vmatprep.mubr.f32.mxu0 %v5050
        %7068 = vmatmul.mubr.f32.gmra.mrb[0].mxu0 %v5049
        %v7069 = vpop.f32.mrb[0].mxu0
        %v7070 = vadd.f32 0.0, %v7069
        %v7071 = vpop.f32.mrb[0].mxu0
        %v7072 = vadd.f32 0.0, %v7071
        %7073 = vmatprep.mubr.f32.mxu0 %v4906
        %7074 = vmatmul.mubr.f32.gmra.mrb[0].mxu0 %v4904
        %v7075 = vpop.f32.mrb[0].mxu0
        %v7076 = vadd.f32 0.0, %v7075
        %v7077 = vpop.f32.mrb[0].mxu0
        %v7078 = vadd.f32 0.0, %v7077
        %7079 = vmatprep.mubr.f32.mxu0 %v5052
        %7080 = vmatmul.mubr.f32.gmra.mrb[0].mxu0 %v5051
        %v7081 = vpop.f32.mrb[0].mxu0
        %v7082 = vadd.f32 0.0, %v7081
        %v7083 = vpop.f32.mrb[0].mxu0
        %v7084 = vadd.f32 0.0, %v7083
        %7085 = vmatprep.mubr.f32.mxu0 %v4910
        %7086 = vmatmul.mubr.f32.gmra.mrb[0].mxu0 %v4908
        %v7087 = vpop.f32.mrb[0].mxu0
        %v7088 = vadd.f32 0.0, %v7087
        %v7089 = vpop.f32.mrb[0].mxu0
        %v7090 = vadd.f32 0.0, %v7089
        %7091 = vmatprep.mubr.f32.mxu0 %v5054
        %7092 = vmatmul.mubr.f32.gmra.mrb[0].mxu0 %v5053
        %v7093 = vpop.f32.mrb[0].mxu0
        %v7094 = vadd.f32 0.0, %v7093
        %v7095 = vpop.f32.mrb[0].mxu0
        %v7096 = vadd.f32 0.0, %v7095
        %7097 = vmatprep.mubr.f32.mxu0 %v4914
        %7098 = vmatmul.mubr.f32.gmra.mrb[0].mxu0 %v4912
        %v7099 = vpop.f32.mrb[0].mxu0
        %v7100 = vadd.f32 0.0, %v7099
        %v7101 = vpop.f32.mrb[0].mxu0
        %v7102 = vadd.f32 0.0, %v7101
        %7103 = vmatprep.mubr.f32.mxu0 %v5056
        %7104 = vmatmul.mubr.f32.gmra.mrb[0].mxu0 %v5055
        %v7105 = vpop.f32.mrb[0].mxu0
        %v7106 = vadd.f32 0.0, %v7105
        %v7107 = vpop.f32.mrb[0].mxu0
        %v7108 = vadd.f32 0.0, %v7107
        %7109 = vmatprep.mubr.f32.mxu0 %v4918
        %7110 = vmatmul.mubr.f32.gmra.mrb[0].mxu0 %v4916
        %v7111 = vpop.f32.mrb[0].mxu0
        %v7112 = vadd.f32 0.0, %v7111
        %v7113 = vpop.f32.mrb[0].mxu0
        %v7114 = vadd.f32 0.0, %v7113
        %7115 = vmatprep.mubr.f32.mxu0 %v5058
        %7116 = vmatmul.mubr.f32.gmra.mrb[0].mxu0 %v5057
        %v7117 = vpop.f32.mrb[0].mxu0
        %v7118 = vadd.f32 0.0, %v7117
        %v7119 = vpop.f32.mrb[0].mxu0
        %v7120 = vadd.f32 0.0, %v7119
        %7121 = vmatprep.mubr.f32.mxu0 %v4922
        %7122 = vmatmul.mubr.f32.gmra.mrb[0].mxu0 %v4920
        %v7123 = vpop.f32.mrb[0].mxu0
        %v7124 = vadd.f32 0.0, %v7123
        %v7125 = vpop.f32.mrb[0].mxu0
        %v7126 = vadd.f32 0.0, %v7125
        %7127 = vmatprep.mubr.f32.mxu0 %v5060
        %7128 = vmatmul.mubr.f32.gmra.mrb[0].mxu0 %v5059
        %v7129 = vpop.f32.mrb[0].mxu0
        %v7130 = vadd.f32 0.0, %v7129
        %v7131 = vpop.f32.mrb[0].mxu0
        %v7132 = vadd.f32 0.0, %v7131
        %7133 = vmatprep.mubr.f32.mxu0 %v4926
        %7134 = vmatmul.mubr.f32.gmra.mrb[0].mxu0 %v4924
        %v7135 = vpop.f32.mrb[0].mxu0
        %v7136 = vadd.f32 0.0, %v7135
        %v7137 = vpop.f32.mrb[0].mxu0
        %v7138 = vadd.f32 0.0, %v7137
        %7139 = vmatprep.mubr.f32.mxu0 %v5062
        %7140 = vmatmul.mubr.f32.gmra.mrb[0].mxu0 %v5061
        %v7141 = vpop.f32.mrb[0].mxu0
        %v7142 = vadd.f32 0.0, %v7141
        %v7143 = vpop.f32.mrb[0].mxu0
        %v7144 = vadd.f32 0.0, %v7143
        %7145 = vmatprep.mubr.f32.mxu0 %v4930
        %7146 = vmatmul.mubr.f32.gmra.mrb[0].mxu0 %v4928
        %v7147 = vpop.f32.mrb[0].mxu0
        %v7148 = vadd.f32 0.0, %v7147
        %v7149 = vpop.f32.mrb[0].mxu0
        %v7150 = vadd.f32 0.0, %v7149
        %7151 = vmatprep.mubr.f32.mxu0 %v5064
        %7152 = vmatmul.mubr.f32.gmra.mrb[0].mxu0 %v5063
        %v7153 = vpop.f32.mrb[0].mxu0
        %v7154 = vadd.f32 0.0, %v7153
        %v7155 = vpop.f32.mrb[0].mxu0
        %v7156 = vadd.f32 0.0, %v7155
        %7157 = vmatprep.mubr.f32.mxu0 %v4934
        %7158 = vmatmul.mubr.f32.gmra.mrb[0].mxu0 %v4932
        %v7159 = vpop.f32.mrb[0].mxu0
        %v7160 = vadd.f32 0.0, %v7159
        %v7161 = vpop.f32.mrb[0].mxu0
        %v7162 = vadd.f32 0.0, %v7161
        %7163 = vmatprep.mubr.f32.mxu0 %v5066
        %7164 = vmatmul.mubr.f32.gmra.mrb[0].mxu0 %v5065
        %v7165 = vpop.f32.mrb[0].mxu0
        %v7166 = vadd.f32 0.0, %v7165
        %v7167 = vpop.f32.mrb[0].mxu0
        %v7168 = vadd.f32 0.0, %v7167
        %7169 = vmatprep.mubr.f32.mxu0 %v4938
        %7170 = vmatmul.mubr.f32.gmra.mrb[0].mxu0 %v4936
        %v7171 = vpop.f32.mrb[0].mxu0
        %v7172 = vadd.f32 0.0, %v7171
        %v7173 = vpop.f32.mrb[0].mxu0
        %v7174 = vadd.f32 0.0, %v7173
        %7175 = vmatprep.mubr.f32.mxu0 %v5068
        %7176 = vmatmul.mubr.f32.gmra.mrb[0].mxu0 %v5067
        %v7177 = vpop.f32.mrb[0].mxu0
        %v7178 = vadd.f32 0.0, %v7177
        %v7179 = vpop.f32.mrb[0].mxu0
        %v7180 = vadd.f32 0.0, %v7179
        %7181 = vmatprep.mubr.f32.mxu0 %v4942
        %7182 = vmatmul.mubr.f32.gmra.mrb[0].mxu0 %v4940
        %v7183 = vpop.f32.mrb[0].mxu0
        %v7184 = vadd.f32 0.0, %v7183
        %v7185 = vpop.f32.mrb[0].mxu0
        %v7186 = vadd.f32 0.0, %v7185
        %7187 = vmatprep.mubr.f32.mxu0 %v5070
        %7188 = vmatmul.mubr.f32.gmra.mrb[0].mxu0 %v5069
        %v7189 = vpop.f32.mrb[0].mxu0
        %v7190 = vadd.f32 0.0, %v7189
        %v7191 = vpop.f32.mrb[0].mxu0
        %v7192 = vadd.f32 0.0, %v7191
        %7193 = vdwg.mxu0
        %v7194 = vadd.f32 %v6808, %v7004
        %v7195 = vadd.f32 %v6809, %v7006
        %v7196 = vadd.f32 %v6810, %v7010
        %v7197 = vadd.f32 %v6811, %v7012
        %v7198 = vadd.f32 %v6812, %v7016
        %v7199 = vadd.f32 %v6813, %v7018
        %v7200 = vadd.f32 %v6814, %v7022
        %v7201 = vadd.f32 %v6815, %v7024
        %v7202 = vadd.f32 %v6816, %v7028
        %v7203 = vadd.f32 %v6817, %v7030
        %v7204 = vadd.f32 %v6818, %v7034
        %v7205 = vadd.f32 %v6819, %v7036
        %v7206 = vadd.f32 %v6820, %v7040
        %v7207 = vadd.f32 %v6821, %v7042
        %v7208 = vadd.f32 %v6822, %v7046
        %v7209 = vadd.f32 %v6823, %v7048
        %v7210 = vadd.f32 %v6824, %v7052
        %v7211 = vadd.f32 %v6825, %v7054
        %v7212 = vadd.f32 %v6826, %v7058
        %v7213 = vadd.f32 %v6827, %v7060
        %v7214 = vadd.f32 %v6828, %v7064
        %v7215 = vadd.f32 %v6829, %v7066
        %v7216 = vadd.f32 %v6830, %v7070
        %v7217 = vadd.f32 %v6831, %v7072
        %v7218 = vadd.f32 %v6832, %v7076
        %v7219 = vadd.f32 %v6833, %v7078
        %v7220 = vadd.f32 %v6834, %v7082
        %v7221 = vadd.f32 %v6835, %v7084
        %v7222 = vadd.f32 %v6836, %v7088
        %v7223 = vadd.f32 %v6837, %v7090
        %v7224 = vadd.f32 %v6838, %v7094
        %v7225 = vadd.f32 %v6839, %v7096
        %v7226 = vadd.f32 %v6840, %v7100
        %v7227 = vadd.f32 %v6841, %v7102
        %v7228 = vadd.f32 %v6842, %v7106
        %v7229 = vadd.f32 %v6843, %v7108
        %v7230 = vadd.f32 %v6844, %v7112
        %v7231 = vadd.f32 %v6845, %v7114
        %v7232 = vadd.f32 %v6846, %v7118
        %v7233 = vadd.f32 %v6847, %v7120
        %v7234 = vadd.f32 %v6848, %v7124
        %v7235 = vadd.f32 %v6849, %v7126
        %v7236 = vadd.f32 %v6850, %v7130
        %v7237 = vadd.f32 %v6851, %v7132
        %v7238 = vadd.f32 %v6852, %v7136
        %v7239 = vadd.f32 %v6853, %v7138
        %v7240 = vadd.f32 %v6854, %v7142
        %v7241 = vadd.f32 %v6855, %v7144
        %v7242 = vadd.f32 %v6856, %v7148
        %v7243 = vadd.f32 %v6857, %v7150
        %v7244 = vadd.f32 %v6858, %v7154
        %v7245 = vadd.f32 %v6859, %v7156
        %v7246 = vadd.f32 %v6860, %v7160
        %v7247 = vadd.f32 %v6861, %v7162
        %v7248 = vadd.f32 %v6862, %v7166
        %v7249 = vadd.f32 %v6863, %v7168
        %v7250 = vadd.f32 %v6864, %v7172
        %v7251 = vadd.f32 %v6865, %v7174
        %v7252 = vadd.f32 %v6866, %v7178
        %v7253 = vadd.f32 %v6867, %v7180
        %v7254 = vadd.f32 %v6868, %v7184
        %v7255 = vadd.f32 %v6869, %v7186
        %v7256 = vadd.f32 %v6870, %v7190
        %v7257 = vadd.f32 %v6871, %v7192
        %s7258 = scalar_lea.vmem [#allocation7], 3072
        %v7259 = vld [vmem:[%s7258] sm:$0xff]
        %v7260 = vld [vmem:[%s7258 + $0x8] sm:$0xff]
        %v7261 = vld [vmem:[%s7258 + $0x10] sm:$0xff]
        %v7262 = vld [vmem:[%s7258 + $0x18] sm:$0xff]
        %v7263 = vld [vmem:[%s7258 + $0x20] sm:$0xff]
        %v7264 = vld [vmem:[%s7258 + $0x28] sm:$0xff]
        %v7265 = vld [vmem:[%s7258 + $0x30] sm:$0xff]
        %v7266 = vld [vmem:[%s7258 + $0x38] sm:$0xff]
        %v7267 = vld [vmem:[%s7258 + $0x40] sm:$0xff]
        %v7268 = vld [vmem:[%s7258 + $0x48] sm:$0xff]
        %v7269 = vld [vmem:[%s7258 + $0x50] sm:$0xff]
        %v7270 = vld [vmem:[%s7258 + $0x58] sm:$0xff]
        %v7271 = vld [vmem:[%s7258 + $0x60] sm:$0xff]
        %v7272 = vld [vmem:[%s7258 + $0x68] sm:$0xff]
        %v7273 = vld [vmem:[%s7258 + $0x70] sm:$0xff]
        %v7274 = vld [vmem:[%s7258 + $0x78] sm:$0xff]
        %v7275 = vld [vmem:[%s7258 + $0x80] sm:$0xff]
        %v7276 = vld [vmem:[%s7258 + $0x88] sm:$0xff]
        %v7277 = vld [vmem:[%s7258 + $0x90] sm:$0xff]
        %v7278 = vld [vmem:[%s7258 + $0x98] sm:$0xff]
        %v7279 = vld [vmem:[%s7258 + $0xa0] sm:$0xff]
        %v7280 = vld [vmem:[%s7258 + $0xa8] sm:$0xff]
        %v7281 = vld [vmem:[%s7258 + $0xb0] sm:$0xff]
        %v7282 = vld [vmem:[%s7258 + $0xb8] sm:$0xff]
        %v7283 = vld [vmem:[%s7258 + $0xc0] sm:$0xff]
        %v7284 = vld [vmem:[%s7258 + $0xc8] sm:$0xff]
        %v7285 = vld [vmem:[%s7258 + $0xd0] sm:$0xff]
        %v7286 = vld [vmem:[%s7258 + $0xd8] sm:$0xff]
        %v7287 = vld [vmem:[%s7258 + $0xe0] sm:$0xff]
        %v7288 = vld [vmem:[%s7258 + $0xe8] sm:$0xff]
        %v7289 = vld [vmem:[%s7258 + $0xf0] sm:$0xff]
        %v7290 = vld [vmem:[%s7258 + $0xf8] sm:$0xff]
        %v7291 = vld [vmem:[%s7258 + $0x100] sm:$0xff]
        %v7292 = vld [vmem:[%s7258 + $0x108] sm:$0xff]
        %v7293 = vld [vmem:[%s7258 + $0x110] sm:$0xff]
        %v7294 = vld [vmem:[%s7258 + $0x118] sm:$0xff]
        %v7295 = vld [vmem:[%s7258 + $0x120] sm:$0xff]
        %v7296 = vld [vmem:[%s7258 + $0x128] sm:$0xff]
        %v7297 = vld [vmem:[%s7258 + $0x130] sm:$0xff]
        %v7298 = vld [vmem:[%s7258 + $0x138] sm:$0xff]
        %v7299 = vld [vmem:[%s7258 + $0x140] sm:$0xff]
        %v7300 = vld [vmem:[%s7258 + $0x148] sm:$0xff]
        %v7301 = vld [vmem:[%s7258 + $0x150] sm:$0xff]
        %v7302 = vld [vmem:[%s7258 + $0x158] sm:$0xff]
        %v7303 = vld [vmem:[%s7258 + $0x160] sm:$0xff]
        %v7304 = vld [vmem:[%s7258 + $0x168] sm:$0xff]
        %v7305 = vld [vmem:[%s7258 + $0x170] sm:$0xff]
        %v7306 = vld [vmem:[%s7258 + $0x178] sm:$0xff]
        %v7307 = vld [vmem:[%s7258 + $0x180] sm:$0xff]
        %v7308 = vld [vmem:[%s7258 + $0x188] sm:$0xff]
        %v7309 = vld [vmem:[%s7258 + $0x190] sm:$0xff]
        %v7310 = vld [vmem:[%s7258 + $0x198] sm:$0xff]
        %v7311 = vld [vmem:[%s7258 + $0x1a0] sm:$0xff]
        %v7312 = vld [vmem:[%s7258 + $0x1a8] sm:$0xff]
        %v7313 = vld [vmem:[%s7258 + $0x1b0] sm:$0xff]
        %v7314 = vld [vmem:[%s7258 + $0x1b8] sm:$0xff]
        %v7315 = vld [vmem:[%s7258 + $0x1c0] sm:$0xff]
        %v7316 = vld [vmem:[%s7258 + $0x1c8] sm:$0xff]
        %v7317 = vld [vmem:[%s7258 + $0x1d0] sm:$0xff]
        %v7318 = vld [vmem:[%s7258 + $0x1d8] sm:$0xff]
        %v7319 = vld [vmem:[%s7258 + $0x1e0] sm:$0xff]
        %v7320 = vld [vmem:[%s7258 + $0x1e8] sm:$0xff]
        %v7321 = vld [vmem:[%s7258 + $0x1f0] sm:$0xff]
        %v7322 = vld [vmem:[%s7258 + $0x1f8] sm:$0xff]
        %7323 = vmatprep.subr.mxu0 %v7260
        %7324 = vmatpush1.msra.mxu0 %v7259
        %7325 = vmatprep.subr.mxu0 %v7262
        %7326 = vmatpush1.msra.mxu0 %v7261
        %7327 = vmatprep.subr.mxu0 %v7264
        %7328 = vmatpush1.msra.mxu0 %v7263
        %7329 = vmatprep.subr.mxu0 %v7266
        %7330 = vmatpush1.msra.mxu0 %v7265
        %7331 = vmatprep.subr.mxu0 %v7268
        %7332 = vmatpush1.msra.mxu0 %v7267
        %7333 = vmatprep.subr.mxu0 %v7270
        %7334 = vmatpush1.msra.mxu0 %v7269
        %7335 = vmatprep.subr.mxu0 %v7272
        %7336 = vmatpush1.msra.mxu0 %v7271
        %7337 = vmatprep.subr.mxu0 %v7274
        %7338 = vmatpush1.msra.mxu0 %v7273
        %7339 = vmatprep.subr.mxu0 %v7276
        %7340 = vmatpush1.msra.mxu0 %v7275
        %7341 = vmatprep.subr.mxu0 %v7278
        %7342 = vmatpush1.msra.mxu0 %v7277
        %7343 = vmatprep.subr.mxu0 %v7280
        %7344 = vmatpush1.msra.mxu0 %v7279
        %7345 = vmatprep.subr.mxu0 %v7282
        %7346 = vmatpush1.msra.mxu0 %v7281
        %7347 = vmatprep.subr.mxu0 %v7284
        %7348 = vmatpush1.msra.mxu0 %v7283
        %7349 = vmatprep.subr.mxu0 %v7286
        %7350 = vmatpush1.msra.mxu0 %v7285
        %7351 = vmatprep.subr.mxu0 %v7288
        %7352 = vmatpush1.msra.mxu0 %v7287
        %7353 = vmatprep.subr.mxu0 %v7290
        %7354 = vmatpush1.msra.mxu0 %v7289
        %7355 = vmatprep.subr.mxu0 %v7292
        %7356 = vmatpush1.msra.mxu0 %v7291
        %7357 = vmatprep.subr.mxu0 %v7294
        %7358 = vmatpush1.msra.mxu0 %v7293
        %7359 = vmatprep.subr.mxu0 %v7296
        %7360 = vmatpush1.msra.mxu0 %v7295
        %7361 = vmatprep.subr.mxu0 %v7298
        %7362 = vmatpush1.msra.mxu0 %v7297
        %7363 = vmatprep.subr.mxu0 %v7300
        %7364 = vmatpush1.msra.mxu0 %v7299
        %7365 = vmatprep.subr.mxu0 %v7302
        %7366 = vmatpush1.msra.mxu0 %v7301
        %7367 = vmatprep.subr.mxu0 %v7304
        %7368 = vmatpush1.msra.mxu0 %v7303
        %7369 = vmatprep.subr.mxu0 %v7306
        %7370 = vmatpush1.msra.mxu0 %v7305
        %7371 = vmatprep.subr.mxu0 %v7308
        %7372 = vmatpush1.msra.mxu0 %v7307
        %7373 = vmatprep.subr.mxu0 %v7310
        %7374 = vmatpush1.msra.mxu0 %v7309
        %7375 = vmatprep.subr.mxu0 %v7312
        %7376 = vmatpush1.msra.mxu0 %v7311
        %7377 = vmatprep.subr.mxu0 %v7314
        %7378 = vmatpush1.msra.mxu0 %v7313
        %7379 = vmatprep.subr.mxu0 %v7316
        %7380 = vmatpush1.msra.mxu0 %v7315
        %7381 = vmatprep.subr.mxu0 %v7318
        %7382 = vmatpush1.msra.mxu0 %v7317
        %7383 = vmatprep.subr.mxu0 %v7320
        %7384 = vmatpush1.msra.mxu0 %v7319
        %7385 = vmatprep.subr.mxu0 %v7322
        %7386 = vmatpush1.msra.mxu0 %v7321
        %7387 = vmatprep.mubr.f32.mxu0 %v4848
        %7388 = vmatmul.mubr.f32.gmra.mrb[0].mxu0 %v4847
        %v7389 = vpop.f32.mrb[0].mxu0
        %v7390 = vadd.f32 0.0, %v7389
        %v7391 = vpop.f32.mrb[0].mxu0
        %v7392 = vadd.f32 0.0, %v7391
        %7393 = vmatprep.mubr.f32.mxu0 %v4692
        %7394 = vmatmul.mubr.f32.gmra.mrb[0].mxu0 %v4690
        %v7395 = vpop.f32.mrb[0].mxu0
        %v7396 = vadd.f32 0.0, %v7395
        %v7397 = vpop.f32.mrb[0].mxu0
        %v7398 = vadd.f32 0.0, %v7397
        %7399 = vmatprep.mubr.f32.mxu0 %v4852
        %7400 = vmatmul.mubr.f32.gmra.mrb[0].mxu0 %v4851
        %v7401 = vpop.f32.mrb[0].mxu0
        %v7402 = vadd.f32 0.0, %v7401
        %v7403 = vpop.f32.mrb[0].mxu0
        %v7404 = vadd.f32 0.0, %v7403
        %7405 = vmatprep.mubr.f32.mxu0 %v4704
        %7406 = vmatmul.mubr.f32.gmra.mrb[0].mxu0 %v4702
        %v7407 = vpop.f32.mrb[0].mxu0
        %v7408 = vadd.f32 0.0, %v7407
        %v7409 = vpop.f32.mrb[0].mxu0
        %v7410 = vadd.f32 0.0, %v7409
        %7411 = vmatprep.mubr.f32.mxu0 %v4854
        %7412 = vmatmul.mubr.f32.gmra.mrb[0].mxu0 %v4853
        %v7413 = vpop.f32.mrb[0].mxu0
        %v7414 = vadd.f32 0.0, %v7413
        %v7415 = vpop.f32.mrb[0].mxu0
        %v7416 = vadd.f32 0.0, %v7415
        %7417 = vmatprep.mubr.f32.mxu0 %v4710
        %7418 = vmatmul.mubr.f32.gmra.mrb[0].mxu0 %v4708
        %v7419 = vpop.f32.mrb[0].mxu0
        %v7420 = vadd.f32 0.0, %v7419
        %v7421 = vpop.f32.mrb[0].mxu0
        %v7422 = vadd.f32 0.0, %v7421
        %7423 = vmatprep.mubr.f32.mxu0 %v4856
        %7424 = vmatmul.mubr.f32.gmra.mrb[0].mxu0 %v4855
        %v7425 = vpop.f32.mrb[0].mxu0
        %v7426 = vadd.f32 0.0, %v7425
        %v7427 = vpop.f32.mrb[0].mxu0
        %v7428 = vadd.f32 0.0, %v7427
        %7429 = vmatprep.mubr.f32.mxu0 %v4716
        %7430 = vmatmul.mubr.f32.gmra.mrb[0].mxu0 %v4714
        %v7431 = vpop.f32.mrb[0].mxu0
        %v7432 = vadd.f32 0.0, %v7431
        %v7433 = vpop.f32.mrb[0].mxu0
        %v7434 = vadd.f32 0.0, %v7433
        %7435 = vmatprep.mubr.f32.mxu0 %v4858
        %7436 = vmatmul.mubr.f32.gmra.mrb[0].mxu0 %v4857
        %v7437 = vpop.f32.mrb[0].mxu0
        %v7438 = vadd.f32 0.0, %v7437
        %v7439 = vpop.f32.mrb[0].mxu0
        %v7440 = vadd.f32 0.0, %v7439
        %7441 = vmatprep.mubr.f32.mxu0 %v4722
        %7442 = vmatmul.mubr.f32.gmra.mrb[0].mxu0 %v4720
        %v7443 = vpop.f32.mrb[0].mxu0
        %v7444 = vadd.f32 0.0, %v7443
        %v7445 = vpop.f32.mrb[0].mxu0
        %v7446 = vadd.f32 0.0, %v7445
        %7447 = vmatprep.mubr.f32.mxu0 %v4860
        %7448 = vmatmul.mubr.f32.gmra.mrb[0].mxu0 %v4859
        %v7449 = vpop.f32.mrb[0].mxu0
        %v7450 = vadd.f32 0.0, %v7449
        %v7451 = vpop.f32.mrb[0].mxu0
        %v7452 = vadd.f32 0.0, %v7451
        %7453 = vmatprep.mubr.f32.mxu0 %v4728
        %7454 = vmatmul.mubr.f32.gmra.mrb[0].mxu0 %v4726
        %v7455 = vpop.f32.mrb[0].mxu0
        %v7456 = vadd.f32 0.0, %v7455
        %v7457 = vpop.f32.mrb[0].mxu0
        %v7458 = vadd.f32 0.0, %v7457
        %7459 = vmatprep.mubr.f32.mxu0 %v4862
        %7460 = vmatmul.mubr.f32.gmra.mrb[0].mxu0 %v4861
        %v7461 = vpop.f32.mrb[0].mxu0
        %v7462 = vadd.f32 0.0, %v7461
        %v7463 = vpop.f32.mrb[0].mxu0
        %v7464 = vadd.f32 0.0, %v7463
        %7465 = vmatprep.mubr.f32.mxu0 %v4734
        %7466 = vmatmul.mubr.f32.gmra.mrb[0].mxu0 %v4732
        %v7467 = vpop.f32.mrb[0].mxu0
        %v7468 = vadd.f32 0.0, %v7467
        %v7469 = vpop.f32.mrb[0].mxu0
        %v7470 = vadd.f32 0.0, %v7469
        %7471 = vmatprep.mubr.f32.mxu0 %v4864
        %7472 = vmatmul.mubr.f32.gmra.mrb[0].mxu0 %v4863
        %v7473 = vpop.f32.mrb[0].mxu0
        %v7474 = vadd.f32 0.0, %v7473
        %v7475 = vpop.f32.mrb[0].mxu0
        %v7476 = vadd.f32 0.0, %v7475
        %7477 = vmatprep.mubr.f32.mxu0 %v4740
        %7478 = vmatmul.mubr.f32.gmra.mrb[0].mxu0 %v4738
        %v7479 = vpop.f32.mrb[0].mxu0
        %v7480 = vadd.f32 0.0, %v7479
        %v7481 = vpop.f32.mrb[0].mxu0
        %v7482 = vadd.f32 0.0, %v7481
        %7483 = vmatprep.mubr.f32.mxu0 %v4866
        %7484 = vmatmul.mubr.f32.gmra.mrb[0].mxu0 %v4865
        %v7485 = vpop.f32.mrb[0].mxu0
        %v7486 = vadd.f32 0.0, %v7485
        %v7487 = vpop.f32.mrb[0].mxu0
        %v7488 = vadd.f32 0.0, %v7487
        %7489 = vmatprep.mubr.f32.mxu0 %v4746
        %7490 = vmatmul.mubr.f32.gmra.mrb[0].mxu0 %v4744
        %v7491 = vpop.f32.mrb[0].mxu0
        %v7492 = vadd.f32 0.0, %v7491
        %v7493 = vpop.f32.mrb[0].mxu0
        %v7494 = vadd.f32 0.0, %v7493
        %7495 = vmatprep.mubr.f32.mxu0 %v4868
        %7496 = vmatmul.mubr.f32.gmra.mrb[0].mxu0 %v4867
        %v7497 = vpop.f32.mrb[0].mxu0
        %v7498 = vadd.f32 0.0, %v7497
        %v7499 = vpop.f32.mrb[0].mxu0
        %v7500 = vadd.f32 0.0, %v7499
        %7501 = vmatprep.mubr.f32.mxu0 %v4752
        %7502 = vmatmul.mubr.f32.gmra.mrb[0].mxu0 %v4750
        %v7503 = vpop.f32.mrb[0].mxu0
        %v7504 = vadd.f32 0.0, %v7503
        %v7505 = vpop.f32.mrb[0].mxu0
        %v7506 = vadd.f32 0.0, %v7505
        %7507 = vmatprep.mubr.f32.mxu0 %v4870
        %7508 = vmatmul.mubr.f32.gmra.mrb[0].mxu0 %v4869
        %v7509 = vpop.f32.mrb[0].mxu0
        %v7510 = vadd.f32 0.0, %v7509
        %v7511 = vpop.f32.mrb[0].mxu0
        %v7512 = vadd.f32 0.0, %v7511
        %7513 = vmatprep.mubr.f32.mxu0 %v4758
        %7514 = vmatmul.mubr.f32.gmra.mrb[0].mxu0 %v4756
        %v7515 = vpop.f32.mrb[0].mxu0
        %v7516 = vadd.f32 0.0, %v7515
        %v7517 = vpop.f32.mrb[0].mxu0
        %v7518 = vadd.f32 0.0, %v7517
        %7519 = vmatprep.mubr.f32.mxu0 %v4872
        %7520 = vmatmul.mubr.f32.gmra.mrb[0].mxu0 %v4871
        %v7521 = vpop.f32.mrb[0].mxu0
        %v7522 = vadd.f32 0.0, %v7521
        %v7523 = vpop.f32.mrb[0].mxu0
        %v7524 = vadd.f32 0.0, %v7523
        %7525 = vmatprep.mubr.f32.mxu0 %v4764
        %7526 = vmatmul.mubr.f32.gmra.mrb[0].mxu0 %v4762
        %v7527 = vpop.f32.mrb[0].mxu0
        %v7528 = vadd.f32 0.0, %v7527
        %v7529 = vpop.f32.mrb[0].mxu0
        %v7530 = vadd.f32 0.0, %v7529
        %7531 = vmatprep.mubr.f32.mxu0 %v4874
        %7532 = vmatmul.mubr.f32.gmra.mrb[0].mxu0 %v4873
        %v7533 = vpop.f32.mrb[0].mxu0
        %v7534 = vadd.f32 0.0, %v7533
        %v7535 = vpop.f32.mrb[0].mxu0
        %v7536 = vadd.f32 0.0, %v7535
        %7537 = vmatprep.mubr.f32.mxu0 %v4770
        %7538 = vmatmul.mubr.f32.gmra.mrb[0].mxu0 %v4768
        %v7539 = vpop.f32.mrb[0].mxu0
        %v7540 = vadd.f32 0.0, %v7539
        %v7541 = vpop.f32.mrb[0].mxu0
        %v7542 = vadd.f32 0.0, %v7541
        %7543 = vmatprep.mubr.f32.mxu0 %v4876
        %7544 = vmatmul.mubr.f32.gmra.mrb[0].mxu0 %v4875
        %v7545 = vpop.f32.mrb[0].mxu0
        %v7546 = vadd.f32 0.0, %v7545
        %v7547 = vpop.f32.mrb[0].mxu0
        %v7548 = vadd.f32 0.0, %v7547
        %7549 = vmatprep.mubr.f32.mxu0 %v4776
        %7550 = vmatmul.mubr.f32.gmra.mrb[0].mxu0 %v4774
        %v7551 = vpop.f32.mrb[0].mxu0
        %v7552 = vadd.f32 0.0, %v7551
        %v7553 = vpop.f32.mrb[0].mxu0
        %v7554 = vadd.f32 0.0, %v7553
        %7555 = vmatprep.mubr.f32.mxu0 %v4878
        %7556 = vmatmul.mubr.f32.gmra.mrb[0].mxu0 %v4877
        %v7557 = vpop.f32.mrb[0].mxu0
        %v7558 = vadd.f32 0.0, %v7557
        %v7559 = vpop.f32.mrb[0].mxu0
        %v7560 = vadd.f32 0.0, %v7559
        %7561 = vmatprep.mubr.f32.mxu0 %v4782
        %7562 = vmatmul.mubr.f32.gmra.mrb[0].mxu0 %v4780
        %v7563 = vpop.f32.mrb[0].mxu0
        %v7564 = vadd.f32 0.0, %v7563
        %v7565 = vpop.f32.mrb[0].mxu0
        %v7566 = vadd.f32 0.0, %v7565
        %7567 = vmatprep.mubr.f32.mxu0 %v4876
        %7568 = vmatmul.mubr.f32.gmra.mrb[0].mxu0 %v4875
        %v7569 = vpop.f32.mrb[0].mxu0
        %v7570 = vadd.f32 0.0, %v7569
        %v7571 = vpop.f32.mrb[0].mxu0
        %v7572 = vadd.f32 0.0, %v7571
        %7573 = vmatprep.mubr.f32.mxu0 %v4776
        %7574 = vmatmul.mubr.f32.gmra.mrb[0].mxu0 %v4774
        %v7575 = vpop.f32.mrb[0].mxu0
        %v7576 = vadd.f32 0.0, %v7575
        %v7577 = vpop.f32.mrb[0].mxu0
        %v7578 = vadd.f32 0.0, %v7577
        %7579 = vdwg.mxu0
        %v7580 = vadd.f32 %v7194, %v7390
        %v7581 = vadd.f32 %v7195, %v7392
        %v7582 = vadd.f32 %v7196, %v7396
        %v7583 = vadd.f32 %v7197, %v7398
        %v7584 = vadd.f32 %v7198, %v7402
        %v7585 = vadd.f32 %v7199, %v7404
        %v7586 = vadd.f32 %v7200, %v7408
        %v7587 = vadd.f32 %v7201, %v7410
        %v7588 = vadd.f32 %v7202, %v7414
        %v7589 = vadd.f32 %v7203, %v7416
        %v7590 = vadd.f32 %v7204, %v7420
        %v7591 = vadd.f32 %v7205, %v7422
        %v7592 = vadd.f32 %v7206, %v7426
        %v7593 = vadd.f32 %v7207, %v7428
        %v7594 = vadd.f32 %v7208, %v7432
        %v7595 = vadd.f32 %v7209, %v7434
        %v7596 = vadd.f32 %v7210, %v7438
        %v7597 = vadd.f32 %v7211, %v7440
        %v7598 = vadd.f32 %v7212, %v7444
        %v7599 = vadd.f32 %v7213, %v7446
        %v7600 = vadd.f32 %v7214, %v7450
        %v7601 = vadd.f32 %v7215, %v7452
        %v7602 = vadd.f32 %v7216, %v7456
        %v7603 = vadd.f32 %v7217, %v7458
        %v7604 = vadd.f32 %v7218, %v7462
        %v7605 = vadd.f32 %v7219, %v7464
        %v7606 = vadd.f32 %v7220, %v7468
        %v7607 = vadd.f32 %v7221, %v7470
        %v7608 = vadd.f32 %v7222, %v7474
        %v7609 = vadd.f32 %v7223, %v7476
        %v7610 = vadd.f32 %v7224, %v7480
        %v7611 = vadd.f32 %v7225, %v7482
        %v7612 = vadd.f32 %v7226, %v7486
        %v7613 = vadd.f32 %v7227, %v7488
        %v7614 = vadd.f32 %v7228, %v7492
        %v7615 = vadd.f32 %v7229, %v7494
        %v7616 = vadd.f32 %v7230, %v7498
        %v7617 = vadd.f32 %v7231, %v7500
        %v7618 = vadd.f32 %v7232, %v7504
        %v7619 = vadd.f32 %v7233, %v7506
        %v7620 = vadd.f32 %v7234, %v7510
        %v7621 = vadd.f32 %v7235, %v7512
        %v7622 = vadd.f32 %v7236, %v7516
        %v7623 = vadd.f32 %v7237, %v7518
        %v7624 = vadd.f32 %v7238, %v7522
        %v7625 = vadd.f32 %v7239, %v7524
        %v7626 = vadd.f32 %v7240, %v7528
        %v7627 = vadd.f32 %v7241, %v7530
        %v7628 = vadd.f32 %v7242, %v7534
        %v7629 = vadd.f32 %v7243, %v7536
        %v7630 = vadd.f32 %v7244, %v7540
        %v7631 = vadd.f32 %v7245, %v7542
        %v7632 = vadd.f32 %v7246, %v7546
        %v7633 = vadd.f32 %v7247, %v7548
        %v7634 = vadd.f32 %v7248, %v7552
        %v7635 = vadd.f32 %v7249, %v7554
        %v7636 = vadd.f32 %v7250, %v7558
        %v7637 = vadd.f32 %v7251, %v7560
        %v7638 = vadd.f32 %v7252, %v7564
        %v7639 = vadd.f32 %v7253, %v7566
        %v7640 = vadd.f32 %v7254, %v7570
        %v7641 = vadd.f32 %v7255, %v7572
        %v7642 = vadd.f32 %v7256, %v7576
        %v7643 = vadd.f32 %v7257, %v7578
        %s7644 = scalar_lea.vmem [#allocation7], 3584
        %v7645 = vld [vmem:[%s7644] sm:$0xff]
        %v7646 = vld [vmem:[%s7644 + $0x8] sm:$0xff]
        %v7647 = vld [vmem:[%s7644 + $0x10] sm:$0xff]
        %v7648 = vld [vmem:[%s7644 + $0x18] sm:$0xff]
        %v7649 = vld [vmem:[%s7644 + $0x20] sm:$0xff]
        %v7650 = vld [vmem:[%s7644 + $0x28] sm:$0xff]
        %v7651 = vld [vmem:[%s7644 + $0x30] sm:$0xff]
        %v7652 = vld [vmem:[%s7644 + $0x38] sm:$0xff]
        %v7653 = vld [vmem:[%s7644 + $0x40] sm:$0xff]
        %v7654 = vld [vmem:[%s7644 + $0x48] sm:$0xff]
        %v7655 = vld [vmem:[%s7644 + $0x50] sm:$0xff]
        %v7656 = vld [vmem:[%s7644 + $0x58] sm:$0xff]
        %v7657 = vld [vmem:[%s7644 + $0x60] sm:$0xff]
        %v7658 = vld [vmem:[%s7644 + $0x68] sm:$0xff]
        %v7659 = vld [vmem:[%s7644 + $0x70] sm:$0xff]
        %v7660 = vld [vmem:[%s7644 + $0x78] sm:$0xff]
        %v7661 = vld [vmem:[%s7644 + $0x80] sm:$0xff]
        %v7662 = vld [vmem:[%s7644 + $0x88] sm:$0xff]
        %v7663 = vld [vmem:[%s7644 + $0x90] sm:$0xff]
        %v7664 = vld [vmem:[%s7644 + $0x98] sm:$0xff]
        %v7665 = vld [vmem:[%s7644 + $0xa0] sm:$0xff]
        %v7666 = vld [vmem:[%s7644 + $0xa8] sm:$0xff]
        %v7667 = vld [vmem:[%s7644 + $0xb0] sm:$0xff]
        %v7668 = vld [vmem:[%s7644 + $0xb8] sm:$0xff]
        %v7669 = vld [vmem:[%s7644 + $0xc0] sm:$0xff]
        %v7670 = vld [vmem:[%s7644 + $0xc8] sm:$0xff]
        %v7671 = vld [vmem:[%s7644 + $0xd0] sm:$0xff]
        %v7672 = vld [vmem:[%s7644 + $0xd8] sm:$0xff]
        %v7673 = vld [vmem:[%s7644 + $0xe0] sm:$0xff]
        %v7674 = vld [vmem:[%s7644 + $0xe8] sm:$0xff]
        %v7675 = vld [vmem:[%s7644 + $0xf0] sm:$0xff]
        %v7676 = vld [vmem:[%s7644 + $0xf8] sm:$0xff]
        %v7677 = vld [vmem:[%s7644 + $0x100] sm:$0xff]
        %v7678 = vld [vmem:[%s7644 + $0x108] sm:$0xff]
        %v7679 = vld [vmem:[%s7644 + $0x110] sm:$0xff]
        %v7680 = vld [vmem:[%s7644 + $0x118] sm:$0xff]
        %v7681 = vld [vmem:[%s7644 + $0x120] sm:$0xff]
        %v7682 = vld [vmem:[%s7644 + $0x128] sm:$0xff]
        %v7683 = vld [vmem:[%s7644 + $0x130] sm:$0xff]
        %v7684 = vld [vmem:[%s7644 + $0x138] sm:$0xff]
        %v7685 = vld [vmem:[%s7644 + $0x140] sm:$0xff]
        %v7686 = vld [vmem:[%s7644 + $0x148] sm:$0xff]
        %v7687 = vld [vmem:[%s7644 + $0x150] sm:$0xff]
        %v7688 = vld [vmem:[%s7644 + $0x158] sm:$0xff]
        %v7689 = vld [vmem:[%s7644 + $0x160] sm:$0xff]
        %v7690 = vld [vmem:[%s7644 + $0x168] sm:$0xff]
        %v7691 = vld [vmem:[%s7644 + $0x170] sm:$0xff]
        %v7692 = vld [vmem:[%s7644 + $0x178] sm:$0xff]
        %v7693 = vld [vmem:[%s7644 + $0x180] sm:$0xff]
        %v7694 = vld [vmem:[%s7644 + $0x188] sm:$0xff]
        %v7695 = vld [vmem:[%s7644 + $0x190] sm:$0xff]
        %v7696 = vld [vmem:[%s7644 + $0x198] sm:$0xff]
        %v7697 = vld [vmem:[%s7644 + $0x1a0] sm:$0xff]
        %v7698 = vld [vmem:[%s7644 + $0x1a8] sm:$0xff]
        %v7699 = vld [vmem:[%s7644 + $0x1b0] sm:$0xff]
        %v7700 = vld [vmem:[%s7644 + $0x1b8] sm:$0xff]
        %v7701 = vld [vmem:[%s7644 + $0x1c0] sm:$0xff]
        %v7702 = vld [vmem:[%s7644 + $0x1c8] sm:$0xff]
        %v7703 = vld [vmem:[%s7644 + $0x1d0] sm:$0xff]
        %v7704 = vld [vmem:[%s7644 + $0x1d8] sm:$0xff]
        %v7705 = vld [vmem:[%s7644 + $0x1e0] sm:$0xff]
        %v7706 = vld [vmem:[%s7644 + $0x1e8] sm:$0xff]
        %v7707 = vld [vmem:[%s7644 + $0x1f0] sm:$0xff]
        %v7708 = vld [vmem:[%s7644 + $0x1f8] sm:$0xff]
        %7709 = vmatprep.subr.mxu0 %v7646
        %7710 = vmatpush1.msra.mxu0 %v7645
        %7711 = vmatprep.subr.mxu0 %v7648
        %7712 = vmatpush1.msra.mxu0 %v7647
        %7713 = vmatprep.subr.mxu0 %v7650
        %7714 = vmatpush1.msra.mxu0 %v7649
        %7715 = vmatprep.subr.mxu0 %v7652
        %7716 = vmatpush1.msra.mxu0 %v7651
        %7717 = vmatprep.subr.mxu0 %v7654
        %7718 = vmatpush1.msra.mxu0 %v7653
        %7719 = vmatprep.subr.mxu0 %v7656
        %7720 = vmatpush1.msra.mxu0 %v7655
        %7721 = vmatprep.subr.mxu0 %v7658
        %7722 = vmatpush1.msra.mxu0 %v7657
        %7723 = vmatprep.subr.mxu0 %v7660
        %7724 = vmatpush1.msra.mxu0 %v7659
        %7725 = vmatprep.subr.mxu0 %v7662
        %7726 = vmatpush1.msra.mxu0 %v7661
        %7727 = vmatprep.subr.mxu0 %v7664
        %7728 = vmatpush1.msra.mxu0 %v7663
        %7729 = vmatprep.subr.mxu0 %v7666
        %7730 = vmatpush1.msra.mxu0 %v7665
        %7731 = vmatprep.subr.mxu0 %v7668
        %7732 = vmatpush1.msra.mxu0 %v7667
        %7733 = vmatprep.subr.mxu0 %v7670
        %7734 = vmatpush1.msra.mxu0 %v7669
        %7735 = vmatprep.subr.mxu0 %v7672
        %7736 = vmatpush1.msra.mxu0 %v7671
        %7737 = vmatprep.subr.mxu0 %v7674
        %7738 = vmatpush1.msra.mxu0 %v7673
        %7739 = vmatprep.subr.mxu0 %v7676
        %7740 = vmatpush1.msra.mxu0 %v7675
        %7741 = vmatprep.subr.mxu0 %v7678
        %7742 = vmatpush1.msra.mxu0 %v7677
        %7743 = vmatprep.subr.mxu0 %v7680
        %7744 = vmatpush1.msra.mxu0 %v7679
        %7745 = vmatprep.subr.mxu0 %v7682
        %7746 = vmatpush1.msra.mxu0 %v7681
        %7747 = vmatprep.subr.mxu0 %v7684
        %7748 = vmatpush1.msra.mxu0 %v7683
        %7749 = vmatprep.subr.mxu0 %v7686
        %7750 = vmatpush1.msra.mxu0 %v7685
        %7751 = vmatprep.subr.mxu0 %v7688
        %7752 = vmatpush1.msra.mxu0 %v7687
        %7753 = vmatprep.subr.mxu0 %v7690
        %7754 = vmatpush1.msra.mxu0 %v7689
        %7755 = vmatprep.subr.mxu0 %v7692
        %7756 = vmatpush1.msra.mxu0 %v7691
        %7757 = vmatprep.subr.mxu0 %v7694
        %7758 = vmatpush1.msra.mxu0 %v7693
        %7759 = vmatprep.subr.mxu0 %v7696
        %7760 = vmatpush1.msra.mxu0 %v7695
        %7761 = vmatprep.subr.mxu0 %v7698
        %7762 = vmatpush1.msra.mxu0 %v7697
        %7763 = vmatprep.subr.mxu0 %v7700
        %7764 = vmatpush1.msra.mxu0 %v7699
        %7765 = vmatprep.subr.mxu0 %v7702
        %7766 = vmatpush1.msra.mxu0 %v7701
        %7767 = vmatprep.subr.mxu0 %v7704
        %7768 = vmatpush1.msra.mxu0 %v7703
        %7769 = vmatprep.subr.mxu0 %v7706
        %7770 = vmatpush1.msra.mxu0 %v7705
        %7771 = vmatprep.subr.mxu0 %v7708
        %7772 = vmatpush1.msra.mxu0 %v7707
        %7773 = vmatprep.mubr.f32.mxu0 %v4500
        %7774 = vmatmul.mubr.f32.gmra.mrb[0].mxu0 %v4499
        %v7775 = vpop.f32.mrb[0].mxu0
        %v7776 = vadd.f32 0.0, %v7775
        %v7777 = vpop.f32.mrb[0].mxu0
        %v7778 = vadd.f32 0.0, %v7777
        %7779 = vmatprep.mubr.f32.mxu0 %v4502
        %7780 = vmatmul.mubr.f32.gmra.mrb[0].mxu0 %v4501
        %v7781 = vpop.f32.mrb[0].mxu0
        %v7782 = vadd.f32 0.0, %v7781
        %v7783 = vpop.f32.mrb[0].mxu0
        %v7784 = vadd.f32 0.0, %v7783
        %7785 = vmatprep.mubr.f32.mxu0 %v4504
        %7786 = vmatmul.mubr.f32.gmra.mrb[0].mxu0 %v4503
        %v7787 = vpop.f32.mrb[0].mxu0
        %v7788 = vadd.f32 0.0, %v7787
        %v7789 = vpop.f32.mrb[0].mxu0
        %v7790 = vadd.f32 0.0, %v7789
        %7791 = vmatprep.mubr.f32.mxu0 %v4506
        %7792 = vmatmul.mubr.f32.gmra.mrb[0].mxu0 %v4505
        %v7793 = vpop.f32.mrb[0].mxu0
        %v7794 = vadd.f32 0.0, %v7793
        %v7795 = vpop.f32.mrb[0].mxu0
        %v7796 = vadd.f32 0.0, %v7795
        %7797 = vmatprep.mubr.f32.mxu0 %v4508
        %7798 = vmatmul.mubr.f32.gmra.mrb[0].mxu0 %v4507
        %v7799 = vpop.f32.mrb[0].mxu0
        %v7800 = vadd.f32 0.0, %v7799
        %v7801 = vpop.f32.mrb[0].mxu0
        %v7802 = vadd.f32 0.0, %v7801
        %7803 = vmatprep.mubr.f32.mxu0 %v4510
        %7804 = vmatmul.mubr.f32.gmra.mrb[0].mxu0 %v4509
        %v7805 = vpop.f32.mrb[0].mxu0
        %v7806 = vadd.f32 0.0, %v7805
        %v7807 = vpop.f32.mrb[0].mxu0
        %v7808 = vadd.f32 0.0, %v7807
        %7809 = vmatprep.mubr.f32.mxu0 %v4512
        %7810 = vmatmul.mubr.f32.gmra.mrb[0].mxu0 %v4511
        %v7811 = vpop.f32.mrb[0].mxu0
        %v7812 = vadd.f32 0.0, %v7811
        %v7813 = vpop.f32.mrb[0].mxu0
        %v7814 = vadd.f32 0.0, %v7813
        %7815 = vmatprep.mubr.f32.mxu0 %v4514
        %7816 = vmatmul.mubr.f32.gmra.mrb[0].mxu0 %v4513
        %v7817 = vpop.f32.mrb[0].mxu0
        %v7818 = vadd.f32 0.0, %v7817
        %v7819 = vpop.f32.mrb[0].mxu0
        %v7820 = vadd.f32 0.0, %v7819
        %7821 = vmatprep.mubr.f32.mxu0 %v4516
        %7822 = vmatmul.mubr.f32.gmra.mrb[0].mxu0 %v4515
        %v7823 = vpop.f32.mrb[0].mxu0
        %v7824 = vadd.f32 0.0, %v7823
        %v7825 = vpop.f32.mrb[0].mxu0
        %v7826 = vadd.f32 0.0, %v7825
        %7827 = vmatprep.mubr.f32.mxu0 %v4518
        %7828 = vmatmul.mubr.f32.gmra.mrb[0].mxu0 %v4517
        %v7829 = vpop.f32.mrb[0].mxu0
        %v7830 = vadd.f32 0.0, %v7829
        %v7831 = vpop.f32.mrb[0].mxu0
        %v7832 = vadd.f32 0.0, %v7831
        %7833 = vmatprep.mubr.f32.mxu0 %v4520
        %7834 = vmatmul.mubr.f32.gmra.mrb[0].mxu0 %v4519
        %v7835 = vpop.f32.mrb[0].mxu0
        %v7836 = vadd.f32 0.0, %v7835
        %v7837 = vpop.f32.mrb[0].mxu0
        %v7838 = vadd.f32 0.0, %v7837
        %7839 = vmatprep.mubr.f32.mxu0 %v4522
        %7840 = vmatmul.mubr.f32.gmra.mrb[0].mxu0 %v4521
        %v7841 = vpop.f32.mrb[0].mxu0
        %v7842 = vadd.f32 0.0, %v7841
        %v7843 = vpop.f32.mrb[0].mxu0
        %v7844 = vadd.f32 0.0, %v7843
        %7845 = vmatprep.mubr.f32.mxu0 %v4524
        %7846 = vmatmul.mubr.f32.gmra.mrb[0].mxu0 %v4523
        %v7847 = vpop.f32.mrb[0].mxu0
        %v7848 = vadd.f32 0.0, %v7847
        %v7849 = vpop.f32.mrb[0].mxu0
        %v7850 = vadd.f32 0.0, %v7849
        %7851 = vmatprep.mubr.f32.mxu0 %v4526
        %7852 = vmatmul.mubr.f32.gmra.mrb[0].mxu0 %v4525
        %v7853 = vpop.f32.mrb[0].mxu0
        %v7854 = vadd.f32 0.0, %v7853
        %v7855 = vpop.f32.mrb[0].mxu0
        %v7856 = vadd.f32 0.0, %v7855
        %7857 = vmatprep.mubr.f32.mxu0 %v4528
        %7858 = vmatmul.mubr.f32.gmra.mrb[0].mxu0 %v4527
        %v7859 = vpop.f32.mrb[0].mxu0
        %v7860 = vadd.f32 0.0, %v7859
        %v7861 = vpop.f32.mrb[0].mxu0
        %v7862 = vadd.f32 0.0, %v7861
        %7863 = vmatprep.mubr.f32.mxu0 %v4530
        %7864 = vmatmul.mubr.f32.gmra.mrb[0].mxu0 %v4529
        %v7865 = vpop.f32.mrb[0].mxu0
        %v7866 = vadd.f32 0.0, %v7865
        %v7867 = vpop.f32.mrb[0].mxu0
        %v7868 = vadd.f32 0.0, %v7867
        %7869 = vmatprep.mubr.f32.mxu0 %v4532
        %7870 = vmatmul.mubr.f32.gmra.mrb[0].mxu0 %v4531
        %v7871 = vpop.f32.mrb[0].mxu0
        %v7872 = vadd.f32 0.0, %v7871
        %v7873 = vpop.f32.mrb[0].mxu0
        %v7874 = vadd.f32 0.0, %v7873
        %7875 = vmatprep.mubr.f32.mxu0 %v4534
        %7876 = vmatmul.mubr.f32.gmra.mrb[0].mxu0 %v4533
        %v7877 = vpop.f32.mrb[0].mxu0
        %v7878 = vadd.f32 0.0, %v7877
        %v7879 = vpop.f32.mrb[0].mxu0
        %v7880 = vadd.f32 0.0, %v7879
        %7881 = vmatprep.mubr.f32.mxu0 %v4536
        %7882 = vmatmul.mubr.f32.gmra.mrb[0].mxu0 %v4535
        %v7883 = vpop.f32.mrb[0].mxu0
        %v7884 = vadd.f32 0.0, %v7883
        %v7885 = vpop.f32.mrb[0].mxu0
        %v7886 = vadd.f32 0.0, %v7885
        %7887 = vmatprep.mubr.f32.mxu0 %v4538
        %7888 = vmatmul.mubr.f32.gmra.mrb[0].mxu0 %v4537
        %v7889 = vpop.f32.mrb[0].mxu0
        %v7890 = vadd.f32 0.0, %v7889
        %v7891 = vpop.f32.mrb[0].mxu0
        %v7892 = vadd.f32 0.0, %v7891
        %7893 = vmatprep.mubr.f32.mxu0 %v4540
        %7894 = vmatmul.mubr.f32.gmra.mrb[0].mxu0 %v4539
        %v7895 = vpop.f32.mrb[0].mxu0
        %v7896 = vadd.f32 0.0, %v7895
        %v7897 = vpop.f32.mrb[0].mxu0
        %v7898 = vadd.f32 0.0, %v7897
        %7899 = vmatprep.mubr.f32.mxu0 %v4542
        %7900 = vmatmul.mubr.f32.gmra.mrb[0].mxu0 %v4541
        %v7901 = vpop.f32.mrb[0].mxu0
        %v7902 = vadd.f32 0.0, %v7901
        %v7903 = vpop.f32.mrb[0].mxu0
        %v7904 = vadd.f32 0.0, %v7903
        %7905 = vmatprep.mubr.f32.mxu0 %v4544
        %7906 = vmatmul.mubr.f32.gmra.mrb[0].mxu0 %v4543
        %v7907 = vpop.f32.mrb[0].mxu0
        %v7908 = vadd.f32 0.0, %v7907
        %v7909 = vpop.f32.mrb[0].mxu0
        %v7910 = vadd.f32 0.0, %v7909
        %7911 = vmatprep.mubr.f32.mxu0 %v4546
        %7912 = vmatmul.mubr.f32.gmra.mrb[0].mxu0 %v4545
        %v7913 = vpop.f32.mrb[0].mxu0
        %v7914 = vadd.f32 0.0, %v7913
        %v7915 = vpop.f32.mrb[0].mxu0
        %v7916 = vadd.f32 0.0, %v7915
        %7917 = vmatprep.mubr.f32.mxu0 %v4548
        %7918 = vmatmul.mubr.f32.gmra.mrb[0].mxu0 %v4547
        %v7919 = vpop.f32.mrb[0].mxu0
        %v7920 = vadd.f32 0.0, %v7919
        %v7921 = vpop.f32.mrb[0].mxu0
        %v7922 = vadd.f32 0.0, %v7921
        %7923 = vmatprep.mubr.f32.mxu0 %v4550
        %7924 = vmatmul.mubr.f32.gmra.mrb[0].mxu0 %v4549
        %v7925 = vpop.f32.mrb[0].mxu0
        %v7926 = vadd.f32 0.0, %v7925
        %v7927 = vpop.f32.mrb[0].mxu0
        %v7928 = vadd.f32 0.0, %v7927
        %7929 = vmatprep.mubr.f32.mxu0 %v4552
        %7930 = vmatmul.mubr.f32.gmra.mrb[0].mxu0 %v4551
        %v7931 = vpop.f32.mrb[0].mxu0
        %v7932 = vadd.f32 0.0, %v7931
        %v7933 = vpop.f32.mrb[0].mxu0
        %v7934 = vadd.f32 0.0, %v7933
        %7935 = vmatprep.mubr.f32.mxu0 %v4554
        %7936 = vmatmul.mubr.f32.gmra.mrb[0].mxu0 %v4553
        %v7937 = vpop.f32.mrb[0].mxu0
        %v7938 = vadd.f32 0.0, %v7937
        %v7939 = vpop.f32.mrb[0].mxu0
        %v7940 = vadd.f32 0.0, %v7939
        %7941 = vmatprep.mubr.f32.mxu0 %v4556
        %7942 = vmatmul.mubr.f32.gmra.mrb[0].mxu0 %v4555
        %v7943 = vpop.f32.mrb[0].mxu0
        %v7944 = vadd.f32 0.0, %v7943
        %v7945 = vpop.f32.mrb[0].mxu0
        %v7946 = vadd.f32 0.0, %v7945
        %7947 = vmatprep.mubr.f32.mxu0 %v4558
        %7948 = vmatmul.mubr.f32.gmra.mrb[0].mxu0 %v4557
        %v7949 = vpop.f32.mrb[0].mxu0
        %v7950 = vadd.f32 0.0, %v7949
        %v7951 = vpop.f32.mrb[0].mxu0
        %v7952 = vadd.f32 0.0, %v7951
        %7953 = vmatprep.mubr.f32.mxu0 %v4552
        %7954 = vmatmul.mubr.f32.gmra.mrb[0].mxu0 %v4551
        %v7955 = vpop.f32.mrb[0].mxu0
        %v7956 = vadd.f32 0.0, %v7955
        %v7957 = vpop.f32.mrb[0].mxu0
        %v7958 = vadd.f32 0.0, %v7957
        %7959 = vmatprep.mubr.f32.mxu0 %v4554
        %7960 = vmatmul.mubr.f32.gmra.mrb[0].mxu0 %v4553
        %v7961 = vpop.f32.mrb[0].mxu0
        %v7962 = vadd.f32 0.0, %v7961
        %v7963 = vpop.f32.mrb[0].mxu0
        %v7964 = vadd.f32 0.0, %v7963
        %7965 = vdwg.mxu0
        %v7966 = vadd.f32 %v7580, %v7776
        %v7967 = vadd.f32 %v7581, %v7778
        %v7968 = vadd.f32 %v7582, %v7782
        %v7969 = vadd.f32 %v7583, %v7784
        %v7970 = vadd.f32 %v7584, %v7788
        %v7971 = vadd.f32 %v7585, %v7790
        %v7972 = vadd.f32 %v7586, %v7794
        %v7973 = vadd.f32 %v7587, %v7796
        %v7974 = vadd.f32 %v7588, %v7800
        %v7975 = vadd.f32 %v7589, %v7802
        %v7976 = vadd.f32 %v7590, %v7806
        %v7977 = vadd.f32 %v7591, %v7808
        %v7978 = vadd.f32 %v7592, %v7812
        %v7979 = vadd.f32 %v7593, %v7814
        %v7980 = vadd.f32 %v7594, %v7818
        %v7981 = vadd.f32 %v7595, %v7820
        %v7982 = vadd.f32 %v7596, %v7824
        %v7983 = vadd.f32 %v7597, %v7826
        %v7984 = vadd.f32 %v7598, %v7830
        %v7985 = vadd.f32 %v7599, %v7832
        %v7986 = vadd.f32 %v7600, %v7836
        %v7987 = vadd.f32 %v7601, %v7838
        %v7988 = vadd.f32 %v7602, %v7842
        %v7989 = vadd.f32 %v7603, %v7844
        %v7990 = vadd.f32 %v7604, %v7848
        %v7991 = vadd.f32 %v7605, %v7850
        %v7992 = vadd.f32 %v7606, %v7854
        %v7993 = vadd.f32 %v7607, %v7856
        %v7994 = vadd.f32 %v7608, %v7860
        %v7995 = vadd.f32 %v7609, %v7862
        %v7996 = vadd.f32 %v7610, %v7866
        %v7997 = vadd.f32 %v7611, %v7868
        %v7998 = vadd.f32 %v7612, %v7872
        %v7999 = vadd.f32 %v7613, %v7874
        %v8000 = vadd.f32 %v7614, %v7878
        %v8001 = vadd.f32 %v7615, %v7880
        %v8002 = vadd.f32 %v7616, %v7884
        %v8003 = vadd.f32 %v7617, %v7886
        %v8004 = vadd.f32 %v7618, %v7890
        %v8005 = vadd.f32 %v7619, %v7892
        %v8006 = vadd.f32 %v7620, %v7896
        %v8007 = vadd.f32 %v7621, %v7898
        %v8008 = vadd.f32 %v7622, %v7902
        %v8009 = vadd.f32 %v7623, %v7904
        %v8010 = vadd.f32 %v7624, %v7908
        %v8011 = vadd.f32 %v7625, %v7910
        %v8012 = vadd.f32 %v7626, %v7914
        %v8013 = vadd.f32 %v7627, %v7916
        %v8014 = vadd.f32 %v7628, %v7920
        %v8015 = vadd.f32 %v7629, %v7922
        %v8016 = vadd.f32 %v7630, %v7926
        %v8017 = vadd.f32 %v7631, %v7928
        %v8018 = vadd.f32 %v7632, %v7932
        %v8019 = vadd.f32 %v7633, %v7934
        %v8020 = vadd.f32 %v7634, %v7938
        %v8021 = vadd.f32 %v7635, %v7940
        %v8022 = vadd.f32 %v7636, %v7944
        %v8023 = vadd.f32 %v7637, %v7946
        %v8024 = vadd.f32 %v7638, %v7950
        %v8025 = vadd.f32 %v7639, %v7952
        %v8026 = vadd.f32 %v7640, %v7956
        %v8027 = vadd.f32 %v7641, %v7958
        %v8028 = vadd.f32 %v7642, %v7962
        %v8029 = vadd.f32 %v7643, %v7964
        %s8030 = scalar_lea.vmem [#allocation7], 4096
        %v8031 = vld [vmem:[%s8030] sm:$0xff]
        %v8032 = vld [vmem:[%s8030 + $0x8] sm:$0xff]
        %v8033 = vld [vmem:[%s8030 + $0x10] sm:$0xff]
        %v8034 = vld [vmem:[%s8030 + $0x18] sm:$0xff]
        %v8035 = vld [vmem:[%s8030 + $0x20] sm:$0xff]
        %v8036 = vld [vmem:[%s8030 + $0x28] sm:$0xff]
        %v8037 = vld [vmem:[%s8030 + $0x30] sm:$0xff]
        %v8038 = vld [vmem:[%s8030 + $0x38] sm:$0xff]
        %v8039 = vld [vmem:[%s8030 + $0x40] sm:$0xff]
        %v8040 = vld [vmem:[%s8030 + $0x48] sm:$0xff]
        %v8041 = vld [vmem:[%s8030 + $0x50] sm:$0xff]
        %v8042 = vld [vmem:[%s8030 + $0x58] sm:$0xff]
        %v8043 = vld [vmem:[%s8030 + $0x60] sm:$0xff]
        %v8044 = vld [vmem:[%s8030 + $0x68] sm:$0xff]
        %v8045 = vld [vmem:[%s8030 + $0x70] sm:$0xff]
        %v8046 = vld [vmem:[%s8030 + $0x78] sm:$0xff]
        %v8047 = vld [vmem:[%s8030 + $0x80] sm:$0xff]
        %v8048 = vld [vmem:[%s8030 + $0x88] sm:$0xff]
        %v8049 = vld [vmem:[%s8030 + $0x90] sm:$0xff]
        %v8050 = vld [vmem:[%s8030 + $0x98] sm:$0xff]
        %v8051 = vld [vmem:[%s8030 + $0xa0] sm:$0xff]
        %v8052 = vld [vmem:[%s8030 + $0xa8] sm:$0xff]
        %v8053 = vld [vmem:[%s8030 + $0xb0] sm:$0xff]
        %v8054 = vld [vmem:[%s8030 + $0xb8] sm:$0xff]
        %v8055 = vld [vmem:[%s8030 + $0xc0] sm:$0xff]
        %v8056 = vld [vmem:[%s8030 + $0xc8] sm:$0xff]
        %v8057 = vld [vmem:[%s8030 + $0xd0] sm:$0xff]
        %v8058 = vld [vmem:[%s8030 + $0xd8] sm:$0xff]
        %v8059 = vld [vmem:[%s8030 + $0xe0] sm:$0xff]
        %v8060 = vld [vmem:[%s8030 + $0xe8] sm:$0xff]
        %v8061 = vld [vmem:[%s8030 + $0xf0] sm:$0xff]
        %v8062 = vld [vmem:[%s8030 + $0xf8] sm:$0xff]
        %v8063 = vld [vmem:[%s8030 + $0x100] sm:$0xff]
        %v8064 = vld [vmem:[%s8030 + $0x108] sm:$0xff]
        %v8065 = vld [vmem:[%s8030 + $0x110] sm:$0xff]
        %v8066 = vld [vmem:[%s8030 + $0x118] sm:$0xff]
        %v8067 = vld [vmem:[%s8030 + $0x120] sm:$0xff]
        %v8068 = vld [vmem:[%s8030 + $0x128] sm:$0xff]
        %v8069 = vld [vmem:[%s8030 + $0x130] sm:$0xff]
        %v8070 = vld [vmem:[%s8030 + $0x138] sm:$0xff]
        %v8071 = vld [vmem:[%s8030 + $0x140] sm:$0xff]
        %v8072 = vld [vmem:[%s8030 + $0x148] sm:$0xff]
        %v8073 = vld [vmem:[%s8030 + $0x150] sm:$0xff]
        %v8074 = vld [vmem:[%s8030 + $0x158] sm:$0xff]
        %v8075 = vld [vmem:[%s8030 + $0x160] sm:$0xff]
        %v8076 = vld [vmem:[%s8030 + $0x168] sm:$0xff]
        %v8077 = vld [vmem:[%s8030 + $0x170] sm:$0xff]
        %v8078 = vld [vmem:[%s8030 + $0x178] sm:$0xff]
        %v8079 = vld [vmem:[%s8030 + $0x180] sm:$0xff]
        %v8080 = vld [vmem:[%s8030 + $0x188] sm:$0xff]
        %v8081 = vld [vmem:[%s8030 + $0x190] sm:$0xff]
        %v8082 = vld [vmem:[%s8030 + $0x198] sm:$0xff]
        %v8083 = vld [vmem:[%s8030 + $0x1a0] sm:$0xff]
        %v8084 = vld [vmem:[%s8030 + $0x1a8] sm:$0xff]
        %v8085 = vld [vmem:[%s8030 + $0x1b0] sm:$0xff]
        %v8086 = vld [vmem:[%s8030 + $0x1b8] sm:$0xff]
        %v8087 = vld [vmem:[%s8030 + $0x1c0] sm:$0xff]
        %v8088 = vld [vmem:[%s8030 + $0x1c8] sm:$0xff]
        %v8089 = vld [vmem:[%s8030 + $0x1d0] sm:$0xff]
        %v8090 = vld [vmem:[%s8030 + $0x1d8] sm:$0xff]
        %v8091 = vld [vmem:[%s8030 + $0x1e0] sm:$0xff]
        %v8092 = vld [vmem:[%s8030 + $0x1e8] sm:$0xff]
        %v8093 = vld [vmem:[%s8030 + $0x1f0] sm:$0xff]
        %v8094 = vld [vmem:[%s8030 + $0x1f8] sm:$0xff]
        %8095 = vmatprep.subr.mxu0 %v8032
        %8096 = vmatpush1.msra.mxu0 %v8031
        %8097 = vmatprep.subr.mxu0 %v8034
        %8098 = vmatpush1.msra.mxu0 %v8033
        %8099 = vmatprep.subr.mxu0 %v8036
        %8100 = vmatpush1.msra.mxu0 %v8035
        %8101 = vmatprep.subr.mxu0 %v8038
        %8102 = vmatpush1.msra.mxu0 %v8037
        %8103 = vmatprep.subr.mxu0 %v8040
        %8104 = vmatpush1.msra.mxu0 %v8039
        %8105 = vmatprep.subr.mxu0 %v8042
        %8106 = vmatpush1.msra.mxu0 %v8041
        %8107 = vmatprep.subr.mxu0 %v8044
        %8108 = vmatpush1.msra.mxu0 %v8043
        %8109 = vmatprep.subr.mxu0 %v8046
        %8110 = vmatpush1.msra.mxu0 %v8045
        %8111 = vmatprep.subr.mxu0 %v8048
        %8112 = vmatpush1.msra.mxu0 %v8047
        %8113 = vmatprep.subr.mxu0 %v8050
        %8114 = vmatpush1.msra.mxu0 %v8049
        %8115 = vmatprep.subr.mxu0 %v8052
        %8116 = vmatpush1.msra.mxu0 %v8051
        %8117 = vmatprep.subr.mxu0 %v8054
        %8118 = vmatpush1.msra.mxu0 %v8053
        %8119 = vmatprep.subr.mxu0 %v8056
        %8120 = vmatpush1.msra.mxu0 %v8055
        %8121 = vmatprep.subr.mxu0 %v8058
        %8122 = vmatpush1.msra.mxu0 %v8057
        %8123 = vmatprep.subr.mxu0 %v8060
        %8124 = vmatpush1.msra.mxu0 %v8059
        %8125 = vmatprep.subr.mxu0 %v8062
        %8126 = vmatpush1.msra.mxu0 %v8061
        %8127 = vmatprep.subr.mxu0 %v8064
        %8128 = vmatpush1.msra.mxu0 %v8063
        %8129 = vmatprep.subr.mxu0 %v8066
        %8130 = vmatpush1.msra.mxu0 %v8065
        %8131 = vmatprep.subr.mxu0 %v8068
        %8132 = vmatpush1.msra.mxu0 %v8067
        %8133 = vmatprep.subr.mxu0 %v8070
        %8134 = vmatpush1.msra.mxu0 %v8069
        %8135 = vmatprep.subr.mxu0 %v8072
        %8136 = vmatpush1.msra.mxu0 %v8071
        %8137 = vmatprep.subr.mxu0 %v8074
        %8138 = vmatpush1.msra.mxu0 %v8073
        %8139 = vmatprep.subr.mxu0 %v8076
        %8140 = vmatpush1.msra.mxu0 %v8075
        %8141 = vmatprep.subr.mxu0 %v8078
        %8142 = vmatpush1.msra.mxu0 %v8077
        %8143 = vmatprep.subr.mxu0 %v8080
        %8144 = vmatpush1.msra.mxu0 %v8079
        %8145 = vmatprep.subr.mxu0 %v8082
        %8146 = vmatpush1.msra.mxu0 %v8081
        %8147 = vmatprep.subr.mxu0 %v8084
        %8148 = vmatpush1.msra.mxu0 %v8083
        %8149 = vmatprep.subr.mxu0 %v8086
        %8150 = vmatpush1.msra.mxu0 %v8085
        %8151 = vmatprep.subr.mxu0 %v8088
        %8152 = vmatpush1.msra.mxu0 %v8087
        %8153 = vmatprep.subr.mxu0 %v8090
        %8154 = vmatpush1.msra.mxu0 %v8089
        %8155 = vmatprep.subr.mxu0 %v8092
        %8156 = vmatpush1.msra.mxu0 %v8091
        %8157 = vmatprep.subr.mxu0 %v8094
        %8158 = vmatpush1.msra.mxu0 %v8093
        %8159 = vmatprep.mubr.f32.mxu0 %v4882
        %8160 = vmatmul.mubr.f32.gmra.mrb[0].mxu0 %v4880
        %v8161 = vpop.f32.mrb[0].mxu0
        %v8162 = vadd.f32 0.0, %v8161
        %v8163 = vpop.f32.mrb[0].mxu0
        %v8164 = vadd.f32 0.0, %v8163
        %8165 = vmatprep.mubr.f32.mxu0 %v5040
        %8166 = vmatmul.mubr.f32.gmra.mrb[0].mxu0 %v5039
        %v8167 = vpop.f32.mrb[0].mxu0
        %v8168 = vadd.f32 0.0, %v8167
        %v8169 = vpop.f32.mrb[0].mxu0
        %v8170 = vadd.f32 0.0, %v8169
        %8171 = vmatprep.mubr.f32.mxu0 %v4890
        %8172 = vmatmul.mubr.f32.gmra.mrb[0].mxu0 %v4888
        %v8173 = vpop.f32.mrb[0].mxu0
        %v8174 = vadd.f32 0.0, %v8173
        %v8175 = vpop.f32.mrb[0].mxu0
        %v8176 = vadd.f32 0.0, %v8175
        %8177 = vmatprep.mubr.f32.mxu0 %v5044
        %8178 = vmatmul.mubr.f32.gmra.mrb[0].mxu0 %v5043
        %v8179 = vpop.f32.mrb[0].mxu0
        %v8180 = vadd.f32 0.0, %v8179
        %v8181 = vpop.f32.mrb[0].mxu0
        %v8182 = vadd.f32 0.0, %v8181
        %8183 = vmatprep.mubr.f32.mxu0 %v4894
        %8184 = vmatmul.mubr.f32.gmra.mrb[0].mxu0 %v4892
        %v8185 = vpop.f32.mrb[0].mxu0
        %v8186 = vadd.f32 0.0, %v8185
        %v8187 = vpop.f32.mrb[0].mxu0
        %v8188 = vadd.f32 0.0, %v8187
        %8189 = vmatprep.mubr.f32.mxu0 %v5046
        %8190 = vmatmul.mubr.f32.gmra.mrb[0].mxu0 %v5045
        %v8191 = vpop.f32.mrb[0].mxu0
        %v8192 = vadd.f32 0.0, %v8191
        %v8193 = vpop.f32.mrb[0].mxu0
        %v8194 = vadd.f32 0.0, %v8193
        %8195 = vmatprep.mubr.f32.mxu0 %v4898
        %8196 = vmatmul.mubr.f32.gmra.mrb[0].mxu0 %v4896
        %v8197 = vpop.f32.mrb[0].mxu0
        %v8198 = vadd.f32 0.0, %v8197
        %v8199 = vpop.f32.mrb[0].mxu0
        %v8200 = vadd.f32 0.0, %v8199
        %8201 = vmatprep.mubr.f32.mxu0 %v5048
        %8202 = vmatmul.mubr.f32.gmra.mrb[0].mxu0 %v5047
        %v8203 = vpop.f32.mrb[0].mxu0
        %v8204 = vadd.f32 0.0, %v8203
        %v8205 = vpop.f32.mrb[0].mxu0
        %v8206 = vadd.f32 0.0, %v8205
        %8207 = vmatprep.mubr.f32.mxu0 %v4902
        %8208 = vmatmul.mubr.f32.gmra.mrb[0].mxu0 %v4900
        %v8209 = vpop.f32.mrb[0].mxu0
        %v8210 = vadd.f32 0.0, %v8209
        %v8211 = vpop.f32.mrb[0].mxu0
        %v8212 = vadd.f32 0.0, %v8211
        %8213 = vmatprep.mubr.f32.mxu0 %v5050
        %8214 = vmatmul.mubr.f32.gmra.mrb[0].mxu0 %v5049
        %v8215 = vpop.f32.mrb[0].mxu0
        %v8216 = vadd.f32 0.0, %v8215
        %v8217 = vpop.f32.mrb[0].mxu0
        %v8218 = vadd.f32 0.0, %v8217
        %8219 = vmatprep.mubr.f32.mxu0 %v4906
        %8220 = vmatmul.mubr.f32.gmra.mrb[0].mxu0 %v4904
        %v8221 = vpop.f32.mrb[0].mxu0
        %v8222 = vadd.f32 0.0, %v8221
        %v8223 = vpop.f32.mrb[0].mxu0
        %v8224 = vadd.f32 0.0, %v8223
        %8225 = vmatprep.mubr.f32.mxu0 %v5052
        %8226 = vmatmul.mubr.f32.gmra.mrb[0].mxu0 %v5051
        %v8227 = vpop.f32.mrb[0].mxu0
        %v8228 = vadd.f32 0.0, %v8227
        %v8229 = vpop.f32.mrb[0].mxu0
        %v8230 = vadd.f32 0.0, %v8229
        %8231 = vmatprep.mubr.f32.mxu0 %v4910
        %8232 = vmatmul.mubr.f32.gmra.mrb[0].mxu0 %v4908
        %v8233 = vpop.f32.mrb[0].mxu0
        %v8234 = vadd.f32 0.0, %v8233
        %v8235 = vpop.f32.mrb[0].mxu0
        %v8236 = vadd.f32 0.0, %v8235
        %8237 = vmatprep.mubr.f32.mxu0 %v5054
        %8238 = vmatmul.mubr.f32.gmra.mrb[0].mxu0 %v5053
        %v8239 = vpop.f32.mrb[0].mxu0
        %v8240 = vadd.f32 0.0, %v8239
        %v8241 = vpop.f32.mrb[0].mxu0
        %v8242 = vadd.f32 0.0, %v8241
        %8243 = vmatprep.mubr.f32.mxu0 %v4914
        %8244 = vmatmul.mubr.f32.gmra.mrb[0].mxu0 %v4912
        %v8245 = vpop.f32.mrb[0].mxu0
        %v8246 = vadd.f32 0.0, %v8245
        %v8247 = vpop.f32.mrb[0].mxu0
        %v8248 = vadd.f32 0.0, %v8247
        %8249 = vmatprep.mubr.f32.mxu0 %v5056
        %8250 = vmatmul.mubr.f32.gmra.mrb[0].mxu0 %v5055
        %v8251 = vpop.f32.mrb[0].mxu0
        %v8252 = vadd.f32 0.0, %v8251
        %v8253 = vpop.f32.mrb[0].mxu0
        %v8254 = vadd.f32 0.0, %v8253
        %8255 = vmatprep.mubr.f32.mxu0 %v4918
        %8256 = vmatmul.mubr.f32.gmra.mrb[0].mxu0 %v4916
        %v8257 = vpop.f32.mrb[0].mxu0
        %v8258 = vadd.f32 0.0, %v8257
        %v8259 = vpop.f32.mrb[0].mxu0
        %v8260 = vadd.f32 0.0, %v8259
        %8261 = vmatprep.mubr.f32.mxu0 %v5058
        %8262 = vmatmul.mubr.f32.gmra.mrb[0].mxu0 %v5057
        %v8263 = vpop.f32.mrb[0].mxu0
        %v8264 = vadd.f32 0.0, %v8263
        %v8265 = vpop.f32.mrb[0].mxu0
        %v8266 = vadd.f32 0.0, %v8265
        %8267 = vmatprep.mubr.f32.mxu0 %v4922
        %8268 = vmatmul.mubr.f32.gmra.mrb[0].mxu0 %v4920
        %v8269 = vpop.f32.mrb[0].mxu0
        %v8270 = vadd.f32 0.0, %v8269
        %v8271 = vpop.f32.mrb[0].mxu0
        %v8272 = vadd.f32 0.0, %v8271
        %8273 = vmatprep.mubr.f32.mxu0 %v5060
        %8274 = vmatmul.mubr.f32.gmra.mrb[0].mxu0 %v5059
        %v8275 = vpop.f32.mrb[0].mxu0
        %v8276 = vadd.f32 0.0, %v8275
        %v8277 = vpop.f32.mrb[0].mxu0
        %v8278 = vadd.f32 0.0, %v8277
        %8279 = vmatprep.mubr.f32.mxu0 %v4926
        %8280 = vmatmul.mubr.f32.gmra.mrb[0].mxu0 %v4924
        %v8281 = vpop.f32.mrb[0].mxu0
        %v8282 = vadd.f32 0.0, %v8281
        %v8283 = vpop.f32.mrb[0].mxu0
        %v8284 = vadd.f32 0.0, %v8283
        %8285 = vmatprep.mubr.f32.mxu0 %v5062
        %8286 = vmatmul.mubr.f32.gmra.mrb[0].mxu0 %v5061
        %v8287 = vpop.f32.mrb[0].mxu0
        %v8288 = vadd.f32 0.0, %v8287
        %v8289 = vpop.f32.mrb[0].mxu0
        %v8290 = vadd.f32 0.0, %v8289
        %8291 = vmatprep.mubr.f32.mxu0 %v4930
        %8292 = vmatmul.mubr.f32.gmra.mrb[0].mxu0 %v4928
        %v8293 = vpop.f32.mrb[0].mxu0
        %v8294 = vadd.f32 0.0, %v8293
        %v8295 = vpop.f32.mrb[0].mxu0
        %v8296 = vadd.f32 0.0, %v8295
        %8297 = vmatprep.mubr.f32.mxu0 %v5064
        %8298 = vmatmul.mubr.f32.gmra.mrb[0].mxu0 %v5063
        %v8299 = vpop.f32.mrb[0].mxu0
        %v8300 = vadd.f32 0.0, %v8299
        %v8301 = vpop.f32.mrb[0].mxu0
        %v8302 = vadd.f32 0.0, %v8301
        %8303 = vmatprep.mubr.f32.mxu0 %v4934
        %8304 = vmatmul.mubr.f32.gmra.mrb[0].mxu0 %v4932
        %v8305 = vpop.f32.mrb[0].mxu0
        %v8306 = vadd.f32 0.0, %v8305
        %v8307 = vpop.f32.mrb[0].mxu0
        %v8308 = vadd.f32 0.0, %v8307
        %8309 = vmatprep.mubr.f32.mxu0 %v5066
        %8310 = vmatmul.mubr.f32.gmra.mrb[0].mxu0 %v5065
        %v8311 = vpop.f32.mrb[0].mxu0
        %v8312 = vadd.f32 0.0, %v8311
        %v8313 = vpop.f32.mrb[0].mxu0
        %v8314 = vadd.f32 0.0, %v8313
        %8315 = vmatprep.mubr.f32.mxu0 %v4938
        %8316 = vmatmul.mubr.f32.gmra.mrb[0].mxu0 %v4936
        %v8317 = vpop.f32.mrb[0].mxu0
        %v8318 = vadd.f32 0.0, %v8317
        %v8319 = vpop.f32.mrb[0].mxu0
        %v8320 = vadd.f32 0.0, %v8319
        %8321 = vmatprep.mubr.f32.mxu0 %v5068
        %8322 = vmatmul.mubr.f32.gmra.mrb[0].mxu0 %v5067
        %v8323 = vpop.f32.mrb[0].mxu0
        %v8324 = vadd.f32 0.0, %v8323
        %v8325 = vpop.f32.mrb[0].mxu0
        %v8326 = vadd.f32 0.0, %v8325
        %8327 = vmatprep.mubr.f32.mxu0 %v4942
        %8328 = vmatmul.mubr.f32.gmra.mrb[0].mxu0 %v4940
        %v8329 = vpop.f32.mrb[0].mxu0
        %v8330 = vadd.f32 0.0, %v8329
        %v8331 = vpop.f32.mrb[0].mxu0
        %v8332 = vadd.f32 0.0, %v8331
        %8333 = vmatprep.mubr.f32.mxu0 %v5070
        %8334 = vmatmul.mubr.f32.gmra.mrb[0].mxu0 %v5069
        %v8335 = vpop.f32.mrb[0].mxu0
        %v8336 = vadd.f32 0.0, %v8335
        %v8337 = vpop.f32.mrb[0].mxu0
        %v8338 = vadd.f32 0.0, %v8337
        %8339 = vmatprep.mubr.f32.mxu0 %v4938
        %8340 = vmatmul.mubr.f32.gmra.mrb[0].mxu0 %v4936
        %v8341 = vpop.f32.mrb[0].mxu0
        %v8342 = vadd.f32 0.0, %v8341
        %v8343 = vpop.f32.mrb[0].mxu0
        %v8344 = vadd.f32 0.0, %v8343
        %8345 = vmatprep.mubr.f32.mxu0 %v5068
        %8346 = vmatmul.mubr.f32.gmra.mrb[0].mxu0 %v5067
        %v8347 = vpop.f32.mrb[0].mxu0
        %v8348 = vadd.f32 0.0, %v8347
        %v8349 = vpop.f32.mrb[0].mxu0
        %v8350 = vadd.f32 0.0, %v8349
        %8351 = vdwg.mxu0
        %v8352 = vadd.f32 %v7966, %v8162
        %v8353 = vadd.f32 %v7967, %v8164
        %v8354 = vadd.f32 %v7968, %v8168
        %v8355 = vadd.f32 %v7969, %v8170
        %v8356 = vadd.f32 %v7970, %v8174
        %v8357 = vadd.f32 %v7971, %v8176
        %v8358 = vadd.f32 %v7972, %v8180
        %v8359 = vadd.f32 %v7973, %v8182
        %v8360 = vadd.f32 %v7974, %v8186
        %v8361 = vadd.f32 %v7975, %v8188
        %v8362 = vadd.f32 %v7976, %v8192
        %v8363 = vadd.f32 %v7977, %v8194
        %v8364 = vadd.f32 %v7978, %v8198
        %v8365 = vadd.f32 %v7979, %v8200
        %v8366 = vadd.f32 %v7980, %v8204
        %v8367 = vadd.f32 %v7981, %v8206
        %v8368 = vadd.f32 %v7982, %v8210
        %v8369 = vadd.f32 %v7983, %v8212
        %v8370 = vadd.f32 %v7984, %v8216
        %v8371 = vadd.f32 %v7985, %v8218
        %v8372 = vadd.f32 %v7986, %v8222
        %v8373 = vadd.f32 %v7987, %v8224
        %v8374 = vadd.f32 %v7988, %v8228
        %v8375 = vadd.f32 %v7989, %v8230
        %v8376 = vadd.f32 %v7990, %v8234
        %v8377 = vadd.f32 %v7991, %v8236
        %v8378 = vadd.f32 %v7992, %v8240
        %v8379 = vadd.f32 %v7993, %v8242
        %v8380 = vadd.f32 %v7994, %v8246
        %v8381 = vadd.f32 %v7995, %v8248
        %v8382 = vadd.f32 %v7996, %v8252
        %v8383 = vadd.f32 %v7997, %v8254
        %v8384 = vadd.f32 %v7998, %v8258
        %v8385 = vadd.f32 %v7999, %v8260
        %v8386 = vadd.f32 %v8000, %v8264
        %v8387 = vadd.f32 %v8001, %v8266
        %v8388 = vadd.f32 %v8002, %v8270
        %v8389 = vadd.f32 %v8003, %v8272
        %v8390 = vadd.f32 %v8004, %v8276
        %v8391 = vadd.f32 %v8005, %v8278
        %v8392 = vadd.f32 %v8006, %v8282
        %v8393 = vadd.f32 %v8007, %v8284
        %v8394 = vadd.f32 %v8008, %v8288
        %v8395 = vadd.f32 %v8009, %v8290
        %v8396 = vadd.f32 %v8010, %v8294
        %v8397 = vadd.f32 %v8011, %v8296
        %v8398 = vadd.f32 %v8012, %v8300
        %v8399 = vadd.f32 %v8013, %v8302
        %v8400 = vadd.f32 %v8014, %v8306
        %v8401 = vadd.f32 %v8015, %v8308
        %v8402 = vadd.f32 %v8016, %v8312
        %v8403 = vadd.f32 %v8017, %v8314
        %v8404 = vadd.f32 %v8018, %v8318
        %v8405 = vadd.f32 %v8019, %v8320
        %v8406 = vadd.f32 %v8020, %v8324
        %v8407 = vadd.f32 %v8021, %v8326
        %v8408 = vadd.f32 %v8022, %v8330
        %v8409 = vadd.f32 %v8023, %v8332
        %v8410 = vadd.f32 %v8024, %v8336
        %v8411 = vadd.f32 %v8025, %v8338
        %v8412 = vadd.f32 %v8026, %v8342
        %v8413 = vadd.f32 %v8027, %v8344
        %v8414 = vadd.f32 %v8028, %v8348
        %v8415 = vadd.f32 %v8029, %v8350
        %v8416 = vadd.f32 %v8352, %v8354
        %v8417 = vadd.f32 %v8416, %v8356
        %v8418 = vadd.f32 %v8417, %v8358
        %v8419 = vadd.f32 %v8418, %v8360
        %v8420 = vadd.f32 %v8419, %v8362
        %v8421 = vadd.f32 %v8420, %v8364
        %v8422 = vadd.f32 %v8421, %v8366
        %v8423 = vadd.f32 %v8422, %v8368
        %v8424 = vadd.f32 %v8423, %v8370
        %v8425 = vadd.f32 %v8424, %v8372
        %v8426 = vadd.f32 %v8425, %v8374
        %v8427 = vadd.f32 %v8426, %v8376
        %v8428 = vadd.f32 %v8427, %v8378
        %v8429 = vadd.f32 %v8428, %v8380
        %v8430 = vadd.f32 %v8429, %v8382
        %v8431 = vadd.f32 %v8430, %v8384
        %v8432 = vadd.f32 %v8431, %v8386
        %v8433 = vadd.f32 %v8432, %v8388
        %v8434 = vadd.f32 %v8433, %v8390
        %v8435 = vadd.f32 %v8434, %v8392
        %v8436 = vadd.f32 %v8435, %v8394
        %v8437 = vadd.f32 %v8436, %v8396
        %v8438 = vadd.f32 %v8437, %v8398
        %v8439 = vadd.f32 %v8438, %v8400
        %v8440 = vadd.f32 %v8439, %v8402
        %v8441 = vadd.f32 %v8440, %v8404
        %v8442 = vadd.f32 %v8441, %v8406
        %v8443 = vadd.f32 %v8442, %v8408
        %v8444 = vadd.f32 %v8443, %v8410
        %v8445 = vadd.f32 %v8444, %v8412
        %v8446 = vadd.f32 %v8445, %v8414
        %v8447 = vrot.slane %v8446, 4
        %v8448 = vadd.f32 %v8446, %v8447
        %v8449 = vrot.slane %v8448, 2
        %v8450 = vadd.f32 %v8448, %v8449
        %v8451 = vrot.slane %v8450, 1
        %v8452 = vadd.f32 %v8450, %v8451
        %v8453 = vadd.f32 %v8353, %v8355
        %v8454 = vadd.f32 %v8453, %v8357
        %v8455 = vadd.f32 %v8454, %v8359
        %v8456 = vadd.f32 %v8455, %v8361
        %v8457 = vadd.f32 %v8456, %v8363
        %v8458 = vadd.f32 %v8457, %v8365
        %v8459 = vadd.f32 %v8458, %v8367
        %v8460 = vadd.f32 %v8459, %v8369
        %v8461 = vadd.f32 %v8460, %v8371
        %v8462 = vadd.f32 %v8461, %v8373
        %v8463 = vadd.f32 %v8462, %v8375
        %v8464 = vadd.f32 %v8463, %v8377
        %v8465 = vadd.f32 %v8464, %v8379
        %v8466 = vadd.f32 %v8465, %v8381
        %v8467 = vadd.f32 %v8466, %v8383
        %v8468 = vadd.f32 %v8467, %v8385
        %v8469 = vadd.f32 %v8468, %v8387
        %v8470 = vadd.f32 %v8469, %v8389
        %v8471 = vadd.f32 %v8470, %v8391
        %v8472 = vadd.f32 %v8471, %v8393
        %v8473 = vadd.f32 %v8472, %v8395
        %v8474 = vadd.f32 %v8473, %v8397
        %v8475 = vadd.f32 %v8474, %v8399
        %v8476 = vadd.f32 %v8475, %v8401
        %v8477 = vadd.f32 %v8476, %v8403
        %v8478 = vadd.f32 %v8477, %v8405
        %v8479 = vadd.f32 %v8478, %v8407
        %v8480 = vadd.f32 %v8479, %v8409
        %v8481 = vadd.f32 %v8480, %v8411
        %v8482 = vadd.f32 %v8481, %v8413
        %v8483 = vadd.f32 %v8482, %v8415
        %v8484 = vrot.slane %v8483, 4
        %v8485 = vadd.f32 %v8483, %v8484
        %v8486 = vrot.slane %v8485, 2
        %v8487 = vadd.f32 %v8485, %v8486
        %v8488 = vrot.slane %v8487, 1
        %v8489 = vadd.f32 %v8487, %v8488
        %v8490 = vmul.f32 %v8352, %v8352
        %v8491 = vmul.f32 %v8353, %v8353
        %v8492 = vmul.f32 %v8354, %v8354
        %v8493 = vmul.f32 %v8355, %v8355
        %v8494 = vmul.f32 %v8356, %v8356
        %v8495 = vmul.f32 %v8357, %v8357
        %v8496 = vmul.f32 %v8358, %v8358
        %v8497 = vmul.f32 %v8359, %v8359
        %v8498 = vmul.f32 %v8360, %v8360
        %v8499 = vmul.f32 %v8361, %v8361
        %v8500 = vmul.f32 %v8362, %v8362
        %v8501 = vmul.f32 %v8363, %v8363
        %v8502 = vmul.f32 %v8364, %v8364
        %v8503 = vmul.f32 %v8365, %v8365
        %v8504 = vmul.f32 %v8366, %v8366
        %v8505 = vmul.f32 %v8367, %v8367
        %v8506 = vmul.f32 %v8368, %v8368
        %v8507 = vmul.f32 %v8369, %v8369
        %v8508 = vmul.f32 %v8370, %v8370
        %v8509 = vmul.f32 %v8371, %v8371
        %v8510 = vmul.f32 %v8372, %v8372
        %v8511 = vmul.f32 %v8373, %v8373
        %v8512 = vmul.f32 %v8374, %v8374
        %v8513 = vmul.f32 %v8375, %v8375
        %v8514 = vmul.f32 %v8376, %v8376
        %v8515 = vmul.f32 %v8377, %v8377
        %v8516 = vmul.f32 %v8378, %v8378
        %v8517 = vmul.f32 %v8379, %v8379
        %v8518 = vmul.f32 %v8380, %v8380
        %v8519 = vmul.f32 %v8381, %v8381
        %v8520 = vmul.f32 %v8382, %v8382
        %v8521 = vmul.f32 %v8383, %v8383
        %v8522 = vmul.f32 %v8384, %v8384
        %v8523 = vmul.f32 %v8385, %v8385
        %v8524 = vmul.f32 %v8386, %v8386
        %v8525 = vmul.f32 %v8387, %v8387
        %v8526 = vmul.f32 %v8388, %v8388
        %v8527 = vmul.f32 %v8389, %v8389
        %v8528 = vmul.f32 %v8390, %v8390
        %v8529 = vmul.f32 %v8391, %v8391
        %v8530 = vmul.f32 %v8392, %v8392
        %v8531 = vmul.f32 %v8393, %v8393
        %v8532 = vmul.f32 %v8394, %v8394
        %v8533 = vmul.f32 %v8395, %v8395
        %v8534 = vmul.f32 %v8396, %v8396
        %v8535 = vmul.f32 %v8397, %v8397
        %v8536 = vmul.f32 %v8398, %v8398
        %v8537 = vmul.f32 %v8399, %v8399
        %v8538 = vmul.f32 %v8400, %v8400
        %v8539 = vmul.f32 %v8401, %v8401
        %v8540 = vmul.f32 %v8402, %v8402
        %v8541 = vmul.f32 %v8403, %v8403
        %v8542 = vmul.f32 %v8404, %v8404
        %v8543 = vmul.f32 %v8405, %v8405
        %v8544 = vmul.f32 %v8406, %v8406
        %v8545 = vmul.f32 %v8407, %v8407
        %v8546 = vmul.f32 %v8408, %v8408
        %v8547 = vmul.f32 %v8409, %v8409
        %v8548 = vmul.f32 %v8410, %v8410
        %v8549 = vmul.f32 %v8411, %v8411
        %v8550 = vmul.f32 %v8412, %v8412
        %v8551 = vmul.f32 %v8413, %v8413
        %v8552 = vmul.f32 %v8414, %v8414
        %v8553 = vmul.f32 %v8415, %v8415
        %v8554 = vadd.f32 %v8490, %v8492
        %v8555 = vadd.f32 %v8554, %v8494
        %v8556 = vadd.f32 %v8555, %v8496
        %v8557 = vadd.f32 %v8556, %v8498
        %v8558 = vadd.f32 %v8557, %v8500
        %v8559 = vadd.f32 %v8558, %v8502
        %v8560 = vadd.f32 %v8559, %v8504
        %v8561 = vadd.f32 %v8560, %v8506
        %v8562 = vadd.f32 %v8561, %v8508
        %v8563 = vadd.f32 %v8562, %v8510
        %v8564 = vadd.f32 %v8563, %v8512
        %v8565 = vadd.f32 %v8564, %v8514
        %v8566 = vadd.f32 %v8565, %v8516
        %v8567 = vadd.f32 %v8566, %v8518
        %v8568 = vadd.f32 %v8567, %v8520
        %v8569 = vadd.f32 %v8568, %v8522
        %v8570 = vadd.f32 %v8569, %v8524
        %v8571 = vadd.f32 %v8570, %v8526
        %v8572 = vadd.f32 %v8571, %v8528
        %v8573 = vadd.f32 %v8572, %v8530
        %v8574 = vadd.f32 %v8573, %v8532
        %v8575 = vadd.f32 %v8574, %v8534
        %v8576 = vadd.f32 %v8575, %v8536
        %v8577 = vadd.f32 %v8576, %v8538
        %v8578 = vadd.f32 %v8577, %v8540
        %v8579 = vadd.f32 %v8578, %v8542
        %v8580 = vadd.f32 %v8579, %v8544
        %v8581 = vadd.f32 %v8580, %v8546
        %v8582 = vadd.f32 %v8581, %v8548
        %v8583 = vadd.f32 %v8582, %v8550
        %v8584 = vadd.f32 %v8583, %v8552
        %v8585 = vrot.slane %v8584, 4
        %v8586 = vadd.f32 %v8584, %v8585
        %v8587 = vrot.slane %v8586, 2
        %v8588 = vadd.f32 %v8586, %v8587
        %v8589 = vrot.slane %v8588, 1
        %v8590 = vadd.f32 %v8588, %v8589
        %v8591 = vadd.f32 %v8491, %v8493
        %v8592 = vadd.f32 %v8591, %v8495
        %v8593 = vadd.f32 %v8592, %v8497
        %v8594 = vadd.f32 %v8593, %v8499
        %v8595 = vadd.f32 %v8594, %v8501
        %v8596 = vadd.f32 %v8595, %v8503
        %v8597 = vadd.f32 %v8596, %v8505
        %v8598 = vadd.f32 %v8597, %v8507
        %v8599 = vadd.f32 %v8598, %v8509
        %v8600 = vadd.f32 %v8599, %v8511
        %v8601 = vadd.f32 %v8600, %v8513
        %v8602 = vadd.f32 %v8601, %v8515
        %v8603 = vadd.f32 %v8602, %v8517
        %v8604 = vadd.f32 %v8603, %v8519
        %v8605 = vadd.f32 %v8604, %v8521
        %v8606 = vadd.f32 %v8605, %v8523
        %v8607 = vadd.f32 %v8606, %v8525
        %v8608 = vadd.f32 %v8607, %v8527
        %v8609 = vadd.f32 %v8608, %v8529
        %v8610 = vadd.f32 %v8609, %v8531
        %v8611 = vadd.f32 %v8610, %v8533
        %v8612 = vadd.f32 %v8611, %v8535
        %v8613 = vadd.f32 %v8612, %v8537
        %v8614 = vadd.f32 %v8613, %v8539
        %v8615 = vadd.f32 %v8614, %v8541
        %v8616 = vadd.f32 %v8615, %v8543
        %v8617 = vadd.f32 %v8616, %v8545
        %v8618 = vadd.f32 %v8617, %v8547
        %v8619 = vadd.f32 %v8618, %v8549
        %v8620 = vadd.f32 %v8619, %v8551
        %v8621 = vadd.f32 %v8620, %v8553
        %v8622 = vrot.slane %v8621, 4
        %v8623 = vadd.f32 %v8621, %v8622
        %v8624 = vrot.slane %v8623, 2
        %v8625 = vadd.f32 %v8623, %v8624
        %v8626 = vrot.slane %v8625, 1
        %v8627 = vadd.f32 %v8625, %v8626
        %v8628 = vmul.f32 %v8452, 0.00390625
        %v8629 = vmul.f32 %v8489, 0.00390625
        %v8630 = vmul.f32 %v8590, 0.00390625
        %v8631 = vmul.f32 %v8627, 0.00390625
        %v8632 = vmul.f32 %v8628, %v8628
        %v8633 = vmul.f32 %v8629, %v8629
        %v8634 = vsub.f32 %v8630, %v8632
        %v8635 = vsub.f32 %v8631, %v8633
        %v8636 = vmax.f32 %v8634, 0.0
        %v8637 = vmax.f32 %v8635, 0.0
        %v8638 = vsub.f32 %v8352, %v8628
        %v8639 = vsub.f32 %v8353, %v8629
        %v8640 = vsub.f32 %v8354, %v8628
        %v8641 = vsub.f32 %v8355, %v8629
        %v8642 = vsub.f32 %v8356, %v8628
        %v8643 = vsub.f32 %v8357, %v8629
        %v8644 = vsub.f32 %v8358, %v8628
        %v8645 = vsub.f32 %v8359, %v8629
        %v8646 = vsub.f32 %v8360, %v8628
        %v8647 = vsub.f32 %v8361, %v8629
        %v8648 = vsub.f32 %v8362, %v8628
        %v8649 = vsub.f32 %v8363, %v8629
        %v8650 = vsub.f32 %v8364, %v8628
        %v8651 = vsub.f32 %v8365, %v8629
        %v8652 = vsub.f32 %v8366, %v8628
        %v8653 = vsub.f32 %v8367, %v8629
        %v8654 = vsub.f32 %v8368, %v8628
        %v8655 = vsub.f32 %v8369, %v8629
        %v8656 = vsub.f32 %v8370, %v8628
        %v8657 = vsub.f32 %v8371, %v8629
        %v8658 = vsub.f32 %v8372, %v8628
        %v8659 = vsub.f32 %v8373, %v8629
        %v8660 = vsub.f32 %v8374, %v8628
        %v8661 = vsub.f32 %v8375, %v8629
        %v8662 = vsub.f32 %v8376, %v8628
        %v8663 = vsub.f32 %v8377, %v8629
        %v8664 = vsub.f32 %v8378, %v8628
        %v8665 = vsub.f32 %v8379, %v8629
        %v8666 = vsub.f32 %v8380, %v8628
        %v8667 = vsub.f32 %v8381, %v8629
        %v8668 = vsub.f32 %v8382, %v8628
        %v8669 = vsub.f32 %v8383, %v8629
        %v8670 = vsub.f32 %v8384, %v8628
        %v8671 = vsub.f32 %v8385, %v8629
        %v8672 = vsub.f32 %v8386, %v8628
        %v8673 = vsub.f32 %v8387, %v8629
        %v8674 = vsub.f32 %v8388, %v8628
        %v8675 = vsub.f32 %v8389, %v8629
        %v8676 = vsub.f32 %v8390, %v8628
        %v8677 = vsub.f32 %v8391, %v8629
        %v8678 = vsub.f32 %v8392, %v8628
        %v8679 = vsub.f32 %v8393, %v8629
        %v8680 = vsub.f32 %v8394, %v8628
        %v8681 = vsub.f32 %v8395, %v8629
        %v8682 = vsub.f32 %v8396, %v8628
        %v8683 = vsub.f32 %v8397, %v8629
        %v8684 = vsub.f32 %v8398, %v8628
        %v8685 = vsub.f32 %v8399, %v8629
        %v8686 = vsub.f32 %v8400, %v8628
        %v8687 = vsub.f32 %v8401, %v8629
        %v8688 = vsub.f32 %v8402, %v8628
        %v8689 = vsub.f32 %v8403, %v8629
        %v8690 = vsub.f32 %v8404, %v8628
        %v8691 = vsub.f32 %v8405, %v8629
        %v8692 = vsub.f32 %v8406, %v8628
        %v8693 = vsub.f32 %v8407, %v8629
        %v8694 = vsub.f32 %v8408, %v8628
        %v8695 = vsub.f32 %v8409, %v8629
        %v8696 = vsub.f32 %v8410, %v8628
        %v8697 = vsub.f32 %v8411, %v8629
        %v8698 = vsub.f32 %v8412, %v8628
        %v8699 = vsub.f32 %v8413, %v8629
        %v8700 = vsub.f32 %v8414, %v8628
        %v8701 = vsub.f32 %v8415, %v8629
        %v8702 = vadd.f32 %v8636, 1e-05
        %v8703 = vadd.f32 %v8637, 1e-05
        %v8704 = vrsqrt.pop %v8702
        %v8705 = vrsqrt.pop %v8703
        %v8706 = vmul.f32 %v8638, %v8704
        %v8707 = vmul.f32 %v8639, %v8705
        %v8708 = vmul.f32 %v8640, %v8704
        %v8709 = vmul.f32 %v8641, %v8705
        %v8710 = vmul.f32 %v8642, %v8704
        %v8711 = vmul.f32 %v8643, %v8705
        %v8712 = vmul.f32 %v8644, %v8704
        %v8713 = vmul.f32 %v8645, %v8705
        %v8714 = vmul.f32 %v8646, %v8704
        %v8715 = vmul.f32 %v8647, %v8705
        %v8716 = vmul.f32 %v8648, %v8704
        %v8717 = vmul.f32 %v8649, %v8705
        %v8718 = vmul.f32 %v8650, %v8704
        %v8719 = vmul.f32 %v8651, %v8705
        %v8720 = vmul.f32 %v8652, %v8704
        %v8721 = vmul.f32 %v8653, %v8705
        %v8722 = vmul.f32 %v8654, %v8704
        %v8723 = vmul.f32 %v8655, %v8705
        %v8724 = vmul.f32 %v8656, %v8704
        %v8725 = vmul.f32 %v8657, %v8705
        %v8726 = vmul.f32 %v8658, %v8704
        %v8727 = vmul.f32 %v8659, %v8705
        %v8728 = vmul.f32 %v8660, %v8704
        %v8729 = vmul.f32 %v8661, %v8705
        %v8730 = vmul.f32 %v8662, %v8704
        %v8731 = vmul.f32 %v8663, %v8705
        %v8732 = vmul.f32 %v8664, %v8704
        %v8733 = vmul.f32 %v8665, %v8705
        %v8734 = vmul.f32 %v8666, %v8704
        %v8735 = vmul.f32 %v8667, %v8705
        %v8736 = vmul.f32 %v8668, %v8704
        %v8737 = vmul.f32 %v8669, %v8705
        %v8738 = vmul.f32 %v8670, %v8704
        %v8739 = vmul.f32 %v8671, %v8705
        %v8740 = vmul.f32 %v8672, %v8704
        %v8741 = vmul.f32 %v8673, %v8705
        %v8742 = vmul.f32 %v8674, %v8704
        %v8743 = vmul.f32 %v8675, %v8705
        %v8744 = vmul.f32 %v8676, %v8704
        %v8745 = vmul.f32 %v8677, %v8705
        %v8746 = vmul.f32 %v8678, %v8704
        %v8747 = vmul.f32 %v8679, %v8705
        %v8748 = vmul.f32 %v8680, %v8704
        %v8749 = vmul.f32 %v8681, %v8705
        %v8750 = vmul.f32 %v8682, %v8704
        %v8751 = vmul.f32 %v8683, %v8705
        %v8752 = vmul.f32 %v8684, %v8704
        %v8753 = vmul.f32 %v8685, %v8705
        %v8754 = vmul.f32 %v8686, %v8704
        %v8755 = vmul.f32 %v8687, %v8705
        %v8756 = vmul.f32 %v8688, %v8704
        %v8757 = vmul.f32 %v8689, %v8705
        %v8758 = vmul.f32 %v8690, %v8704
        %v8759 = vmul.f32 %v8691, %v8705
        %v8760 = vmul.f32 %v8692, %v8704
        %v8761 = vmul.f32 %v8693, %v8705
        %v8762 = vmul.f32 %v8694, %v8704
        %v8763 = vmul.f32 %v8695, %v8705
        %v8764 = vmul.f32 %v8696, %v8704
        %v8765 = vmul.f32 %v8697, %v8705
        %v8766 = vmul.f32 %v8698, %v8704
        %v8767 = vmul.f32 %v8699, %v8705
        %v8768 = vmul.f32 %v8700, %v8704
        %v8769 = vmul.f32 %v8701, %v8705
        %v8770 = vadd.f32 %v218, %v8706
        %v8771 = vadd.f32 %v219, %v8707
        %v8772 = vadd.f32 %v220, %v8708
        %v8773 = vadd.f32 %v221, %v8709
        %v8774 = vadd.f32 %v222, %v8710
        %v8775 = vadd.f32 %v223, %v8711
        %v8776 = vadd.f32 %v224, %v8712
        %v8777 = vadd.f32 %v225, %v8713
        %v8778 = vadd.f32 %v226, %v8714
        %v8779 = vadd.f32 %v227, %v8715
        %v8780 = vadd.f32 %v228, %v8716
        %v8781 = vadd.f32 %v229, %v8717
        %v8782 = vadd.f32 %v230, %v8718
        %v8783 = vadd.f32 %v231, %v8719
        %v8784 = vadd.f32 %v232, %v8720
        %v8785 = vadd.f32 %v233, %v8721
        %v8786 = vadd.f32 %v234, %v8722
        %v8787 = vadd.f32 %v235, %v8723
        %v8788 = vadd.f32 %v236, %v8724
        %v8789 = vadd.f32 %v237, %v8725
        %v8790 = vadd.f32 %v238, %v8726
        %v8791 = vadd.f32 %v239, %v8727
        %v8792 = vadd.f32 %v240, %v8728
        %v8793 = vadd.f32 %v241, %v8729
        %v8794 = vadd.f32 %v242, %v8730
        %v8795 = vadd.f32 %v243, %v8731
        %v8796 = vadd.f32 %v244, %v8732
        %v8797 = vadd.f32 %v245, %v8733
        %v8798 = vadd.f32 %v246, %v8734
        %v8799 = vadd.f32 %v247, %v8735
        %v8800 = vadd.f32 %v248, %v8736
        %v8801 = vadd.f32 %v249, %v8737
        %v8802 = vadd.f32 %v250, %v8738
        %v8803 = vadd.f32 %v251, %v8739
        %v8804 = vadd.f32 %v252, %v8740
        %v8805 = vadd.f32 %v253, %v8741
        %v8806 = vadd.f32 %v254, %v8742
        %v8807 = vadd.f32 %v255, %v8743
        %v8808 = vadd.f32 %v256, %v8744
        %v8809 = vadd.f32 %v257, %v8745
        %v8810 = vadd.f32 %v258, %v8746
        %v8811 = vadd.f32 %v259, %v8747
        %v8812 = vadd.f32 %v260, %v8748
        %v8813 = vadd.f32 %v261, %v8749
        %v8814 = vadd.f32 %v262, %v8750
        %v8815 = vadd.f32 %v263, %v8751
        %v8816 = vadd.f32 %v264, %v8752
        %v8817 = vadd.f32 %v265, %v8753
        %v8818 = vadd.f32 %v266, %v8754
        %v8819 = vadd.f32 %v267, %v8755
        %v8820 = vadd.f32 %v268, %v8756
        %v8821 = vadd.f32 %v269, %v8757
        %v8822 = vadd.f32 %v270, %v8758
        %v8823 = vadd.f32 %v271, %v8759
        %v8824 = vadd.f32 %v272, %v8760
        %v8825 = vadd.f32 %v273, %v8761
        %v8826 = vadd.f32 %v274, %v8762
        %v8827 = vadd.f32 %v275, %v8763
        %v8828 = vadd.f32 %v276, %v8764
        %v8829 = vadd.f32 %v277, %v8765
        %v8830 = vadd.f32 %v278, %v8766
        %v8831 = vadd.f32 %v279, %v8767
        %v8832 = vadd.f32 %v280, %v8768
        %v8833 = vadd.f32 %v281, %v8769
        %8834 = vst [vmem:[%s217] sm:$0xff] %v8770
        %8835 = vst [vmem:[%s217 + $0x8] sm:$0xff] %v8771
        %8836 = vst [vmem:[%s217 + $0x10] sm:$0xff] %v8772
        %8837 = vst [vmem:[%s217 + $0x18] sm:$0xff] %v8773
        %8838 = vst [vmem:[%s217 + $0x20] sm:$0xff] %v8774
        %8839 = vst [vmem:[%s217 + $0x28] sm:$0xff] %v8775
        %8840 = vst [vmem:[%s217 + $0x30] sm:$0xff] %v8776
        %8841 = vst [vmem:[%s217 + $0x38] sm:$0xff] %v8777
        %8842 = vst [vmem:[%s217 + $0x40] sm:$0xff] %v8778
        %8843 = vst [vmem:[%s217 + $0x48] sm:$0xff] %v8779
        %8844 = vst [vmem:[%s217 + $0x50] sm:$0xff] %v8780
        %8845 = vst [vmem:[%s217 + $0x58] sm:$0xff] %v8781
        %8846 = vst [vmem:[%s217 + $0x60] sm:$0xff] %v8782
        %8847 = vst [vmem:[%s217 + $0x68] sm:$0xff] %v8783
        %8848 = vst [vmem:[%s217 + $0x70] sm:$0xff] %v8784
        %8849 = vst [vmem:[%s217 + $0x78] sm:$0xff] %v8785
        %8850 = vst [vmem:[%s217 + $0x80] sm:$0xff] %v8786
        %8851 = vst [vmem:[%s217 + $0x88] sm:$0xff] %v8787
        %8852 = vst [vmem:[%s217 + $0x90] sm:$0xff] %v8788
        %8853 = vst [vmem:[%s217 + $0x98] sm:$0xff] %v8789
        %8854 = vst [vmem:[%s217 + $0xa0] sm:$0xff] %v8790
        %8855 = vst [vmem:[%s217 + $0xa8] sm:$0xff] %v8791
        %8856 = vst [vmem:[%s217 + $0xb0] sm:$0xff] %v8792
        %8857 = vst [vmem:[%s217 + $0xb8] sm:$0xff] %v8793
        %8858 = vst [vmem:[%s217 + $0xc0] sm:$0xff] %v8794
        %8859 = vst [vmem:[%s217 + $0xc8] sm:$0xff] %v8795
        %8860 = vst [vmem:[%s217 + $0xd0] sm:$0xff] %v8796
        %8861 = vst [vmem:[%s217 + $0xd8] sm:$0xff] %v8797
        %8862 = vst [vmem:[%s217 + $0xe0] sm:$0xff] %v8798
        %8863 = vst [vmem:[%s217 + $0xe8] sm:$0xff] %v8799
        %8864 = vst [vmem:[%s217 + $0xf0] sm:$0xff] %v8800
        %8865 = vst [vmem:[%s217 + $0xf8] sm:$0xff] %v8801
        %8866 = vst [vmem:[%s217 + $0x100] sm:$0xff] %v8802
        %8867 = vst [vmem:[%s217 + $0x108] sm:$0xff] %v8803
        %8868 = vst [vmem:[%s217 + $0x110] sm:$0xff] %v8804
        %8869 = vst [vmem:[%s217 + $0x118] sm:$0xff] %v8805
        %8870 = vst [vmem:[%s217 + $0x120] sm:$0xff] %v8806
        %8871 = vst [vmem:[%s217 + $0x128] sm:$0xff] %v8807
        %8872 = vst [vmem:[%s217 + $0x130] sm:$0xff] %v8808
        %8873 = vst [vmem:[%s217 + $0x138] sm:$0xff] %v8809
        %8874 = vst [vmem:[%s217 + $0x140] sm:$0xff] %v8810
        %8875 = vst [vmem:[%s217 + $0x148] sm:$0xff] %v8811
        %8876 = vst [vmem:[%s217 + $0x150] sm:$0xff] %v8812
        %8877 = vst [vmem:[%s217 + $0x158] sm:$0xff] %v8813
        %8878 = vst [vmem:[%s217 + $0x160] sm:$0xff] %v8814
        %8879 = vst [vmem:[%s217 + $0x168] sm:$0xff] %v8815
        %8880 = vst [vmem:[%s217 + $0x170] sm:$0xff] %v8816
        %8881 = vst [vmem:[%s217 + $0x178] sm:$0xff] %v8817
        %8882 = vst [vmem:[%s217 + $0x180] sm:$0xff] %v8818
        %8883 = vst [vmem:[%s217 + $0x188] sm:$0xff] %v8819
        %8884 = vst [vmem:[%s217 + $0x190] sm:$0xff] %v8820
        %8885 = vst [vmem:[%s217 + $0x198] sm:$0xff] %v8821
        %8886 = vst [vmem:[%s217 + $0x1a0] sm:$0xff] %v8822
        %8887 = vst [vmem:[%s217 + $0x1a8] sm:$0xff] %v8823
        %8888 = vst [vmem:[%s217 + $0x1b0] sm:$0xff] %v8824
        %8889 = vst [vmem:[%s217 + $0x1b8] sm:$0xff] %v8825
        %8890 = vst [vmem:[%s217 + $0x1c0] sm:$0xff] %v8826
        %8891 = vst [vmem:[%s217 + $0x1c8] sm:$0xff] %v8827
        %8892 = vst [vmem:[%s217 + $0x1d0] sm:$0xff] %v8828
        %8893 = vst [vmem:[%s217 + $0x1d8] sm:$0xff] %v8829
        %8894 = vst [vmem:[%s217 + $0x1e0] sm:$0xff] %v8830
        %8895 = vst [vmem:[%s217 + $0x1e8] sm:$0xff] %v8831
        %8896 = vst [vmem:[%s217 + $0x1f0] sm:$0xff] %v8832
        %8897 = vst [vmem:[%s217 + $0x1f8] sm:$0xff] %v8833
        %s8898 = sand.u32 %s97, 1
        %s8899 = scalar_lea.sflag [#allocation4], %s8898
        %s8900 = sand.u32 %s97, 1
        %s8901 = smul.addr %s8900, 512
        %s8902 = scalar_lea.vmem [#allocation8], %s8901
        // Predicated region
        $region45: #{tpu_custom_call.1} parent=31 // pred_check
          %p8903 = pneg %p107
        $region46: #{tpu_custom_call.1} parent=31 // pred_check_branch
          %8905 = sbr.rel (%p8903) target = $region48
        $region47: #{tpu_custom_call.1} parent=31 // pred_region
          %s8907 = ssub.s32 8192, 8192
          %8908 = vsyncadd %s8899, %s8907
          %s8909 = smul.addr %s21, 64
          %s8910 = smul.addr %s8909, 128
          %s8911 = scalar_lea.hbm %s3, %s8910
          %s8912 = sshll.u32 %s8902, 4
          %s8913 = int_to_ptr.vmem [resolvable:$true] %s8912
          %8918 = dma.vmem_to_hbm [thread:$0]  %s8913, 8192, %s8911, %s8899, 256, 256, 16
        $region48: #{tpu_custom_call.1} parent=31 // pred_fallthru
          _
      $region32: #{tpu_custom_call.1} parent=5 // pred_fallthru
        _
      %p8919 = scmp.le.s32.totalorder 2, %s16
      // Predicated region
      $region49: #{tpu_custom_call.1} parent=5 // pred_check
        %p8920 = pneg %p8919
      $region50: #{tpu_custom_call.1} parent=5 // pred_check_branch
        %8922 = sbr.rel (%p8920) target = $region52
      $region51: #{tpu_custom_call.1} parent=5 // pred_region
        %s8923 = ssub.s32 %s16, 2
        // Predicated region
        $region53: #{tpu_custom_call.1} parent=51 // pred_check
          %p8924 = pneg %p113
        $region54: #{tpu_custom_call.1} parent=51 // pred_check_branch
          %8926 = sbr.rel (%p8924) target = $region56
        $region55: #{tpu_custom_call.1} parent=51 // pred_region
          %s8927 = sand.u32 %s98, 1
          %s8928 = scalar_lea.sflag [#allocation4], %s8927
          %s8929 = sand.u32 %s98, 1
          %s8930 = smul.addr %s8929, 512
          %s8931 = scalar_lea.vmem [#allocation8], %s8930
          %8932 = dma.done %s8928, 8192
        $region56: #{tpu_custom_call.1} parent=51 // pred_fallthru
          _
      $region52: #{tpu_custom_call.1} parent=5 // pred_fallthru
        _
    $region6: #{tpu_custom_call.1} parent=1 // loop_footer
      %s20 = sadd.s32 1, %s16
    $region7: #{tpu_custom_call.1} parent=1 // loop_footer_branch
      %15 = sbr.rel target = $region3
    $region8: #{tpu_custom_call.1} parent=1 // loop_exit
      _
    %8933 = vsyncpa [#allocation3], 1
    %s8934 = scalar_lea.sflag [#allocation3], 1
    %8935 = vsyncpa %s8934, 1
    %8936 = vsyncpa [#allocation6], 1
    %8937 = vsyncpa [#allocation4], 1
    %s8938 = scalar_lea.sflag [#allocation4], 1
    %8939 = vsyncpa %s8938, 1

</llo_original>
